<compile_context>
chip_gen: v7x
topology: tpu7x:2x2x1
jax: 0.10.0
libtpu: 0.0.40
codegen_flags: <defaults>
</compile_context>

<pallas_src>
import functools
import math

import jax
import jax.numpy as jnp
from jax.experimental import pallas as pl
from jax.experimental.pallas import tpu as pltpu

D_MODEL = 32
NHEAD = 4
HEAD_DIM = D_MODEL // NHEAD
DIM_FF = 64
WINDOW = (4, 4)
SEQ = WINDOW[0] * WINDOW[1]          # window_size[0] * window_size[1] = 16
LN_EPS = 1e-5

WINDOWS_PER_BLOCK = 16               # 16 windows * 16 tokens = 256 rows per MXU push
ROWS_PER_BLOCK = WINDOWS_PER_BLOCK * SEQ
BATCH = 64                           # number of windows in the demo (4 grid steps)


def _layer_norm(x, gamma, beta):
    mu = jnp.mean(x, axis=-1, keepdims=True)
    xc = x - mu
    var = jnp.mean(xc * xc, axis=-1, keepdims=True)
    return xc * jax.lax.rsqrt(var + LN_EPS) * gamma + beta


# --------------------------------------------------------------------------
# Fused kernel per grid step: QKV proj -> head-batched softmax attention ->
# out proj -> residual + LN1 -> FFN(relu) -> residual + LN2.
# Each step handles WINDOWS_PER_BLOCK windows flattened to (ROWS, D).
# --------------------------------------------------------------------------
def _encoder_layer_kernel(x_ref, wqkv_ref, bqkv_ref, wo_ref, w1_ref, b1_ref,
                          w2_ref, vecs_ref, out_ref, *, wpb, seq):
    x = x_ref[...].astype(jnp.float32)                       # (ROWS, D) f32
    xb = x.astype(jnp.bfloat16)                              # MXU operand

    vecs = vecs_ref[...]                                     # (8, D) packed small params
    bo, b2 = vecs[0:1, :], vecs[1:2, :]
    g1, be1 = vecs[2:3, :], vecs[3:4, :]
    g2, be2 = vecs[4:5, :], vecs[5:6, :]

    # ---- fused QKV projection: one (ROWS,D)x(D,3D) bf16 MXU dot, f32 accumulate ----
    # (1/sqrt(head_dim) is pre-folded into the q columns of wqkv/bqkv.)
    qkv = jnp.dot(xb, wqkv_ref[...], preferred_element_type=jnp.float32) + bqkv_ref[...]
    q = qkv[:, 0:D_MODEL]
    k = qkv[:, D_MODEL:2 * D_MODEL]
    v = qkv[:, 2 * D_MODEL:3 * D_MODEL]

    # ---- head-batched attention: (NHEAD*wpb, seq, HEAD_DIM), one einsum pair ----
    def to_heads(t):
        return jnp.concatenate(
            [t[:, h * HEAD_DIM:(h + 1) * HEAD_DIM].reshape(wpb, seq, HEAD_DIM)
             for h in range(NHEAD)], axis=0)

    qh = to_heads(q).astype(jnp.bfloat16)
    kh = to_heads(k).astype(jnp.bfloat16)
    vh = to_heads(v).astype(jnp.bfloat16)

    s = jnp.einsum('bqd,bkd->bqk', qh, kh, preferred_element_type=jnp.float32)
    s = s - jnp.max(s, axis=-1, keepdims=True)               # stable softmax (f32)
    p = jnp.exp(s)
    p = p * pl.reciprocal(jnp.sum(p, axis=-1, keepdims=True), approx=True)
    oh = jnp.einsum('bqk,bkd->bqd', p.astype(jnp.bfloat16), vh,
                    preferred_element_type=jnp.float32)      # (NHEAD*wpb, seq, HD)

    # ---- lane-concat heads back to (ROWS, D); ONE K=D output-projection dot ----
    attn = jnp.concatenate(
        [oh[h * wpb:(h + 1) * wpb].reshape(wpb * seq, HEAD_DIM)
         for h in range(NHEAD)], axis=-1)
    attn = jnp.dot(attn.astype(jnp.bfloat16), wo_ref[...],
                   preferred_element_type=jnp.float32) + bo

    # ---- residual + norm1 + FFN(relu) + residual + norm2 (dropouts = identity) ----
    s1 = _layer_norm(x + attn, g1, be1)
    h1 = jnp.dot(s1.astype(jnp.bfloat16), w1_ref[...],
                 preferred_element_type=jnp.float32) + b1_ref[...]
    h1 = jnp.maximum(h1, 0.0)                                 # relu (f32)
    f = jnp.dot(h1.astype(jnp.bfloat16), w2_ref[...],
                preferred_element_type=jnp.float32) + b2
    out_ref[...] = _layer_norm(s1 + f, g2, be2).astype(out_ref.dtype)


# --------------------------------------------------------------------------
# Wrapper
# --------------------------------------------------------------------------
def double_step_seq(step1, len1, step2, len2):
    seq1 = jnp.arange(0, step1 * len1, step1)
    seq2 = jnp.arange(0, step2 * len2, step2)
    return (seq1[:, None] + seq2[None, :]).reshape(1, -1)


def relative_position_bias(params):
    # Computed in the reference forward but never used by the attention call.
    # Kept for semantic fidelity; DCE'd under jit.
    Wh, Ww = WINDOW
    coords = double_step_seq(2 * Ww - 1, Wh, 1, Ww)
    rel_idx = jnp.flip(coords + coords.T, axis=1)
    table = params["rel_pos_bias_table"]                      # ((2Wh-1)(2Ww-1), nhead)
    bias = table[rel_idx.reshape(-1)].reshape(Wh * Ww, Wh * Ww, -1)
    return jnp.transpose(bias, (2, 0, 1))                     # (nhead, N, N)


@jax.jit
def transformer_encoder_layer_forward(src, params):
    _ = relative_position_bias(params)                        # dead compute, as in reference

    B, S, D = src.shape
    pad = (-B) % WINDOWS_PER_BLOCK
    x = src
    if pad:
        x = jnp.concatenate([x, jnp.zeros((pad, S, D), src.dtype)], axis=0)
    nb = (B + pad) // WINDOWS_PER_BLOCK
    x2 = x.reshape(nb * ROWS_PER_BLOCK, D)                    # free flatten under jit

    kernel = functools.partial(_encoder_layer_kernel, wpb=WINDOWS_PER_BLOCK, seq=S)
    out2 = pl.pallas_call(
        kernel,
        out_shape=jax.ShapeDtypeStruct((nb * ROWS_PER_BLOCK, D), src.dtype),
        grid=(nb,),
        in_specs=[
            pl.BlockSpec((ROWS_PER_BLOCK, D), lambda i: (i, 0)),     # activations
            pl.BlockSpec((D, 3 * D), lambda i: (0, 0)),              # wqkv (bf16, resident)
            pl.BlockSpec((1, 3 * D), lambda i: (0, 0)),              # bqkv
            pl.BlockSpec((D, D), lambda i: (0, 0)),                  # wo (bf16, resident)
            pl.BlockSpec((D, DIM_FF), lambda i: (0, 0)),             # w1 (bf16, resident)
            pl.BlockSpec((1, DIM_FF), lambda i: (0, 0)),             # b1
            pl.BlockSpec((DIM_FF, D), lambda i: (0, 0)),             # w2 (bf16, resident)
            pl.BlockSpec((8, D), lambda i: (0, 0)),                  # packed small vectors
        ],
        out_specs=pl.BlockSpec((ROWS_PER_BLOCK, D), lambda i: (i, 0)),
        compiler_params=pltpu.CompilerParams(dimension_semantics=("parallel",)),
    )(x2, params["wqkv"], params["bqkv"], params["wo"], params["w1"],
      params["b1"], params["w2"], params["vecs"])
    return out2[:B * S].reshape(B, S, D)


def init_params(key):
    ks = jax.random.split(key, 12)
    scale = 0.02

    def w(k, shape):
        return jax.random.normal(k, shape, jnp.float32) * scale

    wq, wk, wv, wo = (w(ks[i], (D_MODEL, D_MODEL)) for i in range(4))
    bq, bk, bv, bo = (w(ks[4 + i], (D_MODEL,)) for i in range(4))
    w1, b1 = w(ks[8], (D_MODEL, DIM_FF)), w(ks[9], (DIM_FF,))
    w2, b2 = w(ks[10], (DIM_FF, D_MODEL)), w(ks[11], (D_MODEL,))
    ones = jnp.ones((D_MODEL,), jnp.float32)
    zeros = jnp.zeros((D_MODEL,), jnp.float32)

    # Fold 1/sqrt(head_dim) into the q projection at init time (one-time cost).
    qscale = 1.0 / math.sqrt(HEAD_DIM)
    wq = wq * qscale
    bq = bq * qscale

    return {
        "wqkv": jnp.concatenate([wq, wk, wv], axis=1).astype(jnp.bfloat16),  # (D, 3D)
        "bqkv": jnp.concatenate([bq, bk, bv])[None, :],                      # (1, 3D) f32
        "wo": wo.astype(jnp.bfloat16),                                       # (D, D)
        "w1": w1.astype(jnp.bfloat16), "b1": b1[None, :],                    # (D,FF), (1,FF)
        "w2": w2.astype(jnp.bfloat16),                                       # (FF, D)
        # packed small vectors: [bo, b2, ln1_g, ln1_b, ln2_g, ln2_b, pad, pad]
        "vecs": jnp.stack([bo, b2, ones, zeros, ones, zeros, zeros, zeros]),  # (8, D)
        # nn.Parameter(torch.zeros(...)) in the reference module:
        "rel_pos_bias_table": jnp.zeros(
            ((2 * WINDOW[0] - 1) * (2 * WINDOW[1] - 1), NHEAD), jnp.float32),
    }


if __name__ == "__main__":
    key = jax.random.PRNGKey(0)
    k_x, k_p = jax.random.split(key)
    src = jax.random.normal(k_x, (BATCH, SEQ, D_MODEL), jnp.float32)
    params = init_params(k_p)

    out = jax.block_until_ready(transformer_encoder_layer_forward(src, params))
    assert out.shape == (BATCH, SEQ, D_MODEL)
    assert bool(jnp.all(jnp.isfinite(out)))
    print("KERNEL_OK")
</pallas_src>

<mosaic_0001>
module attributes {stable_mosaic.version = 11 : i64} {
  func.func @_encoder_layer_kernel(%arg0: i32, %arg1: memref<256x32xf32, #tpu.memory_space<vmem>>, %arg2: memref<32x96xbf16, #tpu.memory_space<vmem>>, %arg3: memref<1x96xf32, #tpu.memory_space<vmem>>, %arg4: memref<32x32xbf16, #tpu.memory_space<vmem>>, %arg5: memref<32x64xbf16, #tpu.memory_space<vmem>>, %arg6: memref<1x64xf32, #tpu.memory_space<vmem>>, %arg7: memref<64x32xbf16, #tpu.memory_space<vmem>>, %arg8: memref<8x32xf32, #tpu.memory_space<vmem>>, %arg9: memref<256x32xf32, #tpu.memory_space<vmem>>) attributes {dimension_semantics = [#tpu.dimension_semantics<parallel>], iteration_bounds = array<i64: 4>, scalar_prefetch = 0 : i64, scratch_operands = 0 : i64, tpu.core_type = #tpu.core_type<tc>, window_params = [{transform_indices = @transform_0, window_bounds = array<i64: 256, 32>}, {pipeline_mode = #tpu.pipeline_mode<synchronous>, transform_indices = @transform_1, window_bounds = array<i64: 32, 96>}, {pipeline_mode = #tpu.pipeline_mode<synchronous>, transform_indices = @transform_2, window_bounds = array<i64: 1, 96>}, {pipeline_mode = #tpu.pipeline_mode<synchronous>, transform_indices = @transform_3, window_bounds = array<i64: 32, 32>}, {pipeline_mode = #tpu.pipeline_mode<synchronous>, transform_indices = @transform_4, window_bounds = array<i64: 32, 64>}, {pipeline_mode = #tpu.pipeline_mode<synchronous>, transform_indices = @transform_5, window_bounds = array<i64: 1, 64>}, {pipeline_mode = #tpu.pipeline_mode<synchronous>, transform_indices = @transform_6, window_bounds = array<i64: 64, 32>}, {pipeline_mode = #tpu.pipeline_mode<synchronous>, transform_indices = @transform_7, window_bounds = array<i64: 8, 32>}, {transform_indices = @transform_8, window_bounds = array<i64: 256, 32>}]} {
    %c0 = arith.constant 0 : index
    %c0_0 = arith.constant 0 : index
    %0 = vector.load %arg1[%c0, %c0_0] : memref<256x32xf32, #tpu.memory_space<vmem>>, vector<256x32xf32>
    %1 = arith.truncf %0 : vector<256x32xf32> to vector<256x32xbf16>
    %c0_1 = arith.constant 0 : index
    %c0_2 = arith.constant 0 : index
    %2 = vector.load %arg8[%c0_1, %c0_2] : memref<8x32xf32, #tpu.memory_space<vmem>>, vector<8x32xf32>
    %3 = vector.extract_strided_slice %2 {offsets = [0, 0], sizes = [1, 32], strides = [1, 1]} : vector<8x32xf32> to vector<1x32xf32>
    %4 = vector.extract_strided_slice %2 {offsets = [1, 0], sizes = [1, 32], strides = [1, 1]} : vector<8x32xf32> to vector<1x32xf32>
    %5 = vector.extract_strided_slice %2 {offsets = [2, 0], sizes = [1, 32], strides = [1, 1]} : vector<8x32xf32> to vector<1x32xf32>
    %6 = vector.extract_strided_slice %2 {offsets = [3, 0], sizes = [1, 32], strides = [1, 1]} : vector<8x32xf32> to vector<1x32xf32>
    %7 = vector.extract_strided_slice %2 {offsets = [4, 0], sizes = [1, 32], strides = [1, 1]} : vector<8x32xf32> to vector<1x32xf32>
    %8 = vector.extract_strided_slice %2 {offsets = [5, 0], sizes = [1, 32], strides = [1, 1]} : vector<8x32xf32> to vector<1x32xf32>
    %c0_3 = arith.constant 0 : index
    %c0_4 = arith.constant 0 : index
    %9 = vector.load %arg2[%c0_3, %c0_4] : memref<32x96xbf16, #tpu.memory_space<vmem>>, vector<32x96xbf16>
    %cst = arith.constant dense<0.000000e+00> : vector<256x96xf32>
    %10 = tpu.matmul %1, %9, %cst {dimension_numbers = #tpu.dot_dimension_numbers<[1], [0], [0], [1], [0, 0, 1, 1], [], []>} : vector<256x32xbf16>, vector<32x96xbf16>, vector<256x96xf32> -> vector<256x96xf32>
    %c0_5 = arith.constant 0 : index
    %c0_6 = arith.constant 0 : index
    %11 = vector.load %arg3[%c0_5, %c0_6] : memref<1x96xf32, #tpu.memory_space<vmem>>, vector<1x96xf32>
    %12 = vector.broadcast %11 : vector<1x96xf32> to vector<256x96xf32>
    %13 = arith.addf %10, %12 : vector<256x96xf32>
    %14 = vector.extract_strided_slice %13 {offsets = [0, 0], sizes = [256, 32], strides = [1, 1]} : vector<256x96xf32> to vector<256x32xf32>
    %15 = vector.extract_strided_slice %13 {offsets = [0, 32], sizes = [256, 32], strides = [1, 1]} : vector<256x96xf32> to vector<256x32xf32>
    %16 = vector.extract_strided_slice %13 {offsets = [0, 64], sizes = [256, 32], strides = [1, 1]} : vector<256x96xf32> to vector<256x32xf32>
    %17 = vector.extract_strided_slice %14 {offsets = [0, 0], sizes = [256, 8], strides = [1, 1]} : vector<256x32xf32> to vector<256x8xf32>
    %18 = vector.shape_cast %17 : vector<256x8xf32> to vector<16x16x8xf32>
    %19 = vector.extract_strided_slice %14 {offsets = [0, 8], sizes = [256, 8], strides = [1, 1]} : vector<256x32xf32> to vector<256x8xf32>
    %20 = vector.shape_cast %19 : vector<256x8xf32> to vector<16x16x8xf32>
    %21 = vector.extract_strided_slice %14 {offsets = [0, 16], sizes = [256, 8], strides = [1, 1]} : vector<256x32xf32> to vector<256x8xf32>
    %22 = vector.shape_cast %21 : vector<256x8xf32> to vector<16x16x8xf32>
    %23 = vector.extract_strided_slice %14 {offsets = [0, 24], sizes = [256, 8], strides = [1, 1]} : vector<256x32xf32> to vector<256x8xf32>
    %24 = vector.shape_cast %23 : vector<256x8xf32> to vector<16x16x8xf32>
    %25 = tpu.concatenate %18, %20, %22, %24 in 0 : vector<16x16x8xf32>, vector<16x16x8xf32>, vector<16x16x8xf32>, vector<16x16x8xf32> -> vector<64x16x8xf32>
    %26 = arith.truncf %25 : vector<64x16x8xf32> to vector<64x16x8xbf16>
    %27 = vector.extract_strided_slice %15 {offsets = [0, 0], sizes = [256, 8], strides = [1, 1]} : vector<256x32xf32> to vector<256x8xf32>
    %28 = vector.shape_cast %27 : vector<256x8xf32> to vector<16x16x8xf32>
    %29 = vector.extract_strided_slice %15 {offsets = [0, 8], sizes = [256, 8], strides = [1, 1]} : vector<256x32xf32> to vector<256x8xf32>
    %30 = vector.shape_cast %29 : vector<256x8xf32> to vector<16x16x8xf32>
    %31 = vector.extract_strided_slice %15 {offsets = [0, 16], sizes = [256, 8], strides = [1, 1]} : vector<256x32xf32> to vector<256x8xf32>
    %32 = vector.shape_cast %31 : vector<256x8xf32> to vector<16x16x8xf32>
    %33 = vector.extract_strided_slice %15 {offsets = [0, 24], sizes = [256, 8], strides = [1, 1]} : vector<256x32xf32> to vector<256x8xf32>
    %34 = vector.shape_cast %33 : vector<256x8xf32> to vector<16x16x8xf32>
    %35 = tpu.concatenate %28, %30, %32, %34 in 0 : vector<16x16x8xf32>, vector<16x16x8xf32>, vector<16x16x8xf32>, vector<16x16x8xf32> -> vector<64x16x8xf32>
    %36 = arith.truncf %35 : vector<64x16x8xf32> to vector<64x16x8xbf16>
    %37 = vector.extract_strided_slice %16 {offsets = [0, 0], sizes = [256, 8], strides = [1, 1]} : vector<256x32xf32> to vector<256x8xf32>
    %38 = vector.shape_cast %37 : vector<256x8xf32> to vector<16x16x8xf32>
    %39 = vector.extract_strided_slice %16 {offsets = [0, 8], sizes = [256, 8], strides = [1, 1]} : vector<256x32xf32> to vector<256x8xf32>
    %40 = vector.shape_cast %39 : vector<256x8xf32> to vector<16x16x8xf32>
    %41 = vector.extract_strided_slice %16 {offsets = [0, 16], sizes = [256, 8], strides = [1, 1]} : vector<256x32xf32> to vector<256x8xf32>
    %42 = vector.shape_cast %41 : vector<256x8xf32> to vector<16x16x8xf32>
    %43 = vector.extract_strided_slice %16 {offsets = [0, 24], sizes = [256, 8], strides = [1, 1]} : vector<256x32xf32> to vector<256x8xf32>
    %44 = vector.shape_cast %43 : vector<256x8xf32> to vector<16x16x8xf32>
    %45 = tpu.concatenate %38, %40, %42, %44 in 0 : vector<16x16x8xf32>, vector<16x16x8xf32>, vector<16x16x8xf32>, vector<16x16x8xf32> -> vector<64x16x8xf32>
    %46 = arith.truncf %45 : vector<64x16x8xf32> to vector<64x16x8xbf16>
    "tpu.trace_start"() <{level = 10 : i32, message = "bqd,bkd->bqk"}> : () -> ()
    %cst_7 = arith.constant dense<0.000000e+00> : vector<64x16x16xf32>
    %47 = tpu.matmul %26, %36, %cst_7 {dimension_numbers = #tpu.dot_dimension_numbers<[2], [2], [1], [1], [0, 0, 0, 1, 1, 1], [0], [0]>} : vector<64x16x8xbf16>, vector<64x16x8xbf16>, vector<64x16x16xf32> -> vector<64x16x16xf32>
    "tpu.trace_stop"() : () -> ()
    %cst_8 = arith.constant dense<0xFF800000> : vector<64x16xf32>
    %48 = vector.multi_reduction <maximumf>, %47, %cst_8 [2] : vector<64x16x16xf32> to vector<64x16xf32>
    %49 = vector.shape_cast %48 : vector<64x16xf32> to vector<64x16x1xf32>
    %50 = vector.broadcast %49 : vector<64x16x1xf32> to vector<64x16x16xf32>
    %51 = arith.subf %47, %50 : vector<64x16x16xf32>
    %52 = math.exp %51 : vector<64x16x16xf32>
    %cst_9 = arith.constant dense<0.000000e+00> : vector<64x16xf32>
    %53 = vector.multi_reduction <add>, %52, %cst_9 [2] : vector<64x16x16xf32> to vector<64x16xf32>
    %54 = vector.shape_cast %53 : vector<64x16xf32> to vector<64x16x1xf32>
    %55 = tpu.reciprocal %54 {approx = true} : vector<64x16x1xf32> -> vector<64x16x1xf32>
    %56 = vector.broadcast %55 : vector<64x16x1xf32> to vector<64x16x16xf32>
    %57 = arith.mulf %52, %56 : vector<64x16x16xf32>
    %58 = arith.truncf %57 : vector<64x16x16xf32> to vector<64x16x16xbf16>
    "tpu.trace_start"() <{level = 10 : i32, message = "bqk,bkd->bqd"}> : () -> ()
    %cst_10 = arith.constant dense<0.000000e+00> : vector<64x16x8xf32>
    %59 = tpu.matmul %58, %46, %cst_10 {dimension_numbers = #tpu.dot_dimension_numbers<[2], [1], [1], [2], [0, 0, 0, 1, 1, 2], [0], [0]>} : vector<64x16x16xbf16>, vector<64x16x8xbf16>, vector<64x16x8xf32> -> vector<64x16x8xf32>
    "tpu.trace_stop"() : () -> ()
    %60 = vector.extract_strided_slice %59 {offsets = [0, 0, 0], sizes = [16, 16, 8], strides = [1, 1, 1]} : vector<64x16x8xf32> to vector<16x16x8xf32>
    %61 = vector.shape_cast %60 : vector<16x16x8xf32> to vector<256x8xf32>
    %62 = vector.extract_strided_slice %59 {offsets = [16, 0, 0], sizes = [16, 16, 8], strides = [1, 1, 1]} : vector<64x16x8xf32> to vector<16x16x8xf32>
    %63 = vector.shape_cast %62 : vector<16x16x8xf32> to vector<256x8xf32>
    %64 = vector.extract_strided_slice %59 {offsets = [32, 0, 0], sizes = [16, 16, 8], strides = [1, 1, 1]} : vector<64x16x8xf32> to vector<16x16x8xf32>
    %65 = vector.shape_cast %64 : vector<16x16x8xf32> to vector<256x8xf32>
    %66 = vector.extract_strided_slice %59 {offsets = [48, 0, 0], sizes = [16, 16, 8], strides = [1, 1, 1]} : vector<64x16x8xf32> to vector<16x16x8xf32>
    %67 = vector.shape_cast %66 : vector<16x16x8xf32> to vector<256x8xf32>
    %68 = tpu.concatenate %61, %63, %65, %67 in 1 : vector<256x8xf32>, vector<256x8xf32>, vector<256x8xf32>, vector<256x8xf32> -> vector<256x32xf32>
    %69 = arith.truncf %68 : vector<256x32xf32> to vector<256x32xbf16>
    %c0_11 = arith.constant 0 : index
    %c0_12 = arith.constant 0 : index
    %70 = vector.load %arg4[%c0_11, %c0_12] : memref<32x32xbf16, #tpu.memory_space<vmem>>, vector<32x32xbf16>
    %cst_13 = arith.constant dense<0.000000e+00> : vector<256x32xf32>
    %71 = tpu.matmul %69, %70, %cst_13 {dimension_numbers = #tpu.dot_dimension_numbers<[1], [0], [0], [1], [0, 0, 1, 1], [], []>} : vector<256x32xbf16>, vector<32x32xbf16>, vector<256x32xf32> -> vector<256x32xf32>
    %72 = vector.broadcast %3 : vector<1x32xf32> to vector<256x32xf32>
    %73 = arith.addf %71, %72 : vector<256x32xf32>
    %74 = arith.addf %0, %73 : vector<256x32xf32>
    %cst_14 = arith.constant dense<0.000000e+00> : vector<256xf32>
    %75 = vector.multi_reduction <add>, %74, %cst_14 [1] : vector<256x32xf32> to vector<256xf32>
    %76 = vector.shape_cast %75 : vector<256xf32> to vector<256x1xf32>
    %cst_15 = arith.constant 3.200000e+01 : f32
    %77 = vector.broadcast %cst_15 : f32 to vector<256x1xf32>
    %78 = arith.divf %76, %77 : vector<256x1xf32>
    %79 = vector.broadcast %78 : vector<256x1xf32> to vector<256x32xf32>
    %80 = arith.subf %74, %79 : vector<256x32xf32>
    %81 = arith.mulf %80, %80 : vector<256x32xf32>
    %cst_16 = arith.constant dense<0.000000e+00> : vector<256xf32>
    %82 = vector.multi_reduction <add>, %81, %cst_16 [1] : vector<256x32xf32> to vector<256xf32>
    %83 = vector.shape_cast %82 : vector<256xf32> to vector<256x1xf32>
    %cst_17 = arith.constant 3.200000e+01 : f32
    %84 = vector.broadcast %cst_17 : f32 to vector<256x1xf32>
    %85 = arith.divf %83, %84 : vector<256x1xf32>
    %cst_18 = arith.constant 9.99999974E-6 : f32
    %86 = vector.broadcast %cst_18 : f32 to vector<256x1xf32>
    %87 = arith.addf %85, %86 : vector<256x1xf32>
    %88 = math.rsqrt %87 : vector<256x1xf32>
    %89 = vector.broadcast %88 : vector<256x1xf32> to vector<256x32xf32>
    %90 = arith.mulf %80, %89 : vector<256x32xf32>
    %91 = vector.broadcast %5 : vector<1x32xf32> to vector<256x32xf32>
    %92 = arith.mulf %90, %91 : vector<256x32xf32>
    %93 = vector.broadcast %6 : vector<1x32xf32> to vector<256x32xf32>
    %94 = arith.addf %92, %93 : vector<256x32xf32>
    %95 = arith.truncf %94 : vector<256x32xf32> to vector<256x32xbf16>
    %c0_19 = arith.constant 0 : index
    %c0_20 = arith.constant 0 : index
    %96 = vector.load %arg5[%c0_19, %c0_20] : memref<32x64xbf16, #tpu.memory_space<vmem>>, vector<32x64xbf16>
    %cst_21 = arith.constant dense<0.000000e+00> : vector<256x64xf32>
    %97 = tpu.matmul %95, %96, %cst_21 {dimension_numbers = #tpu.dot_dimension_numbers<[1], [0], [0], [1], [0, 0, 1, 1], [], []>} : vector<256x32xbf16>, vector<32x64xbf16>, vector<256x64xf32> -> vector<256x64xf32>
    %c0_22 = arith.constant 0 : index
    %c0_23 = arith.constant 0 : index
    %98 = vector.load %arg6[%c0_22, %c0_23] : memref<1x64xf32, #tpu.memory_space<vmem>>, vector<1x64xf32>
    %99 = vector.broadcast %98 : vector<1x64xf32> to vector<256x64xf32>
    %100 = arith.addf %97, %99 : vector<256x64xf32>
    %cst_24 = arith.constant 0.000000e+00 : f32
    %101 = vector.broadcast %cst_24 : f32 to vector<256x64xf32>
    %102 = arith.maximumf %100, %101 : vector<256x64xf32>
    %103 = arith.truncf %102 : vector<256x64xf32> to vector<256x64xbf16>
    %c0_25 = arith.constant 0 : index
    %c0_26 = arith.constant 0 : index
    %104 = vector.load %arg7[%c0_25, %c0_26] : memref<64x32xbf16, #tpu.memory_space<vmem>>, vector<64x32xbf16>
    %cst_27 = arith.constant dense<0.000000e+00> : vector<256x32xf32>
    %105 = tpu.matmul %103, %104, %cst_27 {dimension_numbers = #tpu.dot_dimension_numbers<[1], [0], [0], [1], [0, 0, 1, 1], [], []>} : vector<256x64xbf16>, vector<64x32xbf16>, vector<256x32xf32> -> vector<256x32xf32>
    %106 = vector.broadcast %4 : vector<1x32xf32> to vector<256x32xf32>
    %107 = arith.addf %105, %106 : vector<256x32xf32>
    %108 = arith.addf %94, %107 : vector<256x32xf32>
    %cst_28 = arith.constant dense<0.000000e+00> : vector<256xf32>
    %109 = vector.multi_reduction <add>, %108, %cst_28 [1] : vector<256x32xf32> to vector<256xf32>
    %110 = vector.shape_cast %109 : vector<256xf32> to vector<256x1xf32>
    %cst_29 = arith.constant 3.200000e+01 : f32
    %111 = vector.broadcast %cst_29 : f32 to vector<256x1xf32>
    %112 = arith.divf %110, %111 : vector<256x1xf32>
    %113 = vector.broadcast %112 : vector<256x1xf32> to vector<256x32xf32>
    %114 = arith.subf %108, %113 : vector<256x32xf32>
    %115 = arith.mulf %114, %114 : vector<256x32xf32>
    %cst_30 = arith.constant dense<0.000000e+00> : vector<256xf32>
    %116 = vector.multi_reduction <add>, %115, %cst_30 [1] : vector<256x32xf32> to vector<256xf32>
    %117 = vector.shape_cast %116 : vector<256xf32> to vector<256x1xf32>
    %cst_31 = arith.constant 3.200000e+01 : f32
    %118 = vector.broadcast %cst_31 : f32 to vector<256x1xf32>
    %119 = arith.divf %117, %118 : vector<256x1xf32>
    %cst_32 = arith.constant 9.99999974E-6 : f32
    %120 = vector.broadcast %cst_32 : f32 to vector<256x1xf32>
    %121 = arith.addf %119, %120 : vector<256x1xf32>
    %122 = math.rsqrt %121 : vector<256x1xf32>
    %123 = vector.broadcast %122 : vector<256x1xf32> to vector<256x32xf32>
    %124 = arith.mulf %114, %123 : vector<256x32xf32>
    %125 = vector.broadcast %7 : vector<1x32xf32> to vector<256x32xf32>
    %126 = arith.mulf %124, %125 : vector<256x32xf32>
    %127 = vector.broadcast %8 : vector<1x32xf32> to vector<256x32xf32>
    %128 = arith.addf %126, %127 : vector<256x32xf32>
    %c0_33 = arith.constant 0 : index
    %c0_34 = arith.constant 0 : index
    %129 = vector.load %arg9[%c0_33, %c0_34] : memref<256x32xf32, #tpu.memory_space<vmem>>, vector<256x32xf32>
    tpu.vector_store %arg9[%c0_33, %c0_34], %128 {strides = array<i32>} : memref<256x32xf32, #tpu.memory_space<vmem>>, vector<256x32xf32>,
    return
  }
  func.func @transform_0(%arg0: i32) -> (i32, i32) {
    %c0_i32 = arith.constant 0 : i32
    %c0_i32_0 = arith.constant 0 : i32
    return %arg0, %c0_i32 : i32, i32
  }
  func.func @transform_1(%arg0: i32) -> (i32, i32) {
    %c0_i32 = arith.constant 0 : i32
    %c0_i32_0 = arith.constant 0 : i32
    %c0_i32_1 = arith.constant 0 : i32
    return %c0_i32, %c0_i32_0 : i32, i32
  }
  func.func @transform_2(%arg0: i32) -> (i32, i32) {
    %c0_i32 = arith.constant 0 : i32
    %c0_i32_0 = arith.constant 0 : i32
    %c0_i32_1 = arith.constant 0 : i32
    return %c0_i32, %c0_i32_0 : i32, i32
  }
  func.func @transform_3(%arg0: i32) -> (i32, i32) {
    %c0_i32 = arith.constant 0 : i32
    %c0_i32_0 = arith.constant 0 : i32
    %c0_i32_1 = arith.constant 0 : i32
    return %c0_i32, %c0_i32_0 : i32, i32
  }
  func.func @transform_4(%arg0: i32) -> (i32, i32) {
    %c0_i32 = arith.constant 0 : i32
    %c0_i32_0 = arith.constant 0 : i32
    %c0_i32_1 = arith.constant 0 : i32
    return %c0_i32, %c0_i32_0 : i32, i32
  }
  func.func @transform_5(%arg0: i32) -> (i32, i32) {
    %c0_i32 = arith.constant 0 : i32
    %c0_i32_0 = arith.constant 0 : i32
    %c0_i32_1 = arith.constant 0 : i32
    return %c0_i32, %c0_i32_0 : i32, i32
  }
  func.func @transform_6(%arg0: i32) -> (i32, i32) {
    %c0_i32 = arith.constant 0 : i32
    %c0_i32_0 = arith.constant 0 : i32
    %c0_i32_1 = arith.constant 0 : i32
    return %c0_i32, %c0_i32_0 : i32, i32
  }
  func.func @transform_7(%arg0: i32) -> (i32, i32) {
    %c0_i32 = arith.constant 0 : i32
    %c0_i32_0 = arith.constant 0 : i32
    %c0_i32_1 = arith.constant 0 : i32
    return %c0_i32, %c0_i32_0 : i32, i32
  }
  func.func @transform_8(%arg0: i32) -> (i32, i32) {
    %c0_i32 = arith.constant 0 : i32
    %c0_i32_0 = arith.constant 0 : i32
    return %arg0, %c0_i32 : i32, i32
  }
}

</mosaic_0001>

<llo_original>
// kernel: transformer_encoder_layer_forward.1
$region0: #{transformer_encoder_layer_forward.1}
  #allocation0 [shape = 'u32[]', space=smem, size = 0x4, offset = 0x4, fixed_abs, tag = 'smem constant byte address 0x4 - core index']
  #allocation1 [shape = 'u32[144,128]{1,0:T(1,128)}', space=vmem, size = 0x12000, scoped, tag = 'internal scratch']
  %s0 = inlined_call_operand.vmem [shape: f32[1024,32], index: 0, kind: input, shape index: {}]
  %s1 = inlined_call_operand.vmem [shape: bf16[32,96], index: 1, kind: input, shape index: {}]
  %s2 = inlined_call_operand.vmem [shape: f32[1,96], index: 2, kind: input, shape index: {}]
  %s3 = inlined_call_operand.vmem [shape: bf16[32,32], index: 3, kind: input, shape index: {}]
  %s4 = inlined_call_operand.vmem [shape: bf16[32,64], index: 4, kind: input, shape index: {}]
  %s5 = inlined_call_operand.vmem [shape: f32[1,64], index: 5, kind: input, shape index: {}]
  %s6 = inlined_call_operand.vmem [shape: bf16[64,32], index: 6, kind: input, shape index: {}]
  %s7 = inlined_call_operand.vmem [shape: f32[8,32], index: 7, kind: input, shape index: {}]
  %s8 = inlined_call_operand.vmem [shape: f32[1024,32], index: 8, kind: output, shape index: {}]
  %s9 = sld [smem:[#allocation0]]
  $region65: #{transformer_encoder_layer_forward.1} parent=0
    _
  %s11 = ssub.s32 1, %s9
  %s12 = scalar_select 0, %s11, %s9
  loop: start=0, step=1, limit=6
  $region2: #{transformer_encoder_layer_forward.1} parent=0 // loop_pre_header
    _
  $region3: #{transformer_encoder_layer_forward.1} parent=0 // loop_header
    %s14 = sphi 0, %s18
    %p15 = scmp.ge.s32.totalorder %s14, 6
    %s24 = sphi 0, %s26
    %s27 = sphi 0, %s24
    %s28 = sphi 0, %s27
    %s44 = sphi 0, %s28
    %s48 = sphi 0, %s48
    %s50 = sphi 0, %s48
    %s51 = sphi 0, %s50
    %s65 = sphi 0, %s51
    %s69 = sphi 0, %s69
    %s71 = sphi 0, %s69
    %s72 = sphi 0, %s71
    %s86 = sphi 0, %s72
    %s90 = sphi 0, %s90
    %s92 = sphi 0, %s90
    %s93 = sphi 0, %s92
    %s107 = sphi 0, %s93
    %s111 = sphi 0, %s111
    %s113 = sphi 0, %s111
    %s114 = sphi 0, %s113
    %s128 = sphi 0, %s114
    %s132 = sphi 0, %s132
    %s134 = sphi 0, %s132
    %s135 = sphi 0, %s134
    %s149 = sphi 0, %s135
    %s153 = sphi 0, %s153
    %s155 = sphi 0, %s153
    %s156 = sphi 0, %s155
    %s170 = sphi 0, %s156
    %s174 = sphi 0, %s174
    %s176 = sphi 0, %s174
    %s177 = sphi 0, %s176
    %s191 = sphi 0, %s177
    %s197 = sphi 0, %s199
    %s200 = sphi 0, %s197
    %s201 = sphi 0, %s200
    %s217 = sphi 0, %s201
  $region4: #{transformer_encoder_layer_forward.1} parent=0 // loop_header_branch
    %17 = sbr.rel (%p15) target = $region8
  $region5: #{transformer_encoder_layer_forward.1} parent=0 // loop_body
    %s19 = ssub.s32 %s14, 1
    %s20 = ssub.s32 %s14, 2
    %s21 = sadd.s32 %s14, 1
    %s22 = ssub.s32 %s14, %s21
    %p23 = scmp.eq.s32.totalorder %s22, 0
    %s25 = sadd.s32 %s24, 1
    %s26 = scalar_select %p23, %s24, %s25
    %p29 = pneg %p23
    %p30 = scmp.eq.s32.totalorder %s14, 3
    %p31 = por %p29, %p30
    %p32 = scmp.ne.s32.totalorder %s24, %s27
    %p33 = scmp.eq.s32.totalorder %s14, 0
    %p34 = por %p32, %p33
    %p35 = scmp.ne.s32.totalorder %s24, %s27
    %p36 = scmp.eq.s32.totalorder %s19, 3
    %p37 = por %p35, %p36
    %p38 = scmp.ne.s32.totalorder %s27, %s28
    %p39 = scmp.eq.s32.totalorder %s19, 0
    %p40 = por %p38, %p39
    %p41 = scmp.ne.s32.totalorder %s27, %s28
    %p42 = scmp.eq.s32.totalorder %s20, 3
    %p43 = por %p41, %p42
    %p45 = scmp.ne.s32.totalorder %s28, %s44
    %p46 = scmp.eq.s32.totalorder %s20, 0
    %p47 = por %p45, %p46
    %s49 = sadd.s32 %s48, 1
    %p52 = scmp.eq.s32.totalorder %s14, 3
    %p53 = scmp.ne.s32.totalorder %s48, %s50
    %p54 = scmp.eq.s32.totalorder %s14, 0
    %p55 = por %p53, %p54
    %p56 = scmp.ne.s32.totalorder %s48, %s50
    %p57 = scmp.eq.s32.totalorder %s19, 3
    %p58 = por %p56, %p57
    %p59 = scmp.ne.s32.totalorder %s50, %s51
    %p60 = scmp.eq.s32.totalorder %s19, 0
    %p61 = por %p59, %p60
    %p62 = scmp.ne.s32.totalorder %s50, %s51
    %p63 = scmp.eq.s32.totalorder %s20, 3
    %p64 = por %p62, %p63
    %p66 = scmp.ne.s32.totalorder %s51, %s65
    %p67 = scmp.eq.s32.totalorder %s20, 0
    %p68 = por %p66, %p67
    %s70 = sadd.s32 %s69, 1
    %p73 = scmp.eq.s32.totalorder %s14, 3
    %p74 = scmp.ne.s32.totalorder %s69, %s71
    %p75 = scmp.eq.s32.totalorder %s14, 0
    %p76 = por %p74, %p75
    %p77 = scmp.ne.s32.totalorder %s69, %s71
    %p78 = scmp.eq.s32.totalorder %s19, 3
    %p79 = por %p77, %p78
    %p80 = scmp.ne.s32.totalorder %s71, %s72
    %p81 = scmp.eq.s32.totalorder %s19, 0
    %p82 = por %p80, %p81
    %p83 = scmp.ne.s32.totalorder %s71, %s72
    %p84 = scmp.eq.s32.totalorder %s20, 3
    %p85 = por %p83, %p84
    %p87 = scmp.ne.s32.totalorder %s72, %s86
    %p88 = scmp.eq.s32.totalorder %s20, 0
    %p89 = por %p87, %p88
    %s91 = sadd.s32 %s90, 1
    %p94 = scmp.eq.s32.totalorder %s14, 3
    %p95 = scmp.ne.s32.totalorder %s90, %s92
    %p96 = scmp.eq.s32.totalorder %s14, 0
    %p97 = por %p95, %p96
    %p98 = scmp.ne.s32.totalorder %s90, %s92
    %p99 = scmp.eq.s32.totalorder %s19, 3
    %p100 = por %p98, %p99
    %p101 = scmp.ne.s32.totalorder %s92, %s93
    %p102 = scmp.eq.s32.totalorder %s19, 0
    %p103 = por %p101, %p102
    %p104 = scmp.ne.s32.totalorder %s92, %s93
    %p105 = scmp.eq.s32.totalorder %s20, 3
    %p106 = por %p104, %p105
    %p108 = scmp.ne.s32.totalorder %s93, %s107
    %p109 = scmp.eq.s32.totalorder %s20, 0
    %p110 = por %p108, %p109
    %s112 = sadd.s32 %s111, 1
    %p115 = scmp.eq.s32.totalorder %s14, 3
    %p116 = scmp.ne.s32.totalorder %s111, %s113
    %p117 = scmp.eq.s32.totalorder %s14, 0
    %p118 = por %p116, %p117
    %p119 = scmp.ne.s32.totalorder %s111, %s113
    %p120 = scmp.eq.s32.totalorder %s19, 3
    %p121 = por %p119, %p120
    %p122 = scmp.ne.s32.totalorder %s113, %s114
    %p123 = scmp.eq.s32.totalorder %s19, 0
    %p124 = por %p122, %p123
    %p125 = scmp.ne.s32.totalorder %s113, %s114
    %p126 = scmp.eq.s32.totalorder %s20, 3
    %p127 = por %p125, %p126
    %p129 = scmp.ne.s32.totalorder %s114, %s128
    %p130 = scmp.eq.s32.totalorder %s20, 0
    %p131 = por %p129, %p130
    %s133 = sadd.s32 %s132, 1
    %p136 = scmp.eq.s32.totalorder %s14, 3
    %p137 = scmp.ne.s32.totalorder %s132, %s134
    %p138 = scmp.eq.s32.totalorder %s14, 0
    %p139 = por %p137, %p138
    %p140 = scmp.ne.s32.totalorder %s132, %s134
    %p141 = scmp.eq.s32.totalorder %s19, 3
    %p142 = por %p140, %p141
    %p143 = scmp.ne.s32.totalorder %s134, %s135
    %p144 = scmp.eq.s32.totalorder %s19, 0
    %p145 = por %p143, %p144
    %p146 = scmp.ne.s32.totalorder %s134, %s135
    %p147 = scmp.eq.s32.totalorder %s20, 3
    %p148 = por %p146, %p147
    %p150 = scmp.ne.s32.totalorder %s135, %s149
    %p151 = scmp.eq.s32.totalorder %s20, 0
    %p152 = por %p150, %p151
    %s154 = sadd.s32 %s153, 1
    %p157 = scmp.eq.s32.totalorder %s14, 3
    %p158 = scmp.ne.s32.totalorder %s153, %s155
    %p159 = scmp.eq.s32.totalorder %s14, 0
    %p160 = por %p158, %p159
    %p161 = scmp.ne.s32.totalorder %s153, %s155
    %p162 = scmp.eq.s32.totalorder %s19, 3
    %p163 = por %p161, %p162
    %p164 = scmp.ne.s32.totalorder %s155, %s156
    %p165 = scmp.eq.s32.totalorder %s19, 0
    %p166 = por %p164, %p165
    %p167 = scmp.ne.s32.totalorder %s155, %s156
    %p168 = scmp.eq.s32.totalorder %s20, 3
    %p169 = por %p167, %p168
    %p171 = scmp.ne.s32.totalorder %s156, %s170
    %p172 = scmp.eq.s32.totalorder %s20, 0
    %p173 = por %p171, %p172
    %s175 = sadd.s32 %s174, 1
    %p178 = scmp.eq.s32.totalorder %s14, 3
    %p179 = scmp.ne.s32.totalorder %s174, %s176
    %p180 = scmp.eq.s32.totalorder %s14, 0
    %p181 = por %p179, %p180
    %p182 = scmp.ne.s32.totalorder %s174, %s176
    %p183 = scmp.eq.s32.totalorder %s19, 3
    %p184 = por %p182, %p183
    %p185 = scmp.ne.s32.totalorder %s176, %s177
    %p186 = scmp.eq.s32.totalorder %s19, 0
    %p187 = por %p185, %p186
    %p188 = scmp.ne.s32.totalorder %s176, %s177
    %p189 = scmp.eq.s32.totalorder %s20, 3
    %p190 = por %p188, %p189
    %p192 = scmp.ne.s32.totalorder %s177, %s191
    %p193 = scmp.eq.s32.totalorder %s20, 0
    %p194 = por %p192, %p193
    %s195 = ssub.s32 %s14, %s21
    %p196 = scmp.eq.s32.totalorder %s195, 0
    %s198 = sadd.s32 %s197, 1
    %s199 = scalar_select %p196, %s197, %s198
    %p202 = pneg %p196
    %p203 = scmp.eq.s32.totalorder %s14, 3
    %p204 = por %p202, %p203
    %p205 = scmp.ne.s32.totalorder %s197, %s200
    %p206 = scmp.eq.s32.totalorder %s14, 0
    %p207 = por %p205, %p206
    %p208 = scmp.ne.s32.totalorder %s197, %s200
    %p209 = scmp.eq.s32.totalorder %s19, 3
    %p210 = por %p208, %p209
    %p211 = scmp.ne.s32.totalorder %s200, %s201
    %p212 = scmp.eq.s32.totalorder %s19, 0
    %p213 = por %p211, %p212
    %p214 = scmp.ne.s32.totalorder %s200, %s201
    %p215 = scmp.eq.s32.totalorder %s20, 3
    %p216 = por %p214, %p215
    %p218 = scmp.ne.s32.totalorder %s201, %s217
    %p219 = scmp.eq.s32.totalorder %s20, 0
    %p220 = por %p218, %p219
    %p221 = scmp.le.s32.totalorder 1, %s14
    %p222 = scmp.lt.s32.totalorder %s14, 5
    %p223 = pnand %p221, %p222
    %p224 = pneg %p223
    // Predicated region
    $region9: #{transformer_encoder_layer_forward.1} parent=5 // pred_check
      _
    $region10: #{transformer_encoder_layer_forward.1} parent=5 // pred_check_branch
      %226 = sbr.rel (%p223) target = $region12
    $region11: #{transformer_encoder_layer_forward.1} parent=5 // pred_region
      %s227 = ssub.s32 %s14, 1
      // Predicated region
      $region13: #{transformer_encoder_layer_forward.1} parent=11 // pred_check
        %p228 = pneg %p61
      $region14: #{transformer_encoder_layer_forward.1} parent=11 // pred_check_branch
        %230 = sbr.rel (%p228) target = $region16
      $region15: #{transformer_encoder_layer_forward.1} parent=11 // pred_region
        _
      $region16: #{transformer_encoder_layer_forward.1} parent=11 // pred_fallthru
        _
      // Predicated region
      $region17: #{transformer_encoder_layer_forward.1} parent=11 // pred_check
        %p231 = pneg %p82
      $region18: #{transformer_encoder_layer_forward.1} parent=11 // pred_check_branch
        %233 = sbr.rel (%p231) target = $region20
      $region19: #{transformer_encoder_layer_forward.1} parent=11 // pred_region
        _
      $region20: #{transformer_encoder_layer_forward.1} parent=11 // pred_fallthru
        _
      // Predicated region
      $region21: #{transformer_encoder_layer_forward.1} parent=11 // pred_check
        %p234 = pneg %p103
      $region22: #{transformer_encoder_layer_forward.1} parent=11 // pred_check_branch
        %236 = sbr.rel (%p234) target = $region24
      $region23: #{transformer_encoder_layer_forward.1} parent=11 // pred_region
        _
      $region24: #{transformer_encoder_layer_forward.1} parent=11 // pred_fallthru
        _
      // Predicated region
      $region25: #{transformer_encoder_layer_forward.1} parent=11 // pred_check
        %p237 = pneg %p124
      $region26: #{transformer_encoder_layer_forward.1} parent=11 // pred_check_branch
        %239 = sbr.rel (%p237) target = $region28
      $region27: #{transformer_encoder_layer_forward.1} parent=11 // pred_region
        _
      $region28: #{transformer_encoder_layer_forward.1} parent=11 // pred_fallthru
        _
      // Predicated region
      $region29: #{transformer_encoder_layer_forward.1} parent=11 // pred_check
        %p240 = pneg %p145
      $region30: #{transformer_encoder_layer_forward.1} parent=11 // pred_check_branch
        %242 = sbr.rel (%p240) target = $region32
      $region31: #{transformer_encoder_layer_forward.1} parent=11 // pred_region
        _
      $region32: #{transformer_encoder_layer_forward.1} parent=11 // pred_fallthru
        _
      // Predicated region
      $region33: #{transformer_encoder_layer_forward.1} parent=11 // pred_check
        %p243 = pneg %p166
      $region34: #{transformer_encoder_layer_forward.1} parent=11 // pred_check_branch
        %245 = sbr.rel (%p243) target = $region36
      $region35: #{transformer_encoder_layer_forward.1} parent=11 // pred_region
        _
      $region36: #{transformer_encoder_layer_forward.1} parent=11 // pred_fallthru
        _
      // Predicated region
      $region37: #{transformer_encoder_layer_forward.1} parent=11 // pred_check
        %p246 = pneg %p187
      $region38: #{transformer_encoder_layer_forward.1} parent=11 // pred_check_branch
        %248 = sbr.rel (%p246) target = $region40
      $region39: #{transformer_encoder_layer_forward.1} parent=11 // pred_region
        _
      $region40: #{transformer_encoder_layer_forward.1} parent=11 // pred_fallthru
        _
    $region12: #{transformer_encoder_layer_forward.1} parent=5 // pred_fallthru
      _
    %p249 = scmp.lt.s32.totalorder %s14, 4
    // Predicated region
    $region41: #{transformer_encoder_layer_forward.1} parent=5 // pred_check
      %p250 = pneg %p249
    $region42: #{transformer_encoder_layer_forward.1} parent=5 // pred_check_branch
      %252 = sbr.rel (%p250) target = $region44
    $region43: #{transformer_encoder_layer_forward.1} parent=5 // pred_region
      // Predicated region
      $region45: #{transformer_encoder_layer_forward.1} parent=43 // pred_check
        %p253 = pneg %p34
      $region46: #{transformer_encoder_layer_forward.1} parent=43 // pred_check_branch
        %255 = sbr.rel (%p253) target = $region48
      $region47: #{transformer_encoder_layer_forward.1} parent=43 // pred_region
        %s256 = smul.u32 32, %s14
        %p257 = scmp.lt.s32.totalorder %s256, 127
        %s258 = scalar_select %p257, %s256, 127
        %s259 = smul.addr %s258, 8
        %s260 = scalar_lea.vmem %s0, %s259
        %s261 = smul.u32 32, %s14
      $region48: #{transformer_encoder_layer_forward.1} parent=43 // pred_fallthru
        _
    $region44: #{transformer_encoder_layer_forward.1} parent=5 // pred_fallthru
      _
    %p262 = scmp.le.s32.totalorder 1, %s14
    %p263 = scmp.lt.s32.totalorder %s14, 5
    %p264 = pnand %p262, %p263
    %p265 = pneg %p264
    // Predicated region
    $region49: #{transformer_encoder_layer_forward.1} parent=5 // pred_check
      _
    $region50: #{transformer_encoder_layer_forward.1} parent=5 // pred_check_branch
      %267 = sbr.rel (%p264) target = $region52
    $region51: #{transformer_encoder_layer_forward.1} parent=5 // pred_region
      %s268 = ssub.s32 %s14, 1
      %s269 = smul.u32 32, %s19
      %p270 = scmp.lt.s32.totalorder %s269, 127
      %s271 = scalar_select %p270, %s269, 127
      %s272 = smul.addr %s271, 8
      %s273 = scalar_lea.vmem %s0, %s272
      %p274 = pneg %p40
      %p275 = pneg %p37
      %p276 = pneg %p61
      %p277 = pneg %p58
      %p278 = pneg %p82
      %p279 = pneg %p79
      %p280 = pneg %p103
      %p281 = pneg %p100
      %p282 = pneg %p124
      %p283 = pneg %p121
      %p284 = pneg %p145
      %p285 = pneg %p142
      %p286 = pneg %p166
      %p287 = pneg %p163
      %p288 = pneg %p187
      %p289 = pneg %p184
      %p290 = pneg %p213
      %p291 = pneg %p210
      %s292 = smul.u32 32, %s19
      %p293 = scmp.lt.s32.totalorder %s292, 127
      %s294 = scalar_select %p293, %s292, 127
      %s295 = smul.addr %s294, 8
      %s296 = scalar_lea.vmem %s8, %s295
      %s297 = smul.u32 32, %s19
      %p298 = scmp.lt.s32.totalorder %s297, 127
      %s299 = scalar_select %p298, %s297, 127
      %s300 = smul.addr %s299, 8
      %s301 = scalar_lea.vmem %s0, %s300
      %s302 = smul.u32 32, %s19
      %s303 = smul.u32 32, %s19
      %p304 = scmp.lt.s32.totalorder %s303, 127
      %s305 = scalar_select %p304, %s303, 127
      %s306 = smul.addr %s305, 8
      %s307 = scalar_lea.vmem %s8, %s306
      %s308 = smul.u32 32, %s19
      %v310 = vld [vmem:[%s301] sm:$0xff]
      %v311 = vld [vmem:[%s301 + $0x8] sm:$0xff]
      %v312 = vld [vmem:[%s301 + $0x10] sm:$0xff]
      %v313 = vld [vmem:[%s301 + $0x18] sm:$0xff]
      %v314 = vld [vmem:[%s301 + $0x20] sm:$0xff]
      %v315 = vld [vmem:[%s301 + $0x28] sm:$0xff]
      %v316 = vld [vmem:[%s301 + $0x30] sm:$0xff]
      %v317 = vld [vmem:[%s301 + $0x38] sm:$0xff]
      %v318 = vld [vmem:[%s301 + $0x40] sm:$0xff]
      %v319 = vld [vmem:[%s301 + $0x48] sm:$0xff]
      %v320 = vld [vmem:[%s301 + $0x50] sm:$0xff]
      %v321 = vld [vmem:[%s301 + $0x58] sm:$0xff]
      %v322 = vld [vmem:[%s301 + $0x60] sm:$0xff]
      %v323 = vld [vmem:[%s301 + $0x68] sm:$0xff]
      %v324 = vld [vmem:[%s301 + $0x70] sm:$0xff]
      %v325 = vld [vmem:[%s301 + $0x78] sm:$0xff]
      %v326 = vld [vmem:[%s301 + $0x80] sm:$0xff]
      %v327 = vld [vmem:[%s301 + $0x88] sm:$0xff]
      %v328 = vld [vmem:[%s301 + $0x90] sm:$0xff]
      %v329 = vld [vmem:[%s301 + $0x98] sm:$0xff]
      %v330 = vld [vmem:[%s301 + $0xa0] sm:$0xff]
      %v331 = vld [vmem:[%s301 + $0xa8] sm:$0xff]
      %v332 = vld [vmem:[%s301 + $0xb0] sm:$0xff]
      %v333 = vld [vmem:[%s301 + $0xb8] sm:$0xff]
      %v334 = vld [vmem:[%s301 + $0xc0] sm:$0xff]
      %v335 = vld [vmem:[%s301 + $0xc8] sm:$0xff]
      %v336 = vld [vmem:[%s301 + $0xd0] sm:$0xff]
      %v337 = vld [vmem:[%s301 + $0xd8] sm:$0xff]
      %v338 = vld [vmem:[%s301 + $0xe0] sm:$0xff]
      %v339 = vld [vmem:[%s301 + $0xe8] sm:$0xff]
      %v340 = vld [vmem:[%s301 + $0xf0] sm:$0xff]
      %v341 = vld [vmem:[%s301 + $0xf8] sm:$0xff]
      %v342 = vpack.c.bf16 %v311, %v310
      %v343 = vpack.c.bf16 %v313, %v312
      %v344 = vpack.c.bf16 %v315, %v314
      %v345 = vpack.c.bf16 %v317, %v316
      %v346 = vpack.c.bf16 %v319, %v318
      %v347 = vpack.c.bf16 %v321, %v320
      %v348 = vpack.c.bf16 %v323, %v322
      %v349 = vpack.c.bf16 %v325, %v324
      %v350 = vpack.c.bf16 %v327, %v326
      %v351 = vpack.c.bf16 %v329, %v328
      %v352 = vpack.c.bf16 %v331, %v330
      %v353 = vpack.c.bf16 %v333, %v332
      %v354 = vpack.c.bf16 %v335, %v334
      %v355 = vpack.c.bf16 %v337, %v336
      %v356 = vpack.c.bf16 %v339, %v338
      %v357 = vpack.c.bf16 %v341, %v340
      %v358 = vld [vmem:[%s7] sm:$0xff]
      %v359 = vld [vmem:[%s1] sm:$0xf]
      %v360 = vld [vmem:[%s1 + $0x4] sm:$0xf]
      %v361 = vld [vmem:[%s1 + $0x8] sm:$0xf]
      %v362 = vld [vmem:[%s1 + $0xc] sm:$0xf]
      %v363 = vld [vmem:[%s2] sm:$0x1]
      %v365 = vlaneseq
      %v366 = vshrl.u32 %v365, 7
      %v367 = vsub.s32 0, %v366
      %v368 = vrot.slane %v363, %v367
      %v374 = vunpack.c.l.b16 %v359
      %v375 = vunpack.c.l.b16 %v360
      %v376 = vunpack.c.l.b16 %v361
      %v377 = vunpack.c.l.b16 %v362
      %v378 = vpack.c.b16 %v375, %v374
      %v379 = vpack.c.b16 %v377, %v376
      %vm382 = vcmask 261120
      %v384 = vsel %vm382, %v342, 0
      %v387 = vsel %vm382, %v343, 0
      %v390 = vsel %vm382, %v344, 0
      %v393 = vsel %vm382, %v345, 0
      %v396 = vsel %vm382, %v346, 0
      %v399 = vsel %vm382, %v347, 0
      %v402 = vsel %vm382, %v348, 0
      %v405 = vsel %vm382, %v349, 0
      %v408 = vsel %vm382, %v350, 0
      %v411 = vsel %vm382, %v351, 0
      %v414 = vsel %vm382, %v352, 0
      %v417 = vsel %vm382, %v353, 0
      %v420 = vsel %vm382, %v354, 0
      %v423 = vsel %vm382, %v355, 0
      %v426 = vsel %vm382, %v356, 0
      %v429 = vsel %vm382, %v357, 0
      %431 = vmatprep.subr.bf16.mxu0 0
      %432 = vmatpush1.bf16.msra.mxu0 %v378
      %433 = vmatprep.subr.bf16.mxu0 0
      %434 = vmatpush1.bf16.msra.mxu0 %v379
      %435 = vmatprep.subr.bf16.mxu0 0
      %436 = vmatpush1.bf16.msra.mxu0 0
      %437 = vmatprep.subr.bf16.mxu0 0
      %438 = vmatpush1.bf16.msra.mxu0 0
      %439 = vmatprep.subr.bf16.mxu0 0
      %440 = vmatpush1.bf16.msra.mxu0 0
      %441 = vmatprep.subr.bf16.mxu0 0
      %442 = vmatpush1.bf16.msra.mxu0 0
      %443 = vmatprep.subr.bf16.mxu0 0
      %444 = vmatpush1.bf16.msra.mxu0 0
      %445 = vmatprep.subr.bf16.mxu0 0
      %446 = vmatpush1.bf16.msra.mxu0 0
      %447 = vmatprep.subr.bf16.mxu0 0
      %448 = vmatpush1.bf16.msra.mxu0 0
      %449 = vmatprep.subr.bf16.mxu0 0
      %450 = vmatpush1.bf16.msra.mxu0 0
      %451 = vmatprep.subr.bf16.mxu0 0
      %452 = vmatpush1.bf16.msra.mxu0 0
      %453 = vmatprep.subr.bf16.mxu0 0
      %454 = vmatpush1.bf16.msra.mxu0 0
      %455 = vmatprep.subr.bf16.mxu0 0
      %456 = vmatpush1.bf16.msra.mxu0 0
      %457 = vmatprep.subr.bf16.mxu0 0
      %458 = vmatpush1.bf16.msra.mxu0 0
      %459 = vmatprep.subr.bf16.mxu0 0
      %460 = vmatpush1.bf16.msra.mxu0 0
      %461 = vmatprep.subr.bf16.mxu0 0
      %462 = vmatpush1.bf16.msra.mxu0 0
      %463 = vmatprep.mubr.bf16.mxu0 0
      %464 = vmatmul.mubr.bf16.gmra.mrb[0].mxu0 %v384
      %v465 = vpop.f32.mrb[0].mxu0
      %v466 = vadd.f32 %v368, %v465
      %v467 = vpop.f32.mrb[0].mxu0
      %v468 = vpop.f32.mrb[0].mxu0
      %v469 = vadd.f32 %v368, %v468
      %v470 = vpop.f32.mrb[0].mxu0
      %471 = vmatprep.mubr.bf16.mxu0 0
      %472 = vmatmul.mubr.bf16.gmra.mrb[0].mxu0 %v387
      %v473 = vpop.f32.mrb[0].mxu0
      %v474 = vadd.f32 %v368, %v473
      %v475 = vpop.f32.mrb[0].mxu0
      %v476 = vpop.f32.mrb[0].mxu0
      %v477 = vadd.f32 %v368, %v476
      %v478 = vpop.f32.mrb[0].mxu0
      %479 = vmatprep.mubr.bf16.mxu0 0
      %480 = vmatmul.mubr.bf16.gmra.mrb[0].mxu0 %v390
      %v481 = vpop.f32.mrb[0].mxu0
      %v482 = vadd.f32 %v368, %v481
      %v483 = vpop.f32.mrb[0].mxu0
      %v484 = vpop.f32.mrb[0].mxu0
      %v485 = vadd.f32 %v368, %v484
      %v486 = vpop.f32.mrb[0].mxu0
      %487 = vmatprep.mubr.bf16.mxu0 0
      %488 = vmatmul.mubr.bf16.gmra.mrb[0].mxu0 %v393
      %v489 = vpop.f32.mrb[0].mxu0
      %v490 = vadd.f32 %v368, %v489
      %v491 = vpop.f32.mrb[0].mxu0
      %v492 = vpop.f32.mrb[0].mxu0
      %v493 = vadd.f32 %v368, %v492
      %v494 = vpop.f32.mrb[0].mxu0
      %495 = vmatprep.mubr.bf16.mxu0 0
      %496 = vmatmul.mubr.bf16.gmra.mrb[0].mxu0 %v396
      %v497 = vpop.f32.mrb[0].mxu0
      %v498 = vadd.f32 %v368, %v497
      %v499 = vpop.f32.mrb[0].mxu0
      %v500 = vpop.f32.mrb[0].mxu0
      %v501 = vadd.f32 %v368, %v500
      %v502 = vpop.f32.mrb[0].mxu0
      %503 = vmatprep.mubr.bf16.mxu0 0
      %504 = vmatmul.mubr.bf16.gmra.mrb[0].mxu0 %v399
      %v505 = vpop.f32.mrb[0].mxu0
      %v506 = vadd.f32 %v368, %v505
      %v507 = vpop.f32.mrb[0].mxu0
      %v508 = vpop.f32.mrb[0].mxu0
      %v509 = vadd.f32 %v368, %v508
      %v510 = vpop.f32.mrb[0].mxu0
      %511 = vmatprep.mubr.bf16.mxu0 0
      %512 = vmatmul.mubr.bf16.gmra.mrb[0].mxu0 %v402
      %v513 = vpop.f32.mrb[0].mxu0
      %v514 = vadd.f32 %v368, %v513
      %v515 = vpop.f32.mrb[0].mxu0
      %v516 = vpop.f32.mrb[0].mxu0
      %v517 = vadd.f32 %v368, %v516
      %v518 = vpop.f32.mrb[0].mxu0
      %519 = vmatprep.mubr.bf16.mxu0 0
      %520 = vmatmul.mubr.bf16.gmra.mrb[0].mxu0 %v405
      %v521 = vpop.f32.mrb[0].mxu0
      %v522 = vadd.f32 %v368, %v521
      %v523 = vpop.f32.mrb[0].mxu0
      %v524 = vpop.f32.mrb[0].mxu0
      %v525 = vadd.f32 %v368, %v524
      %v526 = vpop.f32.mrb[0].mxu0
      %527 = vmatprep.mubr.bf16.mxu0 0
      %528 = vmatmul.mubr.bf16.gmra.mrb[0].mxu0 %v408
      %v529 = vpop.f32.mrb[0].mxu0
      %v530 = vadd.f32 %v368, %v529
      %v531 = vpop.f32.mrb[0].mxu0
      %v532 = vpop.f32.mrb[0].mxu0
      %v533 = vadd.f32 %v368, %v532
      %v534 = vpop.f32.mrb[0].mxu0
      %535 = vmatprep.mubr.bf16.mxu0 0
      %536 = vmatmul.mubr.bf16.gmra.mrb[0].mxu0 %v411
      %v537 = vpop.f32.mrb[0].mxu0
      %v538 = vadd.f32 %v368, %v537
      %v539 = vpop.f32.mrb[0].mxu0
      %v540 = vpop.f32.mrb[0].mxu0
      %v541 = vadd.f32 %v368, %v540
      %v542 = vpop.f32.mrb[0].mxu0
      %543 = vmatprep.mubr.bf16.mxu0 0
      %544 = vmatmul.mubr.bf16.gmra.mrb[0].mxu0 %v414
      %v545 = vpop.f32.mrb[0].mxu0
      %v546 = vadd.f32 %v368, %v545
      %v547 = vpop.f32.mrb[0].mxu0
      %v548 = vpop.f32.mrb[0].mxu0
      %v549 = vadd.f32 %v368, %v548
      %v550 = vpop.f32.mrb[0].mxu0
      %551 = vmatprep.mubr.bf16.mxu0 0
      %552 = vmatmul.mubr.bf16.gmra.mrb[0].mxu0 %v417
      %v553 = vpop.f32.mrb[0].mxu0
      %v554 = vadd.f32 %v368, %v553
      %v555 = vpop.f32.mrb[0].mxu0
      %v556 = vpop.f32.mrb[0].mxu0
      %v557 = vadd.f32 %v368, %v556
      %v558 = vpop.f32.mrb[0].mxu0
      %559 = vmatprep.mubr.bf16.mxu0 0
      %560 = vmatmul.mubr.bf16.gmra.mrb[0].mxu0 %v420
      %v561 = vpop.f32.mrb[0].mxu0
      %v562 = vadd.f32 %v368, %v561
      %v563 = vpop.f32.mrb[0].mxu0
      %v564 = vpop.f32.mrb[0].mxu0
      %v565 = vadd.f32 %v368, %v564
      %v566 = vpop.f32.mrb[0].mxu0
      %567 = vmatprep.mubr.bf16.mxu0 0
      %568 = vmatmul.mubr.bf16.gmra.mrb[0].mxu0 %v423
      %v569 = vpop.f32.mrb[0].mxu0
      %v570 = vadd.f32 %v368, %v569
      %v571 = vpop.f32.mrb[0].mxu0
      %v572 = vpop.f32.mrb[0].mxu0
      %v573 = vadd.f32 %v368, %v572
      %v574 = vpop.f32.mrb[0].mxu0
      %575 = vmatprep.mubr.bf16.mxu0 0
      %576 = vmatmul.mubr.bf16.gmra.mrb[0].mxu0 %v426
      %v577 = vpop.f32.mrb[0].mxu0
      %v578 = vadd.f32 %v368, %v577
      %v579 = vpop.f32.mrb[0].mxu0
      %v580 = vpop.f32.mrb[0].mxu0
      %v581 = vadd.f32 %v368, %v580
      %v582 = vpop.f32.mrb[0].mxu0
      %583 = vmatprep.mubr.bf16.mxu0 0
      %584 = vmatmul.mubr.bf16.gmra.mrb[0].mxu0 %v429
      %v585 = vpop.f32.mrb[0].mxu0
      %v586 = vadd.f32 %v368, %v585
      %v587 = vpop.f32.mrb[0].mxu0
      %v588 = vpop.f32.mrb[0].mxu0
      %v589 = vadd.f32 %v368, %v588
      %v590 = vpop.f32.mrb[0].mxu0
      %591 = vdwg.mxu0
      %624 = vrot.lane.b32.xlu0 %v466, 120
      %v625 = vpop.permute.xlu0 %624
      %626 = vrot.lane.b32.xlu0 %v469, 120
      %v627 = vpop.permute.xlu0 %626
      %628 = vrot.lane.b32.xlu0 %v474, 120
      %v629 = vpop.permute.xlu0 %628
      %630 = vrot.lane.b32.xlu0 %v477, 120
      %v631 = vpop.permute.xlu0 %630
      %632 = vrot.lane.b32.xlu0 %v482, 120
      %v633 = vpop.permute.xlu0 %632
      %634 = vrot.lane.b32.xlu0 %v485, 120
      %v635 = vpop.permute.xlu0 %634
      %636 = vrot.lane.b32.xlu0 %v490, 120
      %v637 = vpop.permute.xlu0 %636
      %638 = vrot.lane.b32.xlu0 %v493, 120
      %v639 = vpop.permute.xlu0 %638
      %640 = vrot.lane.b32.xlu0 %v498, 120
      %v641 = vpop.permute.xlu0 %640
      %642 = vrot.lane.b32.xlu0 %v501, 120
      %v643 = vpop.permute.xlu0 %642
      %644 = vrot.lane.b32.xlu0 %v506, 120
      %v645 = vpop.permute.xlu0 %644
      %646 = vrot.lane.b32.xlu0 %v509, 120
      %v647 = vpop.permute.xlu0 %646
      %648 = vrot.lane.b32.xlu0 %v514, 120
      %v649 = vpop.permute.xlu0 %648
      %650 = vrot.lane.b32.xlu0 %v517, 120
      %v651 = vpop.permute.xlu0 %650
      %652 = vrot.lane.b32.xlu0 %v522, 120
      %v653 = vpop.permute.xlu0 %652
      %654 = vrot.lane.b32.xlu0 %v525, 120
      %v655 = vpop.permute.xlu0 %654
      %656 = vrot.lane.b32.xlu0 %v530, 120
      %v657 = vpop.permute.xlu0 %656
      %658 = vrot.lane.b32.xlu0 %v533, 120
      %v659 = vpop.permute.xlu0 %658
      %660 = vrot.lane.b32.xlu0 %v538, 120
      %v661 = vpop.permute.xlu0 %660
      %662 = vrot.lane.b32.xlu0 %v541, 120
      %v663 = vpop.permute.xlu0 %662
      %664 = vrot.lane.b32.xlu0 %v546, 120
      %v665 = vpop.permute.xlu0 %664
      %666 = vrot.lane.b32.xlu0 %v549, 120
      %v667 = vpop.permute.xlu0 %666
      %668 = vrot.lane.b32.xlu0 %v554, 120
      %v669 = vpop.permute.xlu0 %668
      %670 = vrot.lane.b32.xlu0 %v557, 120
      %v671 = vpop.permute.xlu0 %670
      %672 = vrot.lane.b32.xlu0 %v562, 120
      %v673 = vpop.permute.xlu0 %672
      %674 = vrot.lane.b32.xlu0 %v565, 120
      %v675 = vpop.permute.xlu0 %674
      %676 = vrot.lane.b32.xlu0 %v570, 120
      %v677 = vpop.permute.xlu0 %676
      %678 = vrot.lane.b32.xlu0 %v573, 120
      %v679 = vpop.permute.xlu0 %678
      %680 = vrot.lane.b32.xlu0 %v578, 120
      %v681 = vpop.permute.xlu0 %680
      %682 = vrot.lane.b32.xlu0 %v581, 120
      %v683 = vpop.permute.xlu0 %682
      %684 = vrot.lane.b32.xlu0 %v586, 120
      %v685 = vpop.permute.xlu0 %684
      %686 = vrot.lane.b32.xlu0 %v589, 120
      %v687 = vpop.permute.xlu0 %686
      %720 = vrot.lane.b32.xlu0 %v466, 112
      %v721 = vpop.permute.xlu0 %720
      %722 = vrot.lane.b32.xlu0 %v469, 112
      %v723 = vpop.permute.xlu0 %722
      %724 = vrot.lane.b32.xlu0 %v474, 112
      %v725 = vpop.permute.xlu0 %724
      %726 = vrot.lane.b32.xlu0 %v477, 112
      %v727 = vpop.permute.xlu0 %726
      %728 = vrot.lane.b32.xlu0 %v482, 112
      %v729 = vpop.permute.xlu0 %728
      %730 = vrot.lane.b32.xlu0 %v485, 112
      %v731 = vpop.permute.xlu0 %730
      %732 = vrot.lane.b32.xlu0 %v490, 112
      %v733 = vpop.permute.xlu0 %732
      %734 = vrot.lane.b32.xlu0 %v493, 112
      %v735 = vpop.permute.xlu0 %734
      %736 = vrot.lane.b32.xlu0 %v498, 112
      %v737 = vpop.permute.xlu0 %736
      %738 = vrot.lane.b32.xlu0 %v501, 112
      %v739 = vpop.permute.xlu0 %738
      %740 = vrot.lane.b32.xlu0 %v506, 112
      %v741 = vpop.permute.xlu0 %740
      %742 = vrot.lane.b32.xlu0 %v509, 112
      %v743 = vpop.permute.xlu0 %742
      %744 = vrot.lane.b32.xlu0 %v514, 112
      %v745 = vpop.permute.xlu0 %744
      %746 = vrot.lane.b32.xlu0 %v517, 112
      %v747 = vpop.permute.xlu0 %746
      %748 = vrot.lane.b32.xlu0 %v522, 112
      %v749 = vpop.permute.xlu0 %748
      %750 = vrot.lane.b32.xlu0 %v525, 112
      %v751 = vpop.permute.xlu0 %750
      %752 = vrot.lane.b32.xlu0 %v530, 112
      %v753 = vpop.permute.xlu0 %752
      %754 = vrot.lane.b32.xlu0 %v533, 112
      %v755 = vpop.permute.xlu0 %754
      %756 = vrot.lane.b32.xlu0 %v538, 112
      %v757 = vpop.permute.xlu0 %756
      %758 = vrot.lane.b32.xlu0 %v541, 112
      %v759 = vpop.permute.xlu0 %758
      %760 = vrot.lane.b32.xlu0 %v546, 112
      %v761 = vpop.permute.xlu0 %760
      %762 = vrot.lane.b32.xlu0 %v549, 112
      %v763 = vpop.permute.xlu0 %762
      %764 = vrot.lane.b32.xlu0 %v554, 112
      %v765 = vpop.permute.xlu0 %764
      %766 = vrot.lane.b32.xlu0 %v557, 112
      %v767 = vpop.permute.xlu0 %766
      %768 = vrot.lane.b32.xlu0 %v562, 112
      %v769 = vpop.permute.xlu0 %768
      %770 = vrot.lane.b32.xlu0 %v565, 112
      %v771 = vpop.permute.xlu0 %770
      %772 = vrot.lane.b32.xlu0 %v570, 112
      %v773 = vpop.permute.xlu0 %772
      %774 = vrot.lane.b32.xlu0 %v573, 112
      %v775 = vpop.permute.xlu0 %774
      %776 = vrot.lane.b32.xlu0 %v578, 112
      %v777 = vpop.permute.xlu0 %776
      %778 = vrot.lane.b32.xlu0 %v581, 112
      %v779 = vpop.permute.xlu0 %778
      %780 = vrot.lane.b32.xlu0 %v586, 112
      %v781 = vpop.permute.xlu0 %780
      %782 = vrot.lane.b32.xlu0 %v589, 112
      %v783 = vpop.permute.xlu0 %782
      %816 = vrot.lane.b32.xlu0 %v466, 104
      %v817 = vpop.permute.xlu0 %816
      %818 = vrot.lane.b32.xlu0 %v469, 104
      %v819 = vpop.permute.xlu0 %818
      %820 = vrot.lane.b32.xlu0 %v474, 104
      %v821 = vpop.permute.xlu0 %820
      %822 = vrot.lane.b32.xlu0 %v477, 104
      %v823 = vpop.permute.xlu0 %822
      %824 = vrot.lane.b32.xlu0 %v482, 104
      %v825 = vpop.permute.xlu0 %824
      %826 = vrot.lane.b32.xlu0 %v485, 104
      %v827 = vpop.permute.xlu0 %826
      %828 = vrot.lane.b32.xlu0 %v490, 104
      %v829 = vpop.permute.xlu0 %828
      %830 = vrot.lane.b32.xlu0 %v493, 104
      %v831 = vpop.permute.xlu0 %830
      %832 = vrot.lane.b32.xlu0 %v498, 104
      %v833 = vpop.permute.xlu0 %832
      %834 = vrot.lane.b32.xlu0 %v501, 104
      %v835 = vpop.permute.xlu0 %834
      %836 = vrot.lane.b32.xlu0 %v506, 104
      %v837 = vpop.permute.xlu0 %836
      %838 = vrot.lane.b32.xlu0 %v509, 104
      %v839 = vpop.permute.xlu0 %838
      %840 = vrot.lane.b32.xlu0 %v514, 104
      %v841 = vpop.permute.xlu0 %840
      %842 = vrot.lane.b32.xlu0 %v517, 104
      %v843 = vpop.permute.xlu0 %842
      %844 = vrot.lane.b32.xlu0 %v522, 104
      %v845 = vpop.permute.xlu0 %844
      %846 = vrot.lane.b32.xlu0 %v525, 104
      %v847 = vpop.permute.xlu0 %846
      %848 = vrot.lane.b32.xlu0 %v530, 104
      %v849 = vpop.permute.xlu0 %848
      %850 = vrot.lane.b32.xlu0 %v533, 104
      %v851 = vpop.permute.xlu0 %850
      %852 = vrot.lane.b32.xlu0 %v538, 104
      %v853 = vpop.permute.xlu0 %852
      %854 = vrot.lane.b32.xlu0 %v541, 104
      %v855 = vpop.permute.xlu0 %854
      %856 = vrot.lane.b32.xlu0 %v546, 104
      %v857 = vpop.permute.xlu0 %856
      %858 = vrot.lane.b32.xlu0 %v549, 104
      %v859 = vpop.permute.xlu0 %858
      %860 = vrot.lane.b32.xlu0 %v554, 104
      %v861 = vpop.permute.xlu0 %860
      %862 = vrot.lane.b32.xlu0 %v557, 104
      %v863 = vpop.permute.xlu0 %862
      %864 = vrot.lane.b32.xlu0 %v562, 104
      %v865 = vpop.permute.xlu0 %864
      %866 = vrot.lane.b32.xlu0 %v565, 104
      %v867 = vpop.permute.xlu0 %866
      %868 = vrot.lane.b32.xlu0 %v570, 104
      %v869 = vpop.permute.xlu0 %868
      %870 = vrot.lane.b32.xlu0 %v573, 104
      %v871 = vpop.permute.xlu0 %870
      %872 = vrot.lane.b32.xlu0 %v578, 104
      %v873 = vpop.permute.xlu0 %872
      %874 = vrot.lane.b32.xlu0 %v581, 104
      %v875 = vpop.permute.xlu0 %874
      %876 = vrot.lane.b32.xlu0 %v586, 104
      %v877 = vpop.permute.xlu0 %876
      %878 = vrot.lane.b32.xlu0 %v589, 104
      %v879 = vpop.permute.xlu0 %878
      %v912 = vpack.c.bf16 %v469, %v466
      %v913 = vpack.c.bf16 %v477, %v474
      %v914 = vpack.c.bf16 %v485, %v482
      %v915 = vpack.c.bf16 %v493, %v490
      %v916 = vpack.c.bf16 %v501, %v498
      %v917 = vpack.c.bf16 %v509, %v506
      %v918 = vpack.c.bf16 %v517, %v514
      %v919 = vpack.c.bf16 %v525, %v522
      %v920 = vpack.c.bf16 %v533, %v530
      %v921 = vpack.c.bf16 %v541, %v538
      %v922 = vpack.c.bf16 %v549, %v546
      %v923 = vpack.c.bf16 %v557, %v554
      %v924 = vpack.c.bf16 %v565, %v562
      %v925 = vpack.c.bf16 %v573, %v570
      %v926 = vpack.c.bf16 %v581, %v578
      %v927 = vpack.c.bf16 %v589, %v586
      %v928 = vpack.c.bf16 %v627, %v625
      %v929 = vpack.c.bf16 %v631, %v629
      %v930 = vpack.c.bf16 %v635, %v633
      %v931 = vpack.c.bf16 %v639, %v637
      %v932 = vpack.c.bf16 %v643, %v641
      %v933 = vpack.c.bf16 %v647, %v645
      %v934 = vpack.c.bf16 %v651, %v649
      %v935 = vpack.c.bf16 %v655, %v653
      %v936 = vpack.c.bf16 %v659, %v657
      %v937 = vpack.c.bf16 %v663, %v661
      %v938 = vpack.c.bf16 %v667, %v665
      %v939 = vpack.c.bf16 %v671, %v669
      %v940 = vpack.c.bf16 %v675, %v673
      %v941 = vpack.c.bf16 %v679, %v677
      %v942 = vpack.c.bf16 %v683, %v681
      %v943 = vpack.c.bf16 %v687, %v685
      %v944 = vpack.c.bf16 %v723, %v721
      %v945 = vpack.c.bf16 %v727, %v725
      %v946 = vpack.c.bf16 %v731, %v729
      %v947 = vpack.c.bf16 %v735, %v733
      %v948 = vpack.c.bf16 %v739, %v737
      %v949 = vpack.c.bf16 %v743, %v741
      %v950 = vpack.c.bf16 %v747, %v745
      %v951 = vpack.c.bf16 %v751, %v749
      %v952 = vpack.c.bf16 %v755, %v753
      %v953 = vpack.c.bf16 %v759, %v757
      %v954 = vpack.c.bf16 %v763, %v761
      %v955 = vpack.c.bf16 %v767, %v765
      %v956 = vpack.c.bf16 %v771, %v769
      %v957 = vpack.c.bf16 %v775, %v773
      %v958 = vpack.c.bf16 %v779, %v777
      %v959 = vpack.c.bf16 %v783, %v781
      %v960 = vpack.c.bf16 %v819, %v817
      %v961 = vpack.c.bf16 %v823, %v821
      %v962 = vpack.c.bf16 %v827, %v825
      %v963 = vpack.c.bf16 %v831, %v829
      %v964 = vpack.c.bf16 %v835, %v833
      %v965 = vpack.c.bf16 %v839, %v837
      %v966 = vpack.c.bf16 %v843, %v841
      %v967 = vpack.c.bf16 %v847, %v845
      %v968 = vpack.c.bf16 %v851, %v849
      %v969 = vpack.c.bf16 %v855, %v853
      %v970 = vpack.c.bf16 %v859, %v857
      %v971 = vpack.c.bf16 %v863, %v861
      %v972 = vpack.c.bf16 %v867, %v865
      %v973 = vpack.c.bf16 %v871, %v869
      %v974 = vpack.c.bf16 %v875, %v873
      %v975 = vpack.c.bf16 %v879, %v877
      %977 = vrot.lane.b32.xlu0 %v912, 96
      %v978 = vpop.permute.xlu0 %977
      %vm979 = vcmask 64512
      %v981 = vsel %vm979, %v912, 0
      %v984 = vsel %vm979, %v978, 0
      %986 = vmatprep.subr.bf16.mxu0 0
      %987 = vmatpush1.bf16.xpose.msra.mxu0 %v984
      %988 = vmatprep.subr.bf16.mxu0 0
      %989 = vmatpush1.bf16.xpose.msra.mxu0 0
      %990 = vmatprep.subr.bf16.mxu0 0
      %991 = vmatpush1.bf16.xpose.msra.mxu0 0
      %992 = vmatprep.subr.bf16.mxu0 0
      %993 = vmatpush1.bf16.xpose.msra.mxu0 0
      %994 = vmatprep.subr.bf16.mxu0 0
      %995 = vmatpush1.bf16.xpose.msra.mxu0 0
      %996 = vmatprep.subr.bf16.mxu0 0
      %997 = vmatpush1.bf16.xpose.msra.mxu0 0
      %998 = vmatprep.subr.bf16.mxu0 0
      %999 = vmatpush1.bf16.xpose.msra.mxu0 0
      %1000 = vmatprep.subr.bf16.mxu0 0
      %1001 = vmatpush1.bf16.xpose.msra.mxu0 0
      %1002 = vmatprep.subr.bf16.mxu0 0
      %1003 = vmatpush1.bf16.xpose.msra.mxu0 0
      %1004 = vmatprep.subr.bf16.mxu0 0
      %1005 = vmatpush1.bf16.xpose.msra.mxu0 0
      %1006 = vmatprep.subr.bf16.mxu0 0
      %1007 = vmatpush1.bf16.xpose.msra.mxu0 0
      %1008 = vmatprep.subr.bf16.mxu0 0
      %1009 = vmatpush1.bf16.xpose.msra.mxu0 0
      %1010 = vmatprep.subr.bf16.mxu0 0
      %1011 = vmatpush1.bf16.xpose.msra.mxu0 0
      %1012 = vmatprep.subr.bf16.mxu0 0
      %1013 = vmatpush1.bf16.xpose.msra.mxu0 0
      %1014 = vmatprep.subr.bf16.mxu0 0
      %1015 = vmatpush1.bf16.xpose.msra.mxu0 0
      %1016 = vmatprep.subr.bf16.mxu0 0
      %1017 = vmatpush1.bf16.xpose.msra.mxu0 0
      %1018 = vmatprep.mubr.bf16.mxu0 0
      %1019 = vmatmul.mubr.bf16.gmra.mrb[0].mxu0 %v981
      %v1020 = vpop.f32.mrb[0].mxu0
      %v1021 = vadd.f32 0.0, %v1020
      %v1022 = vpop.f32.mrb[0].mxu0
      %v1023 = vpop.f32.mrb[0].mxu0
      %v1024 = vadd.f32 0.0, %v1023
      %v1025 = vpop.f32.mrb[0].mxu0
      %1026 = vdwg.mxu0
      %1028 = vrot.lane.b32.xlu0 %v913, 96
      %v1029 = vpop.permute.xlu0 %1028
      %v1031 = vsel %vm979, %v913, 0
      %v1034 = vsel %vm979, %v1029, 0
      %1036 = vmatprep.subr.bf16.mxu0 0
      %1037 = vmatpush1.bf16.xpose.msra.mxu0 %v1034
      %1038 = vmatprep.subr.bf16.mxu0 0
      %1039 = vmatpush1.bf16.xpose.msra.mxu0 0
      %1040 = vmatprep.subr.bf16.mxu0 0
      %1041 = vmatpush1.bf16.xpose.msra.mxu0 0
      %1042 = vmatprep.subr.bf16.mxu0 0
      %1043 = vmatpush1.bf16.xpose.msra.mxu0 0
      %1044 = vmatprep.subr.bf16.mxu0 0
      %1045 = vmatpush1.bf16.xpose.msra.mxu0 0
      %1046 = vmatprep.subr.bf16.mxu0 0
      %1047 = vmatpush1.bf16.xpose.msra.mxu0 0
      %1048 = vmatprep.subr.bf16.mxu0 0
      %1049 = vmatpush1.bf16.xpose.msra.mxu0 0
      %1050 = vmatprep.subr.bf16.mxu0 0
      %1051 = vmatpush1.bf16.xpose.msra.mxu0 0
      %1052 = vmatprep.subr.bf16.mxu0 0
      %1053 = vmatpush1.bf16.xpose.msra.mxu0 0
      %1054 = vmatprep.subr.bf16.mxu0 0
      %1055 = vmatpush1.bf16.xpose.msra.mxu0 0
      %1056 = vmatprep.subr.bf16.mxu0 0
      %1057 = vmatpush1.bf16.xpose.msra.mxu0 0
      %1058 = vmatprep.subr.bf16.mxu0 0
      %1059 = vmatpush1.bf16.xpose.msra.mxu0 0
      %1060 = vmatprep.subr.bf16.mxu0 0
      %1061 = vmatpush1.bf16.xpose.msra.mxu0 0
      %1062 = vmatprep.subr.bf16.mxu0 0
      %1063 = vmatpush1.bf16.xpose.msra.mxu0 0
      %1064 = vmatprep.subr.bf16.mxu0 0
      %1065 = vmatpush1.bf16.xpose.msra.mxu0 0
      %1066 = vmatprep.subr.bf16.mxu0 0
      %1067 = vmatpush1.bf16.xpose.msra.mxu0 0
      %1068 = vmatprep.mubr.bf16.mxu0 0
      %1069 = vmatmul.mubr.bf16.gmra.mrb[0].mxu0 %v1031
      %v1070 = vpop.f32.mrb[0].mxu0
      %v1071 = vadd.f32 0.0, %v1070
      %v1072 = vpop.f32.mrb[0].mxu0
      %v1073 = vpop.f32.mrb[0].mxu0
      %v1074 = vadd.f32 0.0, %v1073
      %v1075 = vpop.f32.mrb[0].mxu0
      %1076 = vdwg.mxu0
      %1078 = vrot.lane.b32.xlu0 %v914, 96
      %v1079 = vpop.permute.xlu0 %1078
      %v1081 = vsel %vm979, %v914, 0
      %v1084 = vsel %vm979, %v1079, 0
      %1086 = vmatprep.subr.bf16.mxu0 0
      %1087 = vmatpush1.bf16.xpose.msra.mxu0 %v1084
      %1088 = vmatprep.subr.bf16.mxu0 0
      %1089 = vmatpush1.bf16.xpose.msra.mxu0 0
      %1090 = vmatprep.subr.bf16.mxu0 0
      %1091 = vmatpush1.bf16.xpose.msra.mxu0 0
      %1092 = vmatprep.subr.bf16.mxu0 0
      %1093 = vmatpush1.bf16.xpose.msra.mxu0 0
      %1094 = vmatprep.subr.bf16.mxu0 0
      %1095 = vmatpush1.bf16.xpose.msra.mxu0 0
      %1096 = vmatprep.subr.bf16.mxu0 0
      %1097 = vmatpush1.bf16.xpose.msra.mxu0 0
      %1098 = vmatprep.subr.bf16.mxu0 0
      %1099 = vmatpush1.bf16.xpose.msra.mxu0 0
      %1100 = vmatprep.subr.bf16.mxu0 0
      %1101 = vmatpush1.bf16.xpose.msra.mxu0 0
      %1102 = vmatprep.subr.bf16.mxu0 0
      %1103 = vmatpush1.bf16.xpose.msra.mxu0 0
      %1104 = vmatprep.subr.bf16.mxu0 0
      %1105 = vmatpush1.bf16.xpose.msra.mxu0 0
      %1106 = vmatprep.subr.bf16.mxu0 0
      %1107 = vmatpush1.bf16.xpose.msra.mxu0 0
      %1108 = vmatprep.subr.bf16.mxu0 0
      %1109 = vmatpush1.bf16.xpose.msra.mxu0 0
      %1110 = vmatprep.subr.bf16.mxu0 0
      %1111 = vmatpush1.bf16.xpose.msra.mxu0 0
      %1112 = vmatprep.subr.bf16.mxu0 0
      %1113 = vmatpush1.bf16.xpose.msra.mxu0 0
      %1114 = vmatprep.subr.bf16.mxu0 0
      %1115 = vmatpush1.bf16.xpose.msra.mxu0 0
      %1116 = vmatprep.subr.bf16.mxu0 0
      %1117 = vmatpush1.bf16.xpose.msra.mxu0 0
      %1118 = vmatprep.mubr.bf16.mxu0 0
      %1119 = vmatmul.mubr.bf16.gmra.mrb[0].mxu0 %v1081
      %v1120 = vpop.f32.mrb[0].mxu0
      %v1121 = vadd.f32 0.0, %v1120
      %v1122 = vpop.f32.mrb[0].mxu0
      %v1123 = vpop.f32.mrb[0].mxu0
      %v1124 = vadd.f32 0.0, %v1123
      %v1125 = vpop.f32.mrb[0].mxu0
      %1126 = vdwg.mxu0
      %1128 = vrot.lane.b32.xlu0 %v915, 96
      %v1129 = vpop.permute.xlu0 %1128
      %v1131 = vsel %vm979, %v915, 0
      %v1134 = vsel %vm979, %v1129, 0
      %1136 = vmatprep.subr.bf16.mxu0 0
      %1137 = vmatpush1.bf16.xpose.msra.mxu0 %v1134
      %1138 = vmatprep.subr.bf16.mxu0 0
      %1139 = vmatpush1.bf16.xpose.msra.mxu0 0
      %1140 = vmatprep.subr.bf16.mxu0 0
      %1141 = vmatpush1.bf16.xpose.msra.mxu0 0
      %1142 = vmatprep.subr.bf16.mxu0 0
      %1143 = vmatpush1.bf16.xpose.msra.mxu0 0
      %1144 = vmatprep.subr.bf16.mxu0 0
      %1145 = vmatpush1.bf16.xpose.msra.mxu0 0
      %1146 = vmatprep.subr.bf16.mxu0 0
      %1147 = vmatpush1.bf16.xpose.msra.mxu0 0
      %1148 = vmatprep.subr.bf16.mxu0 0
      %1149 = vmatpush1.bf16.xpose.msra.mxu0 0
      %1150 = vmatprep.subr.bf16.mxu0 0
      %1151 = vmatpush1.bf16.xpose.msra.mxu0 0
      %1152 = vmatprep.subr.bf16.mxu0 0
      %1153 = vmatpush1.bf16.xpose.msra.mxu0 0
      %1154 = vmatprep.subr.bf16.mxu0 0
      %1155 = vmatpush1.bf16.xpose.msra.mxu0 0
      %1156 = vmatprep.subr.bf16.mxu0 0
      %1157 = vmatpush1.bf16.xpose.msra.mxu0 0
      %1158 = vmatprep.subr.bf16.mxu0 0
      %1159 = vmatpush1.bf16.xpose.msra.mxu0 0
      %1160 = vmatprep.subr.bf16.mxu0 0
      %1161 = vmatpush1.bf16.xpose.msra.mxu0 0
      %1162 = vmatprep.subr.bf16.mxu0 0
      %1163 = vmatpush1.bf16.xpose.msra.mxu0 0
      %1164 = vmatprep.subr.bf16.mxu0 0
      %1165 = vmatpush1.bf16.xpose.msra.mxu0 0
      %1166 = vmatprep.subr.bf16.mxu0 0
      %1167 = vmatpush1.bf16.xpose.msra.mxu0 0
      %1168 = vmatprep.mubr.bf16.mxu0 0
      %1169 = vmatmul.mubr.bf16.gmra.mrb[0].mxu0 %v1131
      %v1170 = vpop.f32.mrb[0].mxu0
      %v1171 = vadd.f32 0.0, %v1170
      %v1172 = vpop.f32.mrb[0].mxu0
      %v1173 = vpop.f32.mrb[0].mxu0
      %v1174 = vadd.f32 0.0, %v1173
      %v1175 = vpop.f32.mrb[0].mxu0
      %1176 = vdwg.mxu0
      %1178 = vrot.lane.b32.xlu0 %v916, 96
      %v1179 = vpop.permute.xlu0 %1178
      %v1181 = vsel %vm979, %v916, 0
      %v1184 = vsel %vm979, %v1179, 0
      %1186 = vmatprep.subr.bf16.mxu0 0
      %1187 = vmatpush1.bf16.xpose.msra.mxu0 %v1184
      %1188 = vmatprep.subr.bf16.mxu0 0
      %1189 = vmatpush1.bf16.xpose.msra.mxu0 0
      %1190 = vmatprep.subr.bf16.mxu0 0
      %1191 = vmatpush1.bf16.xpose.msra.mxu0 0
      %1192 = vmatprep.subr.bf16.mxu0 0
      %1193 = vmatpush1.bf16.xpose.msra.mxu0 0
      %1194 = vmatprep.subr.bf16.mxu0 0
      %1195 = vmatpush1.bf16.xpose.msra.mxu0 0
      %1196 = vmatprep.subr.bf16.mxu0 0
      %1197 = vmatpush1.bf16.xpose.msra.mxu0 0
      %1198 = vmatprep.subr.bf16.mxu0 0
      %1199 = vmatpush1.bf16.xpose.msra.mxu0 0
      %1200 = vmatprep.subr.bf16.mxu0 0
      %1201 = vmatpush1.bf16.xpose.msra.mxu0 0
      %1202 = vmatprep.subr.bf16.mxu0 0
      %1203 = vmatpush1.bf16.xpose.msra.mxu0 0
      %1204 = vmatprep.subr.bf16.mxu0 0
      %1205 = vmatpush1.bf16.xpose.msra.mxu0 0
      %1206 = vmatprep.subr.bf16.mxu0 0
      %1207 = vmatpush1.bf16.xpose.msra.mxu0 0
      %1208 = vmatprep.subr.bf16.mxu0 0
      %1209 = vmatpush1.bf16.xpose.msra.mxu0 0
      %1210 = vmatprep.subr.bf16.mxu0 0
      %1211 = vmatpush1.bf16.xpose.msra.mxu0 0
      %1212 = vmatprep.subr.bf16.mxu0 0
      %1213 = vmatpush1.bf16.xpose.msra.mxu0 0
      %1214 = vmatprep.subr.bf16.mxu0 0
      %1215 = vmatpush1.bf16.xpose.msra.mxu0 0
      %1216 = vmatprep.subr.bf16.mxu0 0
      %1217 = vmatpush1.bf16.xpose.msra.mxu0 0
      %1218 = vmatprep.mubr.bf16.mxu0 0
      %1219 = vmatmul.mubr.bf16.gmra.mrb[0].mxu0 %v1181
      %v1220 = vpop.f32.mrb[0].mxu0
      %v1221 = vadd.f32 0.0, %v1220
      %v1222 = vpop.f32.mrb[0].mxu0
      %v1223 = vpop.f32.mrb[0].mxu0
      %v1224 = vadd.f32 0.0, %v1223
      %v1225 = vpop.f32.mrb[0].mxu0
      %1226 = vdwg.mxu0
      %1228 = vrot.lane.b32.xlu0 %v917, 96
      %v1229 = vpop.permute.xlu0 %1228
      %v1231 = vsel %vm979, %v917, 0
      %v1234 = vsel %vm979, %v1229, 0
      %1236 = vmatprep.subr.bf16.mxu0 0
      %1237 = vmatpush1.bf16.xpose.msra.mxu0 %v1234
      %1238 = vmatprep.subr.bf16.mxu0 0
      %1239 = vmatpush1.bf16.xpose.msra.mxu0 0
      %1240 = vmatprep.subr.bf16.mxu0 0
      %1241 = vmatpush1.bf16.xpose.msra.mxu0 0
      %1242 = vmatprep.subr.bf16.mxu0 0
      %1243 = vmatpush1.bf16.xpose.msra.mxu0 0
      %1244 = vmatprep.subr.bf16.mxu0 0
      %1245 = vmatpush1.bf16.xpose.msra.mxu0 0
      %1246 = vmatprep.subr.bf16.mxu0 0
      %1247 = vmatpush1.bf16.xpose.msra.mxu0 0
      %1248 = vmatprep.subr.bf16.mxu0 0
      %1249 = vmatpush1.bf16.xpose.msra.mxu0 0
      %1250 = vmatprep.subr.bf16.mxu0 0
      %1251 = vmatpush1.bf16.xpose.msra.mxu0 0
      %1252 = vmatprep.subr.bf16.mxu0 0
      %1253 = vmatpush1.bf16.xpose.msra.mxu0 0
      %1254 = vmatprep.subr.bf16.mxu0 0
      %1255 = vmatpush1.bf16.xpose.msra.mxu0 0
      %1256 = vmatprep.subr.bf16.mxu0 0
      %1257 = vmatpush1.bf16.xpose.msra.mxu0 0
      %1258 = vmatprep.subr.bf16.mxu0 0
      %1259 = vmatpush1.bf16.xpose.msra.mxu0 0
      %1260 = vmatprep.subr.bf16.mxu0 0
      %1261 = vmatpush1.bf16.xpose.msra.mxu0 0
      %1262 = vmatprep.subr.bf16.mxu0 0
      %1263 = vmatpush1.bf16.xpose.msra.mxu0 0
      %1264 = vmatprep.subr.bf16.mxu0 0
      %1265 = vmatpush1.bf16.xpose.msra.mxu0 0
      %1266 = vmatprep.subr.bf16.mxu0 0
      %1267 = vmatpush1.bf16.xpose.msra.mxu0 0
      %1268 = vmatprep.mubr.bf16.mxu0 0
      %1269 = vmatmul.mubr.bf16.gmra.mrb[0].mxu0 %v1231
      %v1270 = vpop.f32.mrb[0].mxu0
      %v1271 = vadd.f32 0.0, %v1270
      %v1272 = vpop.f32.mrb[0].mxu0
      %v1273 = vpop.f32.mrb[0].mxu0
      %v1274 = vadd.f32 0.0, %v1273
      %v1275 = vpop.f32.mrb[0].mxu0
      %1276 = vdwg.mxu0
      %1278 = vrot.lane.b32.xlu0 %v918, 96
      %v1279 = vpop.permute.xlu0 %1278
      %v1281 = vsel %vm979, %v918, 0
      %v1284 = vsel %vm979, %v1279, 0
      %1286 = vmatprep.subr.bf16.mxu0 0
      %1287 = vmatpush1.bf16.xpose.msra.mxu0 %v1284
      %1288 = vmatprep.subr.bf16.mxu0 0
      %1289 = vmatpush1.bf16.xpose.msra.mxu0 0
      %1290 = vmatprep.subr.bf16.mxu0 0
      %1291 = vmatpush1.bf16.xpose.msra.mxu0 0
      %1292 = vmatprep.subr.bf16.mxu0 0
      %1293 = vmatpush1.bf16.xpose.msra.mxu0 0
      %1294 = vmatprep.subr.bf16.mxu0 0
      %1295 = vmatpush1.bf16.xpose.msra.mxu0 0
      %1296 = vmatprep.subr.bf16.mxu0 0
      %1297 = vmatpush1.bf16.xpose.msra.mxu0 0
      %1298 = vmatprep.subr.bf16.mxu0 0
      %1299 = vmatpush1.bf16.xpose.msra.mxu0 0
      %1300 = vmatprep.subr.bf16.mxu0 0
      %1301 = vmatpush1.bf16.xpose.msra.mxu0 0
      %1302 = vmatprep.subr.bf16.mxu0 0
      %1303 = vmatpush1.bf16.xpose.msra.mxu0 0
      %1304 = vmatprep.subr.bf16.mxu0 0
      %1305 = vmatpush1.bf16.xpose.msra.mxu0 0
      %1306 = vmatprep.subr.bf16.mxu0 0
      %1307 = vmatpush1.bf16.xpose.msra.mxu0 0
      %1308 = vmatprep.subr.bf16.mxu0 0
      %1309 = vmatpush1.bf16.xpose.msra.mxu0 0
      %1310 = vmatprep.subr.bf16.mxu0 0
      %1311 = vmatpush1.bf16.xpose.msra.mxu0 0
      %1312 = vmatprep.subr.bf16.mxu0 0
      %1313 = vmatpush1.bf16.xpose.msra.mxu0 0
      %1314 = vmatprep.subr.bf16.mxu0 0
      %1315 = vmatpush1.bf16.xpose.msra.mxu0 0
      %1316 = vmatprep.subr.bf16.mxu0 0
      %1317 = vmatpush1.bf16.xpose.msra.mxu0 0
      %1318 = vmatprep.mubr.bf16.mxu0 0
      %1319 = vmatmul.mubr.bf16.gmra.mrb[0].mxu0 %v1281
      %v1320 = vpop.f32.mrb[0].mxu0
      %v1321 = vadd.f32 0.0, %v1320
      %v1322 = vpop.f32.mrb[0].mxu0
      %v1323 = vpop.f32.mrb[0].mxu0
      %v1324 = vadd.f32 0.0, %v1323
      %v1325 = vpop.f32.mrb[0].mxu0
      %1326 = vdwg.mxu0
      %1328 = vrot.lane.b32.xlu0 %v919, 96
      %v1329 = vpop.permute.xlu0 %1328
      %v1331 = vsel %vm979, %v919, 0
      %v1334 = vsel %vm979, %v1329, 0
      %1336 = vmatprep.subr.bf16.mxu0 0
      %1337 = vmatpush1.bf16.xpose.msra.mxu0 %v1334
      %1338 = vmatprep.subr.bf16.mxu0 0
      %1339 = vmatpush1.bf16.xpose.msra.mxu0 0
      %1340 = vmatprep.subr.bf16.mxu0 0
      %1341 = vmatpush1.bf16.xpose.msra.mxu0 0
      %1342 = vmatprep.subr.bf16.mxu0 0
      %1343 = vmatpush1.bf16.xpose.msra.mxu0 0
      %1344 = vmatprep.subr.bf16.mxu0 0
      %1345 = vmatpush1.bf16.xpose.msra.mxu0 0
      %1346 = vmatprep.subr.bf16.mxu0 0
      %1347 = vmatpush1.bf16.xpose.msra.mxu0 0
      %1348 = vmatprep.subr.bf16.mxu0 0
      %1349 = vmatpush1.bf16.xpose.msra.mxu0 0
      %1350 = vmatprep.subr.bf16.mxu0 0
      %1351 = vmatpush1.bf16.xpose.msra.mxu0 0
      %1352 = vmatprep.subr.bf16.mxu0 0
      %1353 = vmatpush1.bf16.xpose.msra.mxu0 0
      %1354 = vmatprep.subr.bf16.mxu0 0
      %1355 = vmatpush1.bf16.xpose.msra.mxu0 0
      %1356 = vmatprep.subr.bf16.mxu0 0
      %1357 = vmatpush1.bf16.xpose.msra.mxu0 0
      %1358 = vmatprep.subr.bf16.mxu0 0
      %1359 = vmatpush1.bf16.xpose.msra.mxu0 0
      %1360 = vmatprep.subr.bf16.mxu0 0
      %1361 = vmatpush1.bf16.xpose.msra.mxu0 0
      %1362 = vmatprep.subr.bf16.mxu0 0
      %1363 = vmatpush1.bf16.xpose.msra.mxu0 0
      %1364 = vmatprep.subr.bf16.mxu0 0
      %1365 = vmatpush1.bf16.xpose.msra.mxu0 0
      %1366 = vmatprep.subr.bf16.mxu0 0
      %1367 = vmatpush1.bf16.xpose.msra.mxu0 0
      %1368 = vmatprep.mubr.bf16.mxu0 0
      %1369 = vmatmul.mubr.bf16.gmra.mrb[0].mxu0 %v1331
      %v1370 = vpop.f32.mrb[0].mxu0
      %v1371 = vadd.f32 0.0, %v1370
      %v1372 = vpop.f32.mrb[0].mxu0
      %v1373 = vpop.f32.mrb[0].mxu0
      %v1374 = vadd.f32 0.0, %v1373
      %v1375 = vpop.f32.mrb[0].mxu0
      %1376 = vdwg.mxu0
      %1378 = vrot.lane.b32.xlu0 %v920, 96
      %v1379 = vpop.permute.xlu0 %1378
      %v1381 = vsel %vm979, %v920, 0
      %v1384 = vsel %vm979, %v1379, 0
      %1386 = vmatprep.subr.bf16.mxu0 0
      %1387 = vmatpush1.bf16.xpose.msra.mxu0 %v1384
      %1388 = vmatprep.subr.bf16.mxu0 0
      %1389 = vmatpush1.bf16.xpose.msra.mxu0 0
      %1390 = vmatprep.subr.bf16.mxu0 0
      %1391 = vmatpush1.bf16.xpose.msra.mxu0 0
      %1392 = vmatprep.subr.bf16.mxu0 0
      %1393 = vmatpush1.bf16.xpose.msra.mxu0 0
      %1394 = vmatprep.subr.bf16.mxu0 0
      %1395 = vmatpush1.bf16.xpose.msra.mxu0 0
      %1396 = vmatprep.subr.bf16.mxu0 0
      %1397 = vmatpush1.bf16.xpose.msra.mxu0 0
      %1398 = vmatprep.subr.bf16.mxu0 0
      %1399 = vmatpush1.bf16.xpose.msra.mxu0 0
      %1400 = vmatprep.subr.bf16.mxu0 0
      %1401 = vmatpush1.bf16.xpose.msra.mxu0 0
      %1402 = vmatprep.subr.bf16.mxu0 0
      %1403 = vmatpush1.bf16.xpose.msra.mxu0 0
      %1404 = vmatprep.subr.bf16.mxu0 0
      %1405 = vmatpush1.bf16.xpose.msra.mxu0 0
      %1406 = vmatprep.subr.bf16.mxu0 0
      %1407 = vmatpush1.bf16.xpose.msra.mxu0 0
      %1408 = vmatprep.subr.bf16.mxu0 0
      %1409 = vmatpush1.bf16.xpose.msra.mxu0 0
      %1410 = vmatprep.subr.bf16.mxu0 0
      %1411 = vmatpush1.bf16.xpose.msra.mxu0 0
      %1412 = vmatprep.subr.bf16.mxu0 0
      %1413 = vmatpush1.bf16.xpose.msra.mxu0 0
      %1414 = vmatprep.subr.bf16.mxu0 0
      %1415 = vmatpush1.bf16.xpose.msra.mxu0 0
      %1416 = vmatprep.subr.bf16.mxu0 0
      %1417 = vmatpush1.bf16.xpose.msra.mxu0 0
      %1418 = vmatprep.mubr.bf16.mxu0 0
      %1419 = vmatmul.mubr.bf16.gmra.mrb[0].mxu0 %v1381
      %v1420 = vpop.f32.mrb[0].mxu0
      %v1421 = vadd.f32 0.0, %v1420
      %v1422 = vpop.f32.mrb[0].mxu0
      %v1423 = vpop.f32.mrb[0].mxu0
      %v1424 = vadd.f32 0.0, %v1423
      %v1425 = vpop.f32.mrb[0].mxu0
      %1426 = vdwg.mxu0
      %1428 = vrot.lane.b32.xlu0 %v921, 96
      %v1429 = vpop.permute.xlu0 %1428
      %v1431 = vsel %vm979, %v921, 0
      %v1434 = vsel %vm979, %v1429, 0
      %1436 = vmatprep.subr.bf16.mxu0 0
      %1437 = vmatpush1.bf16.xpose.msra.mxu0 %v1434
      %1438 = vmatprep.subr.bf16.mxu0 0
      %1439 = vmatpush1.bf16.xpose.msra.mxu0 0
      %1440 = vmatprep.subr.bf16.mxu0 0
      %1441 = vmatpush1.bf16.xpose.msra.mxu0 0
      %1442 = vmatprep.subr.bf16.mxu0 0
      %1443 = vmatpush1.bf16.xpose.msra.mxu0 0
      %1444 = vmatprep.subr.bf16.mxu0 0
      %1445 = vmatpush1.bf16.xpose.msra.mxu0 0
      %1446 = vmatprep.subr.bf16.mxu0 0
      %1447 = vmatpush1.bf16.xpose.msra.mxu0 0
      %1448 = vmatprep.subr.bf16.mxu0 0
      %1449 = vmatpush1.bf16.xpose.msra.mxu0 0
      %1450 = vmatprep.subr.bf16.mxu0 0
      %1451 = vmatpush1.bf16.xpose.msra.mxu0 0
      %1452 = vmatprep.subr.bf16.mxu0 0
      %1453 = vmatpush1.bf16.xpose.msra.mxu0 0
      %1454 = vmatprep.subr.bf16.mxu0 0
      %1455 = vmatpush1.bf16.xpose.msra.mxu0 0
      %1456 = vmatprep.subr.bf16.mxu0 0
      %1457 = vmatpush1.bf16.xpose.msra.mxu0 0
      %1458 = vmatprep.subr.bf16.mxu0 0
      %1459 = vmatpush1.bf16.xpose.msra.mxu0 0
      %1460 = vmatprep.subr.bf16.mxu0 0
      %1461 = vmatpush1.bf16.xpose.msra.mxu0 0
      %1462 = vmatprep.subr.bf16.mxu0 0
      %1463 = vmatpush1.bf16.xpose.msra.mxu0 0
      %1464 = vmatprep.subr.bf16.mxu0 0
      %1465 = vmatpush1.bf16.xpose.msra.mxu0 0
      %1466 = vmatprep.subr.bf16.mxu0 0
      %1467 = vmatpush1.bf16.xpose.msra.mxu0 0
      %1468 = vmatprep.mubr.bf16.mxu0 0
      %1469 = vmatmul.mubr.bf16.gmra.mrb[0].mxu0 %v1431
      %v1470 = vpop.f32.mrb[0].mxu0
      %v1471 = vadd.f32 0.0, %v1470
      %v1472 = vpop.f32.mrb[0].mxu0
      %v1473 = vpop.f32.mrb[0].mxu0
      %v1474 = vadd.f32 0.0, %v1473
      %v1475 = vpop.f32.mrb[0].mxu0
      %1476 = vdwg.mxu0
      %1478 = vrot.lane.b32.xlu0 %v922, 96
      %v1479 = vpop.permute.xlu0 %1478
      %v1481 = vsel %vm979, %v922, 0
      %v1484 = vsel %vm979, %v1479, 0
      %1486 = vmatprep.subr.bf16.mxu0 0
      %1487 = vmatpush1.bf16.xpose.msra.mxu0 %v1484
      %1488 = vmatprep.subr.bf16.mxu0 0
      %1489 = vmatpush1.bf16.xpose.msra.mxu0 0
      %1490 = vmatprep.subr.bf16.mxu0 0
      %1491 = vmatpush1.bf16.xpose.msra.mxu0 0
      %1492 = vmatprep.subr.bf16.mxu0 0
      %1493 = vmatpush1.bf16.xpose.msra.mxu0 0
      %1494 = vmatprep.subr.bf16.mxu0 0
      %1495 = vmatpush1.bf16.xpose.msra.mxu0 0
      %1496 = vmatprep.subr.bf16.mxu0 0
      %1497 = vmatpush1.bf16.xpose.msra.mxu0 0
      %1498 = vmatprep.subr.bf16.mxu0 0
      %1499 = vmatpush1.bf16.xpose.msra.mxu0 0
      %1500 = vmatprep.subr.bf16.mxu0 0
      %1501 = vmatpush1.bf16.xpose.msra.mxu0 0
      %1502 = vmatprep.subr.bf16.mxu0 0
      %1503 = vmatpush1.bf16.xpose.msra.mxu0 0
      %1504 = vmatprep.subr.bf16.mxu0 0
      %1505 = vmatpush1.bf16.xpose.msra.mxu0 0
      %1506 = vmatprep.subr.bf16.mxu0 0
      %1507 = vmatpush1.bf16.xpose.msra.mxu0 0
      %1508 = vmatprep.subr.bf16.mxu0 0
      %1509 = vmatpush1.bf16.xpose.msra.mxu0 0
      %1510 = vmatprep.subr.bf16.mxu0 0
      %1511 = vmatpush1.bf16.xpose.msra.mxu0 0
      %1512 = vmatprep.subr.bf16.mxu0 0
      %1513 = vmatpush1.bf16.xpose.msra.mxu0 0
      %1514 = vmatprep.subr.bf16.mxu0 0
      %1515 = vmatpush1.bf16.xpose.msra.mxu0 0
      %1516 = vmatprep.subr.bf16.mxu0 0
      %1517 = vmatpush1.bf16.xpose.msra.mxu0 0
      %1518 = vmatprep.mubr.bf16.mxu0 0
      %1519 = vmatmul.mubr.bf16.gmra.mrb[0].mxu0 %v1481
      %v1520 = vpop.f32.mrb[0].mxu0
      %v1521 = vadd.f32 0.0, %v1520
      %v1522 = vpop.f32.mrb[0].mxu0
      %v1523 = vpop.f32.mrb[0].mxu0
      %v1524 = vadd.f32 0.0, %v1523
      %v1525 = vpop.f32.mrb[0].mxu0
      %1526 = vdwg.mxu0
      %1528 = vrot.lane.b32.xlu0 %v923, 96
      %v1529 = vpop.permute.xlu0 %1528
      %v1531 = vsel %vm979, %v923, 0
      %v1534 = vsel %vm979, %v1529, 0
      %1536 = vmatprep.subr.bf16.mxu0 0
      %1537 = vmatpush1.bf16.xpose.msra.mxu0 %v1534
      %1538 = vmatprep.subr.bf16.mxu0 0
      %1539 = vmatpush1.bf16.xpose.msra.mxu0 0
      %1540 = vmatprep.subr.bf16.mxu0 0
      %1541 = vmatpush1.bf16.xpose.msra.mxu0 0
      %1542 = vmatprep.subr.bf16.mxu0 0
      %1543 = vmatpush1.bf16.xpose.msra.mxu0 0
      %1544 = vmatprep.subr.bf16.mxu0 0
      %1545 = vmatpush1.bf16.xpose.msra.mxu0 0
      %1546 = vmatprep.subr.bf16.mxu0 0
      %1547 = vmatpush1.bf16.xpose.msra.mxu0 0
      %1548 = vmatprep.subr.bf16.mxu0 0
      %1549 = vmatpush1.bf16.xpose.msra.mxu0 0
      %1550 = vmatprep.subr.bf16.mxu0 0
      %1551 = vmatpush1.bf16.xpose.msra.mxu0 0
      %1552 = vmatprep.subr.bf16.mxu0 0
      %1553 = vmatpush1.bf16.xpose.msra.mxu0 0
      %1554 = vmatprep.subr.bf16.mxu0 0
      %1555 = vmatpush1.bf16.xpose.msra.mxu0 0
      %1556 = vmatprep.subr.bf16.mxu0 0
      %1557 = vmatpush1.bf16.xpose.msra.mxu0 0
      %1558 = vmatprep.subr.bf16.mxu0 0
      %1559 = vmatpush1.bf16.xpose.msra.mxu0 0
      %1560 = vmatprep.subr.bf16.mxu0 0
      %1561 = vmatpush1.bf16.xpose.msra.mxu0 0
      %1562 = vmatprep.subr.bf16.mxu0 0
      %1563 = vmatpush1.bf16.xpose.msra.mxu0 0
      %1564 = vmatprep.subr.bf16.mxu0 0
      %1565 = vmatpush1.bf16.xpose.msra.mxu0 0
      %1566 = vmatprep.subr.bf16.mxu0 0
      %1567 = vmatpush1.bf16.xpose.msra.mxu0 0
      %1568 = vmatprep.mubr.bf16.mxu0 0
      %1569 = vmatmul.mubr.bf16.gmra.mrb[0].mxu0 %v1531
      %v1570 = vpop.f32.mrb[0].mxu0
      %v1571 = vadd.f32 0.0, %v1570
      %v1572 = vpop.f32.mrb[0].mxu0
      %v1573 = vpop.f32.mrb[0].mxu0
      %v1574 = vadd.f32 0.0, %v1573
      %v1575 = vpop.f32.mrb[0].mxu0
      %1576 = vdwg.mxu0
      %1578 = vrot.lane.b32.xlu0 %v924, 96
      %v1579 = vpop.permute.xlu0 %1578
      %v1581 = vsel %vm979, %v924, 0
      %v1584 = vsel %vm979, %v1579, 0
      %1586 = vmatprep.subr.bf16.mxu0 0
      %1587 = vmatpush1.bf16.xpose.msra.mxu0 %v1584
      %1588 = vmatprep.subr.bf16.mxu0 0
      %1589 = vmatpush1.bf16.xpose.msra.mxu0 0
      %1590 = vmatprep.subr.bf16.mxu0 0
      %1591 = vmatpush1.bf16.xpose.msra.mxu0 0
      %1592 = vmatprep.subr.bf16.mxu0 0
      %1593 = vmatpush1.bf16.xpose.msra.mxu0 0
      %1594 = vmatprep.subr.bf16.mxu0 0
      %1595 = vmatpush1.bf16.xpose.msra.mxu0 0
      %1596 = vmatprep.subr.bf16.mxu0 0
      %1597 = vmatpush1.bf16.xpose.msra.mxu0 0
      %1598 = vmatprep.subr.bf16.mxu0 0
      %1599 = vmatpush1.bf16.xpose.msra.mxu0 0
      %1600 = vmatprep.subr.bf16.mxu0 0
      %1601 = vmatpush1.bf16.xpose.msra.mxu0 0
      %1602 = vmatprep.subr.bf16.mxu0 0
      %1603 = vmatpush1.bf16.xpose.msra.mxu0 0
      %1604 = vmatprep.subr.bf16.mxu0 0
      %1605 = vmatpush1.bf16.xpose.msra.mxu0 0
      %1606 = vmatprep.subr.bf16.mxu0 0
      %1607 = vmatpush1.bf16.xpose.msra.mxu0 0
      %1608 = vmatprep.subr.bf16.mxu0 0
      %1609 = vmatpush1.bf16.xpose.msra.mxu0 0
      %1610 = vmatprep.subr.bf16.mxu0 0
      %1611 = vmatpush1.bf16.xpose.msra.mxu0 0
      %1612 = vmatprep.subr.bf16.mxu0 0
      %1613 = vmatpush1.bf16.xpose.msra.mxu0 0
      %1614 = vmatprep.subr.bf16.mxu0 0
      %1615 = vmatpush1.bf16.xpose.msra.mxu0 0
      %1616 = vmatprep.subr.bf16.mxu0 0
      %1617 = vmatpush1.bf16.xpose.msra.mxu0 0
      %1618 = vmatprep.mubr.bf16.mxu0 0
      %1619 = vmatmul.mubr.bf16.gmra.mrb[0].mxu0 %v1581
      %v1620 = vpop.f32.mrb[0].mxu0
      %v1621 = vadd.f32 0.0, %v1620
      %v1622 = vpop.f32.mrb[0].mxu0
      %v1623 = vpop.f32.mrb[0].mxu0
      %v1624 = vadd.f32 0.0, %v1623
      %v1625 = vpop.f32.mrb[0].mxu0
      %1626 = vdwg.mxu0
      %1628 = vrot.lane.b32.xlu0 %v925, 96
      %v1629 = vpop.permute.xlu0 %1628
      %v1631 = vsel %vm979, %v925, 0
      %v1634 = vsel %vm979, %v1629, 0
      %1636 = vmatprep.subr.bf16.mxu0 0
      %1637 = vmatpush1.bf16.xpose.msra.mxu0 %v1634
      %1638 = vmatprep.subr.bf16.mxu0 0
      %1639 = vmatpush1.bf16.xpose.msra.mxu0 0
      %1640 = vmatprep.subr.bf16.mxu0 0
      %1641 = vmatpush1.bf16.xpose.msra.mxu0 0
      %1642 = vmatprep.subr.bf16.mxu0 0
      %1643 = vmatpush1.bf16.xpose.msra.mxu0 0
      %1644 = vmatprep.subr.bf16.mxu0 0
      %1645 = vmatpush1.bf16.xpose.msra.mxu0 0
      %1646 = vmatprep.subr.bf16.mxu0 0
      %1647 = vmatpush1.bf16.xpose.msra.mxu0 0
      %1648 = vmatprep.subr.bf16.mxu0 0
      %1649 = vmatpush1.bf16.xpose.msra.mxu0 0
      %1650 = vmatprep.subr.bf16.mxu0 0
      %1651 = vmatpush1.bf16.xpose.msra.mxu0 0
      %1652 = vmatprep.subr.bf16.mxu0 0
      %1653 = vmatpush1.bf16.xpose.msra.mxu0 0
      %1654 = vmatprep.subr.bf16.mxu0 0
      %1655 = vmatpush1.bf16.xpose.msra.mxu0 0
      %1656 = vmatprep.subr.bf16.mxu0 0
      %1657 = vmatpush1.bf16.xpose.msra.mxu0 0
      %1658 = vmatprep.subr.bf16.mxu0 0
      %1659 = vmatpush1.bf16.xpose.msra.mxu0 0
      %1660 = vmatprep.subr.bf16.mxu0 0
      %1661 = vmatpush1.bf16.xpose.msra.mxu0 0
      %1662 = vmatprep.subr.bf16.mxu0 0
      %1663 = vmatpush1.bf16.xpose.msra.mxu0 0
      %1664 = vmatprep.subr.bf16.mxu0 0
      %1665 = vmatpush1.bf16.xpose.msra.mxu0 0
      %1666 = vmatprep.subr.bf16.mxu0 0
      %1667 = vmatpush1.bf16.xpose.msra.mxu0 0
      %1668 = vmatprep.mubr.bf16.mxu0 0
      %1669 = vmatmul.mubr.bf16.gmra.mrb[0].mxu0 %v1631
      %v1670 = vpop.f32.mrb[0].mxu0
      %v1671 = vadd.f32 0.0, %v1670
      %v1672 = vpop.f32.mrb[0].mxu0
      %v1673 = vpop.f32.mrb[0].mxu0
      %v1674 = vadd.f32 0.0, %v1673
      %v1675 = vpop.f32.mrb[0].mxu0
      %1676 = vdwg.mxu0
      %1678 = vrot.lane.b32.xlu0 %v926, 96
      %v1679 = vpop.permute.xlu0 %1678
      %v1681 = vsel %vm979, %v926, 0
      %v1684 = vsel %vm979, %v1679, 0
      %1686 = vmatprep.subr.bf16.mxu0 0
      %1687 = vmatpush1.bf16.xpose.msra.mxu0 %v1684
      %1688 = vmatprep.subr.bf16.mxu0 0
      %1689 = vmatpush1.bf16.xpose.msra.mxu0 0
      %1690 = vmatprep.subr.bf16.mxu0 0
      %1691 = vmatpush1.bf16.xpose.msra.mxu0 0
      %1692 = vmatprep.subr.bf16.mxu0 0
      %1693 = vmatpush1.bf16.xpose.msra.mxu0 0
      %1694 = vmatprep.subr.bf16.mxu0 0
      %1695 = vmatpush1.bf16.xpose.msra.mxu0 0
      %1696 = vmatprep.subr.bf16.mxu0 0
      %1697 = vmatpush1.bf16.xpose.msra.mxu0 0
      %1698 = vmatprep.subr.bf16.mxu0 0
      %1699 = vmatpush1.bf16.xpose.msra.mxu0 0
      %1700 = vmatprep.subr.bf16.mxu0 0
      %1701 = vmatpush1.bf16.xpose.msra.mxu0 0
      %1702 = vmatprep.subr.bf16.mxu0 0
      %1703 = vmatpush1.bf16.xpose.msra.mxu0 0
      %1704 = vmatprep.subr.bf16.mxu0 0
      %1705 = vmatpush1.bf16.xpose.msra.mxu0 0
      %1706 = vmatprep.subr.bf16.mxu0 0
      %1707 = vmatpush1.bf16.xpose.msra.mxu0 0
      %1708 = vmatprep.subr.bf16.mxu0 0
      %1709 = vmatpush1.bf16.xpose.msra.mxu0 0
      %1710 = vmatprep.subr.bf16.mxu0 0
      %1711 = vmatpush1.bf16.xpose.msra.mxu0 0
      %1712 = vmatprep.subr.bf16.mxu0 0
      %1713 = vmatpush1.bf16.xpose.msra.mxu0 0
      %1714 = vmatprep.subr.bf16.mxu0 0
      %1715 = vmatpush1.bf16.xpose.msra.mxu0 0
      %1716 = vmatprep.subr.bf16.mxu0 0
      %1717 = vmatpush1.bf16.xpose.msra.mxu0 0
      %1718 = vmatprep.mubr.bf16.mxu0 0
      %1719 = vmatmul.mubr.bf16.gmra.mrb[0].mxu0 %v1681
      %v1720 = vpop.f32.mrb[0].mxu0
      %v1721 = vadd.f32 0.0, %v1720
      %v1722 = vpop.f32.mrb[0].mxu0
      %v1723 = vpop.f32.mrb[0].mxu0
      %v1724 = vadd.f32 0.0, %v1723
      %v1725 = vpop.f32.mrb[0].mxu0
      %1726 = vdwg.mxu0
      %1728 = vrot.lane.b32.xlu0 %v927, 96
      %v1729 = vpop.permute.xlu0 %1728
      %v1731 = vsel %vm979, %v927, 0
      %v1734 = vsel %vm979, %v1729, 0
      %1736 = vmatprep.subr.bf16.mxu0 0
      %1737 = vmatpush1.bf16.xpose.msra.mxu0 %v1734
      %1738 = vmatprep.subr.bf16.mxu0 0
      %1739 = vmatpush1.bf16.xpose.msra.mxu0 0
      %1740 = vmatprep.subr.bf16.mxu0 0
      %1741 = vmatpush1.bf16.xpose.msra.mxu0 0
      %1742 = vmatprep.subr.bf16.mxu0 0
      %1743 = vmatpush1.bf16.xpose.msra.mxu0 0
      %1744 = vmatprep.subr.bf16.mxu0 0
      %1745 = vmatpush1.bf16.xpose.msra.mxu0 0
      %1746 = vmatprep.subr.bf16.mxu0 0
      %1747 = vmatpush1.bf16.xpose.msra.mxu0 0
      %1748 = vmatprep.subr.bf16.mxu0 0
      %1749 = vmatpush1.bf16.xpose.msra.mxu0 0
      %1750 = vmatprep.subr.bf16.mxu0 0
      %1751 = vmatpush1.bf16.xpose.msra.mxu0 0
      %1752 = vmatprep.subr.bf16.mxu0 0
      %1753 = vmatpush1.bf16.xpose.msra.mxu0 0
      %1754 = vmatprep.subr.bf16.mxu0 0
      %1755 = vmatpush1.bf16.xpose.msra.mxu0 0
      %1756 = vmatprep.subr.bf16.mxu0 0
      %1757 = vmatpush1.bf16.xpose.msra.mxu0 0
      %1758 = vmatprep.subr.bf16.mxu0 0
      %1759 = vmatpush1.bf16.xpose.msra.mxu0 0
      %1760 = vmatprep.subr.bf16.mxu0 0
      %1761 = vmatpush1.bf16.xpose.msra.mxu0 0
      %1762 = vmatprep.subr.bf16.mxu0 0
      %1763 = vmatpush1.bf16.xpose.msra.mxu0 0
      %1764 = vmatprep.subr.bf16.mxu0 0
      %1765 = vmatpush1.bf16.xpose.msra.mxu0 0
      %1766 = vmatprep.subr.bf16.mxu0 0
      %1767 = vmatpush1.bf16.xpose.msra.mxu0 0
      %1768 = vmatprep.mubr.bf16.mxu0 0
      %1769 = vmatmul.mubr.bf16.gmra.mrb[0].mxu0 %v1731
      %v1770 = vpop.f32.mrb[0].mxu0
      %v1771 = vadd.f32 0.0, %v1770
      %v1772 = vpop.f32.mrb[0].mxu0
      %v1773 = vpop.f32.mrb[0].mxu0
      %v1774 = vadd.f32 0.0, %v1773
      %v1775 = vpop.f32.mrb[0].mxu0
      %1776 = vdwg.mxu0
      %1778 = vrot.lane.b32.xlu0 %v928, 96
      %v1779 = vpop.permute.xlu0 %1778
      %v1781 = vsel %vm979, %v928, 0
      %v1784 = vsel %vm979, %v1779, 0
      %1786 = vmatprep.subr.bf16.mxu0 0
      %1787 = vmatpush1.bf16.xpose.msra.mxu0 %v1784
      %1788 = vmatprep.subr.bf16.mxu0 0
      %1789 = vmatpush1.bf16.xpose.msra.mxu0 0
      %1790 = vmatprep.subr.bf16.mxu0 0
      %1791 = vmatpush1.bf16.xpose.msra.mxu0 0
      %1792 = vmatprep.subr.bf16.mxu0 0
      %1793 = vmatpush1.bf16.xpose.msra.mxu0 0
      %1794 = vmatprep.subr.bf16.mxu0 0
      %1795 = vmatpush1.bf16.xpose.msra.mxu0 0
      %1796 = vmatprep.subr.bf16.mxu0 0
      %1797 = vmatpush1.bf16.xpose.msra.mxu0 0
      %1798 = vmatprep.subr.bf16.mxu0 0
      %1799 = vmatpush1.bf16.xpose.msra.mxu0 0
      %1800 = vmatprep.subr.bf16.mxu0 0
      %1801 = vmatpush1.bf16.xpose.msra.mxu0 0
      %1802 = vmatprep.subr.bf16.mxu0 0
      %1803 = vmatpush1.bf16.xpose.msra.mxu0 0
      %1804 = vmatprep.subr.bf16.mxu0 0
      %1805 = vmatpush1.bf16.xpose.msra.mxu0 0
      %1806 = vmatprep.subr.bf16.mxu0 0
      %1807 = vmatpush1.bf16.xpose.msra.mxu0 0
      %1808 = vmatprep.subr.bf16.mxu0 0
      %1809 = vmatpush1.bf16.xpose.msra.mxu0 0
      %1810 = vmatprep.subr.bf16.mxu0 0
      %1811 = vmatpush1.bf16.xpose.msra.mxu0 0
      %1812 = vmatprep.subr.bf16.mxu0 0
      %1813 = vmatpush1.bf16.xpose.msra.mxu0 0
      %1814 = vmatprep.subr.bf16.mxu0 0
      %1815 = vmatpush1.bf16.xpose.msra.mxu0 0
      %1816 = vmatprep.subr.bf16.mxu0 0
      %1817 = vmatpush1.bf16.xpose.msra.mxu0 0
      %1818 = vmatprep.mubr.bf16.mxu0 0
      %1819 = vmatmul.mubr.bf16.gmra.mrb[0].mxu0 %v1781
      %v1820 = vpop.f32.mrb[0].mxu0
      %v1821 = vadd.f32 0.0, %v1820
      %v1822 = vpop.f32.mrb[0].mxu0
      %v1823 = vpop.f32.mrb[0].mxu0
      %v1824 = vadd.f32 0.0, %v1823
      %v1825 = vpop.f32.mrb[0].mxu0
      %1826 = vdwg.mxu0
      %1828 = vrot.lane.b32.xlu0 %v929, 96
      %v1829 = vpop.permute.xlu0 %1828
      %v1831 = vsel %vm979, %v929, 0
      %v1834 = vsel %vm979, %v1829, 0
      %1836 = vmatprep.subr.bf16.mxu0 0
      %1837 = vmatpush1.bf16.xpose.msra.mxu0 %v1834
      %1838 = vmatprep.subr.bf16.mxu0 0
      %1839 = vmatpush1.bf16.xpose.msra.mxu0 0
      %1840 = vmatprep.subr.bf16.mxu0 0
      %1841 = vmatpush1.bf16.xpose.msra.mxu0 0
      %1842 = vmatprep.subr.bf16.mxu0 0
      %1843 = vmatpush1.bf16.xpose.msra.mxu0 0
      %1844 = vmatprep.subr.bf16.mxu0 0
      %1845 = vmatpush1.bf16.xpose.msra.mxu0 0
      %1846 = vmatprep.subr.bf16.mxu0 0
      %1847 = vmatpush1.bf16.xpose.msra.mxu0 0
      %1848 = vmatprep.subr.bf16.mxu0 0
      %1849 = vmatpush1.bf16.xpose.msra.mxu0 0
      %1850 = vmatprep.subr.bf16.mxu0 0
      %1851 = vmatpush1.bf16.xpose.msra.mxu0 0
      %1852 = vmatprep.subr.bf16.mxu0 0
      %1853 = vmatpush1.bf16.xpose.msra.mxu0 0
      %1854 = vmatprep.subr.bf16.mxu0 0
      %1855 = vmatpush1.bf16.xpose.msra.mxu0 0
      %1856 = vmatprep.subr.bf16.mxu0 0
      %1857 = vmatpush1.bf16.xpose.msra.mxu0 0
      %1858 = vmatprep.subr.bf16.mxu0 0
      %1859 = vmatpush1.bf16.xpose.msra.mxu0 0
      %1860 = vmatprep.subr.bf16.mxu0 0
      %1861 = vmatpush1.bf16.xpose.msra.mxu0 0
      %1862 = vmatprep.subr.bf16.mxu0 0
      %1863 = vmatpush1.bf16.xpose.msra.mxu0 0
      %1864 = vmatprep.subr.bf16.mxu0 0
      %1865 = vmatpush1.bf16.xpose.msra.mxu0 0
      %1866 = vmatprep.subr.bf16.mxu0 0
      %1867 = vmatpush1.bf16.xpose.msra.mxu0 0
      %1868 = vmatprep.mubr.bf16.mxu0 0
      %1869 = vmatmul.mubr.bf16.gmra.mrb[0].mxu0 %v1831
      %v1870 = vpop.f32.mrb[0].mxu0
      %v1871 = vadd.f32 0.0, %v1870
      %v1872 = vpop.f32.mrb[0].mxu0
      %v1873 = vpop.f32.mrb[0].mxu0
      %v1874 = vadd.f32 0.0, %v1873
      %v1875 = vpop.f32.mrb[0].mxu0
      %1876 = vdwg.mxu0
      %1878 = vrot.lane.b32.xlu0 %v930, 96
      %v1879 = vpop.permute.xlu0 %1878
      %v1881 = vsel %vm979, %v930, 0
      %v1884 = vsel %vm979, %v1879, 0
      %1886 = vmatprep.subr.bf16.mxu0 0
      %1887 = vmatpush1.bf16.xpose.msra.mxu0 %v1884
      %1888 = vmatprep.subr.bf16.mxu0 0
      %1889 = vmatpush1.bf16.xpose.msra.mxu0 0
      %1890 = vmatprep.subr.bf16.mxu0 0
      %1891 = vmatpush1.bf16.xpose.msra.mxu0 0
      %1892 = vmatprep.subr.bf16.mxu0 0
      %1893 = vmatpush1.bf16.xpose.msra.mxu0 0
      %1894 = vmatprep.subr.bf16.mxu0 0
      %1895 = vmatpush1.bf16.xpose.msra.mxu0 0
      %1896 = vmatprep.subr.bf16.mxu0 0
      %1897 = vmatpush1.bf16.xpose.msra.mxu0 0
      %1898 = vmatprep.subr.bf16.mxu0 0
      %1899 = vmatpush1.bf16.xpose.msra.mxu0 0
      %1900 = vmatprep.subr.bf16.mxu0 0
      %1901 = vmatpush1.bf16.xpose.msra.mxu0 0
      %1902 = vmatprep.subr.bf16.mxu0 0
      %1903 = vmatpush1.bf16.xpose.msra.mxu0 0
      %1904 = vmatprep.subr.bf16.mxu0 0
      %1905 = vmatpush1.bf16.xpose.msra.mxu0 0
      %1906 = vmatprep.subr.bf16.mxu0 0
      %1907 = vmatpush1.bf16.xpose.msra.mxu0 0
      %1908 = vmatprep.subr.bf16.mxu0 0
      %1909 = vmatpush1.bf16.xpose.msra.mxu0 0
      %1910 = vmatprep.subr.bf16.mxu0 0
      %1911 = vmatpush1.bf16.xpose.msra.mxu0 0
      %1912 = vmatprep.subr.bf16.mxu0 0
      %1913 = vmatpush1.bf16.xpose.msra.mxu0 0
      %1914 = vmatprep.subr.bf16.mxu0 0
      %1915 = vmatpush1.bf16.xpose.msra.mxu0 0
      %1916 = vmatprep.subr.bf16.mxu0 0
      %1917 = vmatpush1.bf16.xpose.msra.mxu0 0
      %1918 = vmatprep.mubr.bf16.mxu0 0
      %1919 = vmatmul.mubr.bf16.gmra.mrb[0].mxu0 %v1881
      %v1920 = vpop.f32.mrb[0].mxu0
      %v1921 = vadd.f32 0.0, %v1920
      %v1922 = vpop.f32.mrb[0].mxu0
      %v1923 = vpop.f32.mrb[0].mxu0
      %v1924 = vadd.f32 0.0, %v1923
      %v1925 = vpop.f32.mrb[0].mxu0
      %1926 = vdwg.mxu0
      %1928 = vrot.lane.b32.xlu0 %v931, 96
      %v1929 = vpop.permute.xlu0 %1928
      %v1931 = vsel %vm979, %v931, 0
      %v1934 = vsel %vm979, %v1929, 0
      %1936 = vmatprep.subr.bf16.mxu0 0
      %1937 = vmatpush1.bf16.xpose.msra.mxu0 %v1934
      %1938 = vmatprep.subr.bf16.mxu0 0
      %1939 = vmatpush1.bf16.xpose.msra.mxu0 0
      %1940 = vmatprep.subr.bf16.mxu0 0
      %1941 = vmatpush1.bf16.xpose.msra.mxu0 0
      %1942 = vmatprep.subr.bf16.mxu0 0
      %1943 = vmatpush1.bf16.xpose.msra.mxu0 0
      %1944 = vmatprep.subr.bf16.mxu0 0
      %1945 = vmatpush1.bf16.xpose.msra.mxu0 0
      %1946 = vmatprep.subr.bf16.mxu0 0
      %1947 = vmatpush1.bf16.xpose.msra.mxu0 0
      %1948 = vmatprep.subr.bf16.mxu0 0
      %1949 = vmatpush1.bf16.xpose.msra.mxu0 0
      %1950 = vmatprep.subr.bf16.mxu0 0
      %1951 = vmatpush1.bf16.xpose.msra.mxu0 0
      %1952 = vmatprep.subr.bf16.mxu0 0
      %1953 = vmatpush1.bf16.xpose.msra.mxu0 0
      %1954 = vmatprep.subr.bf16.mxu0 0
      %1955 = vmatpush1.bf16.xpose.msra.mxu0 0
      %1956 = vmatprep.subr.bf16.mxu0 0
      %1957 = vmatpush1.bf16.xpose.msra.mxu0 0
      %1958 = vmatprep.subr.bf16.mxu0 0
      %1959 = vmatpush1.bf16.xpose.msra.mxu0 0
      %1960 = vmatprep.subr.bf16.mxu0 0
      %1961 = vmatpush1.bf16.xpose.msra.mxu0 0
      %1962 = vmatprep.subr.bf16.mxu0 0
      %1963 = vmatpush1.bf16.xpose.msra.mxu0 0
      %1964 = vmatprep.subr.bf16.mxu0 0
      %1965 = vmatpush1.bf16.xpose.msra.mxu0 0
      %1966 = vmatprep.subr.bf16.mxu0 0
      %1967 = vmatpush1.bf16.xpose.msra.mxu0 0
      %1968 = vmatprep.mubr.bf16.mxu0 0
      %1969 = vmatmul.mubr.bf16.gmra.mrb[0].mxu0 %v1931
      %v1970 = vpop.f32.mrb[0].mxu0
      %v1971 = vadd.f32 0.0, %v1970
      %v1972 = vpop.f32.mrb[0].mxu0
      %v1973 = vpop.f32.mrb[0].mxu0
      %v1974 = vadd.f32 0.0, %v1973
      %v1975 = vpop.f32.mrb[0].mxu0
      %1976 = vdwg.mxu0
      %1978 = vrot.lane.b32.xlu0 %v932, 96
      %v1979 = vpop.permute.xlu0 %1978
      %v1981 = vsel %vm979, %v932, 0
      %v1984 = vsel %vm979, %v1979, 0
      %1986 = vmatprep.subr.bf16.mxu0 0
      %1987 = vmatpush1.bf16.xpose.msra.mxu0 %v1984
      %1988 = vmatprep.subr.bf16.mxu0 0
      %1989 = vmatpush1.bf16.xpose.msra.mxu0 0
      %1990 = vmatprep.subr.bf16.mxu0 0
      %1991 = vmatpush1.bf16.xpose.msra.mxu0 0
      %1992 = vmatprep.subr.bf16.mxu0 0
      %1993 = vmatpush1.bf16.xpose.msra.mxu0 0
      %1994 = vmatprep.subr.bf16.mxu0 0
      %1995 = vmatpush1.bf16.xpose.msra.mxu0 0
      %1996 = vmatprep.subr.bf16.mxu0 0
      %1997 = vmatpush1.bf16.xpose.msra.mxu0 0
      %1998 = vmatprep.subr.bf16.mxu0 0
      %1999 = vmatpush1.bf16.xpose.msra.mxu0 0
      %2000 = vmatprep.subr.bf16.mxu0 0
      %2001 = vmatpush1.bf16.xpose.msra.mxu0 0
      %2002 = vmatprep.subr.bf16.mxu0 0
      %2003 = vmatpush1.bf16.xpose.msra.mxu0 0
      %2004 = vmatprep.subr.bf16.mxu0 0
      %2005 = vmatpush1.bf16.xpose.msra.mxu0 0
      %2006 = vmatprep.subr.bf16.mxu0 0
      %2007 = vmatpush1.bf16.xpose.msra.mxu0 0
      %2008 = vmatprep.subr.bf16.mxu0 0
      %2009 = vmatpush1.bf16.xpose.msra.mxu0 0
      %2010 = vmatprep.subr.bf16.mxu0 0
      %2011 = vmatpush1.bf16.xpose.msra.mxu0 0
      %2012 = vmatprep.subr.bf16.mxu0 0
      %2013 = vmatpush1.bf16.xpose.msra.mxu0 0
      %2014 = vmatprep.subr.bf16.mxu0 0
      %2015 = vmatpush1.bf16.xpose.msra.mxu0 0
      %2016 = vmatprep.subr.bf16.mxu0 0
      %2017 = vmatpush1.bf16.xpose.msra.mxu0 0
      %2018 = vmatprep.mubr.bf16.mxu0 0
      %2019 = vmatmul.mubr.bf16.gmra.mrb[0].mxu0 %v1981
      %v2020 = vpop.f32.mrb[0].mxu0
      %v2021 = vadd.f32 0.0, %v2020
      %v2022 = vpop.f32.mrb[0].mxu0
      %v2023 = vpop.f32.mrb[0].mxu0
      %v2024 = vadd.f32 0.0, %v2023
      %v2025 = vpop.f32.mrb[0].mxu0
      %2026 = vdwg.mxu0
      %2028 = vrot.lane.b32.xlu0 %v933, 96
      %v2029 = vpop.permute.xlu0 %2028
      %v2031 = vsel %vm979, %v933, 0
      %v2034 = vsel %vm979, %v2029, 0
      %2036 = vmatprep.subr.bf16.mxu0 0
      %2037 = vmatpush1.bf16.xpose.msra.mxu0 %v2034
      %2038 = vmatprep.subr.bf16.mxu0 0
      %2039 = vmatpush1.bf16.xpose.msra.mxu0 0
      %2040 = vmatprep.subr.bf16.mxu0 0
      %2041 = vmatpush1.bf16.xpose.msra.mxu0 0
      %2042 = vmatprep.subr.bf16.mxu0 0
      %2043 = vmatpush1.bf16.xpose.msra.mxu0 0
      %2044 = vmatprep.subr.bf16.mxu0 0
      %2045 = vmatpush1.bf16.xpose.msra.mxu0 0
      %2046 = vmatprep.subr.bf16.mxu0 0
      %2047 = vmatpush1.bf16.xpose.msra.mxu0 0
      %2048 = vmatprep.subr.bf16.mxu0 0
      %2049 = vmatpush1.bf16.xpose.msra.mxu0 0
      %2050 = vmatprep.subr.bf16.mxu0 0
      %2051 = vmatpush1.bf16.xpose.msra.mxu0 0
      %2052 = vmatprep.subr.bf16.mxu0 0
      %2053 = vmatpush1.bf16.xpose.msra.mxu0 0
      %2054 = vmatprep.subr.bf16.mxu0 0
      %2055 = vmatpush1.bf16.xpose.msra.mxu0 0
      %2056 = vmatprep.subr.bf16.mxu0 0
      %2057 = vmatpush1.bf16.xpose.msra.mxu0 0
      %2058 = vmatprep.subr.bf16.mxu0 0
      %2059 = vmatpush1.bf16.xpose.msra.mxu0 0
      %2060 = vmatprep.subr.bf16.mxu0 0
      %2061 = vmatpush1.bf16.xpose.msra.mxu0 0
      %2062 = vmatprep.subr.bf16.mxu0 0
      %2063 = vmatpush1.bf16.xpose.msra.mxu0 0
      %2064 = vmatprep.subr.bf16.mxu0 0
      %2065 = vmatpush1.bf16.xpose.msra.mxu0 0
      %2066 = vmatprep.subr.bf16.mxu0 0
      %2067 = vmatpush1.bf16.xpose.msra.mxu0 0
      %2068 = vmatprep.mubr.bf16.mxu0 0
      %2069 = vmatmul.mubr.bf16.gmra.mrb[0].mxu0 %v2031
      %v2070 = vpop.f32.mrb[0].mxu0
      %v2071 = vadd.f32 0.0, %v2070
      %v2072 = vpop.f32.mrb[0].mxu0
      %v2073 = vpop.f32.mrb[0].mxu0
      %v2074 = vadd.f32 0.0, %v2073
      %v2075 = vpop.f32.mrb[0].mxu0
      %2076 = vdwg.mxu0
      %2078 = vrot.lane.b32.xlu0 %v934, 96
      %v2079 = vpop.permute.xlu0 %2078
      %v2081 = vsel %vm979, %v934, 0
      %v2084 = vsel %vm979, %v2079, 0
      %2086 = vmatprep.subr.bf16.mxu0 0
      %2087 = vmatpush1.bf16.xpose.msra.mxu0 %v2084
      %2088 = vmatprep.subr.bf16.mxu0 0
      %2089 = vmatpush1.bf16.xpose.msra.mxu0 0
      %2090 = vmatprep.subr.bf16.mxu0 0
      %2091 = vmatpush1.bf16.xpose.msra.mxu0 0
      %2092 = vmatprep.subr.bf16.mxu0 0
      %2093 = vmatpush1.bf16.xpose.msra.mxu0 0
      %2094 = vmatprep.subr.bf16.mxu0 0
      %2095 = vmatpush1.bf16.xpose.msra.mxu0 0
      %2096 = vmatprep.subr.bf16.mxu0 0
      %2097 = vmatpush1.bf16.xpose.msra.mxu0 0
      %2098 = vmatprep.subr.bf16.mxu0 0
      %2099 = vmatpush1.bf16.xpose.msra.mxu0 0
      %2100 = vmatprep.subr.bf16.mxu0 0
      %2101 = vmatpush1.bf16.xpose.msra.mxu0 0
      %2102 = vmatprep.subr.bf16.mxu0 0
      %2103 = vmatpush1.bf16.xpose.msra.mxu0 0
      %2104 = vmatprep.subr.bf16.mxu0 0
      %2105 = vmatpush1.bf16.xpose.msra.mxu0 0
      %2106 = vmatprep.subr.bf16.mxu0 0
      %2107 = vmatpush1.bf16.xpose.msra.mxu0 0
      %2108 = vmatprep.subr.bf16.mxu0 0
      %2109 = vmatpush1.bf16.xpose.msra.mxu0 0
      %2110 = vmatprep.subr.bf16.mxu0 0
      %2111 = vmatpush1.bf16.xpose.msra.mxu0 0
      %2112 = vmatprep.subr.bf16.mxu0 0
      %2113 = vmatpush1.bf16.xpose.msra.mxu0 0
      %2114 = vmatprep.subr.bf16.mxu0 0
      %2115 = vmatpush1.bf16.xpose.msra.mxu0 0
      %2116 = vmatprep.subr.bf16.mxu0 0
      %2117 = vmatpush1.bf16.xpose.msra.mxu0 0
      %2118 = vmatprep.mubr.bf16.mxu0 0
      %2119 = vmatmul.mubr.bf16.gmra.mrb[0].mxu0 %v2081
      %v2120 = vpop.f32.mrb[0].mxu0
      %v2121 = vadd.f32 0.0, %v2120
      %v2122 = vpop.f32.mrb[0].mxu0
      %v2123 = vpop.f32.mrb[0].mxu0
      %v2124 = vadd.f32 0.0, %v2123
      %v2125 = vpop.f32.mrb[0].mxu0
      %2126 = vdwg.mxu0
      %2128 = vrot.lane.b32.xlu0 %v935, 96
      %v2129 = vpop.permute.xlu0 %2128
      %v2131 = vsel %vm979, %v935, 0
      %v2134 = vsel %vm979, %v2129, 0
      %2136 = vmatprep.subr.bf16.mxu0 0
      %2137 = vmatpush1.bf16.xpose.msra.mxu0 %v2134
      %2138 = vmatprep.subr.bf16.mxu0 0
      %2139 = vmatpush1.bf16.xpose.msra.mxu0 0
      %2140 = vmatprep.subr.bf16.mxu0 0
      %2141 = vmatpush1.bf16.xpose.msra.mxu0 0
      %2142 = vmatprep.subr.bf16.mxu0 0
      %2143 = vmatpush1.bf16.xpose.msra.mxu0 0
      %2144 = vmatprep.subr.bf16.mxu0 0
      %2145 = vmatpush1.bf16.xpose.msra.mxu0 0
      %2146 = vmatprep.subr.bf16.mxu0 0
      %2147 = vmatpush1.bf16.xpose.msra.mxu0 0
      %2148 = vmatprep.subr.bf16.mxu0 0
      %2149 = vmatpush1.bf16.xpose.msra.mxu0 0
      %2150 = vmatprep.subr.bf16.mxu0 0
      %2151 = vmatpush1.bf16.xpose.msra.mxu0 0
      %2152 = vmatprep.subr.bf16.mxu0 0
      %2153 = vmatpush1.bf16.xpose.msra.mxu0 0
      %2154 = vmatprep.subr.bf16.mxu0 0
      %2155 = vmatpush1.bf16.xpose.msra.mxu0 0
      %2156 = vmatprep.subr.bf16.mxu0 0
      %2157 = vmatpush1.bf16.xpose.msra.mxu0 0
      %2158 = vmatprep.subr.bf16.mxu0 0
      %2159 = vmatpush1.bf16.xpose.msra.mxu0 0
      %2160 = vmatprep.subr.bf16.mxu0 0
      %2161 = vmatpush1.bf16.xpose.msra.mxu0 0
      %2162 = vmatprep.subr.bf16.mxu0 0
      %2163 = vmatpush1.bf16.xpose.msra.mxu0 0
      %2164 = vmatprep.subr.bf16.mxu0 0
      %2165 = vmatpush1.bf16.xpose.msra.mxu0 0
      %2166 = vmatprep.subr.bf16.mxu0 0
      %2167 = vmatpush1.bf16.xpose.msra.mxu0 0
      %2168 = vmatprep.mubr.bf16.mxu0 0
      %2169 = vmatmul.mubr.bf16.gmra.mrb[0].mxu0 %v2131
      %v2170 = vpop.f32.mrb[0].mxu0
      %v2171 = vadd.f32 0.0, %v2170
      %v2172 = vpop.f32.mrb[0].mxu0
      %v2173 = vpop.f32.mrb[0].mxu0
      %v2174 = vadd.f32 0.0, %v2173
      %v2175 = vpop.f32.mrb[0].mxu0
      %2176 = vdwg.mxu0
      %2178 = vrot.lane.b32.xlu0 %v936, 96
      %v2179 = vpop.permute.xlu0 %2178
      %v2181 = vsel %vm979, %v936, 0
      %v2184 = vsel %vm979, %v2179, 0
      %2186 = vmatprep.subr.bf16.mxu0 0
      %2187 = vmatpush1.bf16.xpose.msra.mxu0 %v2184
      %2188 = vmatprep.subr.bf16.mxu0 0
      %2189 = vmatpush1.bf16.xpose.msra.mxu0 0
      %2190 = vmatprep.subr.bf16.mxu0 0
      %2191 = vmatpush1.bf16.xpose.msra.mxu0 0
      %2192 = vmatprep.subr.bf16.mxu0 0
      %2193 = vmatpush1.bf16.xpose.msra.mxu0 0
      %2194 = vmatprep.subr.bf16.mxu0 0
      %2195 = vmatpush1.bf16.xpose.msra.mxu0 0
      %2196 = vmatprep.subr.bf16.mxu0 0
      %2197 = vmatpush1.bf16.xpose.msra.mxu0 0
      %2198 = vmatprep.subr.bf16.mxu0 0
      %2199 = vmatpush1.bf16.xpose.msra.mxu0 0
      %2200 = vmatprep.subr.bf16.mxu0 0
      %2201 = vmatpush1.bf16.xpose.msra.mxu0 0
      %2202 = vmatprep.subr.bf16.mxu0 0
      %2203 = vmatpush1.bf16.xpose.msra.mxu0 0
      %2204 = vmatprep.subr.bf16.mxu0 0
      %2205 = vmatpush1.bf16.xpose.msra.mxu0 0
      %2206 = vmatprep.subr.bf16.mxu0 0
      %2207 = vmatpush1.bf16.xpose.msra.mxu0 0
      %2208 = vmatprep.subr.bf16.mxu0 0
      %2209 = vmatpush1.bf16.xpose.msra.mxu0 0
      %2210 = vmatprep.subr.bf16.mxu0 0
      %2211 = vmatpush1.bf16.xpose.msra.mxu0 0
      %2212 = vmatprep.subr.bf16.mxu0 0
      %2213 = vmatpush1.bf16.xpose.msra.mxu0 0
      %2214 = vmatprep.subr.bf16.mxu0 0
      %2215 = vmatpush1.bf16.xpose.msra.mxu0 0
      %2216 = vmatprep.subr.bf16.mxu0 0
      %2217 = vmatpush1.bf16.xpose.msra.mxu0 0
      %2218 = vmatprep.mubr.bf16.mxu0 0
      %2219 = vmatmul.mubr.bf16.gmra.mrb[0].mxu0 %v2181
      %v2220 = vpop.f32.mrb[0].mxu0
      %v2221 = vadd.f32 0.0, %v2220
      %v2222 = vpop.f32.mrb[0].mxu0
      %v2223 = vpop.f32.mrb[0].mxu0
      %v2224 = vadd.f32 0.0, %v2223
      %v2225 = vpop.f32.mrb[0].mxu0
      %2226 = vdwg.mxu0
      %2228 = vrot.lane.b32.xlu0 %v937, 96
      %v2229 = vpop.permute.xlu0 %2228
      %v2231 = vsel %vm979, %v937, 0
      %v2234 = vsel %vm979, %v2229, 0
      %2236 = vmatprep.subr.bf16.mxu0 0
      %2237 = vmatpush1.bf16.xpose.msra.mxu0 %v2234
      %2238 = vmatprep.subr.bf16.mxu0 0
      %2239 = vmatpush1.bf16.xpose.msra.mxu0 0
      %2240 = vmatprep.subr.bf16.mxu0 0
      %2241 = vmatpush1.bf16.xpose.msra.mxu0 0
      %2242 = vmatprep.subr.bf16.mxu0 0
      %2243 = vmatpush1.bf16.xpose.msra.mxu0 0
      %2244 = vmatprep.subr.bf16.mxu0 0
      %2245 = vmatpush1.bf16.xpose.msra.mxu0 0
      %2246 = vmatprep.subr.bf16.mxu0 0
      %2247 = vmatpush1.bf16.xpose.msra.mxu0 0
      %2248 = vmatprep.subr.bf16.mxu0 0
      %2249 = vmatpush1.bf16.xpose.msra.mxu0 0
      %2250 = vmatprep.subr.bf16.mxu0 0
      %2251 = vmatpush1.bf16.xpose.msra.mxu0 0
      %2252 = vmatprep.subr.bf16.mxu0 0
      %2253 = vmatpush1.bf16.xpose.msra.mxu0 0
      %2254 = vmatprep.subr.bf16.mxu0 0
      %2255 = vmatpush1.bf16.xpose.msra.mxu0 0
      %2256 = vmatprep.subr.bf16.mxu0 0
      %2257 = vmatpush1.bf16.xpose.msra.mxu0 0
      %2258 = vmatprep.subr.bf16.mxu0 0
      %2259 = vmatpush1.bf16.xpose.msra.mxu0 0
      %2260 = vmatprep.subr.bf16.mxu0 0
      %2261 = vmatpush1.bf16.xpose.msra.mxu0 0
      %2262 = vmatprep.subr.bf16.mxu0 0
      %2263 = vmatpush1.bf16.xpose.msra.mxu0 0
      %2264 = vmatprep.subr.bf16.mxu0 0
      %2265 = vmatpush1.bf16.xpose.msra.mxu0 0
      %2266 = vmatprep.subr.bf16.mxu0 0
      %2267 = vmatpush1.bf16.xpose.msra.mxu0 0
      %2268 = vmatprep.mubr.bf16.mxu0 0
      %2269 = vmatmul.mubr.bf16.gmra.mrb[0].mxu0 %v2231
      %v2270 = vpop.f32.mrb[0].mxu0
      %v2271 = vadd.f32 0.0, %v2270
      %v2272 = vpop.f32.mrb[0].mxu0
      %v2273 = vpop.f32.mrb[0].mxu0
      %v2274 = vadd.f32 0.0, %v2273
      %v2275 = vpop.f32.mrb[0].mxu0
      %2276 = vdwg.mxu0
      %2278 = vrot.lane.b32.xlu0 %v938, 96
      %v2279 = vpop.permute.xlu0 %2278
      %v2281 = vsel %vm979, %v938, 0
      %v2284 = vsel %vm979, %v2279, 0
      %2286 = vmatprep.subr.bf16.mxu0 0
      %2287 = vmatpush1.bf16.xpose.msra.mxu0 %v2284
      %2288 = vmatprep.subr.bf16.mxu0 0
      %2289 = vmatpush1.bf16.xpose.msra.mxu0 0
      %2290 = vmatprep.subr.bf16.mxu0 0
      %2291 = vmatpush1.bf16.xpose.msra.mxu0 0
      %2292 = vmatprep.subr.bf16.mxu0 0
      %2293 = vmatpush1.bf16.xpose.msra.mxu0 0
      %2294 = vmatprep.subr.bf16.mxu0 0
      %2295 = vmatpush1.bf16.xpose.msra.mxu0 0
      %2296 = vmatprep.subr.bf16.mxu0 0
      %2297 = vmatpush1.bf16.xpose.msra.mxu0 0
      %2298 = vmatprep.subr.bf16.mxu0 0
      %2299 = vmatpush1.bf16.xpose.msra.mxu0 0
      %2300 = vmatprep.subr.bf16.mxu0 0
      %2301 = vmatpush1.bf16.xpose.msra.mxu0 0
      %2302 = vmatprep.subr.bf16.mxu0 0
      %2303 = vmatpush1.bf16.xpose.msra.mxu0 0
      %2304 = vmatprep.subr.bf16.mxu0 0
      %2305 = vmatpush1.bf16.xpose.msra.mxu0 0
      %2306 = vmatprep.subr.bf16.mxu0 0
      %2307 = vmatpush1.bf16.xpose.msra.mxu0 0
      %2308 = vmatprep.subr.bf16.mxu0 0
      %2309 = vmatpush1.bf16.xpose.msra.mxu0 0
      %2310 = vmatprep.subr.bf16.mxu0 0
      %2311 = vmatpush1.bf16.xpose.msra.mxu0 0
      %2312 = vmatprep.subr.bf16.mxu0 0
      %2313 = vmatpush1.bf16.xpose.msra.mxu0 0
      %2314 = vmatprep.subr.bf16.mxu0 0
      %2315 = vmatpush1.bf16.xpose.msra.mxu0 0
      %2316 = vmatprep.subr.bf16.mxu0 0
      %2317 = vmatpush1.bf16.xpose.msra.mxu0 0
      %2318 = vmatprep.mubr.bf16.mxu0 0
      %2319 = vmatmul.mubr.bf16.gmra.mrb[0].mxu0 %v2281
      %v2320 = vpop.f32.mrb[0].mxu0
      %v2321 = vadd.f32 0.0, %v2320
      %v2322 = vpop.f32.mrb[0].mxu0
      %v2323 = vpop.f32.mrb[0].mxu0
      %v2324 = vadd.f32 0.0, %v2323
      %v2325 = vpop.f32.mrb[0].mxu0
      %2326 = vdwg.mxu0
      %2328 = vrot.lane.b32.xlu0 %v939, 96
      %v2329 = vpop.permute.xlu0 %2328
      %v2331 = vsel %vm979, %v939, 0
      %v2334 = vsel %vm979, %v2329, 0
      %2336 = vmatprep.subr.bf16.mxu0 0
      %2337 = vmatpush1.bf16.xpose.msra.mxu0 %v2334
      %2338 = vmatprep.subr.bf16.mxu0 0
      %2339 = vmatpush1.bf16.xpose.msra.mxu0 0
      %2340 = vmatprep.subr.bf16.mxu0 0
      %2341 = vmatpush1.bf16.xpose.msra.mxu0 0
      %2342 = vmatprep.subr.bf16.mxu0 0
      %2343 = vmatpush1.bf16.xpose.msra.mxu0 0
      %2344 = vmatprep.subr.bf16.mxu0 0
      %2345 = vmatpush1.bf16.xpose.msra.mxu0 0
      %2346 = vmatprep.subr.bf16.mxu0 0
      %2347 = vmatpush1.bf16.xpose.msra.mxu0 0
      %2348 = vmatprep.subr.bf16.mxu0 0
      %2349 = vmatpush1.bf16.xpose.msra.mxu0 0
      %2350 = vmatprep.subr.bf16.mxu0 0
      %2351 = vmatpush1.bf16.xpose.msra.mxu0 0
      %2352 = vmatprep.subr.bf16.mxu0 0
      %2353 = vmatpush1.bf16.xpose.msra.mxu0 0
      %2354 = vmatprep.subr.bf16.mxu0 0
      %2355 = vmatpush1.bf16.xpose.msra.mxu0 0
      %2356 = vmatprep.subr.bf16.mxu0 0
      %2357 = vmatpush1.bf16.xpose.msra.mxu0 0
      %2358 = vmatprep.subr.bf16.mxu0 0
      %2359 = vmatpush1.bf16.xpose.msra.mxu0 0
      %2360 = vmatprep.subr.bf16.mxu0 0
      %2361 = vmatpush1.bf16.xpose.msra.mxu0 0
      %2362 = vmatprep.subr.bf16.mxu0 0
      %2363 = vmatpush1.bf16.xpose.msra.mxu0 0
      %2364 = vmatprep.subr.bf16.mxu0 0
      %2365 = vmatpush1.bf16.xpose.msra.mxu0 0
      %2366 = vmatprep.subr.bf16.mxu0 0
      %2367 = vmatpush1.bf16.xpose.msra.mxu0 0
      %2368 = vmatprep.mubr.bf16.mxu0 0
      %2369 = vmatmul.mubr.bf16.gmra.mrb[0].mxu0 %v2331
      %v2370 = vpop.f32.mrb[0].mxu0
      %v2371 = vadd.f32 0.0, %v2370
      %v2372 = vpop.f32.mrb[0].mxu0
      %v2373 = vpop.f32.mrb[0].mxu0
      %v2374 = vadd.f32 0.0, %v2373
      %v2375 = vpop.f32.mrb[0].mxu0
      %2376 = vdwg.mxu0
      %2378 = vrot.lane.b32.xlu0 %v940, 96
      %v2379 = vpop.permute.xlu0 %2378
      %v2381 = vsel %vm979, %v940, 0
      %v2384 = vsel %vm979, %v2379, 0
      %2386 = vmatprep.subr.bf16.mxu0 0
      %2387 = vmatpush1.bf16.xpose.msra.mxu0 %v2384
      %2388 = vmatprep.subr.bf16.mxu0 0
      %2389 = vmatpush1.bf16.xpose.msra.mxu0 0
      %2390 = vmatprep.subr.bf16.mxu0 0
      %2391 = vmatpush1.bf16.xpose.msra.mxu0 0
      %2392 = vmatprep.subr.bf16.mxu0 0
      %2393 = vmatpush1.bf16.xpose.msra.mxu0 0
      %2394 = vmatprep.subr.bf16.mxu0 0
      %2395 = vmatpush1.bf16.xpose.msra.mxu0 0
      %2396 = vmatprep.subr.bf16.mxu0 0
      %2397 = vmatpush1.bf16.xpose.msra.mxu0 0
      %2398 = vmatprep.subr.bf16.mxu0 0
      %2399 = vmatpush1.bf16.xpose.msra.mxu0 0
      %2400 = vmatprep.subr.bf16.mxu0 0
      %2401 = vmatpush1.bf16.xpose.msra.mxu0 0
      %2402 = vmatprep.subr.bf16.mxu0 0
      %2403 = vmatpush1.bf16.xpose.msra.mxu0 0
      %2404 = vmatprep.subr.bf16.mxu0 0
      %2405 = vmatpush1.bf16.xpose.msra.mxu0 0
      %2406 = vmatprep.subr.bf16.mxu0 0
      %2407 = vmatpush1.bf16.xpose.msra.mxu0 0
      %2408 = vmatprep.subr.bf16.mxu0 0
      %2409 = vmatpush1.bf16.xpose.msra.mxu0 0
      %2410 = vmatprep.subr.bf16.mxu0 0
      %2411 = vmatpush1.bf16.xpose.msra.mxu0 0
      %2412 = vmatprep.subr.bf16.mxu0 0
      %2413 = vmatpush1.bf16.xpose.msra.mxu0 0
      %2414 = vmatprep.subr.bf16.mxu0 0
      %2415 = vmatpush1.bf16.xpose.msra.mxu0 0
      %2416 = vmatprep.subr.bf16.mxu0 0
      %2417 = vmatpush1.bf16.xpose.msra.mxu0 0
      %2418 = vmatprep.mubr.bf16.mxu0 0
      %2419 = vmatmul.mubr.bf16.gmra.mrb[0].mxu0 %v2381
      %v2420 = vpop.f32.mrb[0].mxu0
      %v2421 = vadd.f32 0.0, %v2420
      %v2422 = vpop.f32.mrb[0].mxu0
      %v2423 = vpop.f32.mrb[0].mxu0
      %v2424 = vadd.f32 0.0, %v2423
      %v2425 = vpop.f32.mrb[0].mxu0
      %2426 = vdwg.mxu0
      %2428 = vrot.lane.b32.xlu0 %v941, 96
      %v2429 = vpop.permute.xlu0 %2428
      %v2431 = vsel %vm979, %v941, 0
      %v2434 = vsel %vm979, %v2429, 0
      %2436 = vmatprep.subr.bf16.mxu0 0
      %2437 = vmatpush1.bf16.xpose.msra.mxu0 %v2434
      %2438 = vmatprep.subr.bf16.mxu0 0
      %2439 = vmatpush1.bf16.xpose.msra.mxu0 0
      %2440 = vmatprep.subr.bf16.mxu0 0
      %2441 = vmatpush1.bf16.xpose.msra.mxu0 0
      %2442 = vmatprep.subr.bf16.mxu0 0
      %2443 = vmatpush1.bf16.xpose.msra.mxu0 0
      %2444 = vmatprep.subr.bf16.mxu0 0
      %2445 = vmatpush1.bf16.xpose.msra.mxu0 0
      %2446 = vmatprep.subr.bf16.mxu0 0
      %2447 = vmatpush1.bf16.xpose.msra.mxu0 0
      %2448 = vmatprep.subr.bf16.mxu0 0
      %2449 = vmatpush1.bf16.xpose.msra.mxu0 0
      %2450 = vmatprep.subr.bf16.mxu0 0
      %2451 = vmatpush1.bf16.xpose.msra.mxu0 0
      %2452 = vmatprep.subr.bf16.mxu0 0
      %2453 = vmatpush1.bf16.xpose.msra.mxu0 0
      %2454 = vmatprep.subr.bf16.mxu0 0
      %2455 = vmatpush1.bf16.xpose.msra.mxu0 0
      %2456 = vmatprep.subr.bf16.mxu0 0
      %2457 = vmatpush1.bf16.xpose.msra.mxu0 0
      %2458 = vmatprep.subr.bf16.mxu0 0
      %2459 = vmatpush1.bf16.xpose.msra.mxu0 0
      %2460 = vmatprep.subr.bf16.mxu0 0
      %2461 = vmatpush1.bf16.xpose.msra.mxu0 0
      %2462 = vmatprep.subr.bf16.mxu0 0
      %2463 = vmatpush1.bf16.xpose.msra.mxu0 0
      %2464 = vmatprep.subr.bf16.mxu0 0
      %2465 = vmatpush1.bf16.xpose.msra.mxu0 0
      %2466 = vmatprep.subr.bf16.mxu0 0
      %2467 = vmatpush1.bf16.xpose.msra.mxu0 0
      %2468 = vmatprep.mubr.bf16.mxu0 0
      %2469 = vmatmul.mubr.bf16.gmra.mrb[0].mxu0 %v2431
      %v2470 = vpop.f32.mrb[0].mxu0
      %v2471 = vadd.f32 0.0, %v2470
      %v2472 = vpop.f32.mrb[0].mxu0
      %v2473 = vpop.f32.mrb[0].mxu0
      %v2474 = vadd.f32 0.0, %v2473
      %v2475 = vpop.f32.mrb[0].mxu0
      %2476 = vdwg.mxu0
      %2478 = vrot.lane.b32.xlu0 %v942, 96
      %v2479 = vpop.permute.xlu0 %2478
      %v2481 = vsel %vm979, %v942, 0
      %v2484 = vsel %vm979, %v2479, 0
      %2486 = vmatprep.subr.bf16.mxu0 0
      %2487 = vmatpush1.bf16.xpose.msra.mxu0 %v2484
      %2488 = vmatprep.subr.bf16.mxu0 0
      %2489 = vmatpush1.bf16.xpose.msra.mxu0 0
      %2490 = vmatprep.subr.bf16.mxu0 0
      %2491 = vmatpush1.bf16.xpose.msra.mxu0 0
      %2492 = vmatprep.subr.bf16.mxu0 0
      %2493 = vmatpush1.bf16.xpose.msra.mxu0 0
      %2494 = vmatprep.subr.bf16.mxu0 0
      %2495 = vmatpush1.bf16.xpose.msra.mxu0 0
      %2496 = vmatprep.subr.bf16.mxu0 0
      %2497 = vmatpush1.bf16.xpose.msra.mxu0 0
      %2498 = vmatprep.subr.bf16.mxu0 0
      %2499 = vmatpush1.bf16.xpose.msra.mxu0 0
      %2500 = vmatprep.subr.bf16.mxu0 0
      %2501 = vmatpush1.bf16.xpose.msra.mxu0 0
      %2502 = vmatprep.subr.bf16.mxu0 0
      %2503 = vmatpush1.bf16.xpose.msra.mxu0 0
      %2504 = vmatprep.subr.bf16.mxu0 0
      %2505 = vmatpush1.bf16.xpose.msra.mxu0 0
      %2506 = vmatprep.subr.bf16.mxu0 0
      %2507 = vmatpush1.bf16.xpose.msra.mxu0 0
      %2508 = vmatprep.subr.bf16.mxu0 0
      %2509 = vmatpush1.bf16.xpose.msra.mxu0 0
      %2510 = vmatprep.subr.bf16.mxu0 0
      %2511 = vmatpush1.bf16.xpose.msra.mxu0 0
      %2512 = vmatprep.subr.bf16.mxu0 0
      %2513 = vmatpush1.bf16.xpose.msra.mxu0 0
      %2514 = vmatprep.subr.bf16.mxu0 0
      %2515 = vmatpush1.bf16.xpose.msra.mxu0 0
      %2516 = vmatprep.subr.bf16.mxu0 0
      %2517 = vmatpush1.bf16.xpose.msra.mxu0 0
      %2518 = vmatprep.mubr.bf16.mxu0 0
      %2519 = vmatmul.mubr.bf16.gmra.mrb[0].mxu0 %v2481
      %v2520 = vpop.f32.mrb[0].mxu0
      %v2521 = vadd.f32 0.0, %v2520
      %v2522 = vpop.f32.mrb[0].mxu0
      %v2523 = vpop.f32.mrb[0].mxu0
      %v2524 = vadd.f32 0.0, %v2523
      %v2525 = vpop.f32.mrb[0].mxu0
      %2526 = vdwg.mxu0
      %2528 = vrot.lane.b32.xlu0 %v943, 96
      %v2529 = vpop.permute.xlu0 %2528
      %v2531 = vsel %vm979, %v943, 0
      %v2534 = vsel %vm979, %v2529, 0
      %2536 = vmatprep.subr.bf16.mxu0 0
      %2537 = vmatpush1.bf16.xpose.msra.mxu0 %v2534
      %2538 = vmatprep.subr.bf16.mxu0 0
      %2539 = vmatpush1.bf16.xpose.msra.mxu0 0
      %2540 = vmatprep.subr.bf16.mxu0 0
      %2541 = vmatpush1.bf16.xpose.msra.mxu0 0
      %2542 = vmatprep.subr.bf16.mxu0 0
      %2543 = vmatpush1.bf16.xpose.msra.mxu0 0
      %2544 = vmatprep.subr.bf16.mxu0 0
      %2545 = vmatpush1.bf16.xpose.msra.mxu0 0
      %2546 = vmatprep.subr.bf16.mxu0 0
      %2547 = vmatpush1.bf16.xpose.msra.mxu0 0
      %2548 = vmatprep.subr.bf16.mxu0 0
      %2549 = vmatpush1.bf16.xpose.msra.mxu0 0
      %2550 = vmatprep.subr.bf16.mxu0 0
      %2551 = vmatpush1.bf16.xpose.msra.mxu0 0
      %2552 = vmatprep.subr.bf16.mxu0 0
      %2553 = vmatpush1.bf16.xpose.msra.mxu0 0
      %2554 = vmatprep.subr.bf16.mxu0 0
      %2555 = vmatpush1.bf16.xpose.msra.mxu0 0
      %2556 = vmatprep.subr.bf16.mxu0 0
      %2557 = vmatpush1.bf16.xpose.msra.mxu0 0
      %2558 = vmatprep.subr.bf16.mxu0 0
      %2559 = vmatpush1.bf16.xpose.msra.mxu0 0
      %2560 = vmatprep.subr.bf16.mxu0 0
      %2561 = vmatpush1.bf16.xpose.msra.mxu0 0
      %2562 = vmatprep.subr.bf16.mxu0 0
      %2563 = vmatpush1.bf16.xpose.msra.mxu0 0
      %2564 = vmatprep.subr.bf16.mxu0 0
      %2565 = vmatpush1.bf16.xpose.msra.mxu0 0
      %2566 = vmatprep.subr.bf16.mxu0 0
      %2567 = vmatpush1.bf16.xpose.msra.mxu0 0
      %2568 = vmatprep.mubr.bf16.mxu0 0
      %2569 = vmatmul.mubr.bf16.gmra.mrb[0].mxu0 %v2531
      %v2570 = vpop.f32.mrb[0].mxu0
      %v2571 = vadd.f32 0.0, %v2570
      %v2572 = vpop.f32.mrb[0].mxu0
      %v2573 = vpop.f32.mrb[0].mxu0
      %v2574 = vadd.f32 0.0, %v2573
      %v2575 = vpop.f32.mrb[0].mxu0
      %2576 = vdwg.mxu0
      %2578 = vrot.lane.b32.xlu0 %v944, 96
      %v2579 = vpop.permute.xlu0 %2578
      %v2581 = vsel %vm979, %v944, 0
      %v2584 = vsel %vm979, %v2579, 0
      %2586 = vmatprep.subr.bf16.mxu0 0
      %2587 = vmatpush1.bf16.xpose.msra.mxu0 %v2584
      %2588 = vmatprep.subr.bf16.mxu0 0
      %2589 = vmatpush1.bf16.xpose.msra.mxu0 0
      %2590 = vmatprep.subr.bf16.mxu0 0
      %2591 = vmatpush1.bf16.xpose.msra.mxu0 0
      %2592 = vmatprep.subr.bf16.mxu0 0
      %2593 = vmatpush1.bf16.xpose.msra.mxu0 0
      %2594 = vmatprep.subr.bf16.mxu0 0
      %2595 = vmatpush1.bf16.xpose.msra.mxu0 0
      %2596 = vmatprep.subr.bf16.mxu0 0
      %2597 = vmatpush1.bf16.xpose.msra.mxu0 0
      %2598 = vmatprep.subr.bf16.mxu0 0
      %2599 = vmatpush1.bf16.xpose.msra.mxu0 0
      %2600 = vmatprep.subr.bf16.mxu0 0
      %2601 = vmatpush1.bf16.xpose.msra.mxu0 0
      %2602 = vmatprep.subr.bf16.mxu0 0
      %2603 = vmatpush1.bf16.xpose.msra.mxu0 0
      %2604 = vmatprep.subr.bf16.mxu0 0
      %2605 = vmatpush1.bf16.xpose.msra.mxu0 0
      %2606 = vmatprep.subr.bf16.mxu0 0
      %2607 = vmatpush1.bf16.xpose.msra.mxu0 0
      %2608 = vmatprep.subr.bf16.mxu0 0
      %2609 = vmatpush1.bf16.xpose.msra.mxu0 0
      %2610 = vmatprep.subr.bf16.mxu0 0
      %2611 = vmatpush1.bf16.xpose.msra.mxu0 0
      %2612 = vmatprep.subr.bf16.mxu0 0
      %2613 = vmatpush1.bf16.xpose.msra.mxu0 0
      %2614 = vmatprep.subr.bf16.mxu0 0
      %2615 = vmatpush1.bf16.xpose.msra.mxu0 0
      %2616 = vmatprep.subr.bf16.mxu0 0
      %2617 = vmatpush1.bf16.xpose.msra.mxu0 0
      %2618 = vmatprep.mubr.bf16.mxu0 0
      %2619 = vmatmul.mubr.bf16.gmra.mrb[0].mxu0 %v2581
      %v2620 = vpop.f32.mrb[0].mxu0
      %v2621 = vadd.f32 0.0, %v2620
      %v2622 = vpop.f32.mrb[0].mxu0
      %v2623 = vpop.f32.mrb[0].mxu0
      %v2624 = vadd.f32 0.0, %v2623
      %v2625 = vpop.f32.mrb[0].mxu0
      %2626 = vdwg.mxu0
      %2628 = vrot.lane.b32.xlu0 %v945, 96
      %v2629 = vpop.permute.xlu0 %2628
      %v2631 = vsel %vm979, %v945, 0
      %v2634 = vsel %vm979, %v2629, 0
      %2636 = vmatprep.subr.bf16.mxu0 0
      %2637 = vmatpush1.bf16.xpose.msra.mxu0 %v2634
      %2638 = vmatprep.subr.bf16.mxu0 0
      %2639 = vmatpush1.bf16.xpose.msra.mxu0 0
      %2640 = vmatprep.subr.bf16.mxu0 0
      %2641 = vmatpush1.bf16.xpose.msra.mxu0 0
      %2642 = vmatprep.subr.bf16.mxu0 0
      %2643 = vmatpush1.bf16.xpose.msra.mxu0 0
      %2644 = vmatprep.subr.bf16.mxu0 0
      %2645 = vmatpush1.bf16.xpose.msra.mxu0 0
      %2646 = vmatprep.subr.bf16.mxu0 0
      %2647 = vmatpush1.bf16.xpose.msra.mxu0 0
      %2648 = vmatprep.subr.bf16.mxu0 0
      %2649 = vmatpush1.bf16.xpose.msra.mxu0 0
      %2650 = vmatprep.subr.bf16.mxu0 0
      %2651 = vmatpush1.bf16.xpose.msra.mxu0 0
      %2652 = vmatprep.subr.bf16.mxu0 0
      %2653 = vmatpush1.bf16.xpose.msra.mxu0 0
      %2654 = vmatprep.subr.bf16.mxu0 0
      %2655 = vmatpush1.bf16.xpose.msra.mxu0 0
      %2656 = vmatprep.subr.bf16.mxu0 0
      %2657 = vmatpush1.bf16.xpose.msra.mxu0 0
      %2658 = vmatprep.subr.bf16.mxu0 0
      %2659 = vmatpush1.bf16.xpose.msra.mxu0 0
      %2660 = vmatprep.subr.bf16.mxu0 0
      %2661 = vmatpush1.bf16.xpose.msra.mxu0 0
      %2662 = vmatprep.subr.bf16.mxu0 0
      %2663 = vmatpush1.bf16.xpose.msra.mxu0 0
      %2664 = vmatprep.subr.bf16.mxu0 0
      %2665 = vmatpush1.bf16.xpose.msra.mxu0 0
      %2666 = vmatprep.subr.bf16.mxu0 0
      %2667 = vmatpush1.bf16.xpose.msra.mxu0 0
      %2668 = vmatprep.mubr.bf16.mxu0 0
      %2669 = vmatmul.mubr.bf16.gmra.mrb[0].mxu0 %v2631
      %v2670 = vpop.f32.mrb[0].mxu0
      %v2671 = vadd.f32 0.0, %v2670
      %v2672 = vpop.f32.mrb[0].mxu0
      %v2673 = vpop.f32.mrb[0].mxu0
      %v2674 = vadd.f32 0.0, %v2673
      %v2675 = vpop.f32.mrb[0].mxu0
      %2676 = vdwg.mxu0
      %2678 = vrot.lane.b32.xlu0 %v946, 96
      %v2679 = vpop.permute.xlu0 %2678
      %v2681 = vsel %vm979, %v946, 0
      %v2684 = vsel %vm979, %v2679, 0
      %2686 = vmatprep.subr.bf16.mxu0 0
      %2687 = vmatpush1.bf16.xpose.msra.mxu0 %v2684
      %2688 = vmatprep.subr.bf16.mxu0 0
      %2689 = vmatpush1.bf16.xpose.msra.mxu0 0
      %2690 = vmatprep.subr.bf16.mxu0 0
      %2691 = vmatpush1.bf16.xpose.msra.mxu0 0
      %2692 = vmatprep.subr.bf16.mxu0 0
      %2693 = vmatpush1.bf16.xpose.msra.mxu0 0
      %2694 = vmatprep.subr.bf16.mxu0 0
      %2695 = vmatpush1.bf16.xpose.msra.mxu0 0
      %2696 = vmatprep.subr.bf16.mxu0 0
      %2697 = vmatpush1.bf16.xpose.msra.mxu0 0
      %2698 = vmatprep.subr.bf16.mxu0 0
      %2699 = vmatpush1.bf16.xpose.msra.mxu0 0
      %2700 = vmatprep.subr.bf16.mxu0 0
      %2701 = vmatpush1.bf16.xpose.msra.mxu0 0
      %2702 = vmatprep.subr.bf16.mxu0 0
      %2703 = vmatpush1.bf16.xpose.msra.mxu0 0
      %2704 = vmatprep.subr.bf16.mxu0 0
      %2705 = vmatpush1.bf16.xpose.msra.mxu0 0
      %2706 = vmatprep.subr.bf16.mxu0 0
      %2707 = vmatpush1.bf16.xpose.msra.mxu0 0
      %2708 = vmatprep.subr.bf16.mxu0 0
      %2709 = vmatpush1.bf16.xpose.msra.mxu0 0
      %2710 = vmatprep.subr.bf16.mxu0 0
      %2711 = vmatpush1.bf16.xpose.msra.mxu0 0
      %2712 = vmatprep.subr.bf16.mxu0 0
      %2713 = vmatpush1.bf16.xpose.msra.mxu0 0
      %2714 = vmatprep.subr.bf16.mxu0 0
      %2715 = vmatpush1.bf16.xpose.msra.mxu0 0
      %2716 = vmatprep.subr.bf16.mxu0 0
      %2717 = vmatpush1.bf16.xpose.msra.mxu0 0
      %2718 = vmatprep.mubr.bf16.mxu0 0
      %2719 = vmatmul.mubr.bf16.gmra.mrb[0].mxu0 %v2681
      %v2720 = vpop.f32.mrb[0].mxu0
      %v2721 = vadd.f32 0.0, %v2720
      %v2722 = vpop.f32.mrb[0].mxu0
      %v2723 = vpop.f32.mrb[0].mxu0
      %v2724 = vadd.f32 0.0, %v2723
      %v2725 = vpop.f32.mrb[0].mxu0
      %2726 = vdwg.mxu0
      %2728 = vrot.lane.b32.xlu0 %v947, 96
      %v2729 = vpop.permute.xlu0 %2728
      %v2731 = vsel %vm979, %v947, 0
      %v2734 = vsel %vm979, %v2729, 0
      %2736 = vmatprep.subr.bf16.mxu0 0
      %2737 = vmatpush1.bf16.xpose.msra.mxu0 %v2734
      %2738 = vmatprep.subr.bf16.mxu0 0
      %2739 = vmatpush1.bf16.xpose.msra.mxu0 0
      %2740 = vmatprep.subr.bf16.mxu0 0
      %2741 = vmatpush1.bf16.xpose.msra.mxu0 0
      %2742 = vmatprep.subr.bf16.mxu0 0
      %2743 = vmatpush1.bf16.xpose.msra.mxu0 0
      %2744 = vmatprep.subr.bf16.mxu0 0
      %2745 = vmatpush1.bf16.xpose.msra.mxu0 0
      %2746 = vmatprep.subr.bf16.mxu0 0
      %2747 = vmatpush1.bf16.xpose.msra.mxu0 0
      %2748 = vmatprep.subr.bf16.mxu0 0
      %2749 = vmatpush1.bf16.xpose.msra.mxu0 0
      %2750 = vmatprep.subr.bf16.mxu0 0
      %2751 = vmatpush1.bf16.xpose.msra.mxu0 0
      %2752 = vmatprep.subr.bf16.mxu0 0
      %2753 = vmatpush1.bf16.xpose.msra.mxu0 0
      %2754 = vmatprep.subr.bf16.mxu0 0
      %2755 = vmatpush1.bf16.xpose.msra.mxu0 0
      %2756 = vmatprep.subr.bf16.mxu0 0
      %2757 = vmatpush1.bf16.xpose.msra.mxu0 0
      %2758 = vmatprep.subr.bf16.mxu0 0
      %2759 = vmatpush1.bf16.xpose.msra.mxu0 0
      %2760 = vmatprep.subr.bf16.mxu0 0
      %2761 = vmatpush1.bf16.xpose.msra.mxu0 0
      %2762 = vmatprep.subr.bf16.mxu0 0
      %2763 = vmatpush1.bf16.xpose.msra.mxu0 0
      %2764 = vmatprep.subr.bf16.mxu0 0
      %2765 = vmatpush1.bf16.xpose.msra.mxu0 0
      %2766 = vmatprep.subr.bf16.mxu0 0
      %2767 = vmatpush1.bf16.xpose.msra.mxu0 0
      %2768 = vmatprep.mubr.bf16.mxu0 0
      %2769 = vmatmul.mubr.bf16.gmra.mrb[0].mxu0 %v2731
      %v2770 = vpop.f32.mrb[0].mxu0
      %v2771 = vadd.f32 0.0, %v2770
      %v2772 = vpop.f32.mrb[0].mxu0
      %v2773 = vpop.f32.mrb[0].mxu0
      %v2774 = vadd.f32 0.0, %v2773
      %v2775 = vpop.f32.mrb[0].mxu0
      %2776 = vdwg.mxu0
      %2778 = vrot.lane.b32.xlu0 %v948, 96
      %v2779 = vpop.permute.xlu0 %2778
      %v2781 = vsel %vm979, %v948, 0
      %v2784 = vsel %vm979, %v2779, 0
      %2786 = vmatprep.subr.bf16.mxu0 0
      %2787 = vmatpush1.bf16.xpose.msra.mxu0 %v2784
      %2788 = vmatprep.subr.bf16.mxu0 0
      %2789 = vmatpush1.bf16.xpose.msra.mxu0 0
      %2790 = vmatprep.subr.bf16.mxu0 0
      %2791 = vmatpush1.bf16.xpose.msra.mxu0 0
      %2792 = vmatprep.subr.bf16.mxu0 0
      %2793 = vmatpush1.bf16.xpose.msra.mxu0 0
      %2794 = vmatprep.subr.bf16.mxu0 0
      %2795 = vmatpush1.bf16.xpose.msra.mxu0 0
      %2796 = vmatprep.subr.bf16.mxu0 0
      %2797 = vmatpush1.bf16.xpose.msra.mxu0 0
      %2798 = vmatprep.subr.bf16.mxu0 0
      %2799 = vmatpush1.bf16.xpose.msra.mxu0 0
      %2800 = vmatprep.subr.bf16.mxu0 0
      %2801 = vmatpush1.bf16.xpose.msra.mxu0 0
      %2802 = vmatprep.subr.bf16.mxu0 0
      %2803 = vmatpush1.bf16.xpose.msra.mxu0 0
      %2804 = vmatprep.subr.bf16.mxu0 0
      %2805 = vmatpush1.bf16.xpose.msra.mxu0 0
      %2806 = vmatprep.subr.bf16.mxu0 0
      %2807 = vmatpush1.bf16.xpose.msra.mxu0 0
      %2808 = vmatprep.subr.bf16.mxu0 0
      %2809 = vmatpush1.bf16.xpose.msra.mxu0 0
      %2810 = vmatprep.subr.bf16.mxu0 0
      %2811 = vmatpush1.bf16.xpose.msra.mxu0 0
      %2812 = vmatprep.subr.bf16.mxu0 0
      %2813 = vmatpush1.bf16.xpose.msra.mxu0 0
      %2814 = vmatprep.subr.bf16.mxu0 0
      %2815 = vmatpush1.bf16.xpose.msra.mxu0 0
      %2816 = vmatprep.subr.bf16.mxu0 0
      %2817 = vmatpush1.bf16.xpose.msra.mxu0 0
      %2818 = vmatprep.mubr.bf16.mxu0 0
      %2819 = vmatmul.mubr.bf16.gmra.mrb[0].mxu0 %v2781
      %v2820 = vpop.f32.mrb[0].mxu0
      %v2821 = vadd.f32 0.0, %v2820
      %v2822 = vpop.f32.mrb[0].mxu0
      %v2823 = vpop.f32.mrb[0].mxu0
      %v2824 = vadd.f32 0.0, %v2823
      %v2825 = vpop.f32.mrb[0].mxu0
      %2826 = vdwg.mxu0
      %2828 = vrot.lane.b32.xlu0 %v949, 96
      %v2829 = vpop.permute.xlu0 %2828
      %v2831 = vsel %vm979, %v949, 0
      %v2834 = vsel %vm979, %v2829, 0
      %2836 = vmatprep.subr.bf16.mxu0 0
      %2837 = vmatpush1.bf16.xpose.msra.mxu0 %v2834
      %2838 = vmatprep.subr.bf16.mxu0 0
      %2839 = vmatpush1.bf16.xpose.msra.mxu0 0
      %2840 = vmatprep.subr.bf16.mxu0 0
      %2841 = vmatpush1.bf16.xpose.msra.mxu0 0
      %2842 = vmatprep.subr.bf16.mxu0 0
      %2843 = vmatpush1.bf16.xpose.msra.mxu0 0
      %2844 = vmatprep.subr.bf16.mxu0 0
      %2845 = vmatpush1.bf16.xpose.msra.mxu0 0
      %2846 = vmatprep.subr.bf16.mxu0 0
      %2847 = vmatpush1.bf16.xpose.msra.mxu0 0
      %2848 = vmatprep.subr.bf16.mxu0 0
      %2849 = vmatpush1.bf16.xpose.msra.mxu0 0
      %2850 = vmatprep.subr.bf16.mxu0 0
      %2851 = vmatpush1.bf16.xpose.msra.mxu0 0
      %2852 = vmatprep.subr.bf16.mxu0 0
      %2853 = vmatpush1.bf16.xpose.msra.mxu0 0
      %2854 = vmatprep.subr.bf16.mxu0 0
      %2855 = vmatpush1.bf16.xpose.msra.mxu0 0
      %2856 = vmatprep.subr.bf16.mxu0 0
      %2857 = vmatpush1.bf16.xpose.msra.mxu0 0
      %2858 = vmatprep.subr.bf16.mxu0 0
      %2859 = vmatpush1.bf16.xpose.msra.mxu0 0
      %2860 = vmatprep.subr.bf16.mxu0 0
      %2861 = vmatpush1.bf16.xpose.msra.mxu0 0
      %2862 = vmatprep.subr.bf16.mxu0 0
      %2863 = vmatpush1.bf16.xpose.msra.mxu0 0
      %2864 = vmatprep.subr.bf16.mxu0 0
      %2865 = vmatpush1.bf16.xpose.msra.mxu0 0
      %2866 = vmatprep.subr.bf16.mxu0 0
      %2867 = vmatpush1.bf16.xpose.msra.mxu0 0
      %2868 = vmatprep.mubr.bf16.mxu0 0
      %2869 = vmatmul.mubr.bf16.gmra.mrb[0].mxu0 %v2831
      %v2870 = vpop.f32.mrb[0].mxu0
      %v2871 = vadd.f32 0.0, %v2870
      %v2872 = vpop.f32.mrb[0].mxu0
      %v2873 = vpop.f32.mrb[0].mxu0
      %v2874 = vadd.f32 0.0, %v2873
      %v2875 = vpop.f32.mrb[0].mxu0
      %2876 = vdwg.mxu0
      %2878 = vrot.lane.b32.xlu0 %v950, 96
      %v2879 = vpop.permute.xlu0 %2878
      %v2881 = vsel %vm979, %v950, 0
      %v2884 = vsel %vm979, %v2879, 0
      %2886 = vmatprep.subr.bf16.mxu0 0
      %2887 = vmatpush1.bf16.xpose.msra.mxu0 %v2884
      %2888 = vmatprep.subr.bf16.mxu0 0
      %2889 = vmatpush1.bf16.xpose.msra.mxu0 0
      %2890 = vmatprep.subr.bf16.mxu0 0
      %2891 = vmatpush1.bf16.xpose.msra.mxu0 0
      %2892 = vmatprep.subr.bf16.mxu0 0
      %2893 = vmatpush1.bf16.xpose.msra.mxu0 0
      %2894 = vmatprep.subr.bf16.mxu0 0
      %2895 = vmatpush1.bf16.xpose.msra.mxu0 0
      %2896 = vmatprep.subr.bf16.mxu0 0
      %2897 = vmatpush1.bf16.xpose.msra.mxu0 0
      %2898 = vmatprep.subr.bf16.mxu0 0
      %2899 = vmatpush1.bf16.xpose.msra.mxu0 0
      %2900 = vmatprep.subr.bf16.mxu0 0
      %2901 = vmatpush1.bf16.xpose.msra.mxu0 0
      %2902 = vmatprep.subr.bf16.mxu0 0
      %2903 = vmatpush1.bf16.xpose.msra.mxu0 0
      %2904 = vmatprep.subr.bf16.mxu0 0
      %2905 = vmatpush1.bf16.xpose.msra.mxu0 0
      %2906 = vmatprep.subr.bf16.mxu0 0
      %2907 = vmatpush1.bf16.xpose.msra.mxu0 0
      %2908 = vmatprep.subr.bf16.mxu0 0
      %2909 = vmatpush1.bf16.xpose.msra.mxu0 0
      %2910 = vmatprep.subr.bf16.mxu0 0
      %2911 = vmatpush1.bf16.xpose.msra.mxu0 0
      %2912 = vmatprep.subr.bf16.mxu0 0
      %2913 = vmatpush1.bf16.xpose.msra.mxu0 0
      %2914 = vmatprep.subr.bf16.mxu0 0
      %2915 = vmatpush1.bf16.xpose.msra.mxu0 0
      %2916 = vmatprep.subr.bf16.mxu0 0
      %2917 = vmatpush1.bf16.xpose.msra.mxu0 0
      %2918 = vmatprep.mubr.bf16.mxu0 0
      %2919 = vmatmul.mubr.bf16.gmra.mrb[0].mxu0 %v2881
      %v2920 = vpop.f32.mrb[0].mxu0
      %v2921 = vadd.f32 0.0, %v2920
      %v2922 = vpop.f32.mrb[0].mxu0
      %v2923 = vpop.f32.mrb[0].mxu0
      %v2924 = vadd.f32 0.0, %v2923
      %v2925 = vpop.f32.mrb[0].mxu0
      %2926 = vdwg.mxu0
      %2928 = vrot.lane.b32.xlu0 %v951, 96
      %v2929 = vpop.permute.xlu0 %2928
      %v2931 = vsel %vm979, %v951, 0
      %v2934 = vsel %vm979, %v2929, 0
      %2936 = vmatprep.subr.bf16.mxu0 0
      %2937 = vmatpush1.bf16.xpose.msra.mxu0 %v2934
      %2938 = vmatprep.subr.bf16.mxu0 0
      %2939 = vmatpush1.bf16.xpose.msra.mxu0 0
      %2940 = vmatprep.subr.bf16.mxu0 0
      %2941 = vmatpush1.bf16.xpose.msra.mxu0 0
      %2942 = vmatprep.subr.bf16.mxu0 0
      %2943 = vmatpush1.bf16.xpose.msra.mxu0 0
      %2944 = vmatprep.subr.bf16.mxu0 0
      %2945 = vmatpush1.bf16.xpose.msra.mxu0 0
      %2946 = vmatprep.subr.bf16.mxu0 0
      %2947 = vmatpush1.bf16.xpose.msra.mxu0 0
      %2948 = vmatprep.subr.bf16.mxu0 0
      %2949 = vmatpush1.bf16.xpose.msra.mxu0 0
      %2950 = vmatprep.subr.bf16.mxu0 0
      %2951 = vmatpush1.bf16.xpose.msra.mxu0 0
      %2952 = vmatprep.subr.bf16.mxu0 0
      %2953 = vmatpush1.bf16.xpose.msra.mxu0 0
      %2954 = vmatprep.subr.bf16.mxu0 0
      %2955 = vmatpush1.bf16.xpose.msra.mxu0 0
      %2956 = vmatprep.subr.bf16.mxu0 0
      %2957 = vmatpush1.bf16.xpose.msra.mxu0 0
      %2958 = vmatprep.subr.bf16.mxu0 0
      %2959 = vmatpush1.bf16.xpose.msra.mxu0 0
      %2960 = vmatprep.subr.bf16.mxu0 0
      %2961 = vmatpush1.bf16.xpose.msra.mxu0 0
      %2962 = vmatprep.subr.bf16.mxu0 0
      %2963 = vmatpush1.bf16.xpose.msra.mxu0 0
      %2964 = vmatprep.subr.bf16.mxu0 0
      %2965 = vmatpush1.bf16.xpose.msra.mxu0 0
      %2966 = vmatprep.subr.bf16.mxu0 0
      %2967 = vmatpush1.bf16.xpose.msra.mxu0 0
      %2968 = vmatprep.mubr.bf16.mxu0 0
      %2969 = vmatmul.mubr.bf16.gmra.mrb[0].mxu0 %v2931
      %v2970 = vpop.f32.mrb[0].mxu0
      %v2971 = vadd.f32 0.0, %v2970
      %v2972 = vpop.f32.mrb[0].mxu0
      %v2973 = vpop.f32.mrb[0].mxu0
      %v2974 = vadd.f32 0.0, %v2973
      %v2975 = vpop.f32.mrb[0].mxu0
      %2976 = vdwg.mxu0
      %2978 = vrot.lane.b32.xlu0 %v952, 96
      %v2979 = vpop.permute.xlu0 %2978
      %v2981 = vsel %vm979, %v952, 0
      %v2984 = vsel %vm979, %v2979, 0
      %2986 = vmatprep.subr.bf16.mxu0 0
      %2987 = vmatpush1.bf16.xpose.msra.mxu0 %v2984
      %2988 = vmatprep.subr.bf16.mxu0 0
      %2989 = vmatpush1.bf16.xpose.msra.mxu0 0
      %2990 = vmatprep.subr.bf16.mxu0 0
      %2991 = vmatpush1.bf16.xpose.msra.mxu0 0
      %2992 = vmatprep.subr.bf16.mxu0 0
      %2993 = vmatpush1.bf16.xpose.msra.mxu0 0
      %2994 = vmatprep.subr.bf16.mxu0 0
      %2995 = vmatpush1.bf16.xpose.msra.mxu0 0
      %2996 = vmatprep.subr.bf16.mxu0 0
      %2997 = vmatpush1.bf16.xpose.msra.mxu0 0
      %2998 = vmatprep.subr.bf16.mxu0 0
      %2999 = vmatpush1.bf16.xpose.msra.mxu0 0
      %3000 = vmatprep.subr.bf16.mxu0 0
      %3001 = vmatpush1.bf16.xpose.msra.mxu0 0
      %3002 = vmatprep.subr.bf16.mxu0 0
      %3003 = vmatpush1.bf16.xpose.msra.mxu0 0
      %3004 = vmatprep.subr.bf16.mxu0 0
      %3005 = vmatpush1.bf16.xpose.msra.mxu0 0
      %3006 = vmatprep.subr.bf16.mxu0 0
      %3007 = vmatpush1.bf16.xpose.msra.mxu0 0
      %3008 = vmatprep.subr.bf16.mxu0 0
      %3009 = vmatpush1.bf16.xpose.msra.mxu0 0
      %3010 = vmatprep.subr.bf16.mxu0 0
      %3011 = vmatpush1.bf16.xpose.msra.mxu0 0
      %3012 = vmatprep.subr.bf16.mxu0 0
      %3013 = vmatpush1.bf16.xpose.msra.mxu0 0
      %3014 = vmatprep.subr.bf16.mxu0 0
      %3015 = vmatpush1.bf16.xpose.msra.mxu0 0
      %3016 = vmatprep.subr.bf16.mxu0 0
      %3017 = vmatpush1.bf16.xpose.msra.mxu0 0
      %3018 = vmatprep.mubr.bf16.mxu0 0
      %3019 = vmatmul.mubr.bf16.gmra.mrb[0].mxu0 %v2981
      %v3020 = vpop.f32.mrb[0].mxu0
      %v3021 = vadd.f32 0.0, %v3020
      %v3022 = vpop.f32.mrb[0].mxu0
      %v3023 = vpop.f32.mrb[0].mxu0
      %v3024 = vadd.f32 0.0, %v3023
      %v3025 = vpop.f32.mrb[0].mxu0
      %3026 = vdwg.mxu0
      %3028 = vrot.lane.b32.xlu0 %v953, 96
      %v3029 = vpop.permute.xlu0 %3028
      %v3031 = vsel %vm979, %v953, 0
      %v3034 = vsel %vm979, %v3029, 0
      %3036 = vmatprep.subr.bf16.mxu0 0
      %3037 = vmatpush1.bf16.xpose.msra.mxu0 %v3034
      %3038 = vmatprep.subr.bf16.mxu0 0
      %3039 = vmatpush1.bf16.xpose.msra.mxu0 0
      %3040 = vmatprep.subr.bf16.mxu0 0
      %3041 = vmatpush1.bf16.xpose.msra.mxu0 0
      %3042 = vmatprep.subr.bf16.mxu0 0
      %3043 = vmatpush1.bf16.xpose.msra.mxu0 0
      %3044 = vmatprep.subr.bf16.mxu0 0
      %3045 = vmatpush1.bf16.xpose.msra.mxu0 0
      %3046 = vmatprep.subr.bf16.mxu0 0
      %3047 = vmatpush1.bf16.xpose.msra.mxu0 0
      %3048 = vmatprep.subr.bf16.mxu0 0
      %3049 = vmatpush1.bf16.xpose.msra.mxu0 0
      %3050 = vmatprep.subr.bf16.mxu0 0
      %3051 = vmatpush1.bf16.xpose.msra.mxu0 0
      %3052 = vmatprep.subr.bf16.mxu0 0
      %3053 = vmatpush1.bf16.xpose.msra.mxu0 0
      %3054 = vmatprep.subr.bf16.mxu0 0
      %3055 = vmatpush1.bf16.xpose.msra.mxu0 0
      %3056 = vmatprep.subr.bf16.mxu0 0
      %3057 = vmatpush1.bf16.xpose.msra.mxu0 0
      %3058 = vmatprep.subr.bf16.mxu0 0
      %3059 = vmatpush1.bf16.xpose.msra.mxu0 0
      %3060 = vmatprep.subr.bf16.mxu0 0
      %3061 = vmatpush1.bf16.xpose.msra.mxu0 0
      %3062 = vmatprep.subr.bf16.mxu0 0
      %3063 = vmatpush1.bf16.xpose.msra.mxu0 0
      %3064 = vmatprep.subr.bf16.mxu0 0
      %3065 = vmatpush1.bf16.xpose.msra.mxu0 0
      %3066 = vmatprep.subr.bf16.mxu0 0
      %3067 = vmatpush1.bf16.xpose.msra.mxu0 0
      %3068 = vmatprep.mubr.bf16.mxu0 0
      %3069 = vmatmul.mubr.bf16.gmra.mrb[0].mxu0 %v3031
      %v3070 = vpop.f32.mrb[0].mxu0
      %v3071 = vadd.f32 0.0, %v3070
      %v3072 = vpop.f32.mrb[0].mxu0
      %v3073 = vpop.f32.mrb[0].mxu0
      %v3074 = vadd.f32 0.0, %v3073
      %v3075 = vpop.f32.mrb[0].mxu0
      %3076 = vdwg.mxu0
      %3078 = vrot.lane.b32.xlu0 %v954, 96
      %v3079 = vpop.permute.xlu0 %3078
      %v3081 = vsel %vm979, %v954, 0
      %v3084 = vsel %vm979, %v3079, 0
      %3086 = vmatprep.subr.bf16.mxu0 0
      %3087 = vmatpush1.bf16.xpose.msra.mxu0 %v3084
      %3088 = vmatprep.subr.bf16.mxu0 0
      %3089 = vmatpush1.bf16.xpose.msra.mxu0 0
      %3090 = vmatprep.subr.bf16.mxu0 0
      %3091 = vmatpush1.bf16.xpose.msra.mxu0 0
      %3092 = vmatprep.subr.bf16.mxu0 0
      %3093 = vmatpush1.bf16.xpose.msra.mxu0 0
      %3094 = vmatprep.subr.bf16.mxu0 0
      %3095 = vmatpush1.bf16.xpose.msra.mxu0 0
      %3096 = vmatprep.subr.bf16.mxu0 0
      %3097 = vmatpush1.bf16.xpose.msra.mxu0 0
      %3098 = vmatprep.subr.bf16.mxu0 0
      %3099 = vmatpush1.bf16.xpose.msra.mxu0 0
      %3100 = vmatprep.subr.bf16.mxu0 0
      %3101 = vmatpush1.bf16.xpose.msra.mxu0 0
      %3102 = vmatprep.subr.bf16.mxu0 0
      %3103 = vmatpush1.bf16.xpose.msra.mxu0 0
      %3104 = vmatprep.subr.bf16.mxu0 0
      %3105 = vmatpush1.bf16.xpose.msra.mxu0 0
      %3106 = vmatprep.subr.bf16.mxu0 0
      %3107 = vmatpush1.bf16.xpose.msra.mxu0 0
      %3108 = vmatprep.subr.bf16.mxu0 0
      %3109 = vmatpush1.bf16.xpose.msra.mxu0 0
      %3110 = vmatprep.subr.bf16.mxu0 0
      %3111 = vmatpush1.bf16.xpose.msra.mxu0 0
      %3112 = vmatprep.subr.bf16.mxu0 0
      %3113 = vmatpush1.bf16.xpose.msra.mxu0 0
      %3114 = vmatprep.subr.bf16.mxu0 0
      %3115 = vmatpush1.bf16.xpose.msra.mxu0 0
      %3116 = vmatprep.subr.bf16.mxu0 0
      %3117 = vmatpush1.bf16.xpose.msra.mxu0 0
      %3118 = vmatprep.mubr.bf16.mxu0 0
      %3119 = vmatmul.mubr.bf16.gmra.mrb[0].mxu0 %v3081
      %v3120 = vpop.f32.mrb[0].mxu0
      %v3121 = vadd.f32 0.0, %v3120
      %v3122 = vpop.f32.mrb[0].mxu0
      %v3123 = vpop.f32.mrb[0].mxu0
      %v3124 = vadd.f32 0.0, %v3123
      %v3125 = vpop.f32.mrb[0].mxu0
      %3126 = vdwg.mxu0
      %3128 = vrot.lane.b32.xlu0 %v955, 96
      %v3129 = vpop.permute.xlu0 %3128
      %v3131 = vsel %vm979, %v955, 0
      %v3134 = vsel %vm979, %v3129, 0
      %3136 = vmatprep.subr.bf16.mxu0 0
      %3137 = vmatpush1.bf16.xpose.msra.mxu0 %v3134
      %3138 = vmatprep.subr.bf16.mxu0 0
      %3139 = vmatpush1.bf16.xpose.msra.mxu0 0
      %3140 = vmatprep.subr.bf16.mxu0 0
      %3141 = vmatpush1.bf16.xpose.msra.mxu0 0
      %3142 = vmatprep.subr.bf16.mxu0 0
      %3143 = vmatpush1.bf16.xpose.msra.mxu0 0
      %3144 = vmatprep.subr.bf16.mxu0 0
      %3145 = vmatpush1.bf16.xpose.msra.mxu0 0
      %3146 = vmatprep.subr.bf16.mxu0 0
      %3147 = vmatpush1.bf16.xpose.msra.mxu0 0
      %3148 = vmatprep.subr.bf16.mxu0 0
      %3149 = vmatpush1.bf16.xpose.msra.mxu0 0
      %3150 = vmatprep.subr.bf16.mxu0 0
      %3151 = vmatpush1.bf16.xpose.msra.mxu0 0
      %3152 = vmatprep.subr.bf16.mxu0 0
      %3153 = vmatpush1.bf16.xpose.msra.mxu0 0
      %3154 = vmatprep.subr.bf16.mxu0 0
      %3155 = vmatpush1.bf16.xpose.msra.mxu0 0
      %3156 = vmatprep.subr.bf16.mxu0 0
      %3157 = vmatpush1.bf16.xpose.msra.mxu0 0
      %3158 = vmatprep.subr.bf16.mxu0 0
      %3159 = vmatpush1.bf16.xpose.msra.mxu0 0
      %3160 = vmatprep.subr.bf16.mxu0 0
      %3161 = vmatpush1.bf16.xpose.msra.mxu0 0
      %3162 = vmatprep.subr.bf16.mxu0 0
      %3163 = vmatpush1.bf16.xpose.msra.mxu0 0
      %3164 = vmatprep.subr.bf16.mxu0 0
      %3165 = vmatpush1.bf16.xpose.msra.mxu0 0
      %3166 = vmatprep.subr.bf16.mxu0 0
      %3167 = vmatpush1.bf16.xpose.msra.mxu0 0
      %3168 = vmatprep.mubr.bf16.mxu0 0
      %3169 = vmatmul.mubr.bf16.gmra.mrb[0].mxu0 %v3131
      %v3170 = vpop.f32.mrb[0].mxu0
      %v3171 = vadd.f32 0.0, %v3170
      %v3172 = vpop.f32.mrb[0].mxu0
      %v3173 = vpop.f32.mrb[0].mxu0
      %v3174 = vadd.f32 0.0, %v3173
      %v3175 = vpop.f32.mrb[0].mxu0
      %3176 = vdwg.mxu0
      %3178 = vrot.lane.b32.xlu0 %v956, 96
      %v3179 = vpop.permute.xlu0 %3178
      %v3181 = vsel %vm979, %v956, 0
      %v3184 = vsel %vm979, %v3179, 0
      %3186 = vmatprep.subr.bf16.mxu0 0
      %3187 = vmatpush1.bf16.xpose.msra.mxu0 %v3184
      %3188 = vmatprep.subr.bf16.mxu0 0
      %3189 = vmatpush1.bf16.xpose.msra.mxu0 0
      %3190 = vmatprep.subr.bf16.mxu0 0
      %3191 = vmatpush1.bf16.xpose.msra.mxu0 0
      %3192 = vmatprep.subr.bf16.mxu0 0
      %3193 = vmatpush1.bf16.xpose.msra.mxu0 0
      %3194 = vmatprep.subr.bf16.mxu0 0
      %3195 = vmatpush1.bf16.xpose.msra.mxu0 0
      %3196 = vmatprep.subr.bf16.mxu0 0
      %3197 = vmatpush1.bf16.xpose.msra.mxu0 0
      %3198 = vmatprep.subr.bf16.mxu0 0
      %3199 = vmatpush1.bf16.xpose.msra.mxu0 0
      %3200 = vmatprep.subr.bf16.mxu0 0
      %3201 = vmatpush1.bf16.xpose.msra.mxu0 0
      %3202 = vmatprep.subr.bf16.mxu0 0
      %3203 = vmatpush1.bf16.xpose.msra.mxu0 0
      %3204 = vmatprep.subr.bf16.mxu0 0
      %3205 = vmatpush1.bf16.xpose.msra.mxu0 0
      %3206 = vmatprep.subr.bf16.mxu0 0
      %3207 = vmatpush1.bf16.xpose.msra.mxu0 0
      %3208 = vmatprep.subr.bf16.mxu0 0
      %3209 = vmatpush1.bf16.xpose.msra.mxu0 0
      %3210 = vmatprep.subr.bf16.mxu0 0
      %3211 = vmatpush1.bf16.xpose.msra.mxu0 0
      %3212 = vmatprep.subr.bf16.mxu0 0
      %3213 = vmatpush1.bf16.xpose.msra.mxu0 0
      %3214 = vmatprep.subr.bf16.mxu0 0
      %3215 = vmatpush1.bf16.xpose.msra.mxu0 0
      %3216 = vmatprep.subr.bf16.mxu0 0
      %3217 = vmatpush1.bf16.xpose.msra.mxu0 0
      %3218 = vmatprep.mubr.bf16.mxu0 0
      %3219 = vmatmul.mubr.bf16.gmra.mrb[0].mxu0 %v3181
      %v3220 = vpop.f32.mrb[0].mxu0
      %v3221 = vadd.f32 0.0, %v3220
      %v3222 = vpop.f32.mrb[0].mxu0
      %v3223 = vpop.f32.mrb[0].mxu0
      %v3224 = vadd.f32 0.0, %v3223
      %v3225 = vpop.f32.mrb[0].mxu0
      %3226 = vdwg.mxu0
      %3228 = vrot.lane.b32.xlu0 %v957, 96
      %v3229 = vpop.permute.xlu0 %3228
      %v3231 = vsel %vm979, %v957, 0
      %v3234 = vsel %vm979, %v3229, 0
      %3236 = vmatprep.subr.bf16.mxu0 0
      %3237 = vmatpush1.bf16.xpose.msra.mxu0 %v3234
      %3238 = vmatprep.subr.bf16.mxu0 0
      %3239 = vmatpush1.bf16.xpose.msra.mxu0 0
      %3240 = vmatprep.subr.bf16.mxu0 0
      %3241 = vmatpush1.bf16.xpose.msra.mxu0 0
      %3242 = vmatprep.subr.bf16.mxu0 0
      %3243 = vmatpush1.bf16.xpose.msra.mxu0 0
      %3244 = vmatprep.subr.bf16.mxu0 0
      %3245 = vmatpush1.bf16.xpose.msra.mxu0 0
      %3246 = vmatprep.subr.bf16.mxu0 0
      %3247 = vmatpush1.bf16.xpose.msra.mxu0 0
      %3248 = vmatprep.subr.bf16.mxu0 0
      %3249 = vmatpush1.bf16.xpose.msra.mxu0 0
      %3250 = vmatprep.subr.bf16.mxu0 0
      %3251 = vmatpush1.bf16.xpose.msra.mxu0 0
      %3252 = vmatprep.subr.bf16.mxu0 0
      %3253 = vmatpush1.bf16.xpose.msra.mxu0 0
      %3254 = vmatprep.subr.bf16.mxu0 0
      %3255 = vmatpush1.bf16.xpose.msra.mxu0 0
      %3256 = vmatprep.subr.bf16.mxu0 0
      %3257 = vmatpush1.bf16.xpose.msra.mxu0 0
      %3258 = vmatprep.subr.bf16.mxu0 0
      %3259 = vmatpush1.bf16.xpose.msra.mxu0 0
      %3260 = vmatprep.subr.bf16.mxu0 0
      %3261 = vmatpush1.bf16.xpose.msra.mxu0 0
      %3262 = vmatprep.subr.bf16.mxu0 0
      %3263 = vmatpush1.bf16.xpose.msra.mxu0 0
      %3264 = vmatprep.subr.bf16.mxu0 0
      %3265 = vmatpush1.bf16.xpose.msra.mxu0 0
      %3266 = vmatprep.subr.bf16.mxu0 0
      %3267 = vmatpush1.bf16.xpose.msra.mxu0 0
      %3268 = vmatprep.mubr.bf16.mxu0 0
      %3269 = vmatmul.mubr.bf16.gmra.mrb[0].mxu0 %v3231
      %v3270 = vpop.f32.mrb[0].mxu0
      %v3271 = vadd.f32 0.0, %v3270
      %v3272 = vpop.f32.mrb[0].mxu0
      %v3273 = vpop.f32.mrb[0].mxu0
      %v3274 = vadd.f32 0.0, %v3273
      %v3275 = vpop.f32.mrb[0].mxu0
      %3276 = vdwg.mxu0
      %3278 = vrot.lane.b32.xlu0 %v958, 96
      %v3279 = vpop.permute.xlu0 %3278
      %v3281 = vsel %vm979, %v958, 0
      %v3284 = vsel %vm979, %v3279, 0
      %3286 = vmatprep.subr.bf16.mxu0 0
      %3287 = vmatpush1.bf16.xpose.msra.mxu0 %v3284
      %3288 = vmatprep.subr.bf16.mxu0 0
      %3289 = vmatpush1.bf16.xpose.msra.mxu0 0
      %3290 = vmatprep.subr.bf16.mxu0 0
      %3291 = vmatpush1.bf16.xpose.msra.mxu0 0
      %3292 = vmatprep.subr.bf16.mxu0 0
      %3293 = vmatpush1.bf16.xpose.msra.mxu0 0
      %3294 = vmatprep.subr.bf16.mxu0 0
      %3295 = vmatpush1.bf16.xpose.msra.mxu0 0
      %3296 = vmatprep.subr.bf16.mxu0 0
      %3297 = vmatpush1.bf16.xpose.msra.mxu0 0
      %3298 = vmatprep.subr.bf16.mxu0 0
      %3299 = vmatpush1.bf16.xpose.msra.mxu0 0
      %3300 = vmatprep.subr.bf16.mxu0 0
      %3301 = vmatpush1.bf16.xpose.msra.mxu0 0
      %3302 = vmatprep.subr.bf16.mxu0 0
      %3303 = vmatpush1.bf16.xpose.msra.mxu0 0
      %3304 = vmatprep.subr.bf16.mxu0 0
      %3305 = vmatpush1.bf16.xpose.msra.mxu0 0
      %3306 = vmatprep.subr.bf16.mxu0 0
      %3307 = vmatpush1.bf16.xpose.msra.mxu0 0
      %3308 = vmatprep.subr.bf16.mxu0 0
      %3309 = vmatpush1.bf16.xpose.msra.mxu0 0
      %3310 = vmatprep.subr.bf16.mxu0 0
      %3311 = vmatpush1.bf16.xpose.msra.mxu0 0
      %3312 = vmatprep.subr.bf16.mxu0 0
      %3313 = vmatpush1.bf16.xpose.msra.mxu0 0
      %3314 = vmatprep.subr.bf16.mxu0 0
      %3315 = vmatpush1.bf16.xpose.msra.mxu0 0
      %3316 = vmatprep.subr.bf16.mxu0 0
      %3317 = vmatpush1.bf16.xpose.msra.mxu0 0
      %3318 = vmatprep.mubr.bf16.mxu0 0
      %3319 = vmatmul.mubr.bf16.gmra.mrb[0].mxu0 %v3281
      %v3320 = vpop.f32.mrb[0].mxu0
      %v3321 = vadd.f32 0.0, %v3320
      %v3322 = vpop.f32.mrb[0].mxu0
      %v3323 = vpop.f32.mrb[0].mxu0
      %v3324 = vadd.f32 0.0, %v3323
      %v3325 = vpop.f32.mrb[0].mxu0
      %3326 = vdwg.mxu0
      %3328 = vrot.lane.b32.xlu0 %v959, 96
      %v3329 = vpop.permute.xlu0 %3328
      %v3331 = vsel %vm979, %v959, 0
      %v3334 = vsel %vm979, %v3329, 0
      %3336 = vmatprep.subr.bf16.mxu0 0
      %3337 = vmatpush1.bf16.xpose.msra.mxu0 %v3334
      %3338 = vmatprep.subr.bf16.mxu0 0
      %3339 = vmatpush1.bf16.xpose.msra.mxu0 0
      %3340 = vmatprep.subr.bf16.mxu0 0
      %3341 = vmatpush1.bf16.xpose.msra.mxu0 0
      %3342 = vmatprep.subr.bf16.mxu0 0
      %3343 = vmatpush1.bf16.xpose.msra.mxu0 0
      %3344 = vmatprep.subr.bf16.mxu0 0
      %3345 = vmatpush1.bf16.xpose.msra.mxu0 0
      %3346 = vmatprep.subr.bf16.mxu0 0
      %3347 = vmatpush1.bf16.xpose.msra.mxu0 0
      %3348 = vmatprep.subr.bf16.mxu0 0
      %3349 = vmatpush1.bf16.xpose.msra.mxu0 0
      %3350 = vmatprep.subr.bf16.mxu0 0
      %3351 = vmatpush1.bf16.xpose.msra.mxu0 0
      %3352 = vmatprep.subr.bf16.mxu0 0
      %3353 = vmatpush1.bf16.xpose.msra.mxu0 0
      %3354 = vmatprep.subr.bf16.mxu0 0
      %3355 = vmatpush1.bf16.xpose.msra.mxu0 0
      %3356 = vmatprep.subr.bf16.mxu0 0
      %3357 = vmatpush1.bf16.xpose.msra.mxu0 0
      %3358 = vmatprep.subr.bf16.mxu0 0
      %3359 = vmatpush1.bf16.xpose.msra.mxu0 0
      %3360 = vmatprep.subr.bf16.mxu0 0
      %3361 = vmatpush1.bf16.xpose.msra.mxu0 0
      %3362 = vmatprep.subr.bf16.mxu0 0
      %3363 = vmatpush1.bf16.xpose.msra.mxu0 0
      %3364 = vmatprep.subr.bf16.mxu0 0
      %3365 = vmatpush1.bf16.xpose.msra.mxu0 0
      %3366 = vmatprep.subr.bf16.mxu0 0
      %3367 = vmatpush1.bf16.xpose.msra.mxu0 0
      %3368 = vmatprep.mubr.bf16.mxu0 0
      %3369 = vmatmul.mubr.bf16.gmra.mrb[0].mxu0 %v3331
      %v3370 = vpop.f32.mrb[0].mxu0
      %v3371 = vadd.f32 0.0, %v3370
      %v3372 = vpop.f32.mrb[0].mxu0
      %v3373 = vpop.f32.mrb[0].mxu0
      %v3374 = vadd.f32 0.0, %v3373
      %v3375 = vpop.f32.mrb[0].mxu0
      %3376 = vdwg.mxu0
      %3378 = vrot.lane.b32.xlu0 %v960, 96
      %v3379 = vpop.permute.xlu0 %3378
      %v3381 = vsel %vm979, %v960, 0
      %v3384 = vsel %vm979, %v3379, 0
      %3386 = vmatprep.subr.bf16.mxu0 0
      %3387 = vmatpush1.bf16.xpose.msra.mxu0 %v3384
      %3388 = vmatprep.subr.bf16.mxu0 0
      %3389 = vmatpush1.bf16.xpose.msra.mxu0 0
      %3390 = vmatprep.subr.bf16.mxu0 0
      %3391 = vmatpush1.bf16.xpose.msra.mxu0 0
      %3392 = vmatprep.subr.bf16.mxu0 0
      %3393 = vmatpush1.bf16.xpose.msra.mxu0 0
      %3394 = vmatprep.subr.bf16.mxu0 0
      %3395 = vmatpush1.bf16.xpose.msra.mxu0 0
      %3396 = vmatprep.subr.bf16.mxu0 0
      %3397 = vmatpush1.bf16.xpose.msra.mxu0 0
      %3398 = vmatprep.subr.bf16.mxu0 0
      %3399 = vmatpush1.bf16.xpose.msra.mxu0 0
      %3400 = vmatprep.subr.bf16.mxu0 0
      %3401 = vmatpush1.bf16.xpose.msra.mxu0 0
      %3402 = vmatprep.subr.bf16.mxu0 0
      %3403 = vmatpush1.bf16.xpose.msra.mxu0 0
      %3404 = vmatprep.subr.bf16.mxu0 0
      %3405 = vmatpush1.bf16.xpose.msra.mxu0 0
      %3406 = vmatprep.subr.bf16.mxu0 0
      %3407 = vmatpush1.bf16.xpose.msra.mxu0 0
      %3408 = vmatprep.subr.bf16.mxu0 0
      %3409 = vmatpush1.bf16.xpose.msra.mxu0 0
      %3410 = vmatprep.subr.bf16.mxu0 0
      %3411 = vmatpush1.bf16.xpose.msra.mxu0 0
      %3412 = vmatprep.subr.bf16.mxu0 0
      %3413 = vmatpush1.bf16.xpose.msra.mxu0 0
      %3414 = vmatprep.subr.bf16.mxu0 0
      %3415 = vmatpush1.bf16.xpose.msra.mxu0 0
      %3416 = vmatprep.subr.bf16.mxu0 0
      %3417 = vmatpush1.bf16.xpose.msra.mxu0 0
      %3418 = vmatprep.mubr.bf16.mxu0 0
      %3419 = vmatmul.mubr.bf16.gmra.mrb[0].mxu0 %v3381
      %v3420 = vpop.f32.mrb[0].mxu0
      %v3421 = vadd.f32 0.0, %v3420
      %v3422 = vpop.f32.mrb[0].mxu0
      %v3423 = vpop.f32.mrb[0].mxu0
      %v3424 = vadd.f32 0.0, %v3423
      %v3425 = vpop.f32.mrb[0].mxu0
      %3426 = vdwg.mxu0
      %3428 = vrot.lane.b32.xlu0 %v961, 96
      %v3429 = vpop.permute.xlu0 %3428
      %v3431 = vsel %vm979, %v961, 0
      %v3434 = vsel %vm979, %v3429, 0
      %3436 = vmatprep.subr.bf16.mxu0 0
      %3437 = vmatpush1.bf16.xpose.msra.mxu0 %v3434
      %3438 = vmatprep.subr.bf16.mxu0 0
      %3439 = vmatpush1.bf16.xpose.msra.mxu0 0
      %3440 = vmatprep.subr.bf16.mxu0 0
      %3441 = vmatpush1.bf16.xpose.msra.mxu0 0
      %3442 = vmatprep.subr.bf16.mxu0 0
      %3443 = vmatpush1.bf16.xpose.msra.mxu0 0
      %3444 = vmatprep.subr.bf16.mxu0 0
      %3445 = vmatpush1.bf16.xpose.msra.mxu0 0
      %3446 = vmatprep.subr.bf16.mxu0 0
      %3447 = vmatpush1.bf16.xpose.msra.mxu0 0
      %3448 = vmatprep.subr.bf16.mxu0 0
      %3449 = vmatpush1.bf16.xpose.msra.mxu0 0
      %3450 = vmatprep.subr.bf16.mxu0 0
      %3451 = vmatpush1.bf16.xpose.msra.mxu0 0
      %3452 = vmatprep.subr.bf16.mxu0 0
      %3453 = vmatpush1.bf16.xpose.msra.mxu0 0
      %3454 = vmatprep.subr.bf16.mxu0 0
      %3455 = vmatpush1.bf16.xpose.msra.mxu0 0
      %3456 = vmatprep.subr.bf16.mxu0 0
      %3457 = vmatpush1.bf16.xpose.msra.mxu0 0
      %3458 = vmatprep.subr.bf16.mxu0 0
      %3459 = vmatpush1.bf16.xpose.msra.mxu0 0
      %3460 = vmatprep.subr.bf16.mxu0 0
      %3461 = vmatpush1.bf16.xpose.msra.mxu0 0
      %3462 = vmatprep.subr.bf16.mxu0 0
      %3463 = vmatpush1.bf16.xpose.msra.mxu0 0
      %3464 = vmatprep.subr.bf16.mxu0 0
      %3465 = vmatpush1.bf16.xpose.msra.mxu0 0
      %3466 = vmatprep.subr.bf16.mxu0 0
      %3467 = vmatpush1.bf16.xpose.msra.mxu0 0
      %3468 = vmatprep.mubr.bf16.mxu0 0
      %3469 = vmatmul.mubr.bf16.gmra.mrb[0].mxu0 %v3431
      %v3470 = vpop.f32.mrb[0].mxu0
      %v3471 = vadd.f32 0.0, %v3470
      %v3472 = vpop.f32.mrb[0].mxu0
      %v3473 = vpop.f32.mrb[0].mxu0
      %v3474 = vadd.f32 0.0, %v3473
      %v3475 = vpop.f32.mrb[0].mxu0
      %3476 = vdwg.mxu0
      %3478 = vrot.lane.b32.xlu0 %v962, 96
      %v3479 = vpop.permute.xlu0 %3478
      %v3481 = vsel %vm979, %v962, 0
      %v3484 = vsel %vm979, %v3479, 0
      %3486 = vmatprep.subr.bf16.mxu0 0
      %3487 = vmatpush1.bf16.xpose.msra.mxu0 %v3484
      %3488 = vmatprep.subr.bf16.mxu0 0
      %3489 = vmatpush1.bf16.xpose.msra.mxu0 0
      %3490 = vmatprep.subr.bf16.mxu0 0
      %3491 = vmatpush1.bf16.xpose.msra.mxu0 0
      %3492 = vmatprep.subr.bf16.mxu0 0
      %3493 = vmatpush1.bf16.xpose.msra.mxu0 0
      %3494 = vmatprep.subr.bf16.mxu0 0
      %3495 = vmatpush1.bf16.xpose.msra.mxu0 0
      %3496 = vmatprep.subr.bf16.mxu0 0
      %3497 = vmatpush1.bf16.xpose.msra.mxu0 0
      %3498 = vmatprep.subr.bf16.mxu0 0
      %3499 = vmatpush1.bf16.xpose.msra.mxu0 0
      %3500 = vmatprep.subr.bf16.mxu0 0
      %3501 = vmatpush1.bf16.xpose.msra.mxu0 0
      %3502 = vmatprep.subr.bf16.mxu0 0
      %3503 = vmatpush1.bf16.xpose.msra.mxu0 0
      %3504 = vmatprep.subr.bf16.mxu0 0
      %3505 = vmatpush1.bf16.xpose.msra.mxu0 0
      %3506 = vmatprep.subr.bf16.mxu0 0
      %3507 = vmatpush1.bf16.xpose.msra.mxu0 0
      %3508 = vmatprep.subr.bf16.mxu0 0
      %3509 = vmatpush1.bf16.xpose.msra.mxu0 0
      %3510 = vmatprep.subr.bf16.mxu0 0
      %3511 = vmatpush1.bf16.xpose.msra.mxu0 0
      %3512 = vmatprep.subr.bf16.mxu0 0
      %3513 = vmatpush1.bf16.xpose.msra.mxu0 0
      %3514 = vmatprep.subr.bf16.mxu0 0
      %3515 = vmatpush1.bf16.xpose.msra.mxu0 0
      %3516 = vmatprep.subr.bf16.mxu0 0
      %3517 = vmatpush1.bf16.xpose.msra.mxu0 0
      %3518 = vmatprep.mubr.bf16.mxu0 0
      %3519 = vmatmul.mubr.bf16.gmra.mrb[0].mxu0 %v3481
      %v3520 = vpop.f32.mrb[0].mxu0
      %v3521 = vadd.f32 0.0, %v3520
      %v3522 = vpop.f32.mrb[0].mxu0
      %v3523 = vpop.f32.mrb[0].mxu0
      %v3524 = vadd.f32 0.0, %v3523
      %v3525 = vpop.f32.mrb[0].mxu0
      %3526 = vdwg.mxu0
      %3528 = vrot.lane.b32.xlu0 %v963, 96
      %v3529 = vpop.permute.xlu0 %3528
      %v3531 = vsel %vm979, %v963, 0
      %v3534 = vsel %vm979, %v3529, 0
      %3536 = vmatprep.subr.bf16.mxu0 0
      %3537 = vmatpush1.bf16.xpose.msra.mxu0 %v3534
      %3538 = vmatprep.subr.bf16.mxu0 0
      %3539 = vmatpush1.bf16.xpose.msra.mxu0 0
      %3540 = vmatprep.subr.bf16.mxu0 0
      %3541 = vmatpush1.bf16.xpose.msra.mxu0 0
      %3542 = vmatprep.subr.bf16.mxu0 0
      %3543 = vmatpush1.bf16.xpose.msra.mxu0 0
      %3544 = vmatprep.subr.bf16.mxu0 0
      %3545 = vmatpush1.bf16.xpose.msra.mxu0 0
      %3546 = vmatprep.subr.bf16.mxu0 0
      %3547 = vmatpush1.bf16.xpose.msra.mxu0 0
      %3548 = vmatprep.subr.bf16.mxu0 0
      %3549 = vmatpush1.bf16.xpose.msra.mxu0 0
      %3550 = vmatprep.subr.bf16.mxu0 0
      %3551 = vmatpush1.bf16.xpose.msra.mxu0 0
      %3552 = vmatprep.subr.bf16.mxu0 0
      %3553 = vmatpush1.bf16.xpose.msra.mxu0 0
      %3554 = vmatprep.subr.bf16.mxu0 0
      %3555 = vmatpush1.bf16.xpose.msra.mxu0 0
      %3556 = vmatprep.subr.bf16.mxu0 0
      %3557 = vmatpush1.bf16.xpose.msra.mxu0 0
      %3558 = vmatprep.subr.bf16.mxu0 0
      %3559 = vmatpush1.bf16.xpose.msra.mxu0 0
      %3560 = vmatprep.subr.bf16.mxu0 0
      %3561 = vmatpush1.bf16.xpose.msra.mxu0 0
      %3562 = vmatprep.subr.bf16.mxu0 0
      %3563 = vmatpush1.bf16.xpose.msra.mxu0 0
      %3564 = vmatprep.subr.bf16.mxu0 0
      %3565 = vmatpush1.bf16.xpose.msra.mxu0 0
      %3566 = vmatprep.subr.bf16.mxu0 0
      %3567 = vmatpush1.bf16.xpose.msra.mxu0 0
      %3568 = vmatprep.mubr.bf16.mxu0 0
      %3569 = vmatmul.mubr.bf16.gmra.mrb[0].mxu0 %v3531
      %v3570 = vpop.f32.mrb[0].mxu0
      %v3571 = vadd.f32 0.0, %v3570
      %v3572 = vpop.f32.mrb[0].mxu0
      %v3573 = vpop.f32.mrb[0].mxu0
      %v3574 = vadd.f32 0.0, %v3573
      %v3575 = vpop.f32.mrb[0].mxu0
      %3576 = vdwg.mxu0
      %3578 = vrot.lane.b32.xlu0 %v964, 96
      %v3579 = vpop.permute.xlu0 %3578
      %v3581 = vsel %vm979, %v964, 0
      %v3584 = vsel %vm979, %v3579, 0
      %3586 = vmatprep.subr.bf16.mxu0 0
      %3587 = vmatpush1.bf16.xpose.msra.mxu0 %v3584
      %3588 = vmatprep.subr.bf16.mxu0 0
      %3589 = vmatpush1.bf16.xpose.msra.mxu0 0
      %3590 = vmatprep.subr.bf16.mxu0 0
      %3591 = vmatpush1.bf16.xpose.msra.mxu0 0
      %3592 = vmatprep.subr.bf16.mxu0 0
      %3593 = vmatpush1.bf16.xpose.msra.mxu0 0
      %3594 = vmatprep.subr.bf16.mxu0 0
      %3595 = vmatpush1.bf16.xpose.msra.mxu0 0
      %3596 = vmatprep.subr.bf16.mxu0 0
      %3597 = vmatpush1.bf16.xpose.msra.mxu0 0
      %3598 = vmatprep.subr.bf16.mxu0 0
      %3599 = vmatpush1.bf16.xpose.msra.mxu0 0
      %3600 = vmatprep.subr.bf16.mxu0 0
      %3601 = vmatpush1.bf16.xpose.msra.mxu0 0
      %3602 = vmatprep.subr.bf16.mxu0 0
      %3603 = vmatpush1.bf16.xpose.msra.mxu0 0
      %3604 = vmatprep.subr.bf16.mxu0 0
      %3605 = vmatpush1.bf16.xpose.msra.mxu0 0
      %3606 = vmatprep.subr.bf16.mxu0 0
      %3607 = vmatpush1.bf16.xpose.msra.mxu0 0
      %3608 = vmatprep.subr.bf16.mxu0 0
      %3609 = vmatpush1.bf16.xpose.msra.mxu0 0
      %3610 = vmatprep.subr.bf16.mxu0 0
      %3611 = vmatpush1.bf16.xpose.msra.mxu0 0
      %3612 = vmatprep.subr.bf16.mxu0 0
      %3613 = vmatpush1.bf16.xpose.msra.mxu0 0
      %3614 = vmatprep.subr.bf16.mxu0 0
      %3615 = vmatpush1.bf16.xpose.msra.mxu0 0
      %3616 = vmatprep.subr.bf16.mxu0 0
      %3617 = vmatpush1.bf16.xpose.msra.mxu0 0
      %3618 = vmatprep.mubr.bf16.mxu0 0
      %3619 = vmatmul.mubr.bf16.gmra.mrb[0].mxu0 %v3581
      %v3620 = vpop.f32.mrb[0].mxu0
      %v3621 = vadd.f32 0.0, %v3620
      %v3622 = vpop.f32.mrb[0].mxu0
      %v3623 = vpop.f32.mrb[0].mxu0
      %v3624 = vadd.f32 0.0, %v3623
      %v3625 = vpop.f32.mrb[0].mxu0
      %3626 = vdwg.mxu0
      %3628 = vrot.lane.b32.xlu0 %v965, 96
      %v3629 = vpop.permute.xlu0 %3628
      %v3631 = vsel %vm979, %v965, 0
      %v3634 = vsel %vm979, %v3629, 0
      %3636 = vmatprep.subr.bf16.mxu0 0
      %3637 = vmatpush1.bf16.xpose.msra.mxu0 %v3634
      %3638 = vmatprep.subr.bf16.mxu0 0
      %3639 = vmatpush1.bf16.xpose.msra.mxu0 0
      %3640 = vmatprep.subr.bf16.mxu0 0
      %3641 = vmatpush1.bf16.xpose.msra.mxu0 0
      %3642 = vmatprep.subr.bf16.mxu0 0
      %3643 = vmatpush1.bf16.xpose.msra.mxu0 0
      %3644 = vmatprep.subr.bf16.mxu0 0
      %3645 = vmatpush1.bf16.xpose.msra.mxu0 0
      %3646 = vmatprep.subr.bf16.mxu0 0
      %3647 = vmatpush1.bf16.xpose.msra.mxu0 0
      %3648 = vmatprep.subr.bf16.mxu0 0
      %3649 = vmatpush1.bf16.xpose.msra.mxu0 0
      %3650 = vmatprep.subr.bf16.mxu0 0
      %3651 = vmatpush1.bf16.xpose.msra.mxu0 0
      %3652 = vmatprep.subr.bf16.mxu0 0
      %3653 = vmatpush1.bf16.xpose.msra.mxu0 0
      %3654 = vmatprep.subr.bf16.mxu0 0
      %3655 = vmatpush1.bf16.xpose.msra.mxu0 0
      %3656 = vmatprep.subr.bf16.mxu0 0
      %3657 = vmatpush1.bf16.xpose.msra.mxu0 0
      %3658 = vmatprep.subr.bf16.mxu0 0
      %3659 = vmatpush1.bf16.xpose.msra.mxu0 0
      %3660 = vmatprep.subr.bf16.mxu0 0
      %3661 = vmatpush1.bf16.xpose.msra.mxu0 0
      %3662 = vmatprep.subr.bf16.mxu0 0
      %3663 = vmatpush1.bf16.xpose.msra.mxu0 0
      %3664 = vmatprep.subr.bf16.mxu0 0
      %3665 = vmatpush1.bf16.xpose.msra.mxu0 0
      %3666 = vmatprep.subr.bf16.mxu0 0
      %3667 = vmatpush1.bf16.xpose.msra.mxu0 0
      %3668 = vmatprep.mubr.bf16.mxu0 0
      %3669 = vmatmul.mubr.bf16.gmra.mrb[0].mxu0 %v3631
      %v3670 = vpop.f32.mrb[0].mxu0
      %v3671 = vadd.f32 0.0, %v3670
      %v3672 = vpop.f32.mrb[0].mxu0
      %v3673 = vpop.f32.mrb[0].mxu0
      %v3674 = vadd.f32 0.0, %v3673
      %v3675 = vpop.f32.mrb[0].mxu0
      %3676 = vdwg.mxu0
      %3678 = vrot.lane.b32.xlu0 %v966, 96
      %v3679 = vpop.permute.xlu0 %3678
      %v3681 = vsel %vm979, %v966, 0
      %v3684 = vsel %vm979, %v3679, 0
      %3686 = vmatprep.subr.bf16.mxu0 0
      %3687 = vmatpush1.bf16.xpose.msra.mxu0 %v3684
      %3688 = vmatprep.subr.bf16.mxu0 0
      %3689 = vmatpush1.bf16.xpose.msra.mxu0 0
      %3690 = vmatprep.subr.bf16.mxu0 0
      %3691 = vmatpush1.bf16.xpose.msra.mxu0 0
      %3692 = vmatprep.subr.bf16.mxu0 0
      %3693 = vmatpush1.bf16.xpose.msra.mxu0 0
      %3694 = vmatprep.subr.bf16.mxu0 0
      %3695 = vmatpush1.bf16.xpose.msra.mxu0 0
      %3696 = vmatprep.subr.bf16.mxu0 0
      %3697 = vmatpush1.bf16.xpose.msra.mxu0 0
      %3698 = vmatprep.subr.bf16.mxu0 0
      %3699 = vmatpush1.bf16.xpose.msra.mxu0 0
      %3700 = vmatprep.subr.bf16.mxu0 0
      %3701 = vmatpush1.bf16.xpose.msra.mxu0 0
      %3702 = vmatprep.subr.bf16.mxu0 0
      %3703 = vmatpush1.bf16.xpose.msra.mxu0 0
      %3704 = vmatprep.subr.bf16.mxu0 0
      %3705 = vmatpush1.bf16.xpose.msra.mxu0 0
      %3706 = vmatprep.subr.bf16.mxu0 0
      %3707 = vmatpush1.bf16.xpose.msra.mxu0 0
      %3708 = vmatprep.subr.bf16.mxu0 0
      %3709 = vmatpush1.bf16.xpose.msra.mxu0 0
      %3710 = vmatprep.subr.bf16.mxu0 0
      %3711 = vmatpush1.bf16.xpose.msra.mxu0 0
      %3712 = vmatprep.subr.bf16.mxu0 0
      %3713 = vmatpush1.bf16.xpose.msra.mxu0 0
      %3714 = vmatprep.subr.bf16.mxu0 0
      %3715 = vmatpush1.bf16.xpose.msra.mxu0 0
      %3716 = vmatprep.subr.bf16.mxu0 0
      %3717 = vmatpush1.bf16.xpose.msra.mxu0 0
      %3718 = vmatprep.mubr.bf16.mxu0 0
      %3719 = vmatmul.mubr.bf16.gmra.mrb[0].mxu0 %v3681
      %v3720 = vpop.f32.mrb[0].mxu0
      %v3721 = vadd.f32 0.0, %v3720
      %v3722 = vpop.f32.mrb[0].mxu0
      %v3723 = vpop.f32.mrb[0].mxu0
      %v3724 = vadd.f32 0.0, %v3723
      %v3725 = vpop.f32.mrb[0].mxu0
      %3726 = vdwg.mxu0
      %3728 = vrot.lane.b32.xlu0 %v967, 96
      %v3729 = vpop.permute.xlu0 %3728
      %v3731 = vsel %vm979, %v967, 0
      %v3734 = vsel %vm979, %v3729, 0
      %3736 = vmatprep.subr.bf16.mxu0 0
      %3737 = vmatpush1.bf16.xpose.msra.mxu0 %v3734
      %3738 = vmatprep.subr.bf16.mxu0 0
      %3739 = vmatpush1.bf16.xpose.msra.mxu0 0
      %3740 = vmatprep.subr.bf16.mxu0 0
      %3741 = vmatpush1.bf16.xpose.msra.mxu0 0
      %3742 = vmatprep.subr.bf16.mxu0 0
      %3743 = vmatpush1.bf16.xpose.msra.mxu0 0
      %3744 = vmatprep.subr.bf16.mxu0 0
      %3745 = vmatpush1.bf16.xpose.msra.mxu0 0
      %3746 = vmatprep.subr.bf16.mxu0 0
      %3747 = vmatpush1.bf16.xpose.msra.mxu0 0
      %3748 = vmatprep.subr.bf16.mxu0 0
      %3749 = vmatpush1.bf16.xpose.msra.mxu0 0
      %3750 = vmatprep.subr.bf16.mxu0 0
      %3751 = vmatpush1.bf16.xpose.msra.mxu0 0
      %3752 = vmatprep.subr.bf16.mxu0 0
      %3753 = vmatpush1.bf16.xpose.msra.mxu0 0
      %3754 = vmatprep.subr.bf16.mxu0 0
      %3755 = vmatpush1.bf16.xpose.msra.mxu0 0
      %3756 = vmatprep.subr.bf16.mxu0 0
      %3757 = vmatpush1.bf16.xpose.msra.mxu0 0
      %3758 = vmatprep.subr.bf16.mxu0 0
      %3759 = vmatpush1.bf16.xpose.msra.mxu0 0
      %3760 = vmatprep.subr.bf16.mxu0 0
      %3761 = vmatpush1.bf16.xpose.msra.mxu0 0
      %3762 = vmatprep.subr.bf16.mxu0 0
      %3763 = vmatpush1.bf16.xpose.msra.mxu0 0
      %3764 = vmatprep.subr.bf16.mxu0 0
      %3765 = vmatpush1.bf16.xpose.msra.mxu0 0
      %3766 = vmatprep.subr.bf16.mxu0 0
      %3767 = vmatpush1.bf16.xpose.msra.mxu0 0
      %3768 = vmatprep.mubr.bf16.mxu0 0
      %3769 = vmatmul.mubr.bf16.gmra.mrb[0].mxu0 %v3731
      %v3770 = vpop.f32.mrb[0].mxu0
      %v3771 = vadd.f32 0.0, %v3770
      %v3772 = vpop.f32.mrb[0].mxu0
      %v3773 = vpop.f32.mrb[0].mxu0
      %v3774 = vadd.f32 0.0, %v3773
      %v3775 = vpop.f32.mrb[0].mxu0
      %3776 = vdwg.mxu0
      %3778 = vrot.lane.b32.xlu0 %v968, 96
      %v3779 = vpop.permute.xlu0 %3778
      %v3781 = vsel %vm979, %v968, 0
      %v3784 = vsel %vm979, %v3779, 0
      %3786 = vmatprep.subr.bf16.mxu0 0
      %3787 = vmatpush1.bf16.xpose.msra.mxu0 %v3784
      %3788 = vmatprep.subr.bf16.mxu0 0
      %3789 = vmatpush1.bf16.xpose.msra.mxu0 0
      %3790 = vmatprep.subr.bf16.mxu0 0
      %3791 = vmatpush1.bf16.xpose.msra.mxu0 0
      %3792 = vmatprep.subr.bf16.mxu0 0
      %3793 = vmatpush1.bf16.xpose.msra.mxu0 0
      %3794 = vmatprep.subr.bf16.mxu0 0
      %3795 = vmatpush1.bf16.xpose.msra.mxu0 0
      %3796 = vmatprep.subr.bf16.mxu0 0
      %3797 = vmatpush1.bf16.xpose.msra.mxu0 0
      %3798 = vmatprep.subr.bf16.mxu0 0
      %3799 = vmatpush1.bf16.xpose.msra.mxu0 0
      %3800 = vmatprep.subr.bf16.mxu0 0
      %3801 = vmatpush1.bf16.xpose.msra.mxu0 0
      %3802 = vmatprep.subr.bf16.mxu0 0
      %3803 = vmatpush1.bf16.xpose.msra.mxu0 0
      %3804 = vmatprep.subr.bf16.mxu0 0
      %3805 = vmatpush1.bf16.xpose.msra.mxu0 0
      %3806 = vmatprep.subr.bf16.mxu0 0
      %3807 = vmatpush1.bf16.xpose.msra.mxu0 0
      %3808 = vmatprep.subr.bf16.mxu0 0
      %3809 = vmatpush1.bf16.xpose.msra.mxu0 0
      %3810 = vmatprep.subr.bf16.mxu0 0
      %3811 = vmatpush1.bf16.xpose.msra.mxu0 0
      %3812 = vmatprep.subr.bf16.mxu0 0
      %3813 = vmatpush1.bf16.xpose.msra.mxu0 0
      %3814 = vmatprep.subr.bf16.mxu0 0
      %3815 = vmatpush1.bf16.xpose.msra.mxu0 0
      %3816 = vmatprep.subr.bf16.mxu0 0
      %3817 = vmatpush1.bf16.xpose.msra.mxu0 0
      %3818 = vmatprep.mubr.bf16.mxu0 0
      %3819 = vmatmul.mubr.bf16.gmra.mrb[0].mxu0 %v3781
      %v3820 = vpop.f32.mrb[0].mxu0
      %v3821 = vadd.f32 0.0, %v3820
      %v3822 = vpop.f32.mrb[0].mxu0
      %v3823 = vpop.f32.mrb[0].mxu0
      %v3824 = vadd.f32 0.0, %v3823
      %v3825 = vpop.f32.mrb[0].mxu0
      %3826 = vdwg.mxu0
      %3828 = vrot.lane.b32.xlu0 %v969, 96
      %v3829 = vpop.permute.xlu0 %3828
      %v3831 = vsel %vm979, %v969, 0
      %v3834 = vsel %vm979, %v3829, 0
      %3836 = vmatprep.subr.bf16.mxu0 0
      %3837 = vmatpush1.bf16.xpose.msra.mxu0 %v3834
      %3838 = vmatprep.subr.bf16.mxu0 0
      %3839 = vmatpush1.bf16.xpose.msra.mxu0 0
      %3840 = vmatprep.subr.bf16.mxu0 0
      %3841 = vmatpush1.bf16.xpose.msra.mxu0 0
      %3842 = vmatprep.subr.bf16.mxu0 0
      %3843 = vmatpush1.bf16.xpose.msra.mxu0 0
      %3844 = vmatprep.subr.bf16.mxu0 0
      %3845 = vmatpush1.bf16.xpose.msra.mxu0 0
      %3846 = vmatprep.subr.bf16.mxu0 0
      %3847 = vmatpush1.bf16.xpose.msra.mxu0 0
      %3848 = vmatprep.subr.bf16.mxu0 0
      %3849 = vmatpush1.bf16.xpose.msra.mxu0 0
      %3850 = vmatprep.subr.bf16.mxu0 0
      %3851 = vmatpush1.bf16.xpose.msra.mxu0 0
      %3852 = vmatprep.subr.bf16.mxu0 0
      %3853 = vmatpush1.bf16.xpose.msra.mxu0 0
      %3854 = vmatprep.subr.bf16.mxu0 0
      %3855 = vmatpush1.bf16.xpose.msra.mxu0 0
      %3856 = vmatprep.subr.bf16.mxu0 0
      %3857 = vmatpush1.bf16.xpose.msra.mxu0 0
      %3858 = vmatprep.subr.bf16.mxu0 0
      %3859 = vmatpush1.bf16.xpose.msra.mxu0 0
      %3860 = vmatprep.subr.bf16.mxu0 0
      %3861 = vmatpush1.bf16.xpose.msra.mxu0 0
      %3862 = vmatprep.subr.bf16.mxu0 0
      %3863 = vmatpush1.bf16.xpose.msra.mxu0 0
      %3864 = vmatprep.subr.bf16.mxu0 0
      %3865 = vmatpush1.bf16.xpose.msra.mxu0 0
      %3866 = vmatprep.subr.bf16.mxu0 0
      %3867 = vmatpush1.bf16.xpose.msra.mxu0 0
      %3868 = vmatprep.mubr.bf16.mxu0 0
      %3869 = vmatmul.mubr.bf16.gmra.mrb[0].mxu0 %v3831
      %v3870 = vpop.f32.mrb[0].mxu0
      %v3871 = vadd.f32 0.0, %v3870
      %v3872 = vpop.f32.mrb[0].mxu0
      %v3873 = vpop.f32.mrb[0].mxu0
      %v3874 = vadd.f32 0.0, %v3873
      %v3875 = vpop.f32.mrb[0].mxu0
      %3876 = vdwg.mxu0
      %3878 = vrot.lane.b32.xlu0 %v970, 96
      %v3879 = vpop.permute.xlu0 %3878
      %v3881 = vsel %vm979, %v970, 0
      %v3884 = vsel %vm979, %v3879, 0
      %3886 = vmatprep.subr.bf16.mxu0 0
      %3887 = vmatpush1.bf16.xpose.msra.mxu0 %v3884
      %3888 = vmatprep.subr.bf16.mxu0 0
      %3889 = vmatpush1.bf16.xpose.msra.mxu0 0
      %3890 = vmatprep.subr.bf16.mxu0 0
      %3891 = vmatpush1.bf16.xpose.msra.mxu0 0
      %3892 = vmatprep.subr.bf16.mxu0 0
      %3893 = vmatpush1.bf16.xpose.msra.mxu0 0
      %3894 = vmatprep.subr.bf16.mxu0 0
      %3895 = vmatpush1.bf16.xpose.msra.mxu0 0
      %3896 = vmatprep.subr.bf16.mxu0 0
      %3897 = vmatpush1.bf16.xpose.msra.mxu0 0
      %3898 = vmatprep.subr.bf16.mxu0 0
      %3899 = vmatpush1.bf16.xpose.msra.mxu0 0
      %3900 = vmatprep.subr.bf16.mxu0 0
      %3901 = vmatpush1.bf16.xpose.msra.mxu0 0
      %3902 = vmatprep.subr.bf16.mxu0 0
      %3903 = vmatpush1.bf16.xpose.msra.mxu0 0
      %3904 = vmatprep.subr.bf16.mxu0 0
      %3905 = vmatpush1.bf16.xpose.msra.mxu0 0
      %3906 = vmatprep.subr.bf16.mxu0 0
      %3907 = vmatpush1.bf16.xpose.msra.mxu0 0
      %3908 = vmatprep.subr.bf16.mxu0 0
      %3909 = vmatpush1.bf16.xpose.msra.mxu0 0
      %3910 = vmatprep.subr.bf16.mxu0 0
      %3911 = vmatpush1.bf16.xpose.msra.mxu0 0
      %3912 = vmatprep.subr.bf16.mxu0 0
      %3913 = vmatpush1.bf16.xpose.msra.mxu0 0
      %3914 = vmatprep.subr.bf16.mxu0 0
      %3915 = vmatpush1.bf16.xpose.msra.mxu0 0
      %3916 = vmatprep.subr.bf16.mxu0 0
      %3917 = vmatpush1.bf16.xpose.msra.mxu0 0
      %3918 = vmatprep.mubr.bf16.mxu0 0
      %3919 = vmatmul.mubr.bf16.gmra.mrb[0].mxu0 %v3881
      %v3920 = vpop.f32.mrb[0].mxu0
      %v3921 = vadd.f32 0.0, %v3920
      %v3922 = vpop.f32.mrb[0].mxu0
      %v3923 = vpop.f32.mrb[0].mxu0
      %v3924 = vadd.f32 0.0, %v3923
      %v3925 = vpop.f32.mrb[0].mxu0
      %3926 = vdwg.mxu0
      %3928 = vrot.lane.b32.xlu0 %v971, 96
      %v3929 = vpop.permute.xlu0 %3928
      %v3931 = vsel %vm979, %v971, 0
      %v3934 = vsel %vm979, %v3929, 0
      %3936 = vmatprep.subr.bf16.mxu0 0
      %3937 = vmatpush1.bf16.xpose.msra.mxu0 %v3934
      %3938 = vmatprep.subr.bf16.mxu0 0
      %3939 = vmatpush1.bf16.xpose.msra.mxu0 0
      %3940 = vmatprep.subr.bf16.mxu0 0
      %3941 = vmatpush1.bf16.xpose.msra.mxu0 0
      %3942 = vmatprep.subr.bf16.mxu0 0
      %3943 = vmatpush1.bf16.xpose.msra.mxu0 0
      %3944 = vmatprep.subr.bf16.mxu0 0
      %3945 = vmatpush1.bf16.xpose.msra.mxu0 0
      %3946 = vmatprep.subr.bf16.mxu0 0
      %3947 = vmatpush1.bf16.xpose.msra.mxu0 0
      %3948 = vmatprep.subr.bf16.mxu0 0
      %3949 = vmatpush1.bf16.xpose.msra.mxu0 0
      %3950 = vmatprep.subr.bf16.mxu0 0
      %3951 = vmatpush1.bf16.xpose.msra.mxu0 0
      %3952 = vmatprep.subr.bf16.mxu0 0
      %3953 = vmatpush1.bf16.xpose.msra.mxu0 0
      %3954 = vmatprep.subr.bf16.mxu0 0
      %3955 = vmatpush1.bf16.xpose.msra.mxu0 0
      %3956 = vmatprep.subr.bf16.mxu0 0
      %3957 = vmatpush1.bf16.xpose.msra.mxu0 0
      %3958 = vmatprep.subr.bf16.mxu0 0
      %3959 = vmatpush1.bf16.xpose.msra.mxu0 0
      %3960 = vmatprep.subr.bf16.mxu0 0
      %3961 = vmatpush1.bf16.xpose.msra.mxu0 0
      %3962 = vmatprep.subr.bf16.mxu0 0
      %3963 = vmatpush1.bf16.xpose.msra.mxu0 0
      %3964 = vmatprep.subr.bf16.mxu0 0
      %3965 = vmatpush1.bf16.xpose.msra.mxu0 0
      %3966 = vmatprep.subr.bf16.mxu0 0
      %3967 = vmatpush1.bf16.xpose.msra.mxu0 0
      %3968 = vmatprep.mubr.bf16.mxu0 0
      %3969 = vmatmul.mubr.bf16.gmra.mrb[0].mxu0 %v3931
      %v3970 = vpop.f32.mrb[0].mxu0
      %v3971 = vadd.f32 0.0, %v3970
      %v3972 = vpop.f32.mrb[0].mxu0
      %v3973 = vpop.f32.mrb[0].mxu0
      %v3974 = vadd.f32 0.0, %v3973
      %v3975 = vpop.f32.mrb[0].mxu0
      %3976 = vdwg.mxu0
      %3978 = vrot.lane.b32.xlu0 %v972, 96
      %v3979 = vpop.permute.xlu0 %3978
      %v3981 = vsel %vm979, %v972, 0
      %v3984 = vsel %vm979, %v3979, 0
      %3986 = vmatprep.subr.bf16.mxu0 0
      %3987 = vmatpush1.bf16.xpose.msra.mxu0 %v3984
      %3988 = vmatprep.subr.bf16.mxu0 0
      %3989 = vmatpush1.bf16.xpose.msra.mxu0 0
      %3990 = vmatprep.subr.bf16.mxu0 0
      %3991 = vmatpush1.bf16.xpose.msra.mxu0 0
      %3992 = vmatprep.subr.bf16.mxu0 0
      %3993 = vmatpush1.bf16.xpose.msra.mxu0 0
      %3994 = vmatprep.subr.bf16.mxu0 0
      %3995 = vmatpush1.bf16.xpose.msra.mxu0 0
      %3996 = vmatprep.subr.bf16.mxu0 0
      %3997 = vmatpush1.bf16.xpose.msra.mxu0 0
      %3998 = vmatprep.subr.bf16.mxu0 0
      %3999 = vmatpush1.bf16.xpose.msra.mxu0 0
      %4000 = vmatprep.subr.bf16.mxu0 0
      %4001 = vmatpush1.bf16.xpose.msra.mxu0 0
      %4002 = vmatprep.subr.bf16.mxu0 0
      %4003 = vmatpush1.bf16.xpose.msra.mxu0 0
      %4004 = vmatprep.subr.bf16.mxu0 0
      %4005 = vmatpush1.bf16.xpose.msra.mxu0 0
      %4006 = vmatprep.subr.bf16.mxu0 0
      %4007 = vmatpush1.bf16.xpose.msra.mxu0 0
      %4008 = vmatprep.subr.bf16.mxu0 0
      %4009 = vmatpush1.bf16.xpose.msra.mxu0 0
      %4010 = vmatprep.subr.bf16.mxu0 0
      %4011 = vmatpush1.bf16.xpose.msra.mxu0 0
      %4012 = vmatprep.subr.bf16.mxu0 0
      %4013 = vmatpush1.bf16.xpose.msra.mxu0 0
      %4014 = vmatprep.subr.bf16.mxu0 0
      %4015 = vmatpush1.bf16.xpose.msra.mxu0 0
      %4016 = vmatprep.subr.bf16.mxu0 0
      %4017 = vmatpush1.bf16.xpose.msra.mxu0 0
      %4018 = vmatprep.mubr.bf16.mxu0 0
      %4019 = vmatmul.mubr.bf16.gmra.mrb[0].mxu0 %v3981
      %v4020 = vpop.f32.mrb[0].mxu0
      %v4021 = vadd.f32 0.0, %v4020
      %v4022 = vpop.f32.mrb[0].mxu0
      %v4023 = vpop.f32.mrb[0].mxu0
      %v4024 = vadd.f32 0.0, %v4023
      %v4025 = vpop.f32.mrb[0].mxu0
      %4026 = vdwg.mxu0
      %4028 = vrot.lane.b32.xlu0 %v973, 96
      %v4029 = vpop.permute.xlu0 %4028
      %v4031 = vsel %vm979, %v973, 0
      %v4034 = vsel %vm979, %v4029, 0
      %4036 = vmatprep.subr.bf16.mxu0 0
      %4037 = vmatpush1.bf16.xpose.msra.mxu0 %v4034
      %4038 = vmatprep.subr.bf16.mxu0 0
      %4039 = vmatpush1.bf16.xpose.msra.mxu0 0
      %4040 = vmatprep.subr.bf16.mxu0 0
      %4041 = vmatpush1.bf16.xpose.msra.mxu0 0
      %4042 = vmatprep.subr.bf16.mxu0 0
      %4043 = vmatpush1.bf16.xpose.msra.mxu0 0
      %4044 = vmatprep.subr.bf16.mxu0 0
      %4045 = vmatpush1.bf16.xpose.msra.mxu0 0
      %4046 = vmatprep.subr.bf16.mxu0 0
      %4047 = vmatpush1.bf16.xpose.msra.mxu0 0
      %4048 = vmatprep.subr.bf16.mxu0 0
      %4049 = vmatpush1.bf16.xpose.msra.mxu0 0
      %4050 = vmatprep.subr.bf16.mxu0 0
      %4051 = vmatpush1.bf16.xpose.msra.mxu0 0
      %4052 = vmatprep.subr.bf16.mxu0 0
      %4053 = vmatpush1.bf16.xpose.msra.mxu0 0
      %4054 = vmatprep.subr.bf16.mxu0 0
      %4055 = vmatpush1.bf16.xpose.msra.mxu0 0
      %4056 = vmatprep.subr.bf16.mxu0 0
      %4057 = vmatpush1.bf16.xpose.msra.mxu0 0
      %4058 = vmatprep.subr.bf16.mxu0 0
      %4059 = vmatpush1.bf16.xpose.msra.mxu0 0
      %4060 = vmatprep.subr.bf16.mxu0 0
      %4061 = vmatpush1.bf16.xpose.msra.mxu0 0
      %4062 = vmatprep.subr.bf16.mxu0 0
      %4063 = vmatpush1.bf16.xpose.msra.mxu0 0
      %4064 = vmatprep.subr.bf16.mxu0 0
      %4065 = vmatpush1.bf16.xpose.msra.mxu0 0
      %4066 = vmatprep.subr.bf16.mxu0 0
      %4067 = vmatpush1.bf16.xpose.msra.mxu0 0
      %4068 = vmatprep.mubr.bf16.mxu0 0
      %4069 = vmatmul.mubr.bf16.gmra.mrb[0].mxu0 %v4031
      %v4070 = vpop.f32.mrb[0].mxu0
      %v4071 = vadd.f32 0.0, %v4070
      %v4072 = vpop.f32.mrb[0].mxu0
      %v4073 = vpop.f32.mrb[0].mxu0
      %v4074 = vadd.f32 0.0, %v4073
      %v4075 = vpop.f32.mrb[0].mxu0
      %4076 = vdwg.mxu0
      %4078 = vrot.lane.b32.xlu0 %v974, 96
      %v4079 = vpop.permute.xlu0 %4078
      %v4081 = vsel %vm979, %v974, 0
      %v4084 = vsel %vm979, %v4079, 0
      %4086 = vmatprep.subr.bf16.mxu0 0
      %4087 = vmatpush1.bf16.xpose.msra.mxu0 %v4084
      %4088 = vmatprep.subr.bf16.mxu0 0
      %4089 = vmatpush1.bf16.xpose.msra.mxu0 0
      %4090 = vmatprep.subr.bf16.mxu0 0
      %4091 = vmatpush1.bf16.xpose.msra.mxu0 0
      %4092 = vmatprep.subr.bf16.mxu0 0
      %4093 = vmatpush1.bf16.xpose.msra.mxu0 0
      %4094 = vmatprep.subr.bf16.mxu0 0
      %4095 = vmatpush1.bf16.xpose.msra.mxu0 0
      %4096 = vmatprep.subr.bf16.mxu0 0
      %4097 = vmatpush1.bf16.xpose.msra.mxu0 0
      %4098 = vmatprep.subr.bf16.mxu0 0
      %4099 = vmatpush1.bf16.xpose.msra.mxu0 0
      %4100 = vmatprep.subr.bf16.mxu0 0
      %4101 = vmatpush1.bf16.xpose.msra.mxu0 0
      %4102 = vmatprep.subr.bf16.mxu0 0
      %4103 = vmatpush1.bf16.xpose.msra.mxu0 0
      %4104 = vmatprep.subr.bf16.mxu0 0
      %4105 = vmatpush1.bf16.xpose.msra.mxu0 0
      %4106 = vmatprep.subr.bf16.mxu0 0
      %4107 = vmatpush1.bf16.xpose.msra.mxu0 0
      %4108 = vmatprep.subr.bf16.mxu0 0
      %4109 = vmatpush1.bf16.xpose.msra.mxu0 0
      %4110 = vmatprep.subr.bf16.mxu0 0
      %4111 = vmatpush1.bf16.xpose.msra.mxu0 0
      %4112 = vmatprep.subr.bf16.mxu0 0
      %4113 = vmatpush1.bf16.xpose.msra.mxu0 0
      %4114 = vmatprep.subr.bf16.mxu0 0
      %4115 = vmatpush1.bf16.xpose.msra.mxu0 0
      %4116 = vmatprep.subr.bf16.mxu0 0
      %4117 = vmatpush1.bf16.xpose.msra.mxu0 0
      %4118 = vmatprep.mubr.bf16.mxu0 0
      %4119 = vmatmul.mubr.bf16.gmra.mrb[0].mxu0 %v4081
      %v4120 = vpop.f32.mrb[0].mxu0
      %v4121 = vadd.f32 0.0, %v4120
      %v4122 = vpop.f32.mrb[0].mxu0
      %v4123 = vpop.f32.mrb[0].mxu0
      %v4124 = vadd.f32 0.0, %v4123
      %v4125 = vpop.f32.mrb[0].mxu0
      %4126 = vdwg.mxu0
      %4128 = vrot.lane.b32.xlu0 %v975, 96
      %v4129 = vpop.permute.xlu0 %4128
      %v4131 = vsel %vm979, %v975, 0
      %v4134 = vsel %vm979, %v4129, 0
      %4136 = vmatprep.subr.bf16.mxu0 0
      %4137 = vmatpush1.bf16.xpose.msra.mxu0 %v4134
      %4138 = vmatprep.subr.bf16.mxu0 0
      %4139 = vmatpush1.bf16.xpose.msra.mxu0 0
      %4140 = vmatprep.subr.bf16.mxu0 0
      %4141 = vmatpush1.bf16.xpose.msra.mxu0 0
      %4142 = vmatprep.subr.bf16.mxu0 0
      %4143 = vmatpush1.bf16.xpose.msra.mxu0 0
      %4144 = vmatprep.subr.bf16.mxu0 0
      %4145 = vmatpush1.bf16.xpose.msra.mxu0 0
      %4146 = vmatprep.subr.bf16.mxu0 0
      %4147 = vmatpush1.bf16.xpose.msra.mxu0 0
      %4148 = vmatprep.subr.bf16.mxu0 0
      %4149 = vmatpush1.bf16.xpose.msra.mxu0 0
      %4150 = vmatprep.subr.bf16.mxu0 0
      %4151 = vmatpush1.bf16.xpose.msra.mxu0 0
      %4152 = vmatprep.subr.bf16.mxu0 0
      %4153 = vmatpush1.bf16.xpose.msra.mxu0 0
      %4154 = vmatprep.subr.bf16.mxu0 0
      %4155 = vmatpush1.bf16.xpose.msra.mxu0 0
      %4156 = vmatprep.subr.bf16.mxu0 0
      %4157 = vmatpush1.bf16.xpose.msra.mxu0 0
      %4158 = vmatprep.subr.bf16.mxu0 0
      %4159 = vmatpush1.bf16.xpose.msra.mxu0 0
      %4160 = vmatprep.subr.bf16.mxu0 0
      %4161 = vmatpush1.bf16.xpose.msra.mxu0 0
      %4162 = vmatprep.subr.bf16.mxu0 0
      %4163 = vmatpush1.bf16.xpose.msra.mxu0 0
      %4164 = vmatprep.subr.bf16.mxu0 0
      %4165 = vmatpush1.bf16.xpose.msra.mxu0 0
      %4166 = vmatprep.subr.bf16.mxu0 0
      %4167 = vmatpush1.bf16.xpose.msra.mxu0 0
      %4168 = vmatprep.mubr.bf16.mxu0 0
      %4169 = vmatmul.mubr.bf16.gmra.mrb[0].mxu0 %v4131
      %v4170 = vpop.f32.mrb[0].mxu0
      %v4171 = vadd.f32 0.0, %v4170
      %v4172 = vpop.f32.mrb[0].mxu0
      %v4173 = vpop.f32.mrb[0].mxu0
      %v4174 = vadd.f32 0.0, %v4173
      %v4175 = vpop.f32.mrb[0].mxu0
      %4176 = vdwg.mxu0
      %vm4177 = vcmask 130048
      %v4178 = vsel %vm4177, %v1021, -inf
      %4179 = vmax.xlane.f32.xlu0 %v4178
      %v4180 = vpop.xlane.xlu0 %4179
      %v4181 = vsel %vm4177, %v1024, -inf
      %4182 = vmax.xlane.f32.xlu0 %v4181
      %v4183 = vpop.xlane.xlu0 %4182
      %v4184 = vsel %vm4177, %v1071, -inf
      %4185 = vmax.xlane.f32.xlu0 %v4184
      %v4186 = vpop.xlane.xlu0 %4185
      %v4187 = vsel %vm4177, %v1074, -inf
      %4188 = vmax.xlane.f32.xlu0 %v4187
      %v4189 = vpop.xlane.xlu0 %4188
      %v4190 = vsel %vm4177, %v1121, -inf
      %4191 = vmax.xlane.f32.xlu0 %v4190
      %v4192 = vpop.xlane.xlu0 %4191
      %v4193 = vsel %vm4177, %v1124, -inf
      %4194 = vmax.xlane.f32.xlu0 %v4193
      %v4195 = vpop.xlane.xlu0 %4194
      %v4196 = vsel %vm4177, %v1171, -inf
      %4197 = vmax.xlane.f32.xlu0 %v4196
      %v4198 = vpop.xlane.xlu0 %4197
      %v4199 = vsel %vm4177, %v1174, -inf
      %4200 = vmax.xlane.f32.xlu0 %v4199
      %v4201 = vpop.xlane.xlu0 %4200
      %v4202 = vsel %vm4177, %v1221, -inf
      %4203 = vmax.xlane.f32.xlu0 %v4202
      %v4204 = vpop.xlane.xlu0 %4203
      %v4205 = vsel %vm4177, %v1224, -inf
      %4206 = vmax.xlane.f32.xlu0 %v4205
      %v4207 = vpop.xlane.xlu0 %4206
      %v4208 = vsel %vm4177, %v1271, -inf
      %4209 = vmax.xlane.f32.xlu0 %v4208
      %v4210 = vpop.xlane.xlu0 %4209
      %v4211 = vsel %vm4177, %v1274, -inf
      %4212 = vmax.xlane.f32.xlu0 %v4211
      %v4213 = vpop.xlane.xlu0 %4212
      %v4214 = vsel %vm4177, %v1321, -inf
      %4215 = vmax.xlane.f32.xlu0 %v4214
      %v4216 = vpop.xlane.xlu0 %4215
      %v4217 = vsel %vm4177, %v1324, -inf
      %4218 = vmax.xlane.f32.xlu0 %v4217
      %v4219 = vpop.xlane.xlu0 %4218
      %v4220 = vsel %vm4177, %v1371, -inf
      %4221 = vmax.xlane.f32.xlu0 %v4220
      %v4222 = vpop.xlane.xlu0 %4221
      %v4223 = vsel %vm4177, %v1374, -inf
      %4224 = vmax.xlane.f32.xlu0 %v4223
      %v4225 = vpop.xlane.xlu0 %4224
      %v4226 = vsel %vm4177, %v1421, -inf
      %4227 = vmax.xlane.f32.xlu0 %v4226
      %v4228 = vpop.xlane.xlu0 %4227
      %v4229 = vsel %vm4177, %v1424, -inf
      %4230 = vmax.xlane.f32.xlu0 %v4229
      %v4231 = vpop.xlane.xlu0 %4230
      %v4232 = vsel %vm4177, %v1471, -inf
      %4233 = vmax.xlane.f32.xlu0 %v4232
      %v4234 = vpop.xlane.xlu0 %4233
      %v4235 = vsel %vm4177, %v1474, -inf
      %4236 = vmax.xlane.f32.xlu0 %v4235
      %v4237 = vpop.xlane.xlu0 %4236
      %v4238 = vsel %vm4177, %v1521, -inf
      %4239 = vmax.xlane.f32.xlu0 %v4238
      %v4240 = vpop.xlane.xlu0 %4239
      %v4241 = vsel %vm4177, %v1524, -inf
      %4242 = vmax.xlane.f32.xlu0 %v4241
      %v4243 = vpop.xlane.xlu0 %4242
      %v4244 = vsel %vm4177, %v1571, -inf
      %4245 = vmax.xlane.f32.xlu0 %v4244
      %v4246 = vpop.xlane.xlu0 %4245
      %v4247 = vsel %vm4177, %v1574, -inf
      %4248 = vmax.xlane.f32.xlu0 %v4247
      %v4249 = vpop.xlane.xlu0 %4248
      %v4250 = vsel %vm4177, %v1621, -inf
      %4251 = vmax.xlane.f32.xlu0 %v4250
      %v4252 = vpop.xlane.xlu0 %4251
      %v4253 = vsel %vm4177, %v1624, -inf
      %4254 = vmax.xlane.f32.xlu0 %v4253
      %v4255 = vpop.xlane.xlu0 %4254
      %v4256 = vsel %vm4177, %v1671, -inf
      %4257 = vmax.xlane.f32.xlu0 %v4256
      %v4258 = vpop.xlane.xlu0 %4257
      %v4259 = vsel %vm4177, %v1674, -inf
      %4260 = vmax.xlane.f32.xlu0 %v4259
      %v4261 = vpop.xlane.xlu0 %4260
      %v4262 = vsel %vm4177, %v1721, -inf
      %4263 = vmax.xlane.f32.xlu0 %v4262
      %v4264 = vpop.xlane.xlu0 %4263
      %v4265 = vsel %vm4177, %v1724, -inf
      %4266 = vmax.xlane.f32.xlu0 %v4265
      %v4267 = vpop.xlane.xlu0 %4266
      %v4268 = vsel %vm4177, %v1771, -inf
      %4269 = vmax.xlane.f32.xlu0 %v4268
      %v4270 = vpop.xlane.xlu0 %4269
      %v4271 = vsel %vm4177, %v1774, -inf
      %4272 = vmax.xlane.f32.xlu0 %v4271
      %v4273 = vpop.xlane.xlu0 %4272
      %v4274 = vsel %vm4177, %v1821, -inf
      %4275 = vmax.xlane.f32.xlu0 %v4274
      %v4276 = vpop.xlane.xlu0 %4275
      %v4277 = vsel %vm4177, %v1824, -inf
      %4278 = vmax.xlane.f32.xlu0 %v4277
      %v4279 = vpop.xlane.xlu0 %4278
      %v4280 = vsel %vm4177, %v1871, -inf
      %4281 = vmax.xlane.f32.xlu0 %v4280
      %v4282 = vpop.xlane.xlu0 %4281
      %v4283 = vsel %vm4177, %v1874, -inf
      %4284 = vmax.xlane.f32.xlu0 %v4283
      %v4285 = vpop.xlane.xlu0 %4284
      %v4286 = vsel %vm4177, %v1921, -inf
      %4287 = vmax.xlane.f32.xlu0 %v4286
      %v4288 = vpop.xlane.xlu0 %4287
      %v4289 = vsel %vm4177, %v1924, -inf
      %4290 = vmax.xlane.f32.xlu0 %v4289
      %v4291 = vpop.xlane.xlu0 %4290
      %v4292 = vsel %vm4177, %v1971, -inf
      %4293 = vmax.xlane.f32.xlu0 %v4292
      %v4294 = vpop.xlane.xlu0 %4293
      %v4295 = vsel %vm4177, %v1974, -inf
      %4296 = vmax.xlane.f32.xlu0 %v4295
      %v4297 = vpop.xlane.xlu0 %4296
      %v4298 = vsel %vm4177, %v2021, -inf
      %4299 = vmax.xlane.f32.xlu0 %v4298
      %v4300 = vpop.xlane.xlu0 %4299
      %v4301 = vsel %vm4177, %v2024, -inf
      %4302 = vmax.xlane.f32.xlu0 %v4301
      %v4303 = vpop.xlane.xlu0 %4302
      %v4304 = vsel %vm4177, %v2071, -inf
      %4305 = vmax.xlane.f32.xlu0 %v4304
      %v4306 = vpop.xlane.xlu0 %4305
      %v4307 = vsel %vm4177, %v2074, -inf
      %4308 = vmax.xlane.f32.xlu0 %v4307
      %v4309 = vpop.xlane.xlu0 %4308
      %v4310 = vsel %vm4177, %v2121, -inf
      %4311 = vmax.xlane.f32.xlu0 %v4310
      %v4312 = vpop.xlane.xlu0 %4311
      %v4313 = vsel %vm4177, %v2124, -inf
      %4314 = vmax.xlane.f32.xlu0 %v4313
      %v4315 = vpop.xlane.xlu0 %4314
      %v4316 = vsel %vm4177, %v2171, -inf
      %4317 = vmax.xlane.f32.xlu0 %v4316
      %v4318 = vpop.xlane.xlu0 %4317
      %v4319 = vsel %vm4177, %v2174, -inf
      %4320 = vmax.xlane.f32.xlu0 %v4319
      %v4321 = vpop.xlane.xlu0 %4320
      %v4322 = vsel %vm4177, %v2221, -inf
      %4323 = vmax.xlane.f32.xlu0 %v4322
      %v4324 = vpop.xlane.xlu0 %4323
      %v4325 = vsel %vm4177, %v2224, -inf
      %4326 = vmax.xlane.f32.xlu0 %v4325
      %v4327 = vpop.xlane.xlu0 %4326
      %v4328 = vsel %vm4177, %v2271, -inf
      %4329 = vmax.xlane.f32.xlu0 %v4328
      %v4330 = vpop.xlane.xlu0 %4329
      %v4331 = vsel %vm4177, %v2274, -inf
      %4332 = vmax.xlane.f32.xlu0 %v4331
      %v4333 = vpop.xlane.xlu0 %4332
      %v4334 = vsel %vm4177, %v2321, -inf
      %4335 = vmax.xlane.f32.xlu0 %v4334
      %v4336 = vpop.xlane.xlu0 %4335
      %v4337 = vsel %vm4177, %v2324, -inf
      %4338 = vmax.xlane.f32.xlu0 %v4337
      %v4339 = vpop.xlane.xlu0 %4338
      %v4340 = vsel %vm4177, %v2371, -inf
      %4341 = vmax.xlane.f32.xlu0 %v4340
      %v4342 = vpop.xlane.xlu0 %4341
      %v4343 = vsel %vm4177, %v2374, -inf
      %4344 = vmax.xlane.f32.xlu0 %v4343
      %v4345 = vpop.xlane.xlu0 %4344
      %v4346 = vsel %vm4177, %v2421, -inf
      %4347 = vmax.xlane.f32.xlu0 %v4346
      %v4348 = vpop.xlane.xlu0 %4347
      %v4349 = vsel %vm4177, %v2424, -inf
      %4350 = vmax.xlane.f32.xlu0 %v4349
      %v4351 = vpop.xlane.xlu0 %4350
      %v4352 = vsel %vm4177, %v2471, -inf
      %4353 = vmax.xlane.f32.xlu0 %v4352
      %v4354 = vpop.xlane.xlu0 %4353
      %v4355 = vsel %vm4177, %v2474, -inf
      %4356 = vmax.xlane.f32.xlu0 %v4355
      %v4357 = vpop.xlane.xlu0 %4356
      %v4358 = vsel %vm4177, %v2521, -inf
      %4359 = vmax.xlane.f32.xlu0 %v4358
      %v4360 = vpop.xlane.xlu0 %4359
      %v4361 = vsel %vm4177, %v2524, -inf
      %4362 = vmax.xlane.f32.xlu0 %v4361
      %v4363 = vpop.xlane.xlu0 %4362
      %v4364 = vsel %vm4177, %v2571, -inf
      %4365 = vmax.xlane.f32.xlu0 %v4364
      %v4366 = vpop.xlane.xlu0 %4365
      %v4367 = vsel %vm4177, %v2574, -inf
      %4368 = vmax.xlane.f32.xlu0 %v4367
      %v4369 = vpop.xlane.xlu0 %4368
      %v4370 = vsel %vm4177, %v2621, -inf
      %4371 = vmax.xlane.f32.xlu0 %v4370
      %v4372 = vpop.xlane.xlu0 %4371
      %v4373 = vsel %vm4177, %v2624, -inf
      %4374 = vmax.xlane.f32.xlu0 %v4373
      %v4375 = vpop.xlane.xlu0 %4374
      %v4376 = vsel %vm4177, %v2671, -inf
      %4377 = vmax.xlane.f32.xlu0 %v4376
      %v4378 = vpop.xlane.xlu0 %4377
      %v4379 = vsel %vm4177, %v2674, -inf
      %4380 = vmax.xlane.f32.xlu0 %v4379
      %v4381 = vpop.xlane.xlu0 %4380
      %v4382 = vsel %vm4177, %v2721, -inf
      %4383 = vmax.xlane.f32.xlu0 %v4382
      %v4384 = vpop.xlane.xlu0 %4383
      %v4385 = vsel %vm4177, %v2724, -inf
      %4386 = vmax.xlane.f32.xlu0 %v4385
      %v4387 = vpop.xlane.xlu0 %4386
      %v4388 = vsel %vm4177, %v2771, -inf
      %4389 = vmax.xlane.f32.xlu0 %v4388
      %v4390 = vpop.xlane.xlu0 %4389
      %v4391 = vsel %vm4177, %v2774, -inf
      %4392 = vmax.xlane.f32.xlu0 %v4391
      %v4393 = vpop.xlane.xlu0 %4392
      %v4394 = vsel %vm4177, %v2821, -inf
      %4395 = vmax.xlane.f32.xlu0 %v4394
      %v4396 = vpop.xlane.xlu0 %4395
      %v4397 = vsel %vm4177, %v2824, -inf
      %4398 = vmax.xlane.f32.xlu0 %v4397
      %v4399 = vpop.xlane.xlu0 %4398
      %v4400 = vsel %vm4177, %v2871, -inf
      %4401 = vmax.xlane.f32.xlu0 %v4400
      %v4402 = vpop.xlane.xlu0 %4401
      %v4403 = vsel %vm4177, %v2874, -inf
      %4404 = vmax.xlane.f32.xlu0 %v4403
      %v4405 = vpop.xlane.xlu0 %4404
      %v4406 = vsel %vm4177, %v2921, -inf
      %4407 = vmax.xlane.f32.xlu0 %v4406
      %v4408 = vpop.xlane.xlu0 %4407
      %v4409 = vsel %vm4177, %v2924, -inf
      %4410 = vmax.xlane.f32.xlu0 %v4409
      %v4411 = vpop.xlane.xlu0 %4410
      %v4412 = vsel %vm4177, %v2971, -inf
      %4413 = vmax.xlane.f32.xlu0 %v4412
      %v4414 = vpop.xlane.xlu0 %4413
      %v4415 = vsel %vm4177, %v2974, -inf
      %4416 = vmax.xlane.f32.xlu0 %v4415
      %v4417 = vpop.xlane.xlu0 %4416
      %v4418 = vsel %vm4177, %v3021, -inf
      %4419 = vmax.xlane.f32.xlu0 %v4418
      %v4420 = vpop.xlane.xlu0 %4419
      %v4421 = vsel %vm4177, %v3024, -inf
      %4422 = vmax.xlane.f32.xlu0 %v4421
      %v4423 = vpop.xlane.xlu0 %4422
      %v4424 = vsel %vm4177, %v3071, -inf
      %4425 = vmax.xlane.f32.xlu0 %v4424
      %v4426 = vpop.xlane.xlu0 %4425
      %v4427 = vsel %vm4177, %v3074, -inf
      %4428 = vmax.xlane.f32.xlu0 %v4427
      %v4429 = vpop.xlane.xlu0 %4428
      %v4430 = vsel %vm4177, %v3121, -inf
      %4431 = vmax.xlane.f32.xlu0 %v4430
      %v4432 = vpop.xlane.xlu0 %4431
      %v4433 = vsel %vm4177, %v3124, -inf
      %4434 = vmax.xlane.f32.xlu0 %v4433
      %v4435 = vpop.xlane.xlu0 %4434
      %v4436 = vsel %vm4177, %v3171, -inf
      %4437 = vmax.xlane.f32.xlu0 %v4436
      %v4438 = vpop.xlane.xlu0 %4437
      %v4439 = vsel %vm4177, %v3174, -inf
      %4440 = vmax.xlane.f32.xlu0 %v4439
      %v4441 = vpop.xlane.xlu0 %4440
      %v4442 = vsel %vm4177, %v3221, -inf
      %4443 = vmax.xlane.f32.xlu0 %v4442
      %v4444 = vpop.xlane.xlu0 %4443
      %v4445 = vsel %vm4177, %v3224, -inf
      %4446 = vmax.xlane.f32.xlu0 %v4445
      %v4447 = vpop.xlane.xlu0 %4446
      %v4448 = vsel %vm4177, %v3271, -inf
      %4449 = vmax.xlane.f32.xlu0 %v4448
      %v4450 = vpop.xlane.xlu0 %4449
      %v4451 = vsel %vm4177, %v3274, -inf
      %4452 = vmax.xlane.f32.xlu0 %v4451
      %v4453 = vpop.xlane.xlu0 %4452
      %v4454 = vsel %vm4177, %v3321, -inf
      %4455 = vmax.xlane.f32.xlu0 %v4454
      %v4456 = vpop.xlane.xlu0 %4455
      %v4457 = vsel %vm4177, %v3324, -inf
      %4458 = vmax.xlane.f32.xlu0 %v4457
      %v4459 = vpop.xlane.xlu0 %4458
      %v4460 = vsel %vm4177, %v3371, -inf
      %4461 = vmax.xlane.f32.xlu0 %v4460
      %v4462 = vpop.xlane.xlu0 %4461
      %v4463 = vsel %vm4177, %v3374, -inf
      %4464 = vmax.xlane.f32.xlu0 %v4463
      %v4465 = vpop.xlane.xlu0 %4464
      %v4466 = vsel %vm4177, %v3421, -inf
      %4467 = vmax.xlane.f32.xlu0 %v4466
      %v4468 = vpop.xlane.xlu0 %4467
      %v4469 = vsel %vm4177, %v3424, -inf
      %4470 = vmax.xlane.f32.xlu0 %v4469
      %v4471 = vpop.xlane.xlu0 %4470
      %v4472 = vsel %vm4177, %v3471, -inf
      %4473 = vmax.xlane.f32.xlu0 %v4472
      %v4474 = vpop.xlane.xlu0 %4473
      %v4475 = vsel %vm4177, %v3474, -inf
      %4476 = vmax.xlane.f32.xlu0 %v4475
      %v4477 = vpop.xlane.xlu0 %4476
      %v4478 = vsel %vm4177, %v3521, -inf
      %4479 = vmax.xlane.f32.xlu0 %v4478
      %v4480 = vpop.xlane.xlu0 %4479
      %v4481 = vsel %vm4177, %v3524, -inf
      %4482 = vmax.xlane.f32.xlu0 %v4481
      %v4483 = vpop.xlane.xlu0 %4482
      %v4484 = vsel %vm4177, %v3571, -inf
      %4485 = vmax.xlane.f32.xlu0 %v4484
      %v4486 = vpop.xlane.xlu0 %4485
      %v4487 = vsel %vm4177, %v3574, -inf
      %4488 = vmax.xlane.f32.xlu0 %v4487
      %v4489 = vpop.xlane.xlu0 %4488
      %v4490 = vsel %vm4177, %v3621, -inf
      %4491 = vmax.xlane.f32.xlu0 %v4490
      %v4492 = vpop.xlane.xlu0 %4491
      %v4493 = vsel %vm4177, %v3624, -inf
      %4494 = vmax.xlane.f32.xlu0 %v4493
      %v4495 = vpop.xlane.xlu0 %4494
      %v4496 = vsel %vm4177, %v3671, -inf
      %4497 = vmax.xlane.f32.xlu0 %v4496
      %v4498 = vpop.xlane.xlu0 %4497
      %v4499 = vsel %vm4177, %v3674, -inf
      %4500 = vmax.xlane.f32.xlu0 %v4499
      %v4501 = vpop.xlane.xlu0 %4500
      %v4502 = vsel %vm4177, %v3721, -inf
      %4503 = vmax.xlane.f32.xlu0 %v4502
      %v4504 = vpop.xlane.xlu0 %4503
      %v4505 = vsel %vm4177, %v3724, -inf
      %4506 = vmax.xlane.f32.xlu0 %v4505
      %v4507 = vpop.xlane.xlu0 %4506
      %v4508 = vsel %vm4177, %v3771, -inf
      %4509 = vmax.xlane.f32.xlu0 %v4508
      %v4510 = vpop.xlane.xlu0 %4509
      %v4511 = vsel %vm4177, %v3774, -inf
      %4512 = vmax.xlane.f32.xlu0 %v4511
      %v4513 = vpop.xlane.xlu0 %4512
      %v4514 = vsel %vm4177, %v3821, -inf
      %4515 = vmax.xlane.f32.xlu0 %v4514
      %v4516 = vpop.xlane.xlu0 %4515
      %v4517 = vsel %vm4177, %v3824, -inf
      %4518 = vmax.xlane.f32.xlu0 %v4517
      %v4519 = vpop.xlane.xlu0 %4518
      %v4520 = vsel %vm4177, %v3871, -inf
      %4521 = vmax.xlane.f32.xlu0 %v4520
      %v4522 = vpop.xlane.xlu0 %4521
      %v4523 = vsel %vm4177, %v3874, -inf
      %4524 = vmax.xlane.f32.xlu0 %v4523
      %v4525 = vpop.xlane.xlu0 %4524
      %v4526 = vsel %vm4177, %v3921, -inf
      %4527 = vmax.xlane.f32.xlu0 %v4526
      %v4528 = vpop.xlane.xlu0 %4527
      %v4529 = vsel %vm4177, %v3924, -inf
      %4530 = vmax.xlane.f32.xlu0 %v4529
      %v4531 = vpop.xlane.xlu0 %4530
      %v4532 = vsel %vm4177, %v3971, -inf
      %4533 = vmax.xlane.f32.xlu0 %v4532
      %v4534 = vpop.xlane.xlu0 %4533
      %v4535 = vsel %vm4177, %v3974, -inf
      %4536 = vmax.xlane.f32.xlu0 %v4535
      %v4537 = vpop.xlane.xlu0 %4536
      %v4538 = vsel %vm4177, %v4021, -inf
      %4539 = vmax.xlane.f32.xlu0 %v4538
      %v4540 = vpop.xlane.xlu0 %4539
      %v4541 = vsel %vm4177, %v4024, -inf
      %4542 = vmax.xlane.f32.xlu0 %v4541
      %v4543 = vpop.xlane.xlu0 %4542
      %v4544 = vsel %vm4177, %v4071, -inf
      %4545 = vmax.xlane.f32.xlu0 %v4544
      %v4546 = vpop.xlane.xlu0 %4545
      %v4547 = vsel %vm4177, %v4074, -inf
      %4548 = vmax.xlane.f32.xlu0 %v4547
      %v4549 = vpop.xlane.xlu0 %4548
      %v4550 = vsel %vm4177, %v4121, -inf
      %4551 = vmax.xlane.f32.xlu0 %v4550
      %v4552 = vpop.xlane.xlu0 %4551
      %v4553 = vsel %vm4177, %v4124, -inf
      %4554 = vmax.xlane.f32.xlu0 %v4553
      %v4555 = vpop.xlane.xlu0 %4554
      %v4556 = vsel %vm4177, %v4171, -inf
      %4557 = vmax.xlane.f32.xlu0 %v4556
      %v4558 = vpop.xlane.xlu0 %4557
      %v4559 = vsel %vm4177, %v4174, -inf
      %4560 = vmax.xlane.f32.xlu0 %v4559
      %v4561 = vpop.xlane.xlu0 %4560
      %v4562 = vsub.f32 %v1021, %v4180
      %v4563 = vsub.f32 %v1024, %v4183
      %v4564 = vsub.f32 %v1071, %v4186
      %v4565 = vsub.f32 %v1074, %v4189
      %v4566 = vsub.f32 %v1121, %v4192
      %v4567 = vsub.f32 %v1124, %v4195
      %v4568 = vsub.f32 %v1171, %v4198
      %v4569 = vsub.f32 %v1174, %v4201
      %v4570 = vsub.f32 %v1221, %v4204
      %v4571 = vsub.f32 %v1224, %v4207
      %v4572 = vsub.f32 %v1271, %v4210
      %v4573 = vsub.f32 %v1274, %v4213
      %v4574 = vsub.f32 %v1321, %v4216
      %v4575 = vsub.f32 %v1324, %v4219
      %v4576 = vsub.f32 %v1371, %v4222
      %v4577 = vsub.f32 %v1374, %v4225
      %v4578 = vsub.f32 %v1421, %v4228
      %v4579 = vsub.f32 %v1424, %v4231
      %v4580 = vsub.f32 %v1471, %v4234
      %v4581 = vsub.f32 %v1474, %v4237
      %v4582 = vsub.f32 %v1521, %v4240
      %v4583 = vsub.f32 %v1524, %v4243
      %v4584 = vsub.f32 %v1571, %v4246
      %v4585 = vsub.f32 %v1574, %v4249
      %v4586 = vsub.f32 %v1621, %v4252
      %v4587 = vsub.f32 %v1624, %v4255
      %v4588 = vsub.f32 %v1671, %v4258
      %v4589 = vsub.f32 %v1674, %v4261
      %v4590 = vsub.f32 %v1721, %v4264
      %v4591 = vsub.f32 %v1724, %v4267
      %v4592 = vsub.f32 %v1771, %v4270
      %v4593 = vsub.f32 %v1774, %v4273
      %v4594 = vsub.f32 %v1821, %v4276
      %v4595 = vsub.f32 %v1824, %v4279
      %v4596 = vsub.f32 %v1871, %v4282
      %v4597 = vsub.f32 %v1874, %v4285
      %v4598 = vsub.f32 %v1921, %v4288
      %v4599 = vsub.f32 %v1924, %v4291
      %v4600 = vsub.f32 %v1971, %v4294
      %v4601 = vsub.f32 %v1974, %v4297
      %v4602 = vsub.f32 %v2021, %v4300
      %v4603 = vsub.f32 %v2024, %v4303
      %v4604 = vsub.f32 %v2071, %v4306
      %v4605 = vsub.f32 %v2074, %v4309
      %v4606 = vsub.f32 %v2121, %v4312
      %v4607 = vsub.f32 %v2124, %v4315
      %v4608 = vsub.f32 %v2171, %v4318
      %v4609 = vsub.f32 %v2174, %v4321
      %v4610 = vsub.f32 %v2221, %v4324
      %v4611 = vsub.f32 %v2224, %v4327
      %v4612 = vsub.f32 %v2271, %v4330
      %v4613 = vsub.f32 %v2274, %v4333
      %v4614 = vsub.f32 %v2321, %v4336
      %v4615 = vsub.f32 %v2324, %v4339
      %v4616 = vsub.f32 %v2371, %v4342
      %v4617 = vsub.f32 %v2374, %v4345
      %v4618 = vsub.f32 %v2421, %v4348
      %v4619 = vsub.f32 %v2424, %v4351
      %v4620 = vsub.f32 %v2471, %v4354
      %v4621 = vsub.f32 %v2474, %v4357
      %v4622 = vsub.f32 %v2521, %v4360
      %v4623 = vsub.f32 %v2524, %v4363
      %v4624 = vsub.f32 %v2571, %v4366
      %v4625 = vsub.f32 %v2574, %v4369
      %v4626 = vsub.f32 %v2621, %v4372
      %v4627 = vsub.f32 %v2624, %v4375
      %v4628 = vsub.f32 %v2671, %v4378
      %v4629 = vsub.f32 %v2674, %v4381
      %v4630 = vsub.f32 %v2721, %v4384
      %v4631 = vsub.f32 %v2724, %v4387
      %v4632 = vsub.f32 %v2771, %v4390
      %v4633 = vsub.f32 %v2774, %v4393
      %v4634 = vsub.f32 %v2821, %v4396
      %v4635 = vsub.f32 %v2824, %v4399
      %v4636 = vsub.f32 %v2871, %v4402
      %v4637 = vsub.f32 %v2874, %v4405
      %v4638 = vsub.f32 %v2921, %v4408
      %v4639 = vsub.f32 %v2924, %v4411
      %v4640 = vsub.f32 %v2971, %v4414
      %v4641 = vsub.f32 %v2974, %v4417
      %v4642 = vsub.f32 %v3021, %v4420
      %v4643 = vsub.f32 %v3024, %v4423
      %v4644 = vsub.f32 %v3071, %v4426
      %v4645 = vsub.f32 %v3074, %v4429
      %v4646 = vsub.f32 %v3121, %v4432
      %v4647 = vsub.f32 %v3124, %v4435
      %v4648 = vsub.f32 %v3171, %v4438
      %v4649 = vsub.f32 %v3174, %v4441
      %v4650 = vsub.f32 %v3221, %v4444
      %v4651 = vsub.f32 %v3224, %v4447
      %v4652 = vsub.f32 %v3271, %v4450
      %v4653 = vsub.f32 %v3274, %v4453
      %v4654 = vsub.f32 %v3321, %v4456
      %v4655 = vsub.f32 %v3324, %v4459
      %v4656 = vsub.f32 %v3371, %v4462
      %v4657 = vsub.f32 %v3374, %v4465
      %v4658 = vsub.f32 %v3421, %v4468
      %v4659 = vsub.f32 %v3424, %v4471
      %v4660 = vsub.f32 %v3471, %v4474
      %v4661 = vsub.f32 %v3474, %v4477
      %v4662 = vsub.f32 %v3521, %v4480
      %v4663 = vsub.f32 %v3524, %v4483
      %v4664 = vsub.f32 %v3571, %v4486
      %v4665 = vsub.f32 %v3574, %v4489
      %v4666 = vsub.f32 %v3621, %v4492
      %v4667 = vsub.f32 %v3624, %v4495
      %v4668 = vsub.f32 %v3671, %v4498
      %v4669 = vsub.f32 %v3674, %v4501
      %v4670 = vsub.f32 %v3721, %v4504
      %v4671 = vsub.f32 %v3724, %v4507
      %v4672 = vsub.f32 %v3771, %v4510
      %v4673 = vsub.f32 %v3774, %v4513
      %v4674 = vsub.f32 %v3821, %v4516
      %v4675 = vsub.f32 %v3824, %v4519
      %v4676 = vsub.f32 %v3871, %v4522
      %v4677 = vsub.f32 %v3874, %v4525
      %v4678 = vsub.f32 %v3921, %v4528
      %v4679 = vsub.f32 %v3924, %v4531
      %v4680 = vsub.f32 %v3971, %v4534
      %v4681 = vsub.f32 %v3974, %v4537
      %v4682 = vsub.f32 %v4021, %v4540
      %v4683 = vsub.f32 %v4024, %v4543
      %v4684 = vsub.f32 %v4071, %v4546
      %v4685 = vsub.f32 %v4074, %v4549
      %v4686 = vsub.f32 %v4121, %v4552
      %v4687 = vsub.f32 %v4124, %v4555
      %v4688 = vsub.f32 %v4171, %v4558
      %v4689 = vsub.f32 %v4174, %v4561
      %v4690 = vmul.f32 %v4562, 1.442695
      %v4691 = vpow.pop %v4690
      %v4692 = vmul.f32 %v4563, 1.442695
      %v4693 = vpow.pop %v4692
      %v4694 = vmul.f32 %v4564, 1.442695
      %v4695 = vpow.pop %v4694
      %v4696 = vmul.f32 %v4565, 1.442695
      %v4697 = vpow.pop %v4696
      %v4698 = vmul.f32 %v4566, 1.442695
      %v4699 = vpow.pop %v4698
      %v4700 = vmul.f32 %v4567, 1.442695
      %v4701 = vpow.pop %v4700
      %v4702 = vmul.f32 %v4568, 1.442695
      %v4703 = vpow.pop %v4702
      %v4704 = vmul.f32 %v4569, 1.442695
      %v4705 = vpow.pop %v4704
      %v4706 = vmul.f32 %v4570, 1.442695
      %v4707 = vpow.pop %v4706
      %v4708 = vmul.f32 %v4571, 1.442695
      %v4709 = vpow.pop %v4708
      %v4710 = vmul.f32 %v4572, 1.442695
      %v4711 = vpow.pop %v4710
      %v4712 = vmul.f32 %v4573, 1.442695
      %v4713 = vpow.pop %v4712
      %v4714 = vmul.f32 %v4574, 1.442695
      %v4715 = vpow.pop %v4714
      %v4716 = vmul.f32 %v4575, 1.442695
      %v4717 = vpow.pop %v4716
      %v4718 = vmul.f32 %v4576, 1.442695
      %v4719 = vpow.pop %v4718
      %v4720 = vmul.f32 %v4577, 1.442695
      %v4721 = vpow.pop %v4720
      %v4722 = vmul.f32 %v4578, 1.442695
      %v4723 = vpow.pop %v4722
      %v4724 = vmul.f32 %v4579, 1.442695
      %v4725 = vpow.pop %v4724
      %v4726 = vmul.f32 %v4580, 1.442695
      %v4727 = vpow.pop %v4726
      %v4728 = vmul.f32 %v4581, 1.442695
      %v4729 = vpow.pop %v4728
      %v4730 = vmul.f32 %v4582, 1.442695
      %v4731 = vpow.pop %v4730
      %v4732 = vmul.f32 %v4583, 1.442695
      %v4733 = vpow.pop %v4732
      %v4734 = vmul.f32 %v4584, 1.442695
      %v4735 = vpow.pop %v4734
      %v4736 = vmul.f32 %v4585, 1.442695
      %v4737 = vpow.pop %v4736
      %v4738 = vmul.f32 %v4586, 1.442695
      %v4739 = vpow.pop %v4738
      %v4740 = vmul.f32 %v4587, 1.442695
      %v4741 = vpow.pop %v4740
      %v4742 = vmul.f32 %v4588, 1.442695
      %v4743 = vpow.pop %v4742
      %v4744 = vmul.f32 %v4589, 1.442695
      %v4745 = vpow.pop %v4744
      %v4746 = vmul.f32 %v4590, 1.442695
      %v4747 = vpow.pop %v4746
      %v4748 = vmul.f32 %v4591, 1.442695
      %v4749 = vpow.pop %v4748
      %v4750 = vmul.f32 %v4592, 1.442695
      %v4751 = vpow.pop %v4750
      %v4752 = vmul.f32 %v4593, 1.442695
      %v4753 = vpow.pop %v4752
      %v4754 = vmul.f32 %v4594, 1.442695
      %v4755 = vpow.pop %v4754
      %v4756 = vmul.f32 %v4595, 1.442695
      %v4757 = vpow.pop %v4756
      %v4758 = vmul.f32 %v4596, 1.442695
      %v4759 = vpow.pop %v4758
      %v4760 = vmul.f32 %v4597, 1.442695
      %v4761 = vpow.pop %v4760
      %v4762 = vmul.f32 %v4598, 1.442695
      %v4763 = vpow.pop %v4762
      %v4764 = vmul.f32 %v4599, 1.442695
      %v4765 = vpow.pop %v4764
      %v4766 = vmul.f32 %v4600, 1.442695
      %v4767 = vpow.pop %v4766
      %v4768 = vmul.f32 %v4601, 1.442695
      %v4769 = vpow.pop %v4768
      %v4770 = vmul.f32 %v4602, 1.442695
      %v4771 = vpow.pop %v4770
      %v4772 = vmul.f32 %v4603, 1.442695
      %v4773 = vpow.pop %v4772
      %v4774 = vmul.f32 %v4604, 1.442695
      %v4775 = vpow.pop %v4774
      %v4776 = vmul.f32 %v4605, 1.442695
      %v4777 = vpow.pop %v4776
      %v4778 = vmul.f32 %v4606, 1.442695
      %v4779 = vpow.pop %v4778
      %v4780 = vmul.f32 %v4607, 1.442695
      %v4781 = vpow.pop %v4780
      %v4782 = vmul.f32 %v4608, 1.442695
      %v4783 = vpow.pop %v4782
      %v4784 = vmul.f32 %v4609, 1.442695
      %v4785 = vpow.pop %v4784
      %v4786 = vmul.f32 %v4610, 1.442695
      %v4787 = vpow.pop %v4786
      %v4788 = vmul.f32 %v4611, 1.442695
      %v4789 = vpow.pop %v4788
      %v4790 = vmul.f32 %v4612, 1.442695
      %v4791 = vpow.pop %v4790
      %v4792 = vmul.f32 %v4613, 1.442695
      %v4793 = vpow.pop %v4792
      %v4794 = vmul.f32 %v4614, 1.442695
      %v4795 = vpow.pop %v4794
      %v4796 = vmul.f32 %v4615, 1.442695
      %v4797 = vpow.pop %v4796
      %v4798 = vmul.f32 %v4616, 1.442695
      %v4799 = vpow.pop %v4798
      %v4800 = vmul.f32 %v4617, 1.442695
      %v4801 = vpow.pop %v4800
      %v4802 = vmul.f32 %v4618, 1.442695
      %v4803 = vpow.pop %v4802
      %v4804 = vmul.f32 %v4619, 1.442695
      %v4805 = vpow.pop %v4804
      %v4806 = vmul.f32 %v4620, 1.442695
      %v4807 = vpow.pop %v4806
      %v4808 = vmul.f32 %v4621, 1.442695
      %v4809 = vpow.pop %v4808
      %v4810 = vmul.f32 %v4622, 1.442695
      %v4811 = vpow.pop %v4810
      %v4812 = vmul.f32 %v4623, 1.442695
      %v4813 = vpow.pop %v4812
      %v4814 = vmul.f32 %v4624, 1.442695
      %v4815 = vpow.pop %v4814
      %v4816 = vmul.f32 %v4625, 1.442695
      %v4817 = vpow.pop %v4816
      %v4818 = vmul.f32 %v4626, 1.442695
      %v4819 = vpow.pop %v4818
      %v4820 = vmul.f32 %v4627, 1.442695
      %v4821 = vpow.pop %v4820
      %v4822 = vmul.f32 %v4628, 1.442695
      %v4823 = vpow.pop %v4822
      %v4824 = vmul.f32 %v4629, 1.442695
      %v4825 = vpow.pop %v4824
      %v4826 = vmul.f32 %v4630, 1.442695
      %v4827 = vpow.pop %v4826
      %v4828 = vmul.f32 %v4631, 1.442695
      %v4829 = vpow.pop %v4828
      %v4830 = vmul.f32 %v4632, 1.442695
      %v4831 = vpow.pop %v4830
      %v4832 = vmul.f32 %v4633, 1.442695
      %v4833 = vpow.pop %v4832
      %v4834 = vmul.f32 %v4634, 1.442695
      %v4835 = vpow.pop %v4834
      %v4836 = vmul.f32 %v4635, 1.442695
      %v4837 = vpow.pop %v4836
      %v4838 = vmul.f32 %v4636, 1.442695
      %v4839 = vpow.pop %v4838
      %v4840 = vmul.f32 %v4637, 1.442695
      %v4841 = vpow.pop %v4840
      %v4842 = vmul.f32 %v4638, 1.442695
      %v4843 = vpow.pop %v4842
      %v4844 = vmul.f32 %v4639, 1.442695
      %v4845 = vpow.pop %v4844
      %v4846 = vmul.f32 %v4640, 1.442695
      %v4847 = vpow.pop %v4846
      %v4848 = vmul.f32 %v4641, 1.442695
      %v4849 = vpow.pop %v4848
      %v4850 = vmul.f32 %v4642, 1.442695
      %v4851 = vpow.pop %v4850
      %v4852 = vmul.f32 %v4643, 1.442695
      %v4853 = vpow.pop %v4852
      %v4854 = vmul.f32 %v4644, 1.442695
      %v4855 = vpow.pop %v4854
      %v4856 = vmul.f32 %v4645, 1.442695
      %v4857 = vpow.pop %v4856
      %v4858 = vmul.f32 %v4646, 1.442695
      %v4859 = vpow.pop %v4858
      %v4860 = vmul.f32 %v4647, 1.442695
      %v4861 = vpow.pop %v4860
      %v4862 = vmul.f32 %v4648, 1.442695
      %v4863 = vpow.pop %v4862
      %v4864 = vmul.f32 %v4649, 1.442695
      %v4865 = vpow.pop %v4864
      %v4866 = vmul.f32 %v4650, 1.442695
      %v4867 = vpow.pop %v4866
      %v4868 = vmul.f32 %v4651, 1.442695
      %v4869 = vpow.pop %v4868
      %v4870 = vmul.f32 %v4652, 1.442695
      %v4871 = vpow.pop %v4870
      %v4872 = vmul.f32 %v4653, 1.442695
      %v4873 = vpow.pop %v4872
      %v4874 = vmul.f32 %v4654, 1.442695
      %v4875 = vpow.pop %v4874
      %v4876 = vmul.f32 %v4655, 1.442695
      %v4877 = vpow.pop %v4876
      %v4878 = vmul.f32 %v4656, 1.442695
      %v4879 = vpow.pop %v4878
      %v4880 = vmul.f32 %v4657, 1.442695
      %v4881 = vpow.pop %v4880
      %v4882 = vmul.f32 %v4658, 1.442695
      %v4883 = vpow.pop %v4882
      %v4884 = vmul.f32 %v4659, 1.442695
      %v4885 = vpow.pop %v4884
      %v4886 = vmul.f32 %v4660, 1.442695
      %v4887 = vpow.pop %v4886
      %v4888 = vmul.f32 %v4661, 1.442695
      %v4889 = vpow.pop %v4888
      %v4890 = vmul.f32 %v4662, 1.442695
      %v4891 = vpow.pop %v4890
      %v4892 = vmul.f32 %v4663, 1.442695
      %v4893 = vpow.pop %v4892
      %v4894 = vmul.f32 %v4664, 1.442695
      %v4895 = vpow.pop %v4894
      %v4896 = vmul.f32 %v4665, 1.442695
      %v4897 = vpow.pop %v4896
      %v4898 = vmul.f32 %v4666, 1.442695
      %v4899 = vpow.pop %v4898
      %v4900 = vmul.f32 %v4667, 1.442695
      %v4901 = vpow.pop %v4900
      %v4902 = vmul.f32 %v4668, 1.442695
      %v4903 = vpow.pop %v4902
      %v4904 = vmul.f32 %v4669, 1.442695
      %v4905 = vpow.pop %v4904
      %v4906 = vmul.f32 %v4670, 1.442695
      %v4907 = vpow.pop %v4906
      %v4908 = vmul.f32 %v4671, 1.442695
      %v4909 = vpow.pop %v4908
      %v4910 = vmul.f32 %v4672, 1.442695
      %v4911 = vpow.pop %v4910
      %v4912 = vmul.f32 %v4673, 1.442695
      %v4913 = vpow.pop %v4912
      %v4914 = vmul.f32 %v4674, 1.442695
      %v4915 = vpow.pop %v4914
      %v4916 = vmul.f32 %v4675, 1.442695
      %v4917 = vpow.pop %v4916
      %v4918 = vmul.f32 %v4676, 1.442695
      %v4919 = vpow.pop %v4918
      %v4920 = vmul.f32 %v4677, 1.442695
      %v4921 = vpow.pop %v4920
      %v4922 = vmul.f32 %v4678, 1.442695
      %v4923 = vpow.pop %v4922
      %v4924 = vmul.f32 %v4679, 1.442695
      %v4925 = vpow.pop %v4924
      %v4926 = vmul.f32 %v4680, 1.442695
      %v4927 = vpow.pop %v4926
      %v4928 = vmul.f32 %v4681, 1.442695
      %v4929 = vpow.pop %v4928
      %v4930 = vmul.f32 %v4682, 1.442695
      %v4931 = vpow.pop %v4930
      %v4932 = vmul.f32 %v4683, 1.442695
      %v4933 = vpow.pop %v4932
      %v4934 = vmul.f32 %v4684, 1.442695
      %v4935 = vpow.pop %v4934
      %v4936 = vmul.f32 %v4685, 1.442695
      %v4937 = vpow.pop %v4936
      %v4938 = vmul.f32 %v4686, 1.442695
      %v4939 = vpow.pop %v4938
      %v4940 = vmul.f32 %v4687, 1.442695
      %v4941 = vpow.pop %v4940
      %v4942 = vmul.f32 %v4688, 1.442695
      %v4943 = vpow.pop %v4942
      %v4944 = vmul.f32 %v4689, 1.442695
      %v4945 = vpow.pop %v4944
      %v4946 = vsel %vm4177, %v4691, 0.0
      %4947 = vadd.xlane.f32.xlu0 %v4946
      %v4948 = vpop.xlane.xlu0 %4947
      %v4949 = vsel %vm4177, %v4693, 0.0
      %4950 = vadd.xlane.f32.xlu0 %v4949
      %v4951 = vpop.xlane.xlu0 %4950
      %v4952 = vsel %vm4177, %v4695, 0.0
      %4953 = vadd.xlane.f32.xlu0 %v4952
      %v4954 = vpop.xlane.xlu0 %4953
      %v4955 = vsel %vm4177, %v4697, 0.0
      %4956 = vadd.xlane.f32.xlu0 %v4955
      %v4957 = vpop.xlane.xlu0 %4956
      %v4958 = vsel %vm4177, %v4699, 0.0
      %4959 = vadd.xlane.f32.xlu0 %v4958
      %v4960 = vpop.xlane.xlu0 %4959
      %v4961 = vsel %vm4177, %v4701, 0.0
      %4962 = vadd.xlane.f32.xlu0 %v4961
      %v4963 = vpop.xlane.xlu0 %4962
      %v4964 = vsel %vm4177, %v4703, 0.0
      %4965 = vadd.xlane.f32.xlu0 %v4964
      %v4966 = vpop.xlane.xlu0 %4965
      %v4967 = vsel %vm4177, %v4705, 0.0
      %4968 = vadd.xlane.f32.xlu0 %v4967
      %v4969 = vpop.xlane.xlu0 %4968
      %v4970 = vsel %vm4177, %v4707, 0.0
      %4971 = vadd.xlane.f32.xlu0 %v4970
      %v4972 = vpop.xlane.xlu0 %4971
      %v4973 = vsel %vm4177, %v4709, 0.0
      %4974 = vadd.xlane.f32.xlu0 %v4973
      %v4975 = vpop.xlane.xlu0 %4974
      %v4976 = vsel %vm4177, %v4711, 0.0
      %4977 = vadd.xlane.f32.xlu0 %v4976
      %v4978 = vpop.xlane.xlu0 %4977
      %v4979 = vsel %vm4177, %v4713, 0.0
      %4980 = vadd.xlane.f32.xlu0 %v4979
      %v4981 = vpop.xlane.xlu0 %4980
      %v4982 = vsel %vm4177, %v4715, 0.0
      %4983 = vadd.xlane.f32.xlu0 %v4982
      %v4984 = vpop.xlane.xlu0 %4983
      %v4985 = vsel %vm4177, %v4717, 0.0
      %4986 = vadd.xlane.f32.xlu0 %v4985
      %v4987 = vpop.xlane.xlu0 %4986
      %v4988 = vsel %vm4177, %v4719, 0.0
      %4989 = vadd.xlane.f32.xlu0 %v4988
      %v4990 = vpop.xlane.xlu0 %4989
      %v4991 = vsel %vm4177, %v4721, 0.0
      %4992 = vadd.xlane.f32.xlu0 %v4991
      %v4993 = vpop.xlane.xlu0 %4992
      %v4994 = vsel %vm4177, %v4723, 0.0
      %4995 = vadd.xlane.f32.xlu0 %v4994
      %v4996 = vpop.xlane.xlu0 %4995
      %v4997 = vsel %vm4177, %v4725, 0.0
      %4998 = vadd.xlane.f32.xlu0 %v4997
      %v4999 = vpop.xlane.xlu0 %4998
      %v5000 = vsel %vm4177, %v4727, 0.0
      %5001 = vadd.xlane.f32.xlu0 %v5000
      %v5002 = vpop.xlane.xlu0 %5001
      %v5003 = vsel %vm4177, %v4729, 0.0
      %5004 = vadd.xlane.f32.xlu0 %v5003
      %v5005 = vpop.xlane.xlu0 %5004
      %v5006 = vsel %vm4177, %v4731, 0.0
      %5007 = vadd.xlane.f32.xlu0 %v5006
      %v5008 = vpop.xlane.xlu0 %5007
      %v5009 = vsel %vm4177, %v4733, 0.0
      %5010 = vadd.xlane.f32.xlu0 %v5009
      %v5011 = vpop.xlane.xlu0 %5010
      %v5012 = vsel %vm4177, %v4735, 0.0
      %5013 = vadd.xlane.f32.xlu0 %v5012
      %v5014 = vpop.xlane.xlu0 %5013
      %v5015 = vsel %vm4177, %v4737, 0.0
      %5016 = vadd.xlane.f32.xlu0 %v5015
      %v5017 = vpop.xlane.xlu0 %5016
      %v5018 = vsel %vm4177, %v4739, 0.0
      %5019 = vadd.xlane.f32.xlu0 %v5018
      %v5020 = vpop.xlane.xlu0 %5019
      %v5021 = vsel %vm4177, %v4741, 0.0
      %5022 = vadd.xlane.f32.xlu0 %v5021
      %v5023 = vpop.xlane.xlu0 %5022
      %v5024 = vsel %vm4177, %v4743, 0.0
      %5025 = vadd.xlane.f32.xlu0 %v5024
      %v5026 = vpop.xlane.xlu0 %5025
      %v5027 = vsel %vm4177, %v4745, 0.0
      %5028 = vadd.xlane.f32.xlu0 %v5027
      %v5029 = vpop.xlane.xlu0 %5028
      %v5030 = vsel %vm4177, %v4747, 0.0
      %5031 = vadd.xlane.f32.xlu0 %v5030
      %v5032 = vpop.xlane.xlu0 %5031
      %v5033 = vsel %vm4177, %v4749, 0.0
      %5034 = vadd.xlane.f32.xlu0 %v5033
      %v5035 = vpop.xlane.xlu0 %5034
      %v5036 = vsel %vm4177, %v4751, 0.0
      %5037 = vadd.xlane.f32.xlu0 %v5036
      %v5038 = vpop.xlane.xlu0 %5037
      %v5039 = vsel %vm4177, %v4753, 0.0
      %5040 = vadd.xlane.f32.xlu0 %v5039
      %v5041 = vpop.xlane.xlu0 %5040
      %v5042 = vsel %vm4177, %v4755, 0.0
      %5043 = vadd.xlane.f32.xlu0 %v5042
      %v5044 = vpop.xlane.xlu0 %5043
      %v5045 = vsel %vm4177, %v4757, 0.0
      %5046 = vadd.xlane.f32.xlu0 %v5045
      %v5047 = vpop.xlane.xlu0 %5046
      %v5048 = vsel %vm4177, %v4759, 0.0
      %5049 = vadd.xlane.f32.xlu0 %v5048
      %v5050 = vpop.xlane.xlu0 %5049
      %v5051 = vsel %vm4177, %v4761, 0.0
      %5052 = vadd.xlane.f32.xlu0 %v5051
      %v5053 = vpop.xlane.xlu0 %5052
      %v5054 = vsel %vm4177, %v4763, 0.0
      %5055 = vadd.xlane.f32.xlu0 %v5054
      %v5056 = vpop.xlane.xlu0 %5055
      %v5057 = vsel %vm4177, %v4765, 0.0
      %5058 = vadd.xlane.f32.xlu0 %v5057
      %v5059 = vpop.xlane.xlu0 %5058
      %v5060 = vsel %vm4177, %v4767, 0.0
      %5061 = vadd.xlane.f32.xlu0 %v5060
      %v5062 = vpop.xlane.xlu0 %5061
      %v5063 = vsel %vm4177, %v4769, 0.0
      %5064 = vadd.xlane.f32.xlu0 %v5063
      %v5065 = vpop.xlane.xlu0 %5064
      %v5066 = vsel %vm4177, %v4771, 0.0
      %5067 = vadd.xlane.f32.xlu0 %v5066
      %v5068 = vpop.xlane.xlu0 %5067
      %v5069 = vsel %vm4177, %v4773, 0.0
      %5070 = vadd.xlane.f32.xlu0 %v5069
      %v5071 = vpop.xlane.xlu0 %5070
      %v5072 = vsel %vm4177, %v4775, 0.0
      %5073 = vadd.xlane.f32.xlu0 %v5072
      %v5074 = vpop.xlane.xlu0 %5073
      %v5075 = vsel %vm4177, %v4777, 0.0
      %5076 = vadd.xlane.f32.xlu0 %v5075
      %v5077 = vpop.xlane.xlu0 %5076
      %v5078 = vsel %vm4177, %v4779, 0.0
      %5079 = vadd.xlane.f32.xlu0 %v5078
      %v5080 = vpop.xlane.xlu0 %5079
      %v5081 = vsel %vm4177, %v4781, 0.0
      %5082 = vadd.xlane.f32.xlu0 %v5081
      %v5083 = vpop.xlane.xlu0 %5082
      %v5084 = vsel %vm4177, %v4783, 0.0
      %5085 = vadd.xlane.f32.xlu0 %v5084
      %v5086 = vpop.xlane.xlu0 %5085
      %v5087 = vsel %vm4177, %v4785, 0.0
      %5088 = vadd.xlane.f32.xlu0 %v5087
      %v5089 = vpop.xlane.xlu0 %5088
      %v5090 = vsel %vm4177, %v4787, 0.0
      %5091 = vadd.xlane.f32.xlu0 %v5090
      %v5092 = vpop.xlane.xlu0 %5091
      %v5093 = vsel %vm4177, %v4789, 0.0
      %5094 = vadd.xlane.f32.xlu0 %v5093
      %v5095 = vpop.xlane.xlu0 %5094
      %v5096 = vsel %vm4177, %v4791, 0.0
      %5097 = vadd.xlane.f32.xlu0 %v5096
      %v5098 = vpop.xlane.xlu0 %5097
      %v5099 = vsel %vm4177, %v4793, 0.0
      %5100 = vadd.xlane.f32.xlu0 %v5099
      %v5101 = vpop.xlane.xlu0 %5100
      %v5102 = vsel %vm4177, %v4795, 0.0
      %5103 = vadd.xlane.f32.xlu0 %v5102
      %v5104 = vpop.xlane.xlu0 %5103
      %v5105 = vsel %vm4177, %v4797, 0.0
      %5106 = vadd.xlane.f32.xlu0 %v5105
      %v5107 = vpop.xlane.xlu0 %5106
      %v5108 = vsel %vm4177, %v4799, 0.0
      %5109 = vadd.xlane.f32.xlu0 %v5108
      %v5110 = vpop.xlane.xlu0 %5109
      %v5111 = vsel %vm4177, %v4801, 0.0
      %5112 = vadd.xlane.f32.xlu0 %v5111
      %v5113 = vpop.xlane.xlu0 %5112
      %v5114 = vsel %vm4177, %v4803, 0.0
      %5115 = vadd.xlane.f32.xlu0 %v5114
      %v5116 = vpop.xlane.xlu0 %5115
      %v5117 = vsel %vm4177, %v4805, 0.0
      %5118 = vadd.xlane.f32.xlu0 %v5117
      %v5119 = vpop.xlane.xlu0 %5118
      %v5120 = vsel %vm4177, %v4807, 0.0
      %5121 = vadd.xlane.f32.xlu0 %v5120
      %v5122 = vpop.xlane.xlu0 %5121
      %v5123 = vsel %vm4177, %v4809, 0.0
      %5124 = vadd.xlane.f32.xlu0 %v5123
      %v5125 = vpop.xlane.xlu0 %5124
      %v5126 = vsel %vm4177, %v4811, 0.0
      %5127 = vadd.xlane.f32.xlu0 %v5126
      %v5128 = vpop.xlane.xlu0 %5127
      %v5129 = vsel %vm4177, %v4813, 0.0
      %5130 = vadd.xlane.f32.xlu0 %v5129
      %v5131 = vpop.xlane.xlu0 %5130
      %v5132 = vsel %vm4177, %v4815, 0.0
      %5133 = vadd.xlane.f32.xlu0 %v5132
      %v5134 = vpop.xlane.xlu0 %5133
      %v5135 = vsel %vm4177, %v4817, 0.0
      %5136 = vadd.xlane.f32.xlu0 %v5135
      %v5137 = vpop.xlane.xlu0 %5136
      %v5138 = vsel %vm4177, %v4819, 0.0
      %5139 = vadd.xlane.f32.xlu0 %v5138
      %v5140 = vpop.xlane.xlu0 %5139
      %v5141 = vsel %vm4177, %v4821, 0.0
      %5142 = vadd.xlane.f32.xlu0 %v5141
      %v5143 = vpop.xlane.xlu0 %5142
      %v5144 = vsel %vm4177, %v4823, 0.0
      %5145 = vadd.xlane.f32.xlu0 %v5144
      %v5146 = vpop.xlane.xlu0 %5145
      %v5147 = vsel %vm4177, %v4825, 0.0
      %5148 = vadd.xlane.f32.xlu0 %v5147
      %v5149 = vpop.xlane.xlu0 %5148
      %v5150 = vsel %vm4177, %v4827, 0.0
      %5151 = vadd.xlane.f32.xlu0 %v5150
      %v5152 = vpop.xlane.xlu0 %5151
      %v5153 = vsel %vm4177, %v4829, 0.0
      %5154 = vadd.xlane.f32.xlu0 %v5153
      %v5155 = vpop.xlane.xlu0 %5154
      %v5156 = vsel %vm4177, %v4831, 0.0
      %5157 = vadd.xlane.f32.xlu0 %v5156
      %v5158 = vpop.xlane.xlu0 %5157
      %v5159 = vsel %vm4177, %v4833, 0.0
      %5160 = vadd.xlane.f32.xlu0 %v5159
      %v5161 = vpop.xlane.xlu0 %5160
      %v5162 = vsel %vm4177, %v4835, 0.0
      %5163 = vadd.xlane.f32.xlu0 %v5162
      %v5164 = vpop.xlane.xlu0 %5163
      %v5165 = vsel %vm4177, %v4837, 0.0
      %5166 = vadd.xlane.f32.xlu0 %v5165
      %v5167 = vpop.xlane.xlu0 %5166
      %v5168 = vsel %vm4177, %v4839, 0.0
      %5169 = vadd.xlane.f32.xlu0 %v5168
      %v5170 = vpop.xlane.xlu0 %5169
      %v5171 = vsel %vm4177, %v4841, 0.0
      %5172 = vadd.xlane.f32.xlu0 %v5171
      %v5173 = vpop.xlane.xlu0 %5172
      %v5174 = vsel %vm4177, %v4843, 0.0
      %5175 = vadd.xlane.f32.xlu0 %v5174
      %v5176 = vpop.xlane.xlu0 %5175
      %v5177 = vsel %vm4177, %v4845, 0.0
      %5178 = vadd.xlane.f32.xlu0 %v5177
      %v5179 = vpop.xlane.xlu0 %5178
      %v5180 = vsel %vm4177, %v4847, 0.0
      %5181 = vadd.xlane.f32.xlu0 %v5180
      %v5182 = vpop.xlane.xlu0 %5181
      %v5183 = vsel %vm4177, %v4849, 0.0
      %5184 = vadd.xlane.f32.xlu0 %v5183
      %v5185 = vpop.xlane.xlu0 %5184
      %v5186 = vsel %vm4177, %v4851, 0.0
      %5187 = vadd.xlane.f32.xlu0 %v5186
      %v5188 = vpop.xlane.xlu0 %5187
      %v5189 = vsel %vm4177, %v4853, 0.0
      %5190 = vadd.xlane.f32.xlu0 %v5189
      %v5191 = vpop.xlane.xlu0 %5190
      %v5192 = vsel %vm4177, %v4855, 0.0
      %5193 = vadd.xlane.f32.xlu0 %v5192
      %v5194 = vpop.xlane.xlu0 %5193
      %v5195 = vsel %vm4177, %v4857, 0.0
      %5196 = vadd.xlane.f32.xlu0 %v5195
      %v5197 = vpop.xlane.xlu0 %5196
      %v5198 = vsel %vm4177, %v4859, 0.0
      %5199 = vadd.xlane.f32.xlu0 %v5198
      %v5200 = vpop.xlane.xlu0 %5199
      %v5201 = vsel %vm4177, %v4861, 0.0
      %5202 = vadd.xlane.f32.xlu0 %v5201
      %v5203 = vpop.xlane.xlu0 %5202
      %v5204 = vsel %vm4177, %v4863, 0.0
      %5205 = vadd.xlane.f32.xlu0 %v5204
      %v5206 = vpop.xlane.xlu0 %5205
      %v5207 = vsel %vm4177, %v4865, 0.0
      %5208 = vadd.xlane.f32.xlu0 %v5207
      %v5209 = vpop.xlane.xlu0 %5208
      %v5210 = vsel %vm4177, %v4867, 0.0
      %5211 = vadd.xlane.f32.xlu0 %v5210
      %v5212 = vpop.xlane.xlu0 %5211
      %v5213 = vsel %vm4177, %v4869, 0.0
      %5214 = vadd.xlane.f32.xlu0 %v5213
      %v5215 = vpop.xlane.xlu0 %5214
      %v5216 = vsel %vm4177, %v4871, 0.0
      %5217 = vadd.xlane.f32.xlu0 %v5216
      %v5218 = vpop.xlane.xlu0 %5217
      %v5219 = vsel %vm4177, %v4873, 0.0
      %5220 = vadd.xlane.f32.xlu0 %v5219
      %v5221 = vpop.xlane.xlu0 %5220
      %v5222 = vsel %vm4177, %v4875, 0.0
      %5223 = vadd.xlane.f32.xlu0 %v5222
      %v5224 = vpop.xlane.xlu0 %5223
      %v5225 = vsel %vm4177, %v4877, 0.0
      %5226 = vadd.xlane.f32.xlu0 %v5225
      %v5227 = vpop.xlane.xlu0 %5226
      %v5228 = vsel %vm4177, %v4879, 0.0
      %5229 = vadd.xlane.f32.xlu0 %v5228
      %v5230 = vpop.xlane.xlu0 %5229
      %v5231 = vsel %vm4177, %v4881, 0.0
      %5232 = vadd.xlane.f32.xlu0 %v5231
      %v5233 = vpop.xlane.xlu0 %5232
      %v5234 = vsel %vm4177, %v4883, 0.0
      %5235 = vadd.xlane.f32.xlu0 %v5234
      %v5236 = vpop.xlane.xlu0 %5235
      %v5237 = vsel %vm4177, %v4885, 0.0
      %5238 = vadd.xlane.f32.xlu0 %v5237
      %v5239 = vpop.xlane.xlu0 %5238
      %v5240 = vsel %vm4177, %v4887, 0.0
      %5241 = vadd.xlane.f32.xlu0 %v5240
      %v5242 = vpop.xlane.xlu0 %5241
      %v5243 = vsel %vm4177, %v4889, 0.0
      %5244 = vadd.xlane.f32.xlu0 %v5243
      %v5245 = vpop.xlane.xlu0 %5244
      %v5246 = vsel %vm4177, %v4891, 0.0
      %5247 = vadd.xlane.f32.xlu0 %v5246
      %v5248 = vpop.xlane.xlu0 %5247
      %v5249 = vsel %vm4177, %v4893, 0.0
      %5250 = vadd.xlane.f32.xlu0 %v5249
      %v5251 = vpop.xlane.xlu0 %5250
      %v5252 = vsel %vm4177, %v4895, 0.0
      %5253 = vadd.xlane.f32.xlu0 %v5252
      %v5254 = vpop.xlane.xlu0 %5253
      %v5255 = vsel %vm4177, %v4897, 0.0
      %5256 = vadd.xlane.f32.xlu0 %v5255
      %v5257 = vpop.xlane.xlu0 %5256
      %v5258 = vsel %vm4177, %v4899, 0.0
      %5259 = vadd.xlane.f32.xlu0 %v5258
      %v5260 = vpop.xlane.xlu0 %5259
      %v5261 = vsel %vm4177, %v4901, 0.0
      %5262 = vadd.xlane.f32.xlu0 %v5261
      %v5263 = vpop.xlane.xlu0 %5262
      %v5264 = vsel %vm4177, %v4903, 0.0
      %5265 = vadd.xlane.f32.xlu0 %v5264
      %v5266 = vpop.xlane.xlu0 %5265
      %v5267 = vsel %vm4177, %v4905, 0.0
      %5268 = vadd.xlane.f32.xlu0 %v5267
      %v5269 = vpop.xlane.xlu0 %5268
      %v5270 = vsel %vm4177, %v4907, 0.0
      %5271 = vadd.xlane.f32.xlu0 %v5270
      %v5272 = vpop.xlane.xlu0 %5271
      %v5273 = vsel %vm4177, %v4909, 0.0
      %5274 = vadd.xlane.f32.xlu0 %v5273
      %v5275 = vpop.xlane.xlu0 %5274
      %v5276 = vsel %vm4177, %v4911, 0.0
      %5277 = vadd.xlane.f32.xlu0 %v5276
      %v5278 = vpop.xlane.xlu0 %5277
      %v5279 = vsel %vm4177, %v4913, 0.0
      %5280 = vadd.xlane.f32.xlu0 %v5279
      %v5281 = vpop.xlane.xlu0 %5280
      %v5282 = vsel %vm4177, %v4915, 0.0
      %5283 = vadd.xlane.f32.xlu0 %v5282
      %v5284 = vpop.xlane.xlu0 %5283
      %v5285 = vsel %vm4177, %v4917, 0.0
      %5286 = vadd.xlane.f32.xlu0 %v5285
      %v5287 = vpop.xlane.xlu0 %5286
      %v5288 = vsel %vm4177, %v4919, 0.0
      %5289 = vadd.xlane.f32.xlu0 %v5288
      %v5290 = vpop.xlane.xlu0 %5289
      %v5291 = vsel %vm4177, %v4921, 0.0
      %5292 = vadd.xlane.f32.xlu0 %v5291
      %v5293 = vpop.xlane.xlu0 %5292
      %v5294 = vsel %vm4177, %v4923, 0.0
      %5295 = vadd.xlane.f32.xlu0 %v5294
      %v5296 = vpop.xlane.xlu0 %5295
      %v5297 = vsel %vm4177, %v4925, 0.0
      %5298 = vadd.xlane.f32.xlu0 %v5297
      %v5299 = vpop.xlane.xlu0 %5298
      %v5300 = vsel %vm4177, %v4927, 0.0
      %5301 = vadd.xlane.f32.xlu0 %v5300
      %v5302 = vpop.xlane.xlu0 %5301
      %v5303 = vsel %vm4177, %v4929, 0.0
      %5304 = vadd.xlane.f32.xlu0 %v5303
      %v5305 = vpop.xlane.xlu0 %5304
      %v5306 = vsel %vm4177, %v4931, 0.0
      %5307 = vadd.xlane.f32.xlu0 %v5306
      %v5308 = vpop.xlane.xlu0 %5307
      %v5309 = vsel %vm4177, %v4933, 0.0
      %5310 = vadd.xlane.f32.xlu0 %v5309
      %v5311 = vpop.xlane.xlu0 %5310
      %v5312 = vsel %vm4177, %v4935, 0.0
      %5313 = vadd.xlane.f32.xlu0 %v5312
      %v5314 = vpop.xlane.xlu0 %5313
      %v5315 = vsel %vm4177, %v4937, 0.0
      %5316 = vadd.xlane.f32.xlu0 %v5315
      %v5317 = vpop.xlane.xlu0 %5316
      %v5318 = vsel %vm4177, %v4939, 0.0
      %5319 = vadd.xlane.f32.xlu0 %v5318
      %v5320 = vpop.xlane.xlu0 %5319
      %v5321 = vsel %vm4177, %v4941, 0.0
      %5322 = vadd.xlane.f32.xlu0 %v5321
      %v5323 = vpop.xlane.xlu0 %5322
      %v5324 = vsel %vm4177, %v4943, 0.0
      %5325 = vadd.xlane.f32.xlu0 %v5324
      %v5326 = vpop.xlane.xlu0 %5325
      %v5327 = vsel %vm4177, %v4945, 0.0
      %5328 = vadd.xlane.f32.xlu0 %v5327
      %v5329 = vpop.xlane.xlu0 %5328
      %v5330 = vrcp.pop %v4948
      %v5331 = vrcp.pop %v4951
      %v5332 = vrcp.pop %v4954
      %v5333 = vrcp.pop %v4957
      %v5334 = vrcp.pop %v4960
      %v5335 = vrcp.pop %v4963
      %v5336 = vrcp.pop %v4966
      %v5337 = vrcp.pop %v4969
      %v5338 = vrcp.pop %v4972
      %v5339 = vrcp.pop %v4975
      %v5340 = vrcp.pop %v4978
      %v5341 = vrcp.pop %v4981
      %v5342 = vrcp.pop %v4984
      %v5343 = vrcp.pop %v4987
      %v5344 = vrcp.pop %v4990
      %v5345 = vrcp.pop %v4993
      %v5346 = vrcp.pop %v4996
      %v5347 = vrcp.pop %v4999
      %v5348 = vrcp.pop %v5002
      %v5349 = vrcp.pop %v5005
      %v5350 = vrcp.pop %v5008
      %v5351 = vrcp.pop %v5011
      %v5352 = vrcp.pop %v5014
      %v5353 = vrcp.pop %v5017
      %v5354 = vrcp.pop %v5020
      %v5355 = vrcp.pop %v5023
      %v5356 = vrcp.pop %v5026
      %v5357 = vrcp.pop %v5029
      %v5358 = vrcp.pop %v5032
      %v5359 = vrcp.pop %v5035
      %v5360 = vrcp.pop %v5038
      %v5361 = vrcp.pop %v5041
      %v5362 = vrcp.pop %v5044
      %v5363 = vrcp.pop %v5047
      %v5364 = vrcp.pop %v5050
      %v5365 = vrcp.pop %v5053
      %v5366 = vrcp.pop %v5056
      %v5367 = vrcp.pop %v5059
      %v5368 = vrcp.pop %v5062
      %v5369 = vrcp.pop %v5065
      %v5370 = vrcp.pop %v5068
      %v5371 = vrcp.pop %v5071
      %v5372 = vrcp.pop %v5074
      %v5373 = vrcp.pop %v5077
      %v5374 = vrcp.pop %v5080
      %v5375 = vrcp.pop %v5083
      %v5376 = vrcp.pop %v5086
      %v5377 = vrcp.pop %v5089
      %v5378 = vrcp.pop %v5092
      %v5379 = vrcp.pop %v5095
      %v5380 = vrcp.pop %v5098
      %v5381 = vrcp.pop %v5101
      %v5382 = vrcp.pop %v5104
      %v5383 = vrcp.pop %v5107
      %v5384 = vrcp.pop %v5110
      %v5385 = vrcp.pop %v5113
      %v5386 = vrcp.pop %v5116
      %v5387 = vrcp.pop %v5119
      %v5388 = vrcp.pop %v5122
      %v5389 = vrcp.pop %v5125
      %v5390 = vrcp.pop %v5128
      %v5391 = vrcp.pop %v5131
      %v5392 = vrcp.pop %v5134
      %v5393 = vrcp.pop %v5137
      %v5394 = vrcp.pop %v5140
      %v5395 = vrcp.pop %v5143
      %v5396 = vrcp.pop %v5146
      %v5397 = vrcp.pop %v5149
      %v5398 = vrcp.pop %v5152
      %v5399 = vrcp.pop %v5155
      %v5400 = vrcp.pop %v5158
      %v5401 = vrcp.pop %v5161
      %v5402 = vrcp.pop %v5164
      %v5403 = vrcp.pop %v5167
      %v5404 = vrcp.pop %v5170
      %v5405 = vrcp.pop %v5173
      %v5406 = vrcp.pop %v5176
      %v5407 = vrcp.pop %v5179
      %v5408 = vrcp.pop %v5182
      %v5409 = vrcp.pop %v5185
      %v5410 = vrcp.pop %v5188
      %v5411 = vrcp.pop %v5191
      %v5412 = vrcp.pop %v5194
      %v5413 = vrcp.pop %v5197
      %v5414 = vrcp.pop %v5200
      %v5415 = vrcp.pop %v5203
      %v5416 = vrcp.pop %v5206
      %v5417 = vrcp.pop %v5209
      %v5418 = vrcp.pop %v5212
      %v5419 = vrcp.pop %v5215
      %v5420 = vrcp.pop %v5218
      %v5421 = vrcp.pop %v5221
      %v5422 = vrcp.pop %v5224
      %v5423 = vrcp.pop %v5227
      %v5424 = vrcp.pop %v5230
      %v5425 = vrcp.pop %v5233
      %v5426 = vrcp.pop %v5236
      %v5427 = vrcp.pop %v5239
      %v5428 = vrcp.pop %v5242
      %v5429 = vrcp.pop %v5245
      %v5430 = vrcp.pop %v5248
      %v5431 = vrcp.pop %v5251
      %v5432 = vrcp.pop %v5254
      %v5433 = vrcp.pop %v5257
      %v5434 = vrcp.pop %v5260
      %v5435 = vrcp.pop %v5263
      %v5436 = vrcp.pop %v5266
      %v5437 = vrcp.pop %v5269
      %v5438 = vrcp.pop %v5272
      %v5439 = vrcp.pop %v5275
      %v5440 = vrcp.pop %v5278
      %v5441 = vrcp.pop %v5281
      %v5442 = vrcp.pop %v5284
      %v5443 = vrcp.pop %v5287
      %v5444 = vrcp.pop %v5290
      %v5445 = vrcp.pop %v5293
      %v5446 = vrcp.pop %v5296
      %v5447 = vrcp.pop %v5299
      %v5448 = vrcp.pop %v5302
      %v5449 = vrcp.pop %v5305
      %v5450 = vrcp.pop %v5308
      %v5451 = vrcp.pop %v5311
      %v5452 = vrcp.pop %v5314
      %v5453 = vrcp.pop %v5317
      %v5454 = vrcp.pop %v5320
      %v5455 = vrcp.pop %v5323
      %v5456 = vrcp.pop %v5326
      %v5457 = vrcp.pop %v5329
      %v5458 = vmul.f32 %v4691, %v5330
      %v5459 = vmul.f32 %v4693, %v5331
      %v5460 = vmul.f32 %v4695, %v5332
      %v5461 = vmul.f32 %v4697, %v5333
      %v5462 = vmul.f32 %v4699, %v5334
      %v5463 = vmul.f32 %v4701, %v5335
      %v5464 = vmul.f32 %v4703, %v5336
      %v5465 = vmul.f32 %v4705, %v5337
      %v5466 = vmul.f32 %v4707, %v5338
      %v5467 = vmul.f32 %v4709, %v5339
      %v5468 = vmul.f32 %v4711, %v5340
      %v5469 = vmul.f32 %v4713, %v5341
      %v5470 = vmul.f32 %v4715, %v5342
      %v5471 = vmul.f32 %v4717, %v5343
      %v5472 = vmul.f32 %v4719, %v5344
      %v5473 = vmul.f32 %v4721, %v5345
      %v5474 = vmul.f32 %v4723, %v5346
      %v5475 = vmul.f32 %v4725, %v5347
      %v5476 = vmul.f32 %v4727, %v5348
      %v5477 = vmul.f32 %v4729, %v5349
      %v5478 = vmul.f32 %v4731, %v5350
      %v5479 = vmul.f32 %v4733, %v5351
      %v5480 = vmul.f32 %v4735, %v5352
      %v5481 = vmul.f32 %v4737, %v5353
      %v5482 = vmul.f32 %v4739, %v5354
      %v5483 = vmul.f32 %v4741, %v5355
      %v5484 = vmul.f32 %v4743, %v5356
      %v5485 = vmul.f32 %v4745, %v5357
      %v5486 = vmul.f32 %v4747, %v5358
      %v5487 = vmul.f32 %v4749, %v5359
      %v5488 = vmul.f32 %v4751, %v5360
      %v5489 = vmul.f32 %v4753, %v5361
      %v5490 = vmul.f32 %v4755, %v5362
      %v5491 = vmul.f32 %v4757, %v5363
      %v5492 = vmul.f32 %v4759, %v5364
      %v5493 = vmul.f32 %v4761, %v5365
      %v5494 = vmul.f32 %v4763, %v5366
      %v5495 = vmul.f32 %v4765, %v5367
      %v5496 = vmul.f32 %v4767, %v5368
      %v5497 = vmul.f32 %v4769, %v5369
      %v5498 = vmul.f32 %v4771, %v5370
      %v5499 = vmul.f32 %v4773, %v5371
      %v5500 = vmul.f32 %v4775, %v5372
      %v5501 = vmul.f32 %v4777, %v5373
      %v5502 = vmul.f32 %v4779, %v5374
      %v5503 = vmul.f32 %v4781, %v5375
      %v5504 = vmul.f32 %v4783, %v5376
      %v5505 = vmul.f32 %v4785, %v5377
      %v5506 = vmul.f32 %v4787, %v5378
      %v5507 = vmul.f32 %v4789, %v5379
      %v5508 = vmul.f32 %v4791, %v5380
      %v5509 = vmul.f32 %v4793, %v5381
      %v5510 = vmul.f32 %v4795, %v5382
      %v5511 = vmul.f32 %v4797, %v5383
      %v5512 = vmul.f32 %v4799, %v5384
      %v5513 = vmul.f32 %v4801, %v5385
      %v5514 = vmul.f32 %v4803, %v5386
      %v5515 = vmul.f32 %v4805, %v5387
      %v5516 = vmul.f32 %v4807, %v5388
      %v5517 = vmul.f32 %v4809, %v5389
      %v5518 = vmul.f32 %v4811, %v5390
      %v5519 = vmul.f32 %v4813, %v5391
      %v5520 = vmul.f32 %v4815, %v5392
      %v5521 = vmul.f32 %v4817, %v5393
      %v5522 = vmul.f32 %v4819, %v5394
      %v5523 = vmul.f32 %v4821, %v5395
      %v5524 = vmul.f32 %v4823, %v5396
      %v5525 = vmul.f32 %v4825, %v5397
      %v5526 = vmul.f32 %v4827, %v5398
      %v5527 = vmul.f32 %v4829, %v5399
      %v5528 = vmul.f32 %v4831, %v5400
      %v5529 = vmul.f32 %v4833, %v5401
      %v5530 = vmul.f32 %v4835, %v5402
      %v5531 = vmul.f32 %v4837, %v5403
      %v5532 = vmul.f32 %v4839, %v5404
      %v5533 = vmul.f32 %v4841, %v5405
      %v5534 = vmul.f32 %v4843, %v5406
      %v5535 = vmul.f32 %v4845, %v5407
      %v5536 = vmul.f32 %v4847, %v5408
      %v5537 = vmul.f32 %v4849, %v5409
      %v5538 = vmul.f32 %v4851, %v5410
      %v5539 = vmul.f32 %v4853, %v5411
      %v5540 = vmul.f32 %v4855, %v5412
      %v5541 = vmul.f32 %v4857, %v5413
      %v5542 = vmul.f32 %v4859, %v5414
      %v5543 = vmul.f32 %v4861, %v5415
      %v5544 = vmul.f32 %v4863, %v5416
      %v5545 = vmul.f32 %v4865, %v5417
      %v5546 = vmul.f32 %v4867, %v5418
      %v5547 = vmul.f32 %v4869, %v5419
      %v5548 = vmul.f32 %v4871, %v5420
      %v5549 = vmul.f32 %v4873, %v5421
      %v5550 = vmul.f32 %v4875, %v5422
      %v5551 = vmul.f32 %v4877, %v5423
      %v5552 = vmul.f32 %v4879, %v5424
      %v5553 = vmul.f32 %v4881, %v5425
      %v5554 = vmul.f32 %v4883, %v5426
      %v5555 = vmul.f32 %v4885, %v5427
      %v5556 = vmul.f32 %v4887, %v5428
      %v5557 = vmul.f32 %v4889, %v5429
      %v5558 = vmul.f32 %v4891, %v5430
      %v5559 = vmul.f32 %v4893, %v5431
      %v5560 = vmul.f32 %v4895, %v5432
      %v5561 = vmul.f32 %v4897, %v5433
      %v5562 = vmul.f32 %v4899, %v5434
      %v5563 = vmul.f32 %v4901, %v5435
      %v5564 = vmul.f32 %v4903, %v5436
      %v5565 = vmul.f32 %v4905, %v5437
      %v5566 = vmul.f32 %v4907, %v5438
      %v5567 = vmul.f32 %v4909, %v5439
      %v5568 = vmul.f32 %v4911, %v5440
      %v5569 = vmul.f32 %v4913, %v5441
      %v5570 = vmul.f32 %v4915, %v5442
      %v5571 = vmul.f32 %v4917, %v5443
      %v5572 = vmul.f32 %v4919, %v5444
      %v5573 = vmul.f32 %v4921, %v5445
      %v5574 = vmul.f32 %v4923, %v5446
      %v5575 = vmul.f32 %v4925, %v5447
      %v5576 = vmul.f32 %v4927, %v5448
      %v5577 = vmul.f32 %v4929, %v5449
      %v5578 = vmul.f32 %v4931, %v5450
      %v5579 = vmul.f32 %v4933, %v5451
      %v5580 = vmul.f32 %v4935, %v5452
      %v5581 = vmul.f32 %v4937, %v5453
      %v5582 = vmul.f32 %v4939, %v5454
      %v5583 = vmul.f32 %v4941, %v5455
      %v5584 = vmul.f32 %v4943, %v5456
      %v5585 = vmul.f32 %v4945, %v5457
      %v5586 = vpack.c.bf16 %v5459, %v5458
      %v5587 = vpack.c.bf16 %v5461, %v5460
      %v5588 = vpack.c.bf16 %v5463, %v5462
      %v5589 = vpack.c.bf16 %v5465, %v5464
      %v5590 = vpack.c.bf16 %v5467, %v5466
      %v5591 = vpack.c.bf16 %v5469, %v5468
      %v5592 = vpack.c.bf16 %v5471, %v5470
      %v5593 = vpack.c.bf16 %v5473, %v5472
      %v5594 = vpack.c.bf16 %v5475, %v5474
      %v5595 = vpack.c.bf16 %v5477, %v5476
      %v5596 = vpack.c.bf16 %v5479, %v5478
      %v5597 = vpack.c.bf16 %v5481, %v5480
      %v5598 = vpack.c.bf16 %v5483, %v5482
      %v5599 = vpack.c.bf16 %v5485, %v5484
      %v5600 = vpack.c.bf16 %v5487, %v5486
      %v5601 = vpack.c.bf16 %v5489, %v5488
      %v5602 = vpack.c.bf16 %v5491, %v5490
      %v5603 = vpack.c.bf16 %v5493, %v5492
      %v5604 = vpack.c.bf16 %v5495, %v5494
      %v5605 = vpack.c.bf16 %v5497, %v5496
      %v5606 = vpack.c.bf16 %v5499, %v5498
      %v5607 = vpack.c.bf16 %v5501, %v5500
      %v5608 = vpack.c.bf16 %v5503, %v5502
      %v5609 = vpack.c.bf16 %v5505, %v5504
      %v5610 = vpack.c.bf16 %v5507, %v5506
      %v5611 = vpack.c.bf16 %v5509, %v5508
      %v5612 = vpack.c.bf16 %v5511, %v5510
      %v5613 = vpack.c.bf16 %v5513, %v5512
      %v5614 = vpack.c.bf16 %v5515, %v5514
      %v5615 = vpack.c.bf16 %v5517, %v5516
      %v5616 = vpack.c.bf16 %v5519, %v5518
      %v5617 = vpack.c.bf16 %v5521, %v5520
      %v5618 = vpack.c.bf16 %v5523, %v5522
      %v5619 = vpack.c.bf16 %v5525, %v5524
      %v5620 = vpack.c.bf16 %v5527, %v5526
      %v5621 = vpack.c.bf16 %v5529, %v5528
      %v5622 = vpack.c.bf16 %v5531, %v5530
      %v5623 = vpack.c.bf16 %v5533, %v5532
      %v5624 = vpack.c.bf16 %v5535, %v5534
      %v5625 = vpack.c.bf16 %v5537, %v5536
      %v5626 = vpack.c.bf16 %v5539, %v5538
      %v5627 = vpack.c.bf16 %v5541, %v5540
      %v5628 = vpack.c.bf16 %v5543, %v5542
      %v5629 = vpack.c.bf16 %v5545, %v5544
      %v5630 = vpack.c.bf16 %v5547, %v5546
      %v5631 = vpack.c.bf16 %v5549, %v5548
      %v5632 = vpack.c.bf16 %v5551, %v5550
      %v5633 = vpack.c.bf16 %v5553, %v5552
      %v5634 = vpack.c.bf16 %v5555, %v5554
      %v5635 = vpack.c.bf16 %v5557, %v5556
      %v5636 = vpack.c.bf16 %v5559, %v5558
      %v5637 = vpack.c.bf16 %v5561, %v5560
      %v5638 = vpack.c.bf16 %v5563, %v5562
      %v5639 = vpack.c.bf16 %v5565, %v5564
      %v5640 = vpack.c.bf16 %v5567, %v5566
      %v5641 = vpack.c.bf16 %v5569, %v5568
      %v5642 = vpack.c.bf16 %v5571, %v5570
      %v5643 = vpack.c.bf16 %v5573, %v5572
      %v5644 = vpack.c.bf16 %v5575, %v5574
      %v5645 = vpack.c.bf16 %v5577, %v5576
      %v5646 = vpack.c.bf16 %v5579, %v5578
      %v5647 = vpack.c.bf16 %v5581, %v5580
      %v5648 = vpack.c.bf16 %v5583, %v5582
      %v5649 = vpack.c.bf16 %v5585, %v5584
      %5650 = vrot.lane.b32.xlu0 %v912, 64
      %v5651 = vpop.permute.xlu0 %5650
      %v5654 = vsel %vm4177, %v5586, 0
      %5656 = vmatprep.subr.bf16.mxu0 0
      %5657 = vmatpush1.bf16.msra.mxu0 %v5651
      %5658 = vmatprep.subr.bf16.mxu0 0
      %5659 = vmatpush1.bf16.msra.mxu0 0
      %5660 = vmatprep.subr.bf16.mxu0 0
      %5661 = vmatpush1.bf16.msra.mxu0 0
      %5662 = vmatprep.subr.bf16.mxu0 0
      %5663 = vmatpush1.bf16.msra.mxu0 0
      %5664 = vmatprep.subr.bf16.mxu0 0
      %5665 = vmatpush1.bf16.msra.mxu0 0
      %5666 = vmatprep.subr.bf16.mxu0 0
      %5667 = vmatpush1.bf16.msra.mxu0 0
      %5668 = vmatprep.subr.bf16.mxu0 0
      %5669 = vmatpush1.bf16.msra.mxu0 0
      %5670 = vmatprep.subr.bf16.mxu0 0
      %5671 = vmatpush1.bf16.msra.mxu0 0
      %5672 = vmatprep.subr.bf16.mxu0 0
      %5673 = vmatpush1.bf16.msra.mxu0 0
      %5674 = vmatprep.subr.bf16.mxu0 0
      %5675 = vmatpush1.bf16.msra.mxu0 0
      %5676 = vmatprep.subr.bf16.mxu0 0
      %5677 = vmatpush1.bf16.msra.mxu0 0
      %5678 = vmatprep.subr.bf16.mxu0 0
      %5679 = vmatpush1.bf16.msra.mxu0 0
      %5680 = vmatprep.subr.bf16.mxu0 0
      %5681 = vmatpush1.bf16.msra.mxu0 0
      %5682 = vmatprep.subr.bf16.mxu0 0
      %5683 = vmatpush1.bf16.msra.mxu0 0
      %5684 = vmatprep.subr.bf16.mxu0 0
      %5685 = vmatpush1.bf16.msra.mxu0 0
      %5686 = vmatprep.subr.bf16.mxu0 0
      %5687 = vmatpush1.bf16.msra.mxu0 0
      %5688 = vmatprep.mubr.bf16.mxu0 0
      %5689 = vmatmul.mubr.bf16.gmra.mrb[0].mxu0 %v5654
      %v5690 = vpop.f32.mrb[0].mxu0
      %v5691 = vadd.f32 0.0, %v5690
      %v5692 = vpop.f32.mrb[0].mxu0
      %v5693 = vpop.f32.mrb[0].mxu0
      %v5694 = vadd.f32 0.0, %v5693
      %v5695 = vpop.f32.mrb[0].mxu0
      %5696 = vdwg.mxu0
      %5697 = vrot.lane.b32.xlu0 %v913, 64
      %v5698 = vpop.permute.xlu0 %5697
      %v5701 = vsel %vm4177, %v5587, 0
      %5703 = vmatprep.subr.bf16.mxu0 0
      %5704 = vmatpush1.bf16.msra.mxu0 %v5698
      %5705 = vmatprep.subr.bf16.mxu0 0
      %5706 = vmatpush1.bf16.msra.mxu0 0
      %5707 = vmatprep.subr.bf16.mxu0 0
      %5708 = vmatpush1.bf16.msra.mxu0 0
      %5709 = vmatprep.subr.bf16.mxu0 0
      %5710 = vmatpush1.bf16.msra.mxu0 0
      %5711 = vmatprep.subr.bf16.mxu0 0
      %5712 = vmatpush1.bf16.msra.mxu0 0
      %5713 = vmatprep.subr.bf16.mxu0 0
      %5714 = vmatpush1.bf16.msra.mxu0 0
      %5715 = vmatprep.subr.bf16.mxu0 0
      %5716 = vmatpush1.bf16.msra.mxu0 0
      %5717 = vmatprep.subr.bf16.mxu0 0
      %5718 = vmatpush1.bf16.msra.mxu0 0
      %5719 = vmatprep.subr.bf16.mxu0 0
      %5720 = vmatpush1.bf16.msra.mxu0 0
      %5721 = vmatprep.subr.bf16.mxu0 0
      %5722 = vmatpush1.bf16.msra.mxu0 0
      %5723 = vmatprep.subr.bf16.mxu0 0
      %5724 = vmatpush1.bf16.msra.mxu0 0
      %5725 = vmatprep.subr.bf16.mxu0 0
      %5726 = vmatpush1.bf16.msra.mxu0 0
      %5727 = vmatprep.subr.bf16.mxu0 0
      %5728 = vmatpush1.bf16.msra.mxu0 0
      %5729 = vmatprep.subr.bf16.mxu0 0
      %5730 = vmatpush1.bf16.msra.mxu0 0
      %5731 = vmatprep.subr.bf16.mxu0 0
      %5732 = vmatpush1.bf16.msra.mxu0 0
      %5733 = vmatprep.subr.bf16.mxu0 0
      %5734 = vmatpush1.bf16.msra.mxu0 0
      %5735 = vmatprep.mubr.bf16.mxu0 0
      %5736 = vmatmul.mubr.bf16.gmra.mrb[0].mxu0 %v5701
      %v5737 = vpop.f32.mrb[0].mxu0
      %v5738 = vadd.f32 0.0, %v5737
      %v5739 = vpop.f32.mrb[0].mxu0
      %v5740 = vpop.f32.mrb[0].mxu0
      %v5741 = vadd.f32 0.0, %v5740
      %v5742 = vpop.f32.mrb[0].mxu0
      %5743 = vdwg.mxu0
      %5744 = vrot.lane.b32.xlu0 %v914, 64
      %v5745 = vpop.permute.xlu0 %5744
      %v5748 = vsel %vm4177, %v5588, 0
      %5750 = vmatprep.subr.bf16.mxu0 0
      %5751 = vmatpush1.bf16.msra.mxu0 %v5745
      %5752 = vmatprep.subr.bf16.mxu0 0
      %5753 = vmatpush1.bf16.msra.mxu0 0
      %5754 = vmatprep.subr.bf16.mxu0 0
      %5755 = vmatpush1.bf16.msra.mxu0 0
      %5756 = vmatprep.subr.bf16.mxu0 0
      %5757 = vmatpush1.bf16.msra.mxu0 0
      %5758 = vmatprep.subr.bf16.mxu0 0
      %5759 = vmatpush1.bf16.msra.mxu0 0
      %5760 = vmatprep.subr.bf16.mxu0 0
      %5761 = vmatpush1.bf16.msra.mxu0 0
      %5762 = vmatprep.subr.bf16.mxu0 0
      %5763 = vmatpush1.bf16.msra.mxu0 0
      %5764 = vmatprep.subr.bf16.mxu0 0
      %5765 = vmatpush1.bf16.msra.mxu0 0
      %5766 = vmatprep.subr.bf16.mxu0 0
      %5767 = vmatpush1.bf16.msra.mxu0 0
      %5768 = vmatprep.subr.bf16.mxu0 0
      %5769 = vmatpush1.bf16.msra.mxu0 0
      %5770 = vmatprep.subr.bf16.mxu0 0
      %5771 = vmatpush1.bf16.msra.mxu0 0
      %5772 = vmatprep.subr.bf16.mxu0 0
      %5773 = vmatpush1.bf16.msra.mxu0 0
      %5774 = vmatprep.subr.bf16.mxu0 0
      %5775 = vmatpush1.bf16.msra.mxu0 0
      %5776 = vmatprep.subr.bf16.mxu0 0
      %5777 = vmatpush1.bf16.msra.mxu0 0
      %5778 = vmatprep.subr.bf16.mxu0 0
      %5779 = vmatpush1.bf16.msra.mxu0 0
      %5780 = vmatprep.subr.bf16.mxu0 0
      %5781 = vmatpush1.bf16.msra.mxu0 0
      %5782 = vmatprep.mubr.bf16.mxu0 0
      %5783 = vmatmul.mubr.bf16.gmra.mrb[0].mxu0 %v5748
      %v5784 = vpop.f32.mrb[0].mxu0
      %v5785 = vadd.f32 0.0, %v5784
      %v5786 = vpop.f32.mrb[0].mxu0
      %v5787 = vpop.f32.mrb[0].mxu0
      %v5788 = vadd.f32 0.0, %v5787
      %v5789 = vpop.f32.mrb[0].mxu0
      %5790 = vdwg.mxu0
      %5791 = vrot.lane.b32.xlu0 %v915, 64
      %v5792 = vpop.permute.xlu0 %5791
      %v5795 = vsel %vm4177, %v5589, 0
      %5797 = vmatprep.subr.bf16.mxu0 0
      %5798 = vmatpush1.bf16.msra.mxu0 %v5792
      %5799 = vmatprep.subr.bf16.mxu0 0
      %5800 = vmatpush1.bf16.msra.mxu0 0
      %5801 = vmatprep.subr.bf16.mxu0 0
      %5802 = vmatpush1.bf16.msra.mxu0 0
      %5803 = vmatprep.subr.bf16.mxu0 0
      %5804 = vmatpush1.bf16.msra.mxu0 0
      %5805 = vmatprep.subr.bf16.mxu0 0
      %5806 = vmatpush1.bf16.msra.mxu0 0
      %5807 = vmatprep.subr.bf16.mxu0 0
      %5808 = vmatpush1.bf16.msra.mxu0 0
      %5809 = vmatprep.subr.bf16.mxu0 0
      %5810 = vmatpush1.bf16.msra.mxu0 0
      %5811 = vmatprep.subr.bf16.mxu0 0
      %5812 = vmatpush1.bf16.msra.mxu0 0
      %5813 = vmatprep.subr.bf16.mxu0 0
      %5814 = vmatpush1.bf16.msra.mxu0 0
      %5815 = vmatprep.subr.bf16.mxu0 0
      %5816 = vmatpush1.bf16.msra.mxu0 0
      %5817 = vmatprep.subr.bf16.mxu0 0
      %5818 = vmatpush1.bf16.msra.mxu0 0
      %5819 = vmatprep.subr.bf16.mxu0 0
      %5820 = vmatpush1.bf16.msra.mxu0 0
      %5821 = vmatprep.subr.bf16.mxu0 0
      %5822 = vmatpush1.bf16.msra.mxu0 0
      %5823 = vmatprep.subr.bf16.mxu0 0
      %5824 = vmatpush1.bf16.msra.mxu0 0
      %5825 = vmatprep.subr.bf16.mxu0 0
      %5826 = vmatpush1.bf16.msra.mxu0 0
      %5827 = vmatprep.subr.bf16.mxu0 0
      %5828 = vmatpush1.bf16.msra.mxu0 0
      %5829 = vmatprep.mubr.bf16.mxu0 0
      %5830 = vmatmul.mubr.bf16.gmra.mrb[0].mxu0 %v5795
      %v5831 = vpop.f32.mrb[0].mxu0
      %v5832 = vadd.f32 0.0, %v5831
      %v5833 = vpop.f32.mrb[0].mxu0
      %v5834 = vpop.f32.mrb[0].mxu0
      %v5835 = vadd.f32 0.0, %v5834
      %v5836 = vpop.f32.mrb[0].mxu0
      %5837 = vdwg.mxu0
      %5838 = vrot.lane.b32.xlu0 %v916, 64
      %v5839 = vpop.permute.xlu0 %5838
      %v5842 = vsel %vm4177, %v5590, 0
      %5844 = vmatprep.subr.bf16.mxu0 0
      %5845 = vmatpush1.bf16.msra.mxu0 %v5839
      %5846 = vmatprep.subr.bf16.mxu0 0
      %5847 = vmatpush1.bf16.msra.mxu0 0
      %5848 = vmatprep.subr.bf16.mxu0 0
      %5849 = vmatpush1.bf16.msra.mxu0 0
      %5850 = vmatprep.subr.bf16.mxu0 0
      %5851 = vmatpush1.bf16.msra.mxu0 0
      %5852 = vmatprep.subr.bf16.mxu0 0
      %5853 = vmatpush1.bf16.msra.mxu0 0
      %5854 = vmatprep.subr.bf16.mxu0 0
      %5855 = vmatpush1.bf16.msra.mxu0 0
      %5856 = vmatprep.subr.bf16.mxu0 0
      %5857 = vmatpush1.bf16.msra.mxu0 0
      %5858 = vmatprep.subr.bf16.mxu0 0
      %5859 = vmatpush1.bf16.msra.mxu0 0
      %5860 = vmatprep.subr.bf16.mxu0 0
      %5861 = vmatpush1.bf16.msra.mxu0 0
      %5862 = vmatprep.subr.bf16.mxu0 0
      %5863 = vmatpush1.bf16.msra.mxu0 0
      %5864 = vmatprep.subr.bf16.mxu0 0
      %5865 = vmatpush1.bf16.msra.mxu0 0
      %5866 = vmatprep.subr.bf16.mxu0 0
      %5867 = vmatpush1.bf16.msra.mxu0 0
      %5868 = vmatprep.subr.bf16.mxu0 0
      %5869 = vmatpush1.bf16.msra.mxu0 0
      %5870 = vmatprep.subr.bf16.mxu0 0
      %5871 = vmatpush1.bf16.msra.mxu0 0
      %5872 = vmatprep.subr.bf16.mxu0 0
      %5873 = vmatpush1.bf16.msra.mxu0 0
      %5874 = vmatprep.subr.bf16.mxu0 0
      %5875 = vmatpush1.bf16.msra.mxu0 0
      %5876 = vmatprep.mubr.bf16.mxu0 0
      %5877 = vmatmul.mubr.bf16.gmra.mrb[0].mxu0 %v5842
      %v5878 = vpop.f32.mrb[0].mxu0
      %v5879 = vadd.f32 0.0, %v5878
      %v5880 = vpop.f32.mrb[0].mxu0
      %v5881 = vpop.f32.mrb[0].mxu0
      %v5882 = vadd.f32 0.0, %v5881
      %v5883 = vpop.f32.mrb[0].mxu0
      %5884 = vdwg.mxu0
      %5885 = vrot.lane.b32.xlu0 %v917, 64
      %v5886 = vpop.permute.xlu0 %5885
      %v5889 = vsel %vm4177, %v5591, 0
      %5891 = vmatprep.subr.bf16.mxu0 0
      %5892 = vmatpush1.bf16.msra.mxu0 %v5886
      %5893 = vmatprep.subr.bf16.mxu0 0
      %5894 = vmatpush1.bf16.msra.mxu0 0
      %5895 = vmatprep.subr.bf16.mxu0 0
      %5896 = vmatpush1.bf16.msra.mxu0 0
      %5897 = vmatprep.subr.bf16.mxu0 0
      %5898 = vmatpush1.bf16.msra.mxu0 0
      %5899 = vmatprep.subr.bf16.mxu0 0
      %5900 = vmatpush1.bf16.msra.mxu0 0
      %5901 = vmatprep.subr.bf16.mxu0 0
      %5902 = vmatpush1.bf16.msra.mxu0 0
      %5903 = vmatprep.subr.bf16.mxu0 0
      %5904 = vmatpush1.bf16.msra.mxu0 0
      %5905 = vmatprep.subr.bf16.mxu0 0
      %5906 = vmatpush1.bf16.msra.mxu0 0
      %5907 = vmatprep.subr.bf16.mxu0 0
      %5908 = vmatpush1.bf16.msra.mxu0 0
      %5909 = vmatprep.subr.bf16.mxu0 0
      %5910 = vmatpush1.bf16.msra.mxu0 0
      %5911 = vmatprep.subr.bf16.mxu0 0
      %5912 = vmatpush1.bf16.msra.mxu0 0
      %5913 = vmatprep.subr.bf16.mxu0 0
      %5914 = vmatpush1.bf16.msra.mxu0 0
      %5915 = vmatprep.subr.bf16.mxu0 0
      %5916 = vmatpush1.bf16.msra.mxu0 0
      %5917 = vmatprep.subr.bf16.mxu0 0
      %5918 = vmatpush1.bf16.msra.mxu0 0
      %5919 = vmatprep.subr.bf16.mxu0 0
      %5920 = vmatpush1.bf16.msra.mxu0 0
      %5921 = vmatprep.subr.bf16.mxu0 0
      %5922 = vmatpush1.bf16.msra.mxu0 0
      %5923 = vmatprep.mubr.bf16.mxu0 0
      %5924 = vmatmul.mubr.bf16.gmra.mrb[0].mxu0 %v5889
      %v5925 = vpop.f32.mrb[0].mxu0
      %v5926 = vadd.f32 0.0, %v5925
      %v5927 = vpop.f32.mrb[0].mxu0
      %v5928 = vpop.f32.mrb[0].mxu0
      %v5929 = vadd.f32 0.0, %v5928
      %v5930 = vpop.f32.mrb[0].mxu0
      %5931 = vdwg.mxu0
      %5932 = vrot.lane.b32.xlu0 %v918, 64
      %v5933 = vpop.permute.xlu0 %5932
      %v5936 = vsel %vm4177, %v5592, 0
      %5938 = vmatprep.subr.bf16.mxu0 0
      %5939 = vmatpush1.bf16.msra.mxu0 %v5933
      %5940 = vmatprep.subr.bf16.mxu0 0
      %5941 = vmatpush1.bf16.msra.mxu0 0
      %5942 = vmatprep.subr.bf16.mxu0 0
      %5943 = vmatpush1.bf16.msra.mxu0 0
      %5944 = vmatprep.subr.bf16.mxu0 0
      %5945 = vmatpush1.bf16.msra.mxu0 0
      %5946 = vmatprep.subr.bf16.mxu0 0
      %5947 = vmatpush1.bf16.msra.mxu0 0
      %5948 = vmatprep.subr.bf16.mxu0 0
      %5949 = vmatpush1.bf16.msra.mxu0 0
      %5950 = vmatprep.subr.bf16.mxu0 0
      %5951 = vmatpush1.bf16.msra.mxu0 0
      %5952 = vmatprep.subr.bf16.mxu0 0
      %5953 = vmatpush1.bf16.msra.mxu0 0
      %5954 = vmatprep.subr.bf16.mxu0 0
      %5955 = vmatpush1.bf16.msra.mxu0 0
      %5956 = vmatprep.subr.bf16.mxu0 0
      %5957 = vmatpush1.bf16.msra.mxu0 0
      %5958 = vmatprep.subr.bf16.mxu0 0
      %5959 = vmatpush1.bf16.msra.mxu0 0
      %5960 = vmatprep.subr.bf16.mxu0 0
      %5961 = vmatpush1.bf16.msra.mxu0 0
      %5962 = vmatprep.subr.bf16.mxu0 0
      %5963 = vmatpush1.bf16.msra.mxu0 0
      %5964 = vmatprep.subr.bf16.mxu0 0
      %5965 = vmatpush1.bf16.msra.mxu0 0
      %5966 = vmatprep.subr.bf16.mxu0 0
      %5967 = vmatpush1.bf16.msra.mxu0 0
      %5968 = vmatprep.subr.bf16.mxu0 0
      %5969 = vmatpush1.bf16.msra.mxu0 0
      %5970 = vmatprep.mubr.bf16.mxu0 0
      %5971 = vmatmul.mubr.bf16.gmra.mrb[0].mxu0 %v5936
      %v5972 = vpop.f32.mrb[0].mxu0
      %v5973 = vadd.f32 0.0, %v5972
      %v5974 = vpop.f32.mrb[0].mxu0
      %v5975 = vpop.f32.mrb[0].mxu0
      %v5976 = vadd.f32 0.0, %v5975
      %v5977 = vpop.f32.mrb[0].mxu0
      %5978 = vdwg.mxu0
      %5979 = vrot.lane.b32.xlu0 %v919, 64
      %v5980 = vpop.permute.xlu0 %5979
      %v5983 = vsel %vm4177, %v5593, 0
      %5985 = vmatprep.subr.bf16.mxu0 0
      %5986 = vmatpush1.bf16.msra.mxu0 %v5980
      %5987 = vmatprep.subr.bf16.mxu0 0
      %5988 = vmatpush1.bf16.msra.mxu0 0
      %5989 = vmatprep.subr.bf16.mxu0 0
      %5990 = vmatpush1.bf16.msra.mxu0 0
      %5991 = vmatprep.subr.bf16.mxu0 0
      %5992 = vmatpush1.bf16.msra.mxu0 0
      %5993 = vmatprep.subr.bf16.mxu0 0
      %5994 = vmatpush1.bf16.msra.mxu0 0
      %5995 = vmatprep.subr.bf16.mxu0 0
      %5996 = vmatpush1.bf16.msra.mxu0 0
      %5997 = vmatprep.subr.bf16.mxu0 0
      %5998 = vmatpush1.bf16.msra.mxu0 0
      %5999 = vmatprep.subr.bf16.mxu0 0
      %6000 = vmatpush1.bf16.msra.mxu0 0
      %6001 = vmatprep.subr.bf16.mxu0 0
      %6002 = vmatpush1.bf16.msra.mxu0 0
      %6003 = vmatprep.subr.bf16.mxu0 0
      %6004 = vmatpush1.bf16.msra.mxu0 0
      %6005 = vmatprep.subr.bf16.mxu0 0
      %6006 = vmatpush1.bf16.msra.mxu0 0
      %6007 = vmatprep.subr.bf16.mxu0 0
      %6008 = vmatpush1.bf16.msra.mxu0 0
      %6009 = vmatprep.subr.bf16.mxu0 0
      %6010 = vmatpush1.bf16.msra.mxu0 0
      %6011 = vmatprep.subr.bf16.mxu0 0
      %6012 = vmatpush1.bf16.msra.mxu0 0
      %6013 = vmatprep.subr.bf16.mxu0 0
      %6014 = vmatpush1.bf16.msra.mxu0 0
      %6015 = vmatprep.subr.bf16.mxu0 0
      %6016 = vmatpush1.bf16.msra.mxu0 0
      %6017 = vmatprep.mubr.bf16.mxu0 0
      %6018 = vmatmul.mubr.bf16.gmra.mrb[0].mxu0 %v5983
      %v6019 = vpop.f32.mrb[0].mxu0
      %v6020 = vadd.f32 0.0, %v6019
      %v6021 = vpop.f32.mrb[0].mxu0
      %v6022 = vpop.f32.mrb[0].mxu0
      %v6023 = vadd.f32 0.0, %v6022
      %v6024 = vpop.f32.mrb[0].mxu0
      %6025 = vdwg.mxu0
      %6026 = vrot.lane.b32.xlu0 %v920, 64
      %v6027 = vpop.permute.xlu0 %6026
      %v6030 = vsel %vm4177, %v5594, 0
      %6032 = vmatprep.subr.bf16.mxu0 0
      %6033 = vmatpush1.bf16.msra.mxu0 %v6027
      %6034 = vmatprep.subr.bf16.mxu0 0
      %6035 = vmatpush1.bf16.msra.mxu0 0
      %6036 = vmatprep.subr.bf16.mxu0 0
      %6037 = vmatpush1.bf16.msra.mxu0 0
      %6038 = vmatprep.subr.bf16.mxu0 0
      %6039 = vmatpush1.bf16.msra.mxu0 0
      %6040 = vmatprep.subr.bf16.mxu0 0
      %6041 = vmatpush1.bf16.msra.mxu0 0
      %6042 = vmatprep.subr.bf16.mxu0 0
      %6043 = vmatpush1.bf16.msra.mxu0 0
      %6044 = vmatprep.subr.bf16.mxu0 0
      %6045 = vmatpush1.bf16.msra.mxu0 0
      %6046 = vmatprep.subr.bf16.mxu0 0
      %6047 = vmatpush1.bf16.msra.mxu0 0
      %6048 = vmatprep.subr.bf16.mxu0 0
      %6049 = vmatpush1.bf16.msra.mxu0 0
      %6050 = vmatprep.subr.bf16.mxu0 0
      %6051 = vmatpush1.bf16.msra.mxu0 0
      %6052 = vmatprep.subr.bf16.mxu0 0
      %6053 = vmatpush1.bf16.msra.mxu0 0
      %6054 = vmatprep.subr.bf16.mxu0 0
      %6055 = vmatpush1.bf16.msra.mxu0 0
      %6056 = vmatprep.subr.bf16.mxu0 0
      %6057 = vmatpush1.bf16.msra.mxu0 0
      %6058 = vmatprep.subr.bf16.mxu0 0
      %6059 = vmatpush1.bf16.msra.mxu0 0
      %6060 = vmatprep.subr.bf16.mxu0 0
      %6061 = vmatpush1.bf16.msra.mxu0 0
      %6062 = vmatprep.subr.bf16.mxu0 0
      %6063 = vmatpush1.bf16.msra.mxu0 0
      %6064 = vmatprep.mubr.bf16.mxu0 0
      %6065 = vmatmul.mubr.bf16.gmra.mrb[0].mxu0 %v6030
      %v6066 = vpop.f32.mrb[0].mxu0
      %v6067 = vadd.f32 0.0, %v6066
      %v6068 = vpop.f32.mrb[0].mxu0
      %v6069 = vpop.f32.mrb[0].mxu0
      %v6070 = vadd.f32 0.0, %v6069
      %v6071 = vpop.f32.mrb[0].mxu0
      %6072 = vdwg.mxu0
      %6073 = vrot.lane.b32.xlu0 %v921, 64
      %v6074 = vpop.permute.xlu0 %6073
      %v6077 = vsel %vm4177, %v5595, 0
      %6079 = vmatprep.subr.bf16.mxu0 0
      %6080 = vmatpush1.bf16.msra.mxu0 %v6074
      %6081 = vmatprep.subr.bf16.mxu0 0
      %6082 = vmatpush1.bf16.msra.mxu0 0
      %6083 = vmatprep.subr.bf16.mxu0 0
      %6084 = vmatpush1.bf16.msra.mxu0 0
      %6085 = vmatprep.subr.bf16.mxu0 0
      %6086 = vmatpush1.bf16.msra.mxu0 0
      %6087 = vmatprep.subr.bf16.mxu0 0
      %6088 = vmatpush1.bf16.msra.mxu0 0
      %6089 = vmatprep.subr.bf16.mxu0 0
      %6090 = vmatpush1.bf16.msra.mxu0 0
      %6091 = vmatprep.subr.bf16.mxu0 0
      %6092 = vmatpush1.bf16.msra.mxu0 0
      %6093 = vmatprep.subr.bf16.mxu0 0
      %6094 = vmatpush1.bf16.msra.mxu0 0
      %6095 = vmatprep.subr.bf16.mxu0 0
      %6096 = vmatpush1.bf16.msra.mxu0 0
      %6097 = vmatprep.subr.bf16.mxu0 0
      %6098 = vmatpush1.bf16.msra.mxu0 0
      %6099 = vmatprep.subr.bf16.mxu0 0
      %6100 = vmatpush1.bf16.msra.mxu0 0
      %6101 = vmatprep.subr.bf16.mxu0 0
      %6102 = vmatpush1.bf16.msra.mxu0 0
      %6103 = vmatprep.subr.bf16.mxu0 0
      %6104 = vmatpush1.bf16.msra.mxu0 0
      %6105 = vmatprep.subr.bf16.mxu0 0
      %6106 = vmatpush1.bf16.msra.mxu0 0
      %6107 = vmatprep.subr.bf16.mxu0 0
      %6108 = vmatpush1.bf16.msra.mxu0 0
      %6109 = vmatprep.subr.bf16.mxu0 0
      %6110 = vmatpush1.bf16.msra.mxu0 0
      %6111 = vmatprep.mubr.bf16.mxu0 0
      %6112 = vmatmul.mubr.bf16.gmra.mrb[0].mxu0 %v6077
      %v6113 = vpop.f32.mrb[0].mxu0
      %v6114 = vadd.f32 0.0, %v6113
      %v6115 = vpop.f32.mrb[0].mxu0
      %v6116 = vpop.f32.mrb[0].mxu0
      %v6117 = vadd.f32 0.0, %v6116
      %v6118 = vpop.f32.mrb[0].mxu0
      %6119 = vdwg.mxu0
      %6120 = vrot.lane.b32.xlu0 %v922, 64
      %v6121 = vpop.permute.xlu0 %6120
      %v6124 = vsel %vm4177, %v5596, 0
      %6126 = vmatprep.subr.bf16.mxu0 0
      %6127 = vmatpush1.bf16.msra.mxu0 %v6121
      %6128 = vmatprep.subr.bf16.mxu0 0
      %6129 = vmatpush1.bf16.msra.mxu0 0
      %6130 = vmatprep.subr.bf16.mxu0 0
      %6131 = vmatpush1.bf16.msra.mxu0 0
      %6132 = vmatprep.subr.bf16.mxu0 0
      %6133 = vmatpush1.bf16.msra.mxu0 0
      %6134 = vmatprep.subr.bf16.mxu0 0
      %6135 = vmatpush1.bf16.msra.mxu0 0
      %6136 = vmatprep.subr.bf16.mxu0 0
      %6137 = vmatpush1.bf16.msra.mxu0 0
      %6138 = vmatprep.subr.bf16.mxu0 0
      %6139 = vmatpush1.bf16.msra.mxu0 0
      %6140 = vmatprep.subr.bf16.mxu0 0
      %6141 = vmatpush1.bf16.msra.mxu0 0
      %6142 = vmatprep.subr.bf16.mxu0 0
      %6143 = vmatpush1.bf16.msra.mxu0 0
      %6144 = vmatprep.subr.bf16.mxu0 0
      %6145 = vmatpush1.bf16.msra.mxu0 0
      %6146 = vmatprep.subr.bf16.mxu0 0
      %6147 = vmatpush1.bf16.msra.mxu0 0
      %6148 = vmatprep.subr.bf16.mxu0 0
      %6149 = vmatpush1.bf16.msra.mxu0 0
      %6150 = vmatprep.subr.bf16.mxu0 0
      %6151 = vmatpush1.bf16.msra.mxu0 0
      %6152 = vmatprep.subr.bf16.mxu0 0
      %6153 = vmatpush1.bf16.msra.mxu0 0
      %6154 = vmatprep.subr.bf16.mxu0 0
      %6155 = vmatpush1.bf16.msra.mxu0 0
      %6156 = vmatprep.subr.bf16.mxu0 0
      %6157 = vmatpush1.bf16.msra.mxu0 0
      %6158 = vmatprep.mubr.bf16.mxu0 0
      %6159 = vmatmul.mubr.bf16.gmra.mrb[0].mxu0 %v6124
      %v6160 = vpop.f32.mrb[0].mxu0
      %v6161 = vadd.f32 0.0, %v6160
      %v6162 = vpop.f32.mrb[0].mxu0
      %v6163 = vpop.f32.mrb[0].mxu0
      %v6164 = vadd.f32 0.0, %v6163
      %v6165 = vpop.f32.mrb[0].mxu0
      %6166 = vdwg.mxu0
      %6167 = vrot.lane.b32.xlu0 %v923, 64
      %v6168 = vpop.permute.xlu0 %6167
      %v6171 = vsel %vm4177, %v5597, 0
      %6173 = vmatprep.subr.bf16.mxu0 0
      %6174 = vmatpush1.bf16.msra.mxu0 %v6168
      %6175 = vmatprep.subr.bf16.mxu0 0
      %6176 = vmatpush1.bf16.msra.mxu0 0
      %6177 = vmatprep.subr.bf16.mxu0 0
      %6178 = vmatpush1.bf16.msra.mxu0 0
      %6179 = vmatprep.subr.bf16.mxu0 0
      %6180 = vmatpush1.bf16.msra.mxu0 0
      %6181 = vmatprep.subr.bf16.mxu0 0
      %6182 = vmatpush1.bf16.msra.mxu0 0
      %6183 = vmatprep.subr.bf16.mxu0 0
      %6184 = vmatpush1.bf16.msra.mxu0 0
      %6185 = vmatprep.subr.bf16.mxu0 0
      %6186 = vmatpush1.bf16.msra.mxu0 0
      %6187 = vmatprep.subr.bf16.mxu0 0
      %6188 = vmatpush1.bf16.msra.mxu0 0
      %6189 = vmatprep.subr.bf16.mxu0 0
      %6190 = vmatpush1.bf16.msra.mxu0 0
      %6191 = vmatprep.subr.bf16.mxu0 0
      %6192 = vmatpush1.bf16.msra.mxu0 0
      %6193 = vmatprep.subr.bf16.mxu0 0
      %6194 = vmatpush1.bf16.msra.mxu0 0
      %6195 = vmatprep.subr.bf16.mxu0 0
      %6196 = vmatpush1.bf16.msra.mxu0 0
      %6197 = vmatprep.subr.bf16.mxu0 0
      %6198 = vmatpush1.bf16.msra.mxu0 0
      %6199 = vmatprep.subr.bf16.mxu0 0
      %6200 = vmatpush1.bf16.msra.mxu0 0
      %6201 = vmatprep.subr.bf16.mxu0 0
      %6202 = vmatpush1.bf16.msra.mxu0 0
      %6203 = vmatprep.subr.bf16.mxu0 0
      %6204 = vmatpush1.bf16.msra.mxu0 0
      %6205 = vmatprep.mubr.bf16.mxu0 0
      %6206 = vmatmul.mubr.bf16.gmra.mrb[0].mxu0 %v6171
      %v6207 = vpop.f32.mrb[0].mxu0
      %v6208 = vadd.f32 0.0, %v6207
      %v6209 = vpop.f32.mrb[0].mxu0
      %v6210 = vpop.f32.mrb[0].mxu0
      %v6211 = vadd.f32 0.0, %v6210
      %v6212 = vpop.f32.mrb[0].mxu0
      %6213 = vdwg.mxu0
      %6214 = vrot.lane.b32.xlu0 %v924, 64
      %v6215 = vpop.permute.xlu0 %6214
      %v6218 = vsel %vm4177, %v5598, 0
      %6220 = vmatprep.subr.bf16.mxu0 0
      %6221 = vmatpush1.bf16.msra.mxu0 %v6215
      %6222 = vmatprep.subr.bf16.mxu0 0
      %6223 = vmatpush1.bf16.msra.mxu0 0
      %6224 = vmatprep.subr.bf16.mxu0 0
      %6225 = vmatpush1.bf16.msra.mxu0 0
      %6226 = vmatprep.subr.bf16.mxu0 0
      %6227 = vmatpush1.bf16.msra.mxu0 0
      %6228 = vmatprep.subr.bf16.mxu0 0
      %6229 = vmatpush1.bf16.msra.mxu0 0
      %6230 = vmatprep.subr.bf16.mxu0 0
      %6231 = vmatpush1.bf16.msra.mxu0 0
      %6232 = vmatprep.subr.bf16.mxu0 0
      %6233 = vmatpush1.bf16.msra.mxu0 0
      %6234 = vmatprep.subr.bf16.mxu0 0
      %6235 = vmatpush1.bf16.msra.mxu0 0
      %6236 = vmatprep.subr.bf16.mxu0 0
      %6237 = vmatpush1.bf16.msra.mxu0 0
      %6238 = vmatprep.subr.bf16.mxu0 0
      %6239 = vmatpush1.bf16.msra.mxu0 0
      %6240 = vmatprep.subr.bf16.mxu0 0
      %6241 = vmatpush1.bf16.msra.mxu0 0
      %6242 = vmatprep.subr.bf16.mxu0 0
      %6243 = vmatpush1.bf16.msra.mxu0 0
      %6244 = vmatprep.subr.bf16.mxu0 0
      %6245 = vmatpush1.bf16.msra.mxu0 0
      %6246 = vmatprep.subr.bf16.mxu0 0
      %6247 = vmatpush1.bf16.msra.mxu0 0
      %6248 = vmatprep.subr.bf16.mxu0 0
      %6249 = vmatpush1.bf16.msra.mxu0 0
      %6250 = vmatprep.subr.bf16.mxu0 0
      %6251 = vmatpush1.bf16.msra.mxu0 0
      %6252 = vmatprep.mubr.bf16.mxu0 0
      %6253 = vmatmul.mubr.bf16.gmra.mrb[0].mxu0 %v6218
      %v6254 = vpop.f32.mrb[0].mxu0
      %v6255 = vadd.f32 0.0, %v6254
      %v6256 = vpop.f32.mrb[0].mxu0
      %v6257 = vpop.f32.mrb[0].mxu0
      %v6258 = vadd.f32 0.0, %v6257
      %v6259 = vpop.f32.mrb[0].mxu0
      %6260 = vdwg.mxu0
      %6261 = vrot.lane.b32.xlu0 %v925, 64
      %v6262 = vpop.permute.xlu0 %6261
      %v6265 = vsel %vm4177, %v5599, 0
      %6267 = vmatprep.subr.bf16.mxu0 0
      %6268 = vmatpush1.bf16.msra.mxu0 %v6262
      %6269 = vmatprep.subr.bf16.mxu0 0
      %6270 = vmatpush1.bf16.msra.mxu0 0
      %6271 = vmatprep.subr.bf16.mxu0 0
      %6272 = vmatpush1.bf16.msra.mxu0 0
      %6273 = vmatprep.subr.bf16.mxu0 0
      %6274 = vmatpush1.bf16.msra.mxu0 0
      %6275 = vmatprep.subr.bf16.mxu0 0
      %6276 = vmatpush1.bf16.msra.mxu0 0
      %6277 = vmatprep.subr.bf16.mxu0 0
      %6278 = vmatpush1.bf16.msra.mxu0 0
      %6279 = vmatprep.subr.bf16.mxu0 0
      %6280 = vmatpush1.bf16.msra.mxu0 0
      %6281 = vmatprep.subr.bf16.mxu0 0
      %6282 = vmatpush1.bf16.msra.mxu0 0
      %6283 = vmatprep.subr.bf16.mxu0 0
      %6284 = vmatpush1.bf16.msra.mxu0 0
      %6285 = vmatprep.subr.bf16.mxu0 0
      %6286 = vmatpush1.bf16.msra.mxu0 0
      %6287 = vmatprep.subr.bf16.mxu0 0
      %6288 = vmatpush1.bf16.msra.mxu0 0
      %6289 = vmatprep.subr.bf16.mxu0 0
      %6290 = vmatpush1.bf16.msra.mxu0 0
      %6291 = vmatprep.subr.bf16.mxu0 0
      %6292 = vmatpush1.bf16.msra.mxu0 0
      %6293 = vmatprep.subr.bf16.mxu0 0
      %6294 = vmatpush1.bf16.msra.mxu0 0
      %6295 = vmatprep.subr.bf16.mxu0 0
      %6296 = vmatpush1.bf16.msra.mxu0 0
      %6297 = vmatprep.subr.bf16.mxu0 0
      %6298 = vmatpush1.bf16.msra.mxu0 0
      %6299 = vmatprep.mubr.bf16.mxu0 0
      %6300 = vmatmul.mubr.bf16.gmra.mrb[0].mxu0 %v6265
      %v6301 = vpop.f32.mrb[0].mxu0
      %v6302 = vadd.f32 0.0, %v6301
      %v6303 = vpop.f32.mrb[0].mxu0
      %v6304 = vpop.f32.mrb[0].mxu0
      %v6305 = vadd.f32 0.0, %v6304
      %v6306 = vpop.f32.mrb[0].mxu0
      %6307 = vdwg.mxu0
      %6308 = vrot.lane.b32.xlu0 %v926, 64
      %v6309 = vpop.permute.xlu0 %6308
      %v6312 = vsel %vm4177, %v5600, 0
      %6314 = vmatprep.subr.bf16.mxu0 0
      %6315 = vmatpush1.bf16.msra.mxu0 %v6309
      %6316 = vmatprep.subr.bf16.mxu0 0
      %6317 = vmatpush1.bf16.msra.mxu0 0
      %6318 = vmatprep.subr.bf16.mxu0 0
      %6319 = vmatpush1.bf16.msra.mxu0 0
      %6320 = vmatprep.subr.bf16.mxu0 0
      %6321 = vmatpush1.bf16.msra.mxu0 0
      %6322 = vmatprep.subr.bf16.mxu0 0
      %6323 = vmatpush1.bf16.msra.mxu0 0
      %6324 = vmatprep.subr.bf16.mxu0 0
      %6325 = vmatpush1.bf16.msra.mxu0 0
      %6326 = vmatprep.subr.bf16.mxu0 0
      %6327 = vmatpush1.bf16.msra.mxu0 0
      %6328 = vmatprep.subr.bf16.mxu0 0
      %6329 = vmatpush1.bf16.msra.mxu0 0
      %6330 = vmatprep.subr.bf16.mxu0 0
      %6331 = vmatpush1.bf16.msra.mxu0 0
      %6332 = vmatprep.subr.bf16.mxu0 0
      %6333 = vmatpush1.bf16.msra.mxu0 0
      %6334 = vmatprep.subr.bf16.mxu0 0
      %6335 = vmatpush1.bf16.msra.mxu0 0
      %6336 = vmatprep.subr.bf16.mxu0 0
      %6337 = vmatpush1.bf16.msra.mxu0 0
      %6338 = vmatprep.subr.bf16.mxu0 0
      %6339 = vmatpush1.bf16.msra.mxu0 0
      %6340 = vmatprep.subr.bf16.mxu0 0
      %6341 = vmatpush1.bf16.msra.mxu0 0
      %6342 = vmatprep.subr.bf16.mxu0 0
      %6343 = vmatpush1.bf16.msra.mxu0 0
      %6344 = vmatprep.subr.bf16.mxu0 0
      %6345 = vmatpush1.bf16.msra.mxu0 0
      %6346 = vmatprep.mubr.bf16.mxu0 0
      %6347 = vmatmul.mubr.bf16.gmra.mrb[0].mxu0 %v6312
      %v6348 = vpop.f32.mrb[0].mxu0
      %v6349 = vadd.f32 0.0, %v6348
      %v6350 = vpop.f32.mrb[0].mxu0
      %v6351 = vpop.f32.mrb[0].mxu0
      %v6352 = vadd.f32 0.0, %v6351
      %v6353 = vpop.f32.mrb[0].mxu0
      %6354 = vdwg.mxu0
      %6355 = vrot.lane.b32.xlu0 %v927, 64
      %v6356 = vpop.permute.xlu0 %6355
      %v6359 = vsel %vm4177, %v5601, 0
      %6361 = vmatprep.subr.bf16.mxu0 0
      %6362 = vmatpush1.bf16.msra.mxu0 %v6356
      %6363 = vmatprep.subr.bf16.mxu0 0
      %6364 = vmatpush1.bf16.msra.mxu0 0
      %6365 = vmatprep.subr.bf16.mxu0 0
      %6366 = vmatpush1.bf16.msra.mxu0 0
      %6367 = vmatprep.subr.bf16.mxu0 0
      %6368 = vmatpush1.bf16.msra.mxu0 0
      %6369 = vmatprep.subr.bf16.mxu0 0
      %6370 = vmatpush1.bf16.msra.mxu0 0
      %6371 = vmatprep.subr.bf16.mxu0 0
      %6372 = vmatpush1.bf16.msra.mxu0 0
      %6373 = vmatprep.subr.bf16.mxu0 0
      %6374 = vmatpush1.bf16.msra.mxu0 0
      %6375 = vmatprep.subr.bf16.mxu0 0
      %6376 = vmatpush1.bf16.msra.mxu0 0
      %6377 = vmatprep.subr.bf16.mxu0 0
      %6378 = vmatpush1.bf16.msra.mxu0 0
      %6379 = vmatprep.subr.bf16.mxu0 0
      %6380 = vmatpush1.bf16.msra.mxu0 0
      %6381 = vmatprep.subr.bf16.mxu0 0
      %6382 = vmatpush1.bf16.msra.mxu0 0
      %6383 = vmatprep.subr.bf16.mxu0 0
      %6384 = vmatpush1.bf16.msra.mxu0 0
      %6385 = vmatprep.subr.bf16.mxu0 0
      %6386 = vmatpush1.bf16.msra.mxu0 0
      %6387 = vmatprep.subr.bf16.mxu0 0
      %6388 = vmatpush1.bf16.msra.mxu0 0
      %6389 = vmatprep.subr.bf16.mxu0 0
      %6390 = vmatpush1.bf16.msra.mxu0 0
      %6391 = vmatprep.subr.bf16.mxu0 0
      %6392 = vmatpush1.bf16.msra.mxu0 0
      %6393 = vmatprep.mubr.bf16.mxu0 0
      %6394 = vmatmul.mubr.bf16.gmra.mrb[0].mxu0 %v6359
      %v6395 = vpop.f32.mrb[0].mxu0
      %v6396 = vadd.f32 0.0, %v6395
      %v6397 = vpop.f32.mrb[0].mxu0
      %v6398 = vpop.f32.mrb[0].mxu0
      %v6399 = vadd.f32 0.0, %v6398
      %v6400 = vpop.f32.mrb[0].mxu0
      %6401 = vdwg.mxu0
      %6402 = vrot.lane.b32.xlu0 %v928, 64
      %v6403 = vpop.permute.xlu0 %6402
      %v6406 = vsel %vm4177, %v5602, 0
      %6408 = vmatprep.subr.bf16.mxu0 0
      %6409 = vmatpush1.bf16.msra.mxu0 %v6403
      %6410 = vmatprep.subr.bf16.mxu0 0
      %6411 = vmatpush1.bf16.msra.mxu0 0
      %6412 = vmatprep.subr.bf16.mxu0 0
      %6413 = vmatpush1.bf16.msra.mxu0 0
      %6414 = vmatprep.subr.bf16.mxu0 0
      %6415 = vmatpush1.bf16.msra.mxu0 0
      %6416 = vmatprep.subr.bf16.mxu0 0
      %6417 = vmatpush1.bf16.msra.mxu0 0
      %6418 = vmatprep.subr.bf16.mxu0 0
      %6419 = vmatpush1.bf16.msra.mxu0 0
      %6420 = vmatprep.subr.bf16.mxu0 0
      %6421 = vmatpush1.bf16.msra.mxu0 0
      %6422 = vmatprep.subr.bf16.mxu0 0
      %6423 = vmatpush1.bf16.msra.mxu0 0
      %6424 = vmatprep.subr.bf16.mxu0 0
      %6425 = vmatpush1.bf16.msra.mxu0 0
      %6426 = vmatprep.subr.bf16.mxu0 0
      %6427 = vmatpush1.bf16.msra.mxu0 0
      %6428 = vmatprep.subr.bf16.mxu0 0
      %6429 = vmatpush1.bf16.msra.mxu0 0
      %6430 = vmatprep.subr.bf16.mxu0 0
      %6431 = vmatpush1.bf16.msra.mxu0 0
      %6432 = vmatprep.subr.bf16.mxu0 0
      %6433 = vmatpush1.bf16.msra.mxu0 0
      %6434 = vmatprep.subr.bf16.mxu0 0
      %6435 = vmatpush1.bf16.msra.mxu0 0
      %6436 = vmatprep.subr.bf16.mxu0 0
      %6437 = vmatpush1.bf16.msra.mxu0 0
      %6438 = vmatprep.subr.bf16.mxu0 0
      %6439 = vmatpush1.bf16.msra.mxu0 0
      %6440 = vmatprep.mubr.bf16.mxu0 0
      %6441 = vmatmul.mubr.bf16.gmra.mrb[0].mxu0 %v6406
      %v6442 = vpop.f32.mrb[0].mxu0
      %v6443 = vadd.f32 0.0, %v6442
      %v6444 = vpop.f32.mrb[0].mxu0
      %v6445 = vpop.f32.mrb[0].mxu0
      %v6446 = vadd.f32 0.0, %v6445
      %v6447 = vpop.f32.mrb[0].mxu0
      %6448 = vdwg.mxu0
      %6449 = vrot.lane.b32.xlu0 %v929, 64
      %v6450 = vpop.permute.xlu0 %6449
      %v6453 = vsel %vm4177, %v5603, 0
      %6455 = vmatprep.subr.bf16.mxu0 0
      %6456 = vmatpush1.bf16.msra.mxu0 %v6450
      %6457 = vmatprep.subr.bf16.mxu0 0
      %6458 = vmatpush1.bf16.msra.mxu0 0
      %6459 = vmatprep.subr.bf16.mxu0 0
      %6460 = vmatpush1.bf16.msra.mxu0 0
      %6461 = vmatprep.subr.bf16.mxu0 0
      %6462 = vmatpush1.bf16.msra.mxu0 0
      %6463 = vmatprep.subr.bf16.mxu0 0
      %6464 = vmatpush1.bf16.msra.mxu0 0
      %6465 = vmatprep.subr.bf16.mxu0 0
      %6466 = vmatpush1.bf16.msra.mxu0 0
      %6467 = vmatprep.subr.bf16.mxu0 0
      %6468 = vmatpush1.bf16.msra.mxu0 0
      %6469 = vmatprep.subr.bf16.mxu0 0
      %6470 = vmatpush1.bf16.msra.mxu0 0
      %6471 = vmatprep.subr.bf16.mxu0 0
      %6472 = vmatpush1.bf16.msra.mxu0 0
      %6473 = vmatprep.subr.bf16.mxu0 0
      %6474 = vmatpush1.bf16.msra.mxu0 0
      %6475 = vmatprep.subr.bf16.mxu0 0
      %6476 = vmatpush1.bf16.msra.mxu0 0
      %6477 = vmatprep.subr.bf16.mxu0 0
      %6478 = vmatpush1.bf16.msra.mxu0 0
      %6479 = vmatprep.subr.bf16.mxu0 0
      %6480 = vmatpush1.bf16.msra.mxu0 0
      %6481 = vmatprep.subr.bf16.mxu0 0
      %6482 = vmatpush1.bf16.msra.mxu0 0
      %6483 = vmatprep.subr.bf16.mxu0 0
      %6484 = vmatpush1.bf16.msra.mxu0 0
      %6485 = vmatprep.subr.bf16.mxu0 0
      %6486 = vmatpush1.bf16.msra.mxu0 0
      %6487 = vmatprep.mubr.bf16.mxu0 0
      %6488 = vmatmul.mubr.bf16.gmra.mrb[0].mxu0 %v6453
      %v6489 = vpop.f32.mrb[0].mxu0
      %v6490 = vadd.f32 0.0, %v6489
      %v6491 = vpop.f32.mrb[0].mxu0
      %v6492 = vpop.f32.mrb[0].mxu0
      %v6493 = vadd.f32 0.0, %v6492
      %v6494 = vpop.f32.mrb[0].mxu0
      %6495 = vdwg.mxu0
      %6496 = vrot.lane.b32.xlu0 %v930, 64
      %v6497 = vpop.permute.xlu0 %6496
      %v6500 = vsel %vm4177, %v5604, 0
      %6502 = vmatprep.subr.bf16.mxu0 0
      %6503 = vmatpush1.bf16.msra.mxu0 %v6497
      %6504 = vmatprep.subr.bf16.mxu0 0
      %6505 = vmatpush1.bf16.msra.mxu0 0
      %6506 = vmatprep.subr.bf16.mxu0 0
      %6507 = vmatpush1.bf16.msra.mxu0 0
      %6508 = vmatprep.subr.bf16.mxu0 0
      %6509 = vmatpush1.bf16.msra.mxu0 0
      %6510 = vmatprep.subr.bf16.mxu0 0
      %6511 = vmatpush1.bf16.msra.mxu0 0
      %6512 = vmatprep.subr.bf16.mxu0 0
      %6513 = vmatpush1.bf16.msra.mxu0 0
      %6514 = vmatprep.subr.bf16.mxu0 0
      %6515 = vmatpush1.bf16.msra.mxu0 0
      %6516 = vmatprep.subr.bf16.mxu0 0
      %6517 = vmatpush1.bf16.msra.mxu0 0
      %6518 = vmatprep.subr.bf16.mxu0 0
      %6519 = vmatpush1.bf16.msra.mxu0 0
      %6520 = vmatprep.subr.bf16.mxu0 0
      %6521 = vmatpush1.bf16.msra.mxu0 0
      %6522 = vmatprep.subr.bf16.mxu0 0
      %6523 = vmatpush1.bf16.msra.mxu0 0
      %6524 = vmatprep.subr.bf16.mxu0 0
      %6525 = vmatpush1.bf16.msra.mxu0 0
      %6526 = vmatprep.subr.bf16.mxu0 0
      %6527 = vmatpush1.bf16.msra.mxu0 0
      %6528 = vmatprep.subr.bf16.mxu0 0
      %6529 = vmatpush1.bf16.msra.mxu0 0
      %6530 = vmatprep.subr.bf16.mxu0 0
      %6531 = vmatpush1.bf16.msra.mxu0 0
      %6532 = vmatprep.subr.bf16.mxu0 0
      %6533 = vmatpush1.bf16.msra.mxu0 0
      %6534 = vmatprep.mubr.bf16.mxu0 0
      %6535 = vmatmul.mubr.bf16.gmra.mrb[0].mxu0 %v6500
      %v6536 = vpop.f32.mrb[0].mxu0
      %v6537 = vadd.f32 0.0, %v6536
      %v6538 = vpop.f32.mrb[0].mxu0
      %v6539 = vpop.f32.mrb[0].mxu0
      %v6540 = vadd.f32 0.0, %v6539
      %v6541 = vpop.f32.mrb[0].mxu0
      %6542 = vdwg.mxu0
      %6543 = vrot.lane.b32.xlu0 %v931, 64
      %v6544 = vpop.permute.xlu0 %6543
      %v6547 = vsel %vm4177, %v5605, 0
      %6549 = vmatprep.subr.bf16.mxu0 0
      %6550 = vmatpush1.bf16.msra.mxu0 %v6544
      %6551 = vmatprep.subr.bf16.mxu0 0
      %6552 = vmatpush1.bf16.msra.mxu0 0
      %6553 = vmatprep.subr.bf16.mxu0 0
      %6554 = vmatpush1.bf16.msra.mxu0 0
      %6555 = vmatprep.subr.bf16.mxu0 0
      %6556 = vmatpush1.bf16.msra.mxu0 0
      %6557 = vmatprep.subr.bf16.mxu0 0
      %6558 = vmatpush1.bf16.msra.mxu0 0
      %6559 = vmatprep.subr.bf16.mxu0 0
      %6560 = vmatpush1.bf16.msra.mxu0 0
      %6561 = vmatprep.subr.bf16.mxu0 0
      %6562 = vmatpush1.bf16.msra.mxu0 0
      %6563 = vmatprep.subr.bf16.mxu0 0
      %6564 = vmatpush1.bf16.msra.mxu0 0
      %6565 = vmatprep.subr.bf16.mxu0 0
      %6566 = vmatpush1.bf16.msra.mxu0 0
      %6567 = vmatprep.subr.bf16.mxu0 0
      %6568 = vmatpush1.bf16.msra.mxu0 0
      %6569 = vmatprep.subr.bf16.mxu0 0
      %6570 = vmatpush1.bf16.msra.mxu0 0
      %6571 = vmatprep.subr.bf16.mxu0 0
      %6572 = vmatpush1.bf16.msra.mxu0 0
      %6573 = vmatprep.subr.bf16.mxu0 0
      %6574 = vmatpush1.bf16.msra.mxu0 0
      %6575 = vmatprep.subr.bf16.mxu0 0
      %6576 = vmatpush1.bf16.msra.mxu0 0
      %6577 = vmatprep.subr.bf16.mxu0 0
      %6578 = vmatpush1.bf16.msra.mxu0 0
      %6579 = vmatprep.subr.bf16.mxu0 0
      %6580 = vmatpush1.bf16.msra.mxu0 0
      %6581 = vmatprep.mubr.bf16.mxu0 0
      %6582 = vmatmul.mubr.bf16.gmra.mrb[0].mxu0 %v6547
      %v6583 = vpop.f32.mrb[0].mxu0
      %v6584 = vadd.f32 0.0, %v6583
      %v6585 = vpop.f32.mrb[0].mxu0
      %v6586 = vpop.f32.mrb[0].mxu0
      %v6587 = vadd.f32 0.0, %v6586
      %v6588 = vpop.f32.mrb[0].mxu0
      %6589 = vdwg.mxu0
      %6590 = vrot.lane.b32.xlu0 %v932, 64
      %v6591 = vpop.permute.xlu0 %6590
      %v6594 = vsel %vm4177, %v5606, 0
      %6596 = vmatprep.subr.bf16.mxu0 0
      %6597 = vmatpush1.bf16.msra.mxu0 %v6591
      %6598 = vmatprep.subr.bf16.mxu0 0
      %6599 = vmatpush1.bf16.msra.mxu0 0
      %6600 = vmatprep.subr.bf16.mxu0 0
      %6601 = vmatpush1.bf16.msra.mxu0 0
      %6602 = vmatprep.subr.bf16.mxu0 0
      %6603 = vmatpush1.bf16.msra.mxu0 0
      %6604 = vmatprep.subr.bf16.mxu0 0
      %6605 = vmatpush1.bf16.msra.mxu0 0
      %6606 = vmatprep.subr.bf16.mxu0 0
      %6607 = vmatpush1.bf16.msra.mxu0 0
      %6608 = vmatprep.subr.bf16.mxu0 0
      %6609 = vmatpush1.bf16.msra.mxu0 0
      %6610 = vmatprep.subr.bf16.mxu0 0
      %6611 = vmatpush1.bf16.msra.mxu0 0
      %6612 = vmatprep.subr.bf16.mxu0 0
      %6613 = vmatpush1.bf16.msra.mxu0 0
      %6614 = vmatprep.subr.bf16.mxu0 0
      %6615 = vmatpush1.bf16.msra.mxu0 0
      %6616 = vmatprep.subr.bf16.mxu0 0
      %6617 = vmatpush1.bf16.msra.mxu0 0
      %6618 = vmatprep.subr.bf16.mxu0 0
      %6619 = vmatpush1.bf16.msra.mxu0 0
      %6620 = vmatprep.subr.bf16.mxu0 0
      %6621 = vmatpush1.bf16.msra.mxu0 0
      %6622 = vmatprep.subr.bf16.mxu0 0
      %6623 = vmatpush1.bf16.msra.mxu0 0
      %6624 = vmatprep.subr.bf16.mxu0 0
      %6625 = vmatpush1.bf16.msra.mxu0 0
      %6626 = vmatprep.subr.bf16.mxu0 0
      %6627 = vmatpush1.bf16.msra.mxu0 0
      %6628 = vmatprep.mubr.bf16.mxu0 0
      %6629 = vmatmul.mubr.bf16.gmra.mrb[0].mxu0 %v6594
      %v6630 = vpop.f32.mrb[0].mxu0
      %v6631 = vadd.f32 0.0, %v6630
      %v6632 = vpop.f32.mrb[0].mxu0
      %v6633 = vpop.f32.mrb[0].mxu0
      %v6634 = vadd.f32 0.0, %v6633
      %v6635 = vpop.f32.mrb[0].mxu0
      %6636 = vdwg.mxu0
      %6637 = vrot.lane.b32.xlu0 %v933, 64
      %v6638 = vpop.permute.xlu0 %6637
      %v6641 = vsel %vm4177, %v5607, 0
      %6643 = vmatprep.subr.bf16.mxu0 0
      %6644 = vmatpush1.bf16.msra.mxu0 %v6638
      %6645 = vmatprep.subr.bf16.mxu0 0
      %6646 = vmatpush1.bf16.msra.mxu0 0
      %6647 = vmatprep.subr.bf16.mxu0 0
      %6648 = vmatpush1.bf16.msra.mxu0 0
      %6649 = vmatprep.subr.bf16.mxu0 0
      %6650 = vmatpush1.bf16.msra.mxu0 0
      %6651 = vmatprep.subr.bf16.mxu0 0
      %6652 = vmatpush1.bf16.msra.mxu0 0
      %6653 = vmatprep.subr.bf16.mxu0 0
      %6654 = vmatpush1.bf16.msra.mxu0 0
      %6655 = vmatprep.subr.bf16.mxu0 0
      %6656 = vmatpush1.bf16.msra.mxu0 0
      %6657 = vmatprep.subr.bf16.mxu0 0
      %6658 = vmatpush1.bf16.msra.mxu0 0
      %6659 = vmatprep.subr.bf16.mxu0 0
      %6660 = vmatpush1.bf16.msra.mxu0 0
      %6661 = vmatprep.subr.bf16.mxu0 0
      %6662 = vmatpush1.bf16.msra.mxu0 0
      %6663 = vmatprep.subr.bf16.mxu0 0
      %6664 = vmatpush1.bf16.msra.mxu0 0
      %6665 = vmatprep.subr.bf16.mxu0 0
      %6666 = vmatpush1.bf16.msra.mxu0 0
      %6667 = vmatprep.subr.bf16.mxu0 0
      %6668 = vmatpush1.bf16.msra.mxu0 0
      %6669 = vmatprep.subr.bf16.mxu0 0
      %6670 = vmatpush1.bf16.msra.mxu0 0
      %6671 = vmatprep.subr.bf16.mxu0 0
      %6672 = vmatpush1.bf16.msra.mxu0 0
      %6673 = vmatprep.subr.bf16.mxu0 0
      %6674 = vmatpush1.bf16.msra.mxu0 0
      %6675 = vmatprep.mubr.bf16.mxu0 0
      %6676 = vmatmul.mubr.bf16.gmra.mrb[0].mxu0 %v6641
      %v6677 = vpop.f32.mrb[0].mxu0
      %v6678 = vadd.f32 0.0, %v6677
      %v6679 = vpop.f32.mrb[0].mxu0
      %v6680 = vpop.f32.mrb[0].mxu0
      %v6681 = vadd.f32 0.0, %v6680
      %v6682 = vpop.f32.mrb[0].mxu0
      %6683 = vdwg.mxu0
      %6684 = vrot.lane.b32.xlu0 %v934, 64
      %v6685 = vpop.permute.xlu0 %6684
      %v6688 = vsel %vm4177, %v5608, 0
      %6690 = vmatprep.subr.bf16.mxu0 0
      %6691 = vmatpush1.bf16.msra.mxu0 %v6685
      %6692 = vmatprep.subr.bf16.mxu0 0
      %6693 = vmatpush1.bf16.msra.mxu0 0
      %6694 = vmatprep.subr.bf16.mxu0 0
      %6695 = vmatpush1.bf16.msra.mxu0 0
      %6696 = vmatprep.subr.bf16.mxu0 0
      %6697 = vmatpush1.bf16.msra.mxu0 0
      %6698 = vmatprep.subr.bf16.mxu0 0
      %6699 = vmatpush1.bf16.msra.mxu0 0
      %6700 = vmatprep.subr.bf16.mxu0 0
      %6701 = vmatpush1.bf16.msra.mxu0 0
      %6702 = vmatprep.subr.bf16.mxu0 0
      %6703 = vmatpush1.bf16.msra.mxu0 0
      %6704 = vmatprep.subr.bf16.mxu0 0
      %6705 = vmatpush1.bf16.msra.mxu0 0
      %6706 = vmatprep.subr.bf16.mxu0 0
      %6707 = vmatpush1.bf16.msra.mxu0 0
      %6708 = vmatprep.subr.bf16.mxu0 0
      %6709 = vmatpush1.bf16.msra.mxu0 0
      %6710 = vmatprep.subr.bf16.mxu0 0
      %6711 = vmatpush1.bf16.msra.mxu0 0
      %6712 = vmatprep.subr.bf16.mxu0 0
      %6713 = vmatpush1.bf16.msra.mxu0 0
      %6714 = vmatprep.subr.bf16.mxu0 0
      %6715 = vmatpush1.bf16.msra.mxu0 0
      %6716 = vmatprep.subr.bf16.mxu0 0
      %6717 = vmatpush1.bf16.msra.mxu0 0
      %6718 = vmatprep.subr.bf16.mxu0 0
      %6719 = vmatpush1.bf16.msra.mxu0 0
      %6720 = vmatprep.subr.bf16.mxu0 0
      %6721 = vmatpush1.bf16.msra.mxu0 0
      %6722 = vmatprep.mubr.bf16.mxu0 0
      %6723 = vmatmul.mubr.bf16.gmra.mrb[0].mxu0 %v6688
      %v6724 = vpop.f32.mrb[0].mxu0
      %v6725 = vadd.f32 0.0, %v6724
      %v6726 = vpop.f32.mrb[0].mxu0
      %v6727 = vpop.f32.mrb[0].mxu0
      %v6728 = vadd.f32 0.0, %v6727
      %v6729 = vpop.f32.mrb[0].mxu0
      %6730 = vdwg.mxu0
      %6731 = vrot.lane.b32.xlu0 %v935, 64
      %v6732 = vpop.permute.xlu0 %6731
      %v6735 = vsel %vm4177, %v5609, 0
      %6737 = vmatprep.subr.bf16.mxu0 0
      %6738 = vmatpush1.bf16.msra.mxu0 %v6732
      %6739 = vmatprep.subr.bf16.mxu0 0
      %6740 = vmatpush1.bf16.msra.mxu0 0
      %6741 = vmatprep.subr.bf16.mxu0 0
      %6742 = vmatpush1.bf16.msra.mxu0 0
      %6743 = vmatprep.subr.bf16.mxu0 0
      %6744 = vmatpush1.bf16.msra.mxu0 0
      %6745 = vmatprep.subr.bf16.mxu0 0
      %6746 = vmatpush1.bf16.msra.mxu0 0
      %6747 = vmatprep.subr.bf16.mxu0 0
      %6748 = vmatpush1.bf16.msra.mxu0 0
      %6749 = vmatprep.subr.bf16.mxu0 0
      %6750 = vmatpush1.bf16.msra.mxu0 0
      %6751 = vmatprep.subr.bf16.mxu0 0
      %6752 = vmatpush1.bf16.msra.mxu0 0
      %6753 = vmatprep.subr.bf16.mxu0 0
      %6754 = vmatpush1.bf16.msra.mxu0 0
      %6755 = vmatprep.subr.bf16.mxu0 0
      %6756 = vmatpush1.bf16.msra.mxu0 0
      %6757 = vmatprep.subr.bf16.mxu0 0
      %6758 = vmatpush1.bf16.msra.mxu0 0
      %6759 = vmatprep.subr.bf16.mxu0 0
      %6760 = vmatpush1.bf16.msra.mxu0 0
      %6761 = vmatprep.subr.bf16.mxu0 0
      %6762 = vmatpush1.bf16.msra.mxu0 0
      %6763 = vmatprep.subr.bf16.mxu0 0
      %6764 = vmatpush1.bf16.msra.mxu0 0
      %6765 = vmatprep.subr.bf16.mxu0 0
      %6766 = vmatpush1.bf16.msra.mxu0 0
      %6767 = vmatprep.subr.bf16.mxu0 0
      %6768 = vmatpush1.bf16.msra.mxu0 0
      %6769 = vmatprep.mubr.bf16.mxu0 0
      %6770 = vmatmul.mubr.bf16.gmra.mrb[0].mxu0 %v6735
      %v6771 = vpop.f32.mrb[0].mxu0
      %v6772 = vadd.f32 0.0, %v6771
      %v6773 = vpop.f32.mrb[0].mxu0
      %v6774 = vpop.f32.mrb[0].mxu0
      %v6775 = vadd.f32 0.0, %v6774
      %v6776 = vpop.f32.mrb[0].mxu0
      %6777 = vdwg.mxu0
      %6778 = vrot.lane.b32.xlu0 %v936, 64
      %v6779 = vpop.permute.xlu0 %6778
      %v6782 = vsel %vm4177, %v5610, 0
      %6784 = vmatprep.subr.bf16.mxu0 0
      %6785 = vmatpush1.bf16.msra.mxu0 %v6779
      %6786 = vmatprep.subr.bf16.mxu0 0
      %6787 = vmatpush1.bf16.msra.mxu0 0
      %6788 = vmatprep.subr.bf16.mxu0 0
      %6789 = vmatpush1.bf16.msra.mxu0 0
      %6790 = vmatprep.subr.bf16.mxu0 0
      %6791 = vmatpush1.bf16.msra.mxu0 0
      %6792 = vmatprep.subr.bf16.mxu0 0
      %6793 = vmatpush1.bf16.msra.mxu0 0
      %6794 = vmatprep.subr.bf16.mxu0 0
      %6795 = vmatpush1.bf16.msra.mxu0 0
      %6796 = vmatprep.subr.bf16.mxu0 0
      %6797 = vmatpush1.bf16.msra.mxu0 0
      %6798 = vmatprep.subr.bf16.mxu0 0
      %6799 = vmatpush1.bf16.msra.mxu0 0
      %6800 = vmatprep.subr.bf16.mxu0 0
      %6801 = vmatpush1.bf16.msra.mxu0 0
      %6802 = vmatprep.subr.bf16.mxu0 0
      %6803 = vmatpush1.bf16.msra.mxu0 0
      %6804 = vmatprep.subr.bf16.mxu0 0
      %6805 = vmatpush1.bf16.msra.mxu0 0
      %6806 = vmatprep.subr.bf16.mxu0 0
      %6807 = vmatpush1.bf16.msra.mxu0 0
      %6808 = vmatprep.subr.bf16.mxu0 0
      %6809 = vmatpush1.bf16.msra.mxu0 0
      %6810 = vmatprep.subr.bf16.mxu0 0
      %6811 = vmatpush1.bf16.msra.mxu0 0
      %6812 = vmatprep.subr.bf16.mxu0 0
      %6813 = vmatpush1.bf16.msra.mxu0 0
      %6814 = vmatprep.subr.bf16.mxu0 0
      %6815 = vmatpush1.bf16.msra.mxu0 0
      %6816 = vmatprep.mubr.bf16.mxu0 0
      %6817 = vmatmul.mubr.bf16.gmra.mrb[0].mxu0 %v6782
      %v6818 = vpop.f32.mrb[0].mxu0
      %v6819 = vadd.f32 0.0, %v6818
      %v6820 = vpop.f32.mrb[0].mxu0
      %v6821 = vpop.f32.mrb[0].mxu0
      %v6822 = vadd.f32 0.0, %v6821
      %v6823 = vpop.f32.mrb[0].mxu0
      %6824 = vdwg.mxu0
      %6825 = vrot.lane.b32.xlu0 %v937, 64
      %v6826 = vpop.permute.xlu0 %6825
      %v6829 = vsel %vm4177, %v5611, 0
      %6831 = vmatprep.subr.bf16.mxu0 0
      %6832 = vmatpush1.bf16.msra.mxu0 %v6826
      %6833 = vmatprep.subr.bf16.mxu0 0
      %6834 = vmatpush1.bf16.msra.mxu0 0
      %6835 = vmatprep.subr.bf16.mxu0 0
      %6836 = vmatpush1.bf16.msra.mxu0 0
      %6837 = vmatprep.subr.bf16.mxu0 0
      %6838 = vmatpush1.bf16.msra.mxu0 0
      %6839 = vmatprep.subr.bf16.mxu0 0
      %6840 = vmatpush1.bf16.msra.mxu0 0
      %6841 = vmatprep.subr.bf16.mxu0 0
      %6842 = vmatpush1.bf16.msra.mxu0 0
      %6843 = vmatprep.subr.bf16.mxu0 0
      %6844 = vmatpush1.bf16.msra.mxu0 0
      %6845 = vmatprep.subr.bf16.mxu0 0
      %6846 = vmatpush1.bf16.msra.mxu0 0
      %6847 = vmatprep.subr.bf16.mxu0 0
      %6848 = vmatpush1.bf16.msra.mxu0 0
      %6849 = vmatprep.subr.bf16.mxu0 0
      %6850 = vmatpush1.bf16.msra.mxu0 0
      %6851 = vmatprep.subr.bf16.mxu0 0
      %6852 = vmatpush1.bf16.msra.mxu0 0
      %6853 = vmatprep.subr.bf16.mxu0 0
      %6854 = vmatpush1.bf16.msra.mxu0 0
      %6855 = vmatprep.subr.bf16.mxu0 0
      %6856 = vmatpush1.bf16.msra.mxu0 0
      %6857 = vmatprep.subr.bf16.mxu0 0
      %6858 = vmatpush1.bf16.msra.mxu0 0
      %6859 = vmatprep.subr.bf16.mxu0 0
      %6860 = vmatpush1.bf16.msra.mxu0 0
      %6861 = vmatprep.subr.bf16.mxu0 0
      %6862 = vmatpush1.bf16.msra.mxu0 0
      %6863 = vmatprep.mubr.bf16.mxu0 0
      %6864 = vmatmul.mubr.bf16.gmra.mrb[0].mxu0 %v6829
      %v6865 = vpop.f32.mrb[0].mxu0
      %v6866 = vadd.f32 0.0, %v6865
      %v6867 = vpop.f32.mrb[0].mxu0
      %v6868 = vpop.f32.mrb[0].mxu0
      %v6869 = vadd.f32 0.0, %v6868
      %v6870 = vpop.f32.mrb[0].mxu0
      %6871 = vdwg.mxu0
      %6872 = vrot.lane.b32.xlu0 %v938, 64
      %v6873 = vpop.permute.xlu0 %6872
      %v6876 = vsel %vm4177, %v5612, 0
      %6878 = vmatprep.subr.bf16.mxu0 0
      %6879 = vmatpush1.bf16.msra.mxu0 %v6873
      %6880 = vmatprep.subr.bf16.mxu0 0
      %6881 = vmatpush1.bf16.msra.mxu0 0
      %6882 = vmatprep.subr.bf16.mxu0 0
      %6883 = vmatpush1.bf16.msra.mxu0 0
      %6884 = vmatprep.subr.bf16.mxu0 0
      %6885 = vmatpush1.bf16.msra.mxu0 0
      %6886 = vmatprep.subr.bf16.mxu0 0
      %6887 = vmatpush1.bf16.msra.mxu0 0
      %6888 = vmatprep.subr.bf16.mxu0 0
      %6889 = vmatpush1.bf16.msra.mxu0 0
      %6890 = vmatprep.subr.bf16.mxu0 0
      %6891 = vmatpush1.bf16.msra.mxu0 0
      %6892 = vmatprep.subr.bf16.mxu0 0
      %6893 = vmatpush1.bf16.msra.mxu0 0
      %6894 = vmatprep.subr.bf16.mxu0 0
      %6895 = vmatpush1.bf16.msra.mxu0 0
      %6896 = vmatprep.subr.bf16.mxu0 0
      %6897 = vmatpush1.bf16.msra.mxu0 0
      %6898 = vmatprep.subr.bf16.mxu0 0
      %6899 = vmatpush1.bf16.msra.mxu0 0
      %6900 = vmatprep.subr.bf16.mxu0 0
      %6901 = vmatpush1.bf16.msra.mxu0 0
      %6902 = vmatprep.subr.bf16.mxu0 0
      %6903 = vmatpush1.bf16.msra.mxu0 0
      %6904 = vmatprep.subr.bf16.mxu0 0
      %6905 = vmatpush1.bf16.msra.mxu0 0
      %6906 = vmatprep.subr.bf16.mxu0 0
      %6907 = vmatpush1.bf16.msra.mxu0 0
      %6908 = vmatprep.subr.bf16.mxu0 0
      %6909 = vmatpush1.bf16.msra.mxu0 0
      %6910 = vmatprep.mubr.bf16.mxu0 0
      %6911 = vmatmul.mubr.bf16.gmra.mrb[0].mxu0 %v6876
      %v6912 = vpop.f32.mrb[0].mxu0
      %v6913 = vadd.f32 0.0, %v6912
      %v6914 = vpop.f32.mrb[0].mxu0
      %v6915 = vpop.f32.mrb[0].mxu0
      %v6916 = vadd.f32 0.0, %v6915
      %v6917 = vpop.f32.mrb[0].mxu0
      %6918 = vdwg.mxu0
      %6919 = vrot.lane.b32.xlu0 %v939, 64
      %v6920 = vpop.permute.xlu0 %6919
      %v6923 = vsel %vm4177, %v5613, 0
      %6925 = vmatprep.subr.bf16.mxu0 0
      %6926 = vmatpush1.bf16.msra.mxu0 %v6920
      %6927 = vmatprep.subr.bf16.mxu0 0
      %6928 = vmatpush1.bf16.msra.mxu0 0
      %6929 = vmatprep.subr.bf16.mxu0 0
      %6930 = vmatpush1.bf16.msra.mxu0 0
      %6931 = vmatprep.subr.bf16.mxu0 0
      %6932 = vmatpush1.bf16.msra.mxu0 0
      %6933 = vmatprep.subr.bf16.mxu0 0
      %6934 = vmatpush1.bf16.msra.mxu0 0
      %6935 = vmatprep.subr.bf16.mxu0 0
      %6936 = vmatpush1.bf16.msra.mxu0 0
      %6937 = vmatprep.subr.bf16.mxu0 0
      %6938 = vmatpush1.bf16.msra.mxu0 0
      %6939 = vmatprep.subr.bf16.mxu0 0
      %6940 = vmatpush1.bf16.msra.mxu0 0
      %6941 = vmatprep.subr.bf16.mxu0 0
      %6942 = vmatpush1.bf16.msra.mxu0 0
      %6943 = vmatprep.subr.bf16.mxu0 0
      %6944 = vmatpush1.bf16.msra.mxu0 0
      %6945 = vmatprep.subr.bf16.mxu0 0
      %6946 = vmatpush1.bf16.msra.mxu0 0
      %6947 = vmatprep.subr.bf16.mxu0 0
      %6948 = vmatpush1.bf16.msra.mxu0 0
      %6949 = vmatprep.subr.bf16.mxu0 0
      %6950 = vmatpush1.bf16.msra.mxu0 0
      %6951 = vmatprep.subr.bf16.mxu0 0
      %6952 = vmatpush1.bf16.msra.mxu0 0
      %6953 = vmatprep.subr.bf16.mxu0 0
      %6954 = vmatpush1.bf16.msra.mxu0 0
      %6955 = vmatprep.subr.bf16.mxu0 0
      %6956 = vmatpush1.bf16.msra.mxu0 0
      %6957 = vmatprep.mubr.bf16.mxu0 0
      %6958 = vmatmul.mubr.bf16.gmra.mrb[0].mxu0 %v6923
      %v6959 = vpop.f32.mrb[0].mxu0
      %v6960 = vadd.f32 0.0, %v6959
      %v6961 = vpop.f32.mrb[0].mxu0
      %v6962 = vpop.f32.mrb[0].mxu0
      %v6963 = vadd.f32 0.0, %v6962
      %v6964 = vpop.f32.mrb[0].mxu0
      %6965 = vdwg.mxu0
      %6966 = vrot.lane.b32.xlu0 %v940, 64
      %v6967 = vpop.permute.xlu0 %6966
      %v6970 = vsel %vm4177, %v5614, 0
      %6972 = vmatprep.subr.bf16.mxu0 0
      %6973 = vmatpush1.bf16.msra.mxu0 %v6967
      %6974 = vmatprep.subr.bf16.mxu0 0
      %6975 = vmatpush1.bf16.msra.mxu0 0
      %6976 = vmatprep.subr.bf16.mxu0 0
      %6977 = vmatpush1.bf16.msra.mxu0 0
      %6978 = vmatprep.subr.bf16.mxu0 0
      %6979 = vmatpush1.bf16.msra.mxu0 0
      %6980 = vmatprep.subr.bf16.mxu0 0
      %6981 = vmatpush1.bf16.msra.mxu0 0
      %6982 = vmatprep.subr.bf16.mxu0 0
      %6983 = vmatpush1.bf16.msra.mxu0 0
      %6984 = vmatprep.subr.bf16.mxu0 0
      %6985 = vmatpush1.bf16.msra.mxu0 0
      %6986 = vmatprep.subr.bf16.mxu0 0
      %6987 = vmatpush1.bf16.msra.mxu0 0
      %6988 = vmatprep.subr.bf16.mxu0 0
      %6989 = vmatpush1.bf16.msra.mxu0 0
      %6990 = vmatprep.subr.bf16.mxu0 0
      %6991 = vmatpush1.bf16.msra.mxu0 0
      %6992 = vmatprep.subr.bf16.mxu0 0
      %6993 = vmatpush1.bf16.msra.mxu0 0
      %6994 = vmatprep.subr.bf16.mxu0 0
      %6995 = vmatpush1.bf16.msra.mxu0 0
      %6996 = vmatprep.subr.bf16.mxu0 0
      %6997 = vmatpush1.bf16.msra.mxu0 0
      %6998 = vmatprep.subr.bf16.mxu0 0
      %6999 = vmatpush1.bf16.msra.mxu0 0
      %7000 = vmatprep.subr.bf16.mxu0 0
      %7001 = vmatpush1.bf16.msra.mxu0 0
      %7002 = vmatprep.subr.bf16.mxu0 0
      %7003 = vmatpush1.bf16.msra.mxu0 0
      %7004 = vmatprep.mubr.bf16.mxu0 0
      %7005 = vmatmul.mubr.bf16.gmra.mrb[0].mxu0 %v6970
      %v7006 = vpop.f32.mrb[0].mxu0
      %v7007 = vadd.f32 0.0, %v7006
      %v7008 = vpop.f32.mrb[0].mxu0
      %v7009 = vpop.f32.mrb[0].mxu0
      %v7010 = vadd.f32 0.0, %v7009
      %v7011 = vpop.f32.mrb[0].mxu0
      %7012 = vdwg.mxu0
      %7013 = vrot.lane.b32.xlu0 %v941, 64
      %v7014 = vpop.permute.xlu0 %7013
      %v7017 = vsel %vm4177, %v5615, 0
      %7019 = vmatprep.subr.bf16.mxu0 0
      %7020 = vmatpush1.bf16.msra.mxu0 %v7014
      %7021 = vmatprep.subr.bf16.mxu0 0
      %7022 = vmatpush1.bf16.msra.mxu0 0
      %7023 = vmatprep.subr.bf16.mxu0 0
      %7024 = vmatpush1.bf16.msra.mxu0 0
      %7025 = vmatprep.subr.bf16.mxu0 0
      %7026 = vmatpush1.bf16.msra.mxu0 0
      %7027 = vmatprep.subr.bf16.mxu0 0
      %7028 = vmatpush1.bf16.msra.mxu0 0
      %7029 = vmatprep.subr.bf16.mxu0 0
      %7030 = vmatpush1.bf16.msra.mxu0 0
      %7031 = vmatprep.subr.bf16.mxu0 0
      %7032 = vmatpush1.bf16.msra.mxu0 0
      %7033 = vmatprep.subr.bf16.mxu0 0
      %7034 = vmatpush1.bf16.msra.mxu0 0
      %7035 = vmatprep.subr.bf16.mxu0 0
      %7036 = vmatpush1.bf16.msra.mxu0 0
      %7037 = vmatprep.subr.bf16.mxu0 0
      %7038 = vmatpush1.bf16.msra.mxu0 0
      %7039 = vmatprep.subr.bf16.mxu0 0
      %7040 = vmatpush1.bf16.msra.mxu0 0
      %7041 = vmatprep.subr.bf16.mxu0 0
      %7042 = vmatpush1.bf16.msra.mxu0 0
      %7043 = vmatprep.subr.bf16.mxu0 0
      %7044 = vmatpush1.bf16.msra.mxu0 0
      %7045 = vmatprep.subr.bf16.mxu0 0
      %7046 = vmatpush1.bf16.msra.mxu0 0
      %7047 = vmatprep.subr.bf16.mxu0 0
      %7048 = vmatpush1.bf16.msra.mxu0 0
      %7049 = vmatprep.subr.bf16.mxu0 0
      %7050 = vmatpush1.bf16.msra.mxu0 0
      %7051 = vmatprep.mubr.bf16.mxu0 0
      %7052 = vmatmul.mubr.bf16.gmra.mrb[0].mxu0 %v7017
      %v7053 = vpop.f32.mrb[0].mxu0
      %v7054 = vadd.f32 0.0, %v7053
      %v7055 = vpop.f32.mrb[0].mxu0
      %v7056 = vpop.f32.mrb[0].mxu0
      %v7057 = vadd.f32 0.0, %v7056
      %v7058 = vpop.f32.mrb[0].mxu0
      %7059 = vdwg.mxu0
      %7060 = vrot.lane.b32.xlu0 %v942, 64
      %v7061 = vpop.permute.xlu0 %7060
      %v7064 = vsel %vm4177, %v5616, 0
      %7066 = vmatprep.subr.bf16.mxu0 0
      %7067 = vmatpush1.bf16.msra.mxu0 %v7061
      %7068 = vmatprep.subr.bf16.mxu0 0
      %7069 = vmatpush1.bf16.msra.mxu0 0
      %7070 = vmatprep.subr.bf16.mxu0 0
      %7071 = vmatpush1.bf16.msra.mxu0 0
      %7072 = vmatprep.subr.bf16.mxu0 0
      %7073 = vmatpush1.bf16.msra.mxu0 0
      %7074 = vmatprep.subr.bf16.mxu0 0
      %7075 = vmatpush1.bf16.msra.mxu0 0
      %7076 = vmatprep.subr.bf16.mxu0 0
      %7077 = vmatpush1.bf16.msra.mxu0 0
      %7078 = vmatprep.subr.bf16.mxu0 0
      %7079 = vmatpush1.bf16.msra.mxu0 0
      %7080 = vmatprep.subr.bf16.mxu0 0
      %7081 = vmatpush1.bf16.msra.mxu0 0
      %7082 = vmatprep.subr.bf16.mxu0 0
      %7083 = vmatpush1.bf16.msra.mxu0 0
      %7084 = vmatprep.subr.bf16.mxu0 0
      %7085 = vmatpush1.bf16.msra.mxu0 0
      %7086 = vmatprep.subr.bf16.mxu0 0
      %7087 = vmatpush1.bf16.msra.mxu0 0
      %7088 = vmatprep.subr.bf16.mxu0 0
      %7089 = vmatpush1.bf16.msra.mxu0 0
      %7090 = vmatprep.subr.bf16.mxu0 0
      %7091 = vmatpush1.bf16.msra.mxu0 0
      %7092 = vmatprep.subr.bf16.mxu0 0
      %7093 = vmatpush1.bf16.msra.mxu0 0
      %7094 = vmatprep.subr.bf16.mxu0 0
      %7095 = vmatpush1.bf16.msra.mxu0 0
      %7096 = vmatprep.subr.bf16.mxu0 0
      %7097 = vmatpush1.bf16.msra.mxu0 0
      %7098 = vmatprep.mubr.bf16.mxu0 0
      %7099 = vmatmul.mubr.bf16.gmra.mrb[0].mxu0 %v7064
      %v7100 = vpop.f32.mrb[0].mxu0
      %v7101 = vadd.f32 0.0, %v7100
      %v7102 = vpop.f32.mrb[0].mxu0
      %v7103 = vpop.f32.mrb[0].mxu0
      %v7104 = vadd.f32 0.0, %v7103
      %v7105 = vpop.f32.mrb[0].mxu0
      %7106 = vdwg.mxu0
      %7107 = vrot.lane.b32.xlu0 %v943, 64
      %v7108 = vpop.permute.xlu0 %7107
      %v7111 = vsel %vm4177, %v5617, 0
      %7113 = vmatprep.subr.bf16.mxu0 0
      %7114 = vmatpush1.bf16.msra.mxu0 %v7108
      %7115 = vmatprep.subr.bf16.mxu0 0
      %7116 = vmatpush1.bf16.msra.mxu0 0
      %7117 = vmatprep.subr.bf16.mxu0 0
      %7118 = vmatpush1.bf16.msra.mxu0 0
      %7119 = vmatprep.subr.bf16.mxu0 0
      %7120 = vmatpush1.bf16.msra.mxu0 0
      %7121 = vmatprep.subr.bf16.mxu0 0
      %7122 = vmatpush1.bf16.msra.mxu0 0
      %7123 = vmatprep.subr.bf16.mxu0 0
      %7124 = vmatpush1.bf16.msra.mxu0 0
      %7125 = vmatprep.subr.bf16.mxu0 0
      %7126 = vmatpush1.bf16.msra.mxu0 0
      %7127 = vmatprep.subr.bf16.mxu0 0
      %7128 = vmatpush1.bf16.msra.mxu0 0
      %7129 = vmatprep.subr.bf16.mxu0 0
      %7130 = vmatpush1.bf16.msra.mxu0 0
      %7131 = vmatprep.subr.bf16.mxu0 0
      %7132 = vmatpush1.bf16.msra.mxu0 0
      %7133 = vmatprep.subr.bf16.mxu0 0
      %7134 = vmatpush1.bf16.msra.mxu0 0
      %7135 = vmatprep.subr.bf16.mxu0 0
      %7136 = vmatpush1.bf16.msra.mxu0 0
      %7137 = vmatprep.subr.bf16.mxu0 0
      %7138 = vmatpush1.bf16.msra.mxu0 0
      %7139 = vmatprep.subr.bf16.mxu0 0
      %7140 = vmatpush1.bf16.msra.mxu0 0
      %7141 = vmatprep.subr.bf16.mxu0 0
      %7142 = vmatpush1.bf16.msra.mxu0 0
      %7143 = vmatprep.subr.bf16.mxu0 0
      %7144 = vmatpush1.bf16.msra.mxu0 0
      %7145 = vmatprep.mubr.bf16.mxu0 0
      %7146 = vmatmul.mubr.bf16.gmra.mrb[0].mxu0 %v7111
      %v7147 = vpop.f32.mrb[0].mxu0
      %v7148 = vadd.f32 0.0, %v7147
      %v7149 = vpop.f32.mrb[0].mxu0
      %v7150 = vpop.f32.mrb[0].mxu0
      %v7151 = vadd.f32 0.0, %v7150
      %v7152 = vpop.f32.mrb[0].mxu0
      %7153 = vdwg.mxu0
      %7154 = vrot.lane.b32.xlu0 %v944, 64
      %v7155 = vpop.permute.xlu0 %7154
      %v7158 = vsel %vm4177, %v5618, 0
      %7160 = vmatprep.subr.bf16.mxu0 0
      %7161 = vmatpush1.bf16.msra.mxu0 %v7155
      %7162 = vmatprep.subr.bf16.mxu0 0
      %7163 = vmatpush1.bf16.msra.mxu0 0
      %7164 = vmatprep.subr.bf16.mxu0 0
      %7165 = vmatpush1.bf16.msra.mxu0 0
      %7166 = vmatprep.subr.bf16.mxu0 0
      %7167 = vmatpush1.bf16.msra.mxu0 0
      %7168 = vmatprep.subr.bf16.mxu0 0
      %7169 = vmatpush1.bf16.msra.mxu0 0
      %7170 = vmatprep.subr.bf16.mxu0 0
      %7171 = vmatpush1.bf16.msra.mxu0 0
      %7172 = vmatprep.subr.bf16.mxu0 0
      %7173 = vmatpush1.bf16.msra.mxu0 0
      %7174 = vmatprep.subr.bf16.mxu0 0
      %7175 = vmatpush1.bf16.msra.mxu0 0
      %7176 = vmatprep.subr.bf16.mxu0 0
      %7177 = vmatpush1.bf16.msra.mxu0 0
      %7178 = vmatprep.subr.bf16.mxu0 0
      %7179 = vmatpush1.bf16.msra.mxu0 0
      %7180 = vmatprep.subr.bf16.mxu0 0
      %7181 = vmatpush1.bf16.msra.mxu0 0
      %7182 = vmatprep.subr.bf16.mxu0 0
      %7183 = vmatpush1.bf16.msra.mxu0 0
      %7184 = vmatprep.subr.bf16.mxu0 0
      %7185 = vmatpush1.bf16.msra.mxu0 0
      %7186 = vmatprep.subr.bf16.mxu0 0
      %7187 = vmatpush1.bf16.msra.mxu0 0
      %7188 = vmatprep.subr.bf16.mxu0 0
      %7189 = vmatpush1.bf16.msra.mxu0 0
      %7190 = vmatprep.subr.bf16.mxu0 0
      %7191 = vmatpush1.bf16.msra.mxu0 0
      %7192 = vmatprep.mubr.bf16.mxu0 0
      %7193 = vmatmul.mubr.bf16.gmra.mrb[0].mxu0 %v7158
      %v7194 = vpop.f32.mrb[0].mxu0
      %v7195 = vadd.f32 0.0, %v7194
      %v7196 = vpop.f32.mrb[0].mxu0
      %v7197 = vpop.f32.mrb[0].mxu0
      %v7198 = vadd.f32 0.0, %v7197
      %v7199 = vpop.f32.mrb[0].mxu0
      %7200 = vdwg.mxu0
      %7201 = vrot.lane.b32.xlu0 %v945, 64
      %v7202 = vpop.permute.xlu0 %7201
      %v7205 = vsel %vm4177, %v5619, 0
      %7207 = vmatprep.subr.bf16.mxu0 0
      %7208 = vmatpush1.bf16.msra.mxu0 %v7202
      %7209 = vmatprep.subr.bf16.mxu0 0
      %7210 = vmatpush1.bf16.msra.mxu0 0
      %7211 = vmatprep.subr.bf16.mxu0 0
      %7212 = vmatpush1.bf16.msra.mxu0 0
      %7213 = vmatprep.subr.bf16.mxu0 0
      %7214 = vmatpush1.bf16.msra.mxu0 0
      %7215 = vmatprep.subr.bf16.mxu0 0
      %7216 = vmatpush1.bf16.msra.mxu0 0
      %7217 = vmatprep.subr.bf16.mxu0 0
      %7218 = vmatpush1.bf16.msra.mxu0 0
      %7219 = vmatprep.subr.bf16.mxu0 0
      %7220 = vmatpush1.bf16.msra.mxu0 0
      %7221 = vmatprep.subr.bf16.mxu0 0
      %7222 = vmatpush1.bf16.msra.mxu0 0
      %7223 = vmatprep.subr.bf16.mxu0 0
      %7224 = vmatpush1.bf16.msra.mxu0 0
      %7225 = vmatprep.subr.bf16.mxu0 0
      %7226 = vmatpush1.bf16.msra.mxu0 0
      %7227 = vmatprep.subr.bf16.mxu0 0
      %7228 = vmatpush1.bf16.msra.mxu0 0
      %7229 = vmatprep.subr.bf16.mxu0 0
      %7230 = vmatpush1.bf16.msra.mxu0 0
      %7231 = vmatprep.subr.bf16.mxu0 0
      %7232 = vmatpush1.bf16.msra.mxu0 0
      %7233 = vmatprep.subr.bf16.mxu0 0
      %7234 = vmatpush1.bf16.msra.mxu0 0
      %7235 = vmatprep.subr.bf16.mxu0 0
      %7236 = vmatpush1.bf16.msra.mxu0 0
      %7237 = vmatprep.subr.bf16.mxu0 0
      %7238 = vmatpush1.bf16.msra.mxu0 0
      %7239 = vmatprep.mubr.bf16.mxu0 0
      %7240 = vmatmul.mubr.bf16.gmra.mrb[0].mxu0 %v7205
      %v7241 = vpop.f32.mrb[0].mxu0
      %v7242 = vadd.f32 0.0, %v7241
      %v7243 = vpop.f32.mrb[0].mxu0
      %v7244 = vpop.f32.mrb[0].mxu0
      %v7245 = vadd.f32 0.0, %v7244
      %v7246 = vpop.f32.mrb[0].mxu0
      %7247 = vdwg.mxu0
      %7248 = vrot.lane.b32.xlu0 %v946, 64
      %v7249 = vpop.permute.xlu0 %7248
      %v7252 = vsel %vm4177, %v5620, 0
      %7254 = vmatprep.subr.bf16.mxu0 0
      %7255 = vmatpush1.bf16.msra.mxu0 %v7249
      %7256 = vmatprep.subr.bf16.mxu0 0
      %7257 = vmatpush1.bf16.msra.mxu0 0
      %7258 = vmatprep.subr.bf16.mxu0 0
      %7259 = vmatpush1.bf16.msra.mxu0 0
      %7260 = vmatprep.subr.bf16.mxu0 0
      %7261 = vmatpush1.bf16.msra.mxu0 0
      %7262 = vmatprep.subr.bf16.mxu0 0
      %7263 = vmatpush1.bf16.msra.mxu0 0
      %7264 = vmatprep.subr.bf16.mxu0 0
      %7265 = vmatpush1.bf16.msra.mxu0 0
      %7266 = vmatprep.subr.bf16.mxu0 0
      %7267 = vmatpush1.bf16.msra.mxu0 0
      %7268 = vmatprep.subr.bf16.mxu0 0
      %7269 = vmatpush1.bf16.msra.mxu0 0
      %7270 = vmatprep.subr.bf16.mxu0 0
      %7271 = vmatpush1.bf16.msra.mxu0 0
      %7272 = vmatprep.subr.bf16.mxu0 0
      %7273 = vmatpush1.bf16.msra.mxu0 0
      %7274 = vmatprep.subr.bf16.mxu0 0
      %7275 = vmatpush1.bf16.msra.mxu0 0
      %7276 = vmatprep.subr.bf16.mxu0 0
      %7277 = vmatpush1.bf16.msra.mxu0 0
      %7278 = vmatprep.subr.bf16.mxu0 0
      %7279 = vmatpush1.bf16.msra.mxu0 0
      %7280 = vmatprep.subr.bf16.mxu0 0
      %7281 = vmatpush1.bf16.msra.mxu0 0
      %7282 = vmatprep.subr.bf16.mxu0 0
      %7283 = vmatpush1.bf16.msra.mxu0 0
      %7284 = vmatprep.subr.bf16.mxu0 0
      %7285 = vmatpush1.bf16.msra.mxu0 0
      %7286 = vmatprep.mubr.bf16.mxu0 0
      %7287 = vmatmul.mubr.bf16.gmra.mrb[0].mxu0 %v7252
      %v7288 = vpop.f32.mrb[0].mxu0
      %v7289 = vadd.f32 0.0, %v7288
      %v7290 = vpop.f32.mrb[0].mxu0
      %v7291 = vpop.f32.mrb[0].mxu0
      %v7292 = vadd.f32 0.0, %v7291
      %v7293 = vpop.f32.mrb[0].mxu0
      %7294 = vdwg.mxu0
      %7295 = vrot.lane.b32.xlu0 %v947, 64
      %v7296 = vpop.permute.xlu0 %7295
      %v7299 = vsel %vm4177, %v5621, 0
      %7301 = vmatprep.subr.bf16.mxu0 0
      %7302 = vmatpush1.bf16.msra.mxu0 %v7296
      %7303 = vmatprep.subr.bf16.mxu0 0
      %7304 = vmatpush1.bf16.msra.mxu0 0
      %7305 = vmatprep.subr.bf16.mxu0 0
      %7306 = vmatpush1.bf16.msra.mxu0 0
      %7307 = vmatprep.subr.bf16.mxu0 0
      %7308 = vmatpush1.bf16.msra.mxu0 0
      %7309 = vmatprep.subr.bf16.mxu0 0
      %7310 = vmatpush1.bf16.msra.mxu0 0
      %7311 = vmatprep.subr.bf16.mxu0 0
      %7312 = vmatpush1.bf16.msra.mxu0 0
      %7313 = vmatprep.subr.bf16.mxu0 0
      %7314 = vmatpush1.bf16.msra.mxu0 0
      %7315 = vmatprep.subr.bf16.mxu0 0
      %7316 = vmatpush1.bf16.msra.mxu0 0
      %7317 = vmatprep.subr.bf16.mxu0 0
      %7318 = vmatpush1.bf16.msra.mxu0 0
      %7319 = vmatprep.subr.bf16.mxu0 0
      %7320 = vmatpush1.bf16.msra.mxu0 0
      %7321 = vmatprep.subr.bf16.mxu0 0
      %7322 = vmatpush1.bf16.msra.mxu0 0
      %7323 = vmatprep.subr.bf16.mxu0 0
      %7324 = vmatpush1.bf16.msra.mxu0 0
      %7325 = vmatprep.subr.bf16.mxu0 0
      %7326 = vmatpush1.bf16.msra.mxu0 0
      %7327 = vmatprep.subr.bf16.mxu0 0
      %7328 = vmatpush1.bf16.msra.mxu0 0
      %7329 = vmatprep.subr.bf16.mxu0 0
      %7330 = vmatpush1.bf16.msra.mxu0 0
      %7331 = vmatprep.subr.bf16.mxu0 0
      %7332 = vmatpush1.bf16.msra.mxu0 0
      %7333 = vmatprep.mubr.bf16.mxu0 0
      %7334 = vmatmul.mubr.bf16.gmra.mrb[0].mxu0 %v7299
      %v7335 = vpop.f32.mrb[0].mxu0
      %v7336 = vadd.f32 0.0, %v7335
      %v7337 = vpop.f32.mrb[0].mxu0
      %v7338 = vpop.f32.mrb[0].mxu0
      %v7339 = vadd.f32 0.0, %v7338
      %v7340 = vpop.f32.mrb[0].mxu0
      %7341 = vdwg.mxu0
      %7342 = vrot.lane.b32.xlu0 %v948, 64
      %v7343 = vpop.permute.xlu0 %7342
      %v7346 = vsel %vm4177, %v5622, 0
      %7348 = vmatprep.subr.bf16.mxu0 0
      %7349 = vmatpush1.bf16.msra.mxu0 %v7343
      %7350 = vmatprep.subr.bf16.mxu0 0
      %7351 = vmatpush1.bf16.msra.mxu0 0
      %7352 = vmatprep.subr.bf16.mxu0 0
      %7353 = vmatpush1.bf16.msra.mxu0 0
      %7354 = vmatprep.subr.bf16.mxu0 0
      %7355 = vmatpush1.bf16.msra.mxu0 0
      %7356 = vmatprep.subr.bf16.mxu0 0
      %7357 = vmatpush1.bf16.msra.mxu0 0
      %7358 = vmatprep.subr.bf16.mxu0 0
      %7359 = vmatpush1.bf16.msra.mxu0 0
      %7360 = vmatprep.subr.bf16.mxu0 0
      %7361 = vmatpush1.bf16.msra.mxu0 0
      %7362 = vmatprep.subr.bf16.mxu0 0
      %7363 = vmatpush1.bf16.msra.mxu0 0
      %7364 = vmatprep.subr.bf16.mxu0 0
      %7365 = vmatpush1.bf16.msra.mxu0 0
      %7366 = vmatprep.subr.bf16.mxu0 0
      %7367 = vmatpush1.bf16.msra.mxu0 0
      %7368 = vmatprep.subr.bf16.mxu0 0
      %7369 = vmatpush1.bf16.msra.mxu0 0
      %7370 = vmatprep.subr.bf16.mxu0 0
      %7371 = vmatpush1.bf16.msra.mxu0 0
      %7372 = vmatprep.subr.bf16.mxu0 0
      %7373 = vmatpush1.bf16.msra.mxu0 0
      %7374 = vmatprep.subr.bf16.mxu0 0
      %7375 = vmatpush1.bf16.msra.mxu0 0
      %7376 = vmatprep.subr.bf16.mxu0 0
      %7377 = vmatpush1.bf16.msra.mxu0 0
      %7378 = vmatprep.subr.bf16.mxu0 0
      %7379 = vmatpush1.bf16.msra.mxu0 0
      %7380 = vmatprep.mubr.bf16.mxu0 0
      %7381 = vmatmul.mubr.bf16.gmra.mrb[0].mxu0 %v7346
      %v7382 = vpop.f32.mrb[0].mxu0
      %v7383 = vadd.f32 0.0, %v7382
      %v7384 = vpop.f32.mrb[0].mxu0
      %v7385 = vpop.f32.mrb[0].mxu0
      %v7386 = vadd.f32 0.0, %v7385
      %v7387 = vpop.f32.mrb[0].mxu0
      %7388 = vdwg.mxu0
      %7389 = vrot.lane.b32.xlu0 %v949, 64
      %v7390 = vpop.permute.xlu0 %7389
      %v7393 = vsel %vm4177, %v5623, 0
      %7395 = vmatprep.subr.bf16.mxu0 0
      %7396 = vmatpush1.bf16.msra.mxu0 %v7390
      %7397 = vmatprep.subr.bf16.mxu0 0
      %7398 = vmatpush1.bf16.msra.mxu0 0
      %7399 = vmatprep.subr.bf16.mxu0 0
      %7400 = vmatpush1.bf16.msra.mxu0 0
      %7401 = vmatprep.subr.bf16.mxu0 0
      %7402 = vmatpush1.bf16.msra.mxu0 0
      %7403 = vmatprep.subr.bf16.mxu0 0
      %7404 = vmatpush1.bf16.msra.mxu0 0
      %7405 = vmatprep.subr.bf16.mxu0 0
      %7406 = vmatpush1.bf16.msra.mxu0 0
      %7407 = vmatprep.subr.bf16.mxu0 0
      %7408 = vmatpush1.bf16.msra.mxu0 0
      %7409 = vmatprep.subr.bf16.mxu0 0
      %7410 = vmatpush1.bf16.msra.mxu0 0
      %7411 = vmatprep.subr.bf16.mxu0 0
      %7412 = vmatpush1.bf16.msra.mxu0 0
      %7413 = vmatprep.subr.bf16.mxu0 0
      %7414 = vmatpush1.bf16.msra.mxu0 0
      %7415 = vmatprep.subr.bf16.mxu0 0
      %7416 = vmatpush1.bf16.msra.mxu0 0
      %7417 = vmatprep.subr.bf16.mxu0 0
      %7418 = vmatpush1.bf16.msra.mxu0 0
      %7419 = vmatprep.subr.bf16.mxu0 0
      %7420 = vmatpush1.bf16.msra.mxu0 0
      %7421 = vmatprep.subr.bf16.mxu0 0
      %7422 = vmatpush1.bf16.msra.mxu0 0
      %7423 = vmatprep.subr.bf16.mxu0 0
      %7424 = vmatpush1.bf16.msra.mxu0 0
      %7425 = vmatprep.subr.bf16.mxu0 0
      %7426 = vmatpush1.bf16.msra.mxu0 0
      %7427 = vmatprep.mubr.bf16.mxu0 0
      %7428 = vmatmul.mubr.bf16.gmra.mrb[0].mxu0 %v7393
      %v7429 = vpop.f32.mrb[0].mxu0
      %v7430 = vadd.f32 0.0, %v7429
      %v7431 = vpop.f32.mrb[0].mxu0
      %v7432 = vpop.f32.mrb[0].mxu0
      %v7433 = vadd.f32 0.0, %v7432
      %v7434 = vpop.f32.mrb[0].mxu0
      %7435 = vdwg.mxu0
      %7436 = vrot.lane.b32.xlu0 %v950, 64
      %v7437 = vpop.permute.xlu0 %7436
      %v7440 = vsel %vm4177, %v5624, 0
      %7442 = vmatprep.subr.bf16.mxu0 0
      %7443 = vmatpush1.bf16.msra.mxu0 %v7437
      %7444 = vmatprep.subr.bf16.mxu0 0
      %7445 = vmatpush1.bf16.msra.mxu0 0
      %7446 = vmatprep.subr.bf16.mxu0 0
      %7447 = vmatpush1.bf16.msra.mxu0 0
      %7448 = vmatprep.subr.bf16.mxu0 0
      %7449 = vmatpush1.bf16.msra.mxu0 0
      %7450 = vmatprep.subr.bf16.mxu0 0
      %7451 = vmatpush1.bf16.msra.mxu0 0
      %7452 = vmatprep.subr.bf16.mxu0 0
      %7453 = vmatpush1.bf16.msra.mxu0 0
      %7454 = vmatprep.subr.bf16.mxu0 0
      %7455 = vmatpush1.bf16.msra.mxu0 0
      %7456 = vmatprep.subr.bf16.mxu0 0
      %7457 = vmatpush1.bf16.msra.mxu0 0
      %7458 = vmatprep.subr.bf16.mxu0 0
      %7459 = vmatpush1.bf16.msra.mxu0 0
      %7460 = vmatprep.subr.bf16.mxu0 0
      %7461 = vmatpush1.bf16.msra.mxu0 0
      %7462 = vmatprep.subr.bf16.mxu0 0
      %7463 = vmatpush1.bf16.msra.mxu0 0
      %7464 = vmatprep.subr.bf16.mxu0 0
      %7465 = vmatpush1.bf16.msra.mxu0 0
      %7466 = vmatprep.subr.bf16.mxu0 0
      %7467 = vmatpush1.bf16.msra.mxu0 0
      %7468 = vmatprep.subr.bf16.mxu0 0
      %7469 = vmatpush1.bf16.msra.mxu0 0
      %7470 = vmatprep.subr.bf16.mxu0 0
      %7471 = vmatpush1.bf16.msra.mxu0 0
      %7472 = vmatprep.subr.bf16.mxu0 0
      %7473 = vmatpush1.bf16.msra.mxu0 0
      %7474 = vmatprep.mubr.bf16.mxu0 0
      %7475 = vmatmul.mubr.bf16.gmra.mrb[0].mxu0 %v7440
      %v7476 = vpop.f32.mrb[0].mxu0
      %v7477 = vadd.f32 0.0, %v7476
      %v7478 = vpop.f32.mrb[0].mxu0
      %v7479 = vpop.f32.mrb[0].mxu0
      %v7480 = vadd.f32 0.0, %v7479
      %v7481 = vpop.f32.mrb[0].mxu0
      %7482 = vdwg.mxu0
      %7483 = vrot.lane.b32.xlu0 %v951, 64
      %v7484 = vpop.permute.xlu0 %7483
      %v7487 = vsel %vm4177, %v5625, 0
      %7489 = vmatprep.subr.bf16.mxu0 0
      %7490 = vmatpush1.bf16.msra.mxu0 %v7484
      %7491 = vmatprep.subr.bf16.mxu0 0
      %7492 = vmatpush1.bf16.msra.mxu0 0
      %7493 = vmatprep.subr.bf16.mxu0 0
      %7494 = vmatpush1.bf16.msra.mxu0 0
      %7495 = vmatprep.subr.bf16.mxu0 0
      %7496 = vmatpush1.bf16.msra.mxu0 0
      %7497 = vmatprep.subr.bf16.mxu0 0
      %7498 = vmatpush1.bf16.msra.mxu0 0
      %7499 = vmatprep.subr.bf16.mxu0 0
      %7500 = vmatpush1.bf16.msra.mxu0 0
      %7501 = vmatprep.subr.bf16.mxu0 0
      %7502 = vmatpush1.bf16.msra.mxu0 0
      %7503 = vmatprep.subr.bf16.mxu0 0
      %7504 = vmatpush1.bf16.msra.mxu0 0
      %7505 = vmatprep.subr.bf16.mxu0 0
      %7506 = vmatpush1.bf16.msra.mxu0 0
      %7507 = vmatprep.subr.bf16.mxu0 0
      %7508 = vmatpush1.bf16.msra.mxu0 0
      %7509 = vmatprep.subr.bf16.mxu0 0
      %7510 = vmatpush1.bf16.msra.mxu0 0
      %7511 = vmatprep.subr.bf16.mxu0 0
      %7512 = vmatpush1.bf16.msra.mxu0 0
      %7513 = vmatprep.subr.bf16.mxu0 0
      %7514 = vmatpush1.bf16.msra.mxu0 0
      %7515 = vmatprep.subr.bf16.mxu0 0
      %7516 = vmatpush1.bf16.msra.mxu0 0
      %7517 = vmatprep.subr.bf16.mxu0 0
      %7518 = vmatpush1.bf16.msra.mxu0 0
      %7519 = vmatprep.subr.bf16.mxu0 0
      %7520 = vmatpush1.bf16.msra.mxu0 0
      %7521 = vmatprep.mubr.bf16.mxu0 0
      %7522 = vmatmul.mubr.bf16.gmra.mrb[0].mxu0 %v7487
      %v7523 = vpop.f32.mrb[0].mxu0
      %v7524 = vadd.f32 0.0, %v7523
      %v7525 = vpop.f32.mrb[0].mxu0
      %v7526 = vpop.f32.mrb[0].mxu0
      %v7527 = vadd.f32 0.0, %v7526
      %v7528 = vpop.f32.mrb[0].mxu0
      %7529 = vdwg.mxu0
      %7530 = vrot.lane.b32.xlu0 %v952, 64
      %v7531 = vpop.permute.xlu0 %7530
      %v7534 = vsel %vm4177, %v5626, 0
      %7536 = vmatprep.subr.bf16.mxu0 0
      %7537 = vmatpush1.bf16.msra.mxu0 %v7531
      %7538 = vmatprep.subr.bf16.mxu0 0
      %7539 = vmatpush1.bf16.msra.mxu0 0
      %7540 = vmatprep.subr.bf16.mxu0 0
      %7541 = vmatpush1.bf16.msra.mxu0 0
      %7542 = vmatprep.subr.bf16.mxu0 0
      %7543 = vmatpush1.bf16.msra.mxu0 0
      %7544 = vmatprep.subr.bf16.mxu0 0
      %7545 = vmatpush1.bf16.msra.mxu0 0
      %7546 = vmatprep.subr.bf16.mxu0 0
      %7547 = vmatpush1.bf16.msra.mxu0 0
      %7548 = vmatprep.subr.bf16.mxu0 0
      %7549 = vmatpush1.bf16.msra.mxu0 0
      %7550 = vmatprep.subr.bf16.mxu0 0
      %7551 = vmatpush1.bf16.msra.mxu0 0
      %7552 = vmatprep.subr.bf16.mxu0 0
      %7553 = vmatpush1.bf16.msra.mxu0 0
      %7554 = vmatprep.subr.bf16.mxu0 0
      %7555 = vmatpush1.bf16.msra.mxu0 0
      %7556 = vmatprep.subr.bf16.mxu0 0
      %7557 = vmatpush1.bf16.msra.mxu0 0
      %7558 = vmatprep.subr.bf16.mxu0 0
      %7559 = vmatpush1.bf16.msra.mxu0 0
      %7560 = vmatprep.subr.bf16.mxu0 0
      %7561 = vmatpush1.bf16.msra.mxu0 0
      %7562 = vmatprep.subr.bf16.mxu0 0
      %7563 = vmatpush1.bf16.msra.mxu0 0
      %7564 = vmatprep.subr.bf16.mxu0 0
      %7565 = vmatpush1.bf16.msra.mxu0 0
      %7566 = vmatprep.subr.bf16.mxu0 0
      %7567 = vmatpush1.bf16.msra.mxu0 0
      %7568 = vmatprep.mubr.bf16.mxu0 0
      %7569 = vmatmul.mubr.bf16.gmra.mrb[0].mxu0 %v7534
      %v7570 = vpop.f32.mrb[0].mxu0
      %v7571 = vadd.f32 0.0, %v7570
      %v7572 = vpop.f32.mrb[0].mxu0
      %v7573 = vpop.f32.mrb[0].mxu0
      %v7574 = vadd.f32 0.0, %v7573
      %v7575 = vpop.f32.mrb[0].mxu0
      %7576 = vdwg.mxu0
      %7577 = vrot.lane.b32.xlu0 %v953, 64
      %v7578 = vpop.permute.xlu0 %7577
      %v7581 = vsel %vm4177, %v5627, 0
      %7583 = vmatprep.subr.bf16.mxu0 0
      %7584 = vmatpush1.bf16.msra.mxu0 %v7578
      %7585 = vmatprep.subr.bf16.mxu0 0
      %7586 = vmatpush1.bf16.msra.mxu0 0
      %7587 = vmatprep.subr.bf16.mxu0 0
      %7588 = vmatpush1.bf16.msra.mxu0 0
      %7589 = vmatprep.subr.bf16.mxu0 0
      %7590 = vmatpush1.bf16.msra.mxu0 0
      %7591 = vmatprep.subr.bf16.mxu0 0
      %7592 = vmatpush1.bf16.msra.mxu0 0
      %7593 = vmatprep.subr.bf16.mxu0 0
      %7594 = vmatpush1.bf16.msra.mxu0 0
      %7595 = vmatprep.subr.bf16.mxu0 0
      %7596 = vmatpush1.bf16.msra.mxu0 0
      %7597 = vmatprep.subr.bf16.mxu0 0
      %7598 = vmatpush1.bf16.msra.mxu0 0
      %7599 = vmatprep.subr.bf16.mxu0 0
      %7600 = vmatpush1.bf16.msra.mxu0 0
      %7601 = vmatprep.subr.bf16.mxu0 0
      %7602 = vmatpush1.bf16.msra.mxu0 0
      %7603 = vmatprep.subr.bf16.mxu0 0
      %7604 = vmatpush1.bf16.msra.mxu0 0
      %7605 = vmatprep.subr.bf16.mxu0 0
      %7606 = vmatpush1.bf16.msra.mxu0 0
      %7607 = vmatprep.subr.bf16.mxu0 0
      %7608 = vmatpush1.bf16.msra.mxu0 0
      %7609 = vmatprep.subr.bf16.mxu0 0
      %7610 = vmatpush1.bf16.msra.mxu0 0
      %7611 = vmatprep.subr.bf16.mxu0 0
      %7612 = vmatpush1.bf16.msra.mxu0 0
      %7613 = vmatprep.subr.bf16.mxu0 0
      %7614 = vmatpush1.bf16.msra.mxu0 0
      %7615 = vmatprep.mubr.bf16.mxu0 0
      %7616 = vmatmul.mubr.bf16.gmra.mrb[0].mxu0 %v7581
      %v7617 = vpop.f32.mrb[0].mxu0
      %v7618 = vadd.f32 0.0, %v7617
      %v7619 = vpop.f32.mrb[0].mxu0
      %v7620 = vpop.f32.mrb[0].mxu0
      %v7621 = vadd.f32 0.0, %v7620
      %v7622 = vpop.f32.mrb[0].mxu0
      %7623 = vdwg.mxu0
      %7624 = vrot.lane.b32.xlu0 %v954, 64
      %v7625 = vpop.permute.xlu0 %7624
      %v7628 = vsel %vm4177, %v5628, 0
      %7630 = vmatprep.subr.bf16.mxu0 0
      %7631 = vmatpush1.bf16.msra.mxu0 %v7625
      %7632 = vmatprep.subr.bf16.mxu0 0
      %7633 = vmatpush1.bf16.msra.mxu0 0
      %7634 = vmatprep.subr.bf16.mxu0 0
      %7635 = vmatpush1.bf16.msra.mxu0 0
      %7636 = vmatprep.subr.bf16.mxu0 0
      %7637 = vmatpush1.bf16.msra.mxu0 0
      %7638 = vmatprep.subr.bf16.mxu0 0
      %7639 = vmatpush1.bf16.msra.mxu0 0
      %7640 = vmatprep.subr.bf16.mxu0 0
      %7641 = vmatpush1.bf16.msra.mxu0 0
      %7642 = vmatprep.subr.bf16.mxu0 0
      %7643 = vmatpush1.bf16.msra.mxu0 0
      %7644 = vmatprep.subr.bf16.mxu0 0
      %7645 = vmatpush1.bf16.msra.mxu0 0
      %7646 = vmatprep.subr.bf16.mxu0 0
      %7647 = vmatpush1.bf16.msra.mxu0 0
      %7648 = vmatprep.subr.bf16.mxu0 0
      %7649 = vmatpush1.bf16.msra.mxu0 0
      %7650 = vmatprep.subr.bf16.mxu0 0
      %7651 = vmatpush1.bf16.msra.mxu0 0
      %7652 = vmatprep.subr.bf16.mxu0 0
      %7653 = vmatpush1.bf16.msra.mxu0 0
      %7654 = vmatprep.subr.bf16.mxu0 0
      %7655 = vmatpush1.bf16.msra.mxu0 0
      %7656 = vmatprep.subr.bf16.mxu0 0
      %7657 = vmatpush1.bf16.msra.mxu0 0
      %7658 = vmatprep.subr.bf16.mxu0 0
      %7659 = vmatpush1.bf16.msra.mxu0 0
      %7660 = vmatprep.subr.bf16.mxu0 0
      %7661 = vmatpush1.bf16.msra.mxu0 0
      %7662 = vmatprep.mubr.bf16.mxu0 0
      %7663 = vmatmul.mubr.bf16.gmra.mrb[0].mxu0 %v7628
      %v7664 = vpop.f32.mrb[0].mxu0
      %v7665 = vadd.f32 0.0, %v7664
      %v7666 = vpop.f32.mrb[0].mxu0
      %v7667 = vpop.f32.mrb[0].mxu0
      %v7668 = vadd.f32 0.0, %v7667
      %v7669 = vpop.f32.mrb[0].mxu0
      %7670 = vdwg.mxu0
      %7671 = vrot.lane.b32.xlu0 %v955, 64
      %v7672 = vpop.permute.xlu0 %7671
      %v7675 = vsel %vm4177, %v5629, 0
      %7677 = vmatprep.subr.bf16.mxu0 0
      %7678 = vmatpush1.bf16.msra.mxu0 %v7672
      %7679 = vmatprep.subr.bf16.mxu0 0
      %7680 = vmatpush1.bf16.msra.mxu0 0
      %7681 = vmatprep.subr.bf16.mxu0 0
      %7682 = vmatpush1.bf16.msra.mxu0 0
      %7683 = vmatprep.subr.bf16.mxu0 0
      %7684 = vmatpush1.bf16.msra.mxu0 0
      %7685 = vmatprep.subr.bf16.mxu0 0
      %7686 = vmatpush1.bf16.msra.mxu0 0
      %7687 = vmatprep.subr.bf16.mxu0 0
      %7688 = vmatpush1.bf16.msra.mxu0 0
      %7689 = vmatprep.subr.bf16.mxu0 0
      %7690 = vmatpush1.bf16.msra.mxu0 0
      %7691 = vmatprep.subr.bf16.mxu0 0
      %7692 = vmatpush1.bf16.msra.mxu0 0
      %7693 = vmatprep.subr.bf16.mxu0 0
      %7694 = vmatpush1.bf16.msra.mxu0 0
      %7695 = vmatprep.subr.bf16.mxu0 0
      %7696 = vmatpush1.bf16.msra.mxu0 0
      %7697 = vmatprep.subr.bf16.mxu0 0
      %7698 = vmatpush1.bf16.msra.mxu0 0
      %7699 = vmatprep.subr.bf16.mxu0 0
      %7700 = vmatpush1.bf16.msra.mxu0 0
      %7701 = vmatprep.subr.bf16.mxu0 0
      %7702 = vmatpush1.bf16.msra.mxu0 0
      %7703 = vmatprep.subr.bf16.mxu0 0
      %7704 = vmatpush1.bf16.msra.mxu0 0
      %7705 = vmatprep.subr.bf16.mxu0 0
      %7706 = vmatpush1.bf16.msra.mxu0 0
      %7707 = vmatprep.subr.bf16.mxu0 0
      %7708 = vmatpush1.bf16.msra.mxu0 0
      %7709 = vmatprep.mubr.bf16.mxu0 0
      %7710 = vmatmul.mubr.bf16.gmra.mrb[0].mxu0 %v7675
      %v7711 = vpop.f32.mrb[0].mxu0
      %v7712 = vadd.f32 0.0, %v7711
      %v7713 = vpop.f32.mrb[0].mxu0
      %v7714 = vpop.f32.mrb[0].mxu0
      %v7715 = vadd.f32 0.0, %v7714
      %v7716 = vpop.f32.mrb[0].mxu0
      %7717 = vdwg.mxu0
      %7718 = vrot.lane.b32.xlu0 %v956, 64
      %v7719 = vpop.permute.xlu0 %7718
      %v7722 = vsel %vm4177, %v5630, 0
      %7724 = vmatprep.subr.bf16.mxu0 0
      %7725 = vmatpush1.bf16.msra.mxu0 %v7719
      %7726 = vmatprep.subr.bf16.mxu0 0
      %7727 = vmatpush1.bf16.msra.mxu0 0
      %7728 = vmatprep.subr.bf16.mxu0 0
      %7729 = vmatpush1.bf16.msra.mxu0 0
      %7730 = vmatprep.subr.bf16.mxu0 0
      %7731 = vmatpush1.bf16.msra.mxu0 0
      %7732 = vmatprep.subr.bf16.mxu0 0
      %7733 = vmatpush1.bf16.msra.mxu0 0
      %7734 = vmatprep.subr.bf16.mxu0 0
      %7735 = vmatpush1.bf16.msra.mxu0 0
      %7736 = vmatprep.subr.bf16.mxu0 0
      %7737 = vmatpush1.bf16.msra.mxu0 0
      %7738 = vmatprep.subr.bf16.mxu0 0
      %7739 = vmatpush1.bf16.msra.mxu0 0
      %7740 = vmatprep.subr.bf16.mxu0 0
      %7741 = vmatpush1.bf16.msra.mxu0 0
      %7742 = vmatprep.subr.bf16.mxu0 0
      %7743 = vmatpush1.bf16.msra.mxu0 0
      %7744 = vmatprep.subr.bf16.mxu0 0
      %7745 = vmatpush1.bf16.msra.mxu0 0
      %7746 = vmatprep.subr.bf16.mxu0 0
      %7747 = vmatpush1.bf16.msra.mxu0 0
      %7748 = vmatprep.subr.bf16.mxu0 0
      %7749 = vmatpush1.bf16.msra.mxu0 0
      %7750 = vmatprep.subr.bf16.mxu0 0
      %7751 = vmatpush1.bf16.msra.mxu0 0
      %7752 = vmatprep.subr.bf16.mxu0 0
      %7753 = vmatpush1.bf16.msra.mxu0 0
      %7754 = vmatprep.subr.bf16.mxu0 0
      %7755 = vmatpush1.bf16.msra.mxu0 0
      %7756 = vmatprep.mubr.bf16.mxu0 0
      %7757 = vmatmul.mubr.bf16.gmra.mrb[0].mxu0 %v7722
      %v7758 = vpop.f32.mrb[0].mxu0
      %v7759 = vadd.f32 0.0, %v7758
      %v7760 = vpop.f32.mrb[0].mxu0
      %v7761 = vpop.f32.mrb[0].mxu0
      %v7762 = vadd.f32 0.0, %v7761
      %v7763 = vpop.f32.mrb[0].mxu0
      %7764 = vdwg.mxu0
      %7765 = vrot.lane.b32.xlu0 %v957, 64
      %v7766 = vpop.permute.xlu0 %7765
      %v7769 = vsel %vm4177, %v5631, 0
      %7771 = vmatprep.subr.bf16.mxu0 0
      %7772 = vmatpush1.bf16.msra.mxu0 %v7766
      %7773 = vmatprep.subr.bf16.mxu0 0
      %7774 = vmatpush1.bf16.msra.mxu0 0
      %7775 = vmatprep.subr.bf16.mxu0 0
      %7776 = vmatpush1.bf16.msra.mxu0 0
      %7777 = vmatprep.subr.bf16.mxu0 0
      %7778 = vmatpush1.bf16.msra.mxu0 0
      %7779 = vmatprep.subr.bf16.mxu0 0
      %7780 = vmatpush1.bf16.msra.mxu0 0
      %7781 = vmatprep.subr.bf16.mxu0 0
      %7782 = vmatpush1.bf16.msra.mxu0 0
      %7783 = vmatprep.subr.bf16.mxu0 0
      %7784 = vmatpush1.bf16.msra.mxu0 0
      %7785 = vmatprep.subr.bf16.mxu0 0
      %7786 = vmatpush1.bf16.msra.mxu0 0
      %7787 = vmatprep.subr.bf16.mxu0 0
      %7788 = vmatpush1.bf16.msra.mxu0 0
      %7789 = vmatprep.subr.bf16.mxu0 0
      %7790 = vmatpush1.bf16.msra.mxu0 0
      %7791 = vmatprep.subr.bf16.mxu0 0
      %7792 = vmatpush1.bf16.msra.mxu0 0
      %7793 = vmatprep.subr.bf16.mxu0 0
      %7794 = vmatpush1.bf16.msra.mxu0 0
      %7795 = vmatprep.subr.bf16.mxu0 0
      %7796 = vmatpush1.bf16.msra.mxu0 0
      %7797 = vmatprep.subr.bf16.mxu0 0
      %7798 = vmatpush1.bf16.msra.mxu0 0
      %7799 = vmatprep.subr.bf16.mxu0 0
      %7800 = vmatpush1.bf16.msra.mxu0 0
      %7801 = vmatprep.subr.bf16.mxu0 0
      %7802 = vmatpush1.bf16.msra.mxu0 0
      %7803 = vmatprep.mubr.bf16.mxu0 0
      %7804 = vmatmul.mubr.bf16.gmra.mrb[0].mxu0 %v7769
      %v7805 = vpop.f32.mrb[0].mxu0
      %v7806 = vadd.f32 0.0, %v7805
      %v7807 = vpop.f32.mrb[0].mxu0
      %v7808 = vpop.f32.mrb[0].mxu0
      %v7809 = vadd.f32 0.0, %v7808
      %v7810 = vpop.f32.mrb[0].mxu0
      %7811 = vdwg.mxu0
      %7812 = vrot.lane.b32.xlu0 %v958, 64
      %v7813 = vpop.permute.xlu0 %7812
      %v7816 = vsel %vm4177, %v5632, 0
      %7818 = vmatprep.subr.bf16.mxu0 0
      %7819 = vmatpush1.bf16.msra.mxu0 %v7813
      %7820 = vmatprep.subr.bf16.mxu0 0
      %7821 = vmatpush1.bf16.msra.mxu0 0
      %7822 = vmatprep.subr.bf16.mxu0 0
      %7823 = vmatpush1.bf16.msra.mxu0 0
      %7824 = vmatprep.subr.bf16.mxu0 0
      %7825 = vmatpush1.bf16.msra.mxu0 0
      %7826 = vmatprep.subr.bf16.mxu0 0
      %7827 = vmatpush1.bf16.msra.mxu0 0
      %7828 = vmatprep.subr.bf16.mxu0 0
      %7829 = vmatpush1.bf16.msra.mxu0 0
      %7830 = vmatprep.subr.bf16.mxu0 0
      %7831 = vmatpush1.bf16.msra.mxu0 0
      %7832 = vmatprep.subr.bf16.mxu0 0
      %7833 = vmatpush1.bf16.msra.mxu0 0
      %7834 = vmatprep.subr.bf16.mxu0 0
      %7835 = vmatpush1.bf16.msra.mxu0 0
      %7836 = vmatprep.subr.bf16.mxu0 0
      %7837 = vmatpush1.bf16.msra.mxu0 0
      %7838 = vmatprep.subr.bf16.mxu0 0
      %7839 = vmatpush1.bf16.msra.mxu0 0
      %7840 = vmatprep.subr.bf16.mxu0 0
      %7841 = vmatpush1.bf16.msra.mxu0 0
      %7842 = vmatprep.subr.bf16.mxu0 0
      %7843 = vmatpush1.bf16.msra.mxu0 0
      %7844 = vmatprep.subr.bf16.mxu0 0
      %7845 = vmatpush1.bf16.msra.mxu0 0
      %7846 = vmatprep.subr.bf16.mxu0 0
      %7847 = vmatpush1.bf16.msra.mxu0 0
      %7848 = vmatprep.subr.bf16.mxu0 0
      %7849 = vmatpush1.bf16.msra.mxu0 0
      %7850 = vmatprep.mubr.bf16.mxu0 0
      %7851 = vmatmul.mubr.bf16.gmra.mrb[0].mxu0 %v7816
      %v7852 = vpop.f32.mrb[0].mxu0
      %v7853 = vadd.f32 0.0, %v7852
      %v7854 = vpop.f32.mrb[0].mxu0
      %v7855 = vpop.f32.mrb[0].mxu0
      %v7856 = vadd.f32 0.0, %v7855
      %v7857 = vpop.f32.mrb[0].mxu0
      %7858 = vdwg.mxu0
      %7859 = vrot.lane.b32.xlu0 %v959, 64
      %v7860 = vpop.permute.xlu0 %7859
      %v7863 = vsel %vm4177, %v5633, 0
      %7865 = vmatprep.subr.bf16.mxu0 0
      %7866 = vmatpush1.bf16.msra.mxu0 %v7860
      %7867 = vmatprep.subr.bf16.mxu0 0
      %7868 = vmatpush1.bf16.msra.mxu0 0
      %7869 = vmatprep.subr.bf16.mxu0 0
      %7870 = vmatpush1.bf16.msra.mxu0 0
      %7871 = vmatprep.subr.bf16.mxu0 0
      %7872 = vmatpush1.bf16.msra.mxu0 0
      %7873 = vmatprep.subr.bf16.mxu0 0
      %7874 = vmatpush1.bf16.msra.mxu0 0
      %7875 = vmatprep.subr.bf16.mxu0 0
      %7876 = vmatpush1.bf16.msra.mxu0 0
      %7877 = vmatprep.subr.bf16.mxu0 0
      %7878 = vmatpush1.bf16.msra.mxu0 0
      %7879 = vmatprep.subr.bf16.mxu0 0
      %7880 = vmatpush1.bf16.msra.mxu0 0
      %7881 = vmatprep.subr.bf16.mxu0 0
      %7882 = vmatpush1.bf16.msra.mxu0 0
      %7883 = vmatprep.subr.bf16.mxu0 0
      %7884 = vmatpush1.bf16.msra.mxu0 0
      %7885 = vmatprep.subr.bf16.mxu0 0
      %7886 = vmatpush1.bf16.msra.mxu0 0
      %7887 = vmatprep.subr.bf16.mxu0 0
      %7888 = vmatpush1.bf16.msra.mxu0 0
      %7889 = vmatprep.subr.bf16.mxu0 0
      %7890 = vmatpush1.bf16.msra.mxu0 0
      %7891 = vmatprep.subr.bf16.mxu0 0
      %7892 = vmatpush1.bf16.msra.mxu0 0
      %7893 = vmatprep.subr.bf16.mxu0 0
      %7894 = vmatpush1.bf16.msra.mxu0 0
      %7895 = vmatprep.subr.bf16.mxu0 0
      %7896 = vmatpush1.bf16.msra.mxu0 0
      %7897 = vmatprep.mubr.bf16.mxu0 0
      %7898 = vmatmul.mubr.bf16.gmra.mrb[0].mxu0 %v7863
      %v7899 = vpop.f32.mrb[0].mxu0
      %v7900 = vadd.f32 0.0, %v7899
      %v7901 = vpop.f32.mrb[0].mxu0
      %v7902 = vpop.f32.mrb[0].mxu0
      %v7903 = vadd.f32 0.0, %v7902
      %v7904 = vpop.f32.mrb[0].mxu0
      %7905 = vdwg.mxu0
      %7906 = vrot.lane.b32.xlu0 %v960, 64
      %v7907 = vpop.permute.xlu0 %7906
      %v7910 = vsel %vm4177, %v5634, 0
      %7912 = vmatprep.subr.bf16.mxu0 0
      %7913 = vmatpush1.bf16.msra.mxu0 %v7907
      %7914 = vmatprep.subr.bf16.mxu0 0
      %7915 = vmatpush1.bf16.msra.mxu0 0
      %7916 = vmatprep.subr.bf16.mxu0 0
      %7917 = vmatpush1.bf16.msra.mxu0 0
      %7918 = vmatprep.subr.bf16.mxu0 0
      %7919 = vmatpush1.bf16.msra.mxu0 0
      %7920 = vmatprep.subr.bf16.mxu0 0
      %7921 = vmatpush1.bf16.msra.mxu0 0
      %7922 = vmatprep.subr.bf16.mxu0 0
      %7923 = vmatpush1.bf16.msra.mxu0 0
      %7924 = vmatprep.subr.bf16.mxu0 0
      %7925 = vmatpush1.bf16.msra.mxu0 0
      %7926 = vmatprep.subr.bf16.mxu0 0
      %7927 = vmatpush1.bf16.msra.mxu0 0
      %7928 = vmatprep.subr.bf16.mxu0 0
      %7929 = vmatpush1.bf16.msra.mxu0 0
      %7930 = vmatprep.subr.bf16.mxu0 0
      %7931 = vmatpush1.bf16.msra.mxu0 0
      %7932 = vmatprep.subr.bf16.mxu0 0
      %7933 = vmatpush1.bf16.msra.mxu0 0
      %7934 = vmatprep.subr.bf16.mxu0 0
      %7935 = vmatpush1.bf16.msra.mxu0 0
      %7936 = vmatprep.subr.bf16.mxu0 0
      %7937 = vmatpush1.bf16.msra.mxu0 0
      %7938 = vmatprep.subr.bf16.mxu0 0
      %7939 = vmatpush1.bf16.msra.mxu0 0
      %7940 = vmatprep.subr.bf16.mxu0 0
      %7941 = vmatpush1.bf16.msra.mxu0 0
      %7942 = vmatprep.subr.bf16.mxu0 0
      %7943 = vmatpush1.bf16.msra.mxu0 0
      %7944 = vmatprep.mubr.bf16.mxu0 0
      %7945 = vmatmul.mubr.bf16.gmra.mrb[0].mxu0 %v7910
      %v7946 = vpop.f32.mrb[0].mxu0
      %v7947 = vadd.f32 0.0, %v7946
      %v7948 = vpop.f32.mrb[0].mxu0
      %v7949 = vpop.f32.mrb[0].mxu0
      %v7950 = vadd.f32 0.0, %v7949
      %v7951 = vpop.f32.mrb[0].mxu0
      %7952 = vdwg.mxu0
      %7953 = vrot.lane.b32.xlu0 %v961, 64
      %v7954 = vpop.permute.xlu0 %7953
      %v7957 = vsel %vm4177, %v5635, 0
      %7959 = vmatprep.subr.bf16.mxu0 0
      %7960 = vmatpush1.bf16.msra.mxu0 %v7954
      %7961 = vmatprep.subr.bf16.mxu0 0
      %7962 = vmatpush1.bf16.msra.mxu0 0
      %7963 = vmatprep.subr.bf16.mxu0 0
      %7964 = vmatpush1.bf16.msra.mxu0 0
      %7965 = vmatprep.subr.bf16.mxu0 0
      %7966 = vmatpush1.bf16.msra.mxu0 0
      %7967 = vmatprep.subr.bf16.mxu0 0
      %7968 = vmatpush1.bf16.msra.mxu0 0
      %7969 = vmatprep.subr.bf16.mxu0 0
      %7970 = vmatpush1.bf16.msra.mxu0 0
      %7971 = vmatprep.subr.bf16.mxu0 0
      %7972 = vmatpush1.bf16.msra.mxu0 0
      %7973 = vmatprep.subr.bf16.mxu0 0
      %7974 = vmatpush1.bf16.msra.mxu0 0
      %7975 = vmatprep.subr.bf16.mxu0 0
      %7976 = vmatpush1.bf16.msra.mxu0 0
      %7977 = vmatprep.subr.bf16.mxu0 0
      %7978 = vmatpush1.bf16.msra.mxu0 0
      %7979 = vmatprep.subr.bf16.mxu0 0
      %7980 = vmatpush1.bf16.msra.mxu0 0
      %7981 = vmatprep.subr.bf16.mxu0 0
      %7982 = vmatpush1.bf16.msra.mxu0 0
      %7983 = vmatprep.subr.bf16.mxu0 0
      %7984 = vmatpush1.bf16.msra.mxu0 0
      %7985 = vmatprep.subr.bf16.mxu0 0
      %7986 = vmatpush1.bf16.msra.mxu0 0
      %7987 = vmatprep.subr.bf16.mxu0 0
      %7988 = vmatpush1.bf16.msra.mxu0 0
      %7989 = vmatprep.subr.bf16.mxu0 0
      %7990 = vmatpush1.bf16.msra.mxu0 0
      %7991 = vmatprep.mubr.bf16.mxu0 0
      %7992 = vmatmul.mubr.bf16.gmra.mrb[0].mxu0 %v7957
      %v7993 = vpop.f32.mrb[0].mxu0
      %v7994 = vadd.f32 0.0, %v7993
      %v7995 = vpop.f32.mrb[0].mxu0
      %v7996 = vpop.f32.mrb[0].mxu0
      %v7997 = vadd.f32 0.0, %v7996
      %v7998 = vpop.f32.mrb[0].mxu0
      %7999 = vdwg.mxu0
      %8000 = vrot.lane.b32.xlu0 %v962, 64
      %v8001 = vpop.permute.xlu0 %8000
      %v8004 = vsel %vm4177, %v5636, 0
      %8006 = vmatprep.subr.bf16.mxu0 0
      %8007 = vmatpush1.bf16.msra.mxu0 %v8001
      %8008 = vmatprep.subr.bf16.mxu0 0
      %8009 = vmatpush1.bf16.msra.mxu0 0
      %8010 = vmatprep.subr.bf16.mxu0 0
      %8011 = vmatpush1.bf16.msra.mxu0 0
      %8012 = vmatprep.subr.bf16.mxu0 0
      %8013 = vmatpush1.bf16.msra.mxu0 0
      %8014 = vmatprep.subr.bf16.mxu0 0
      %8015 = vmatpush1.bf16.msra.mxu0 0
      %8016 = vmatprep.subr.bf16.mxu0 0
      %8017 = vmatpush1.bf16.msra.mxu0 0
      %8018 = vmatprep.subr.bf16.mxu0 0
      %8019 = vmatpush1.bf16.msra.mxu0 0
      %8020 = vmatprep.subr.bf16.mxu0 0
      %8021 = vmatpush1.bf16.msra.mxu0 0
      %8022 = vmatprep.subr.bf16.mxu0 0
      %8023 = vmatpush1.bf16.msra.mxu0 0
      %8024 = vmatprep.subr.bf16.mxu0 0
      %8025 = vmatpush1.bf16.msra.mxu0 0
      %8026 = vmatprep.subr.bf16.mxu0 0
      %8027 = vmatpush1.bf16.msra.mxu0 0
      %8028 = vmatprep.subr.bf16.mxu0 0
      %8029 = vmatpush1.bf16.msra.mxu0 0
      %8030 = vmatprep.subr.bf16.mxu0 0
      %8031 = vmatpush1.bf16.msra.mxu0 0
      %8032 = vmatprep.subr.bf16.mxu0 0
      %8033 = vmatpush1.bf16.msra.mxu0 0
      %8034 = vmatprep.subr.bf16.mxu0 0
      %8035 = vmatpush1.bf16.msra.mxu0 0
      %8036 = vmatprep.subr.bf16.mxu0 0
      %8037 = vmatpush1.bf16.msra.mxu0 0
      %8038 = vmatprep.mubr.bf16.mxu0 0
      %8039 = vmatmul.mubr.bf16.gmra.mrb[0].mxu0 %v8004
      %v8040 = vpop.f32.mrb[0].mxu0
      %v8041 = vadd.f32 0.0, %v8040
      %v8042 = vpop.f32.mrb[0].mxu0
      %v8043 = vpop.f32.mrb[0].mxu0
      %v8044 = vadd.f32 0.0, %v8043
      %v8045 = vpop.f32.mrb[0].mxu0
      %8046 = vdwg.mxu0
      %8047 = vrot.lane.b32.xlu0 %v963, 64
      %v8048 = vpop.permute.xlu0 %8047
      %v8051 = vsel %vm4177, %v5637, 0
      %8053 = vmatprep.subr.bf16.mxu0 0
      %8054 = vmatpush1.bf16.msra.mxu0 %v8048
      %8055 = vmatprep.subr.bf16.mxu0 0
      %8056 = vmatpush1.bf16.msra.mxu0 0
      %8057 = vmatprep.subr.bf16.mxu0 0
      %8058 = vmatpush1.bf16.msra.mxu0 0
      %8059 = vmatprep.subr.bf16.mxu0 0
      %8060 = vmatpush1.bf16.msra.mxu0 0
      %8061 = vmatprep.subr.bf16.mxu0 0
      %8062 = vmatpush1.bf16.msra.mxu0 0
      %8063 = vmatprep.subr.bf16.mxu0 0
      %8064 = vmatpush1.bf16.msra.mxu0 0
      %8065 = vmatprep.subr.bf16.mxu0 0
      %8066 = vmatpush1.bf16.msra.mxu0 0
      %8067 = vmatprep.subr.bf16.mxu0 0
      %8068 = vmatpush1.bf16.msra.mxu0 0
      %8069 = vmatprep.subr.bf16.mxu0 0
      %8070 = vmatpush1.bf16.msra.mxu0 0
      %8071 = vmatprep.subr.bf16.mxu0 0
      %8072 = vmatpush1.bf16.msra.mxu0 0
      %8073 = vmatprep.subr.bf16.mxu0 0
      %8074 = vmatpush1.bf16.msra.mxu0 0
      %8075 = vmatprep.subr.bf16.mxu0 0
      %8076 = vmatpush1.bf16.msra.mxu0 0
      %8077 = vmatprep.subr.bf16.mxu0 0
      %8078 = vmatpush1.bf16.msra.mxu0 0
      %8079 = vmatprep.subr.bf16.mxu0 0
      %8080 = vmatpush1.bf16.msra.mxu0 0
      %8081 = vmatprep.subr.bf16.mxu0 0
      %8082 = vmatpush1.bf16.msra.mxu0 0
      %8083 = vmatprep.subr.bf16.mxu0 0
      %8084 = vmatpush1.bf16.msra.mxu0 0
      %8085 = vmatprep.mubr.bf16.mxu0 0
      %8086 = vmatmul.mubr.bf16.gmra.mrb[0].mxu0 %v8051
      %v8087 = vpop.f32.mrb[0].mxu0
      %v8088 = vadd.f32 0.0, %v8087
      %v8089 = vpop.f32.mrb[0].mxu0
      %v8090 = vpop.f32.mrb[0].mxu0
      %v8091 = vadd.f32 0.0, %v8090
      %v8092 = vpop.f32.mrb[0].mxu0
      %8093 = vdwg.mxu0
      %8094 = vrot.lane.b32.xlu0 %v964, 64
      %v8095 = vpop.permute.xlu0 %8094
      %v8098 = vsel %vm4177, %v5638, 0
      %8100 = vmatprep.subr.bf16.mxu0 0
      %8101 = vmatpush1.bf16.msra.mxu0 %v8095
      %8102 = vmatprep.subr.bf16.mxu0 0
      %8103 = vmatpush1.bf16.msra.mxu0 0
      %8104 = vmatprep.subr.bf16.mxu0 0
      %8105 = vmatpush1.bf16.msra.mxu0 0
      %8106 = vmatprep.subr.bf16.mxu0 0
      %8107 = vmatpush1.bf16.msra.mxu0 0
      %8108 = vmatprep.subr.bf16.mxu0 0
      %8109 = vmatpush1.bf16.msra.mxu0 0
      %8110 = vmatprep.subr.bf16.mxu0 0
      %8111 = vmatpush1.bf16.msra.mxu0 0
      %8112 = vmatprep.subr.bf16.mxu0 0
      %8113 = vmatpush1.bf16.msra.mxu0 0
      %8114 = vmatprep.subr.bf16.mxu0 0
      %8115 = vmatpush1.bf16.msra.mxu0 0
      %8116 = vmatprep.subr.bf16.mxu0 0
      %8117 = vmatpush1.bf16.msra.mxu0 0
      %8118 = vmatprep.subr.bf16.mxu0 0
      %8119 = vmatpush1.bf16.msra.mxu0 0
      %8120 = vmatprep.subr.bf16.mxu0 0
      %8121 = vmatpush1.bf16.msra.mxu0 0
      %8122 = vmatprep.subr.bf16.mxu0 0
      %8123 = vmatpush1.bf16.msra.mxu0 0
      %8124 = vmatprep.subr.bf16.mxu0 0
      %8125 = vmatpush1.bf16.msra.mxu0 0
      %8126 = vmatprep.subr.bf16.mxu0 0
      %8127 = vmatpush1.bf16.msra.mxu0 0
      %8128 = vmatprep.subr.bf16.mxu0 0
      %8129 = vmatpush1.bf16.msra.mxu0 0
      %8130 = vmatprep.subr.bf16.mxu0 0
      %8131 = vmatpush1.bf16.msra.mxu0 0
      %8132 = vmatprep.mubr.bf16.mxu0 0
      %8133 = vmatmul.mubr.bf16.gmra.mrb[0].mxu0 %v8098
      %v8134 = vpop.f32.mrb[0].mxu0
      %v8135 = vadd.f32 0.0, %v8134
      %v8136 = vpop.f32.mrb[0].mxu0
      %v8137 = vpop.f32.mrb[0].mxu0
      %v8138 = vadd.f32 0.0, %v8137
      %v8139 = vpop.f32.mrb[0].mxu0
      %8140 = vdwg.mxu0
      %8141 = vrot.lane.b32.xlu0 %v965, 64
      %v8142 = vpop.permute.xlu0 %8141
      %v8145 = vsel %vm4177, %v5639, 0
      %8147 = vmatprep.subr.bf16.mxu0 0
      %8148 = vmatpush1.bf16.msra.mxu0 %v8142
      %8149 = vmatprep.subr.bf16.mxu0 0
      %8150 = vmatpush1.bf16.msra.mxu0 0
      %8151 = vmatprep.subr.bf16.mxu0 0
      %8152 = vmatpush1.bf16.msra.mxu0 0
      %8153 = vmatprep.subr.bf16.mxu0 0
      %8154 = vmatpush1.bf16.msra.mxu0 0
      %8155 = vmatprep.subr.bf16.mxu0 0
      %8156 = vmatpush1.bf16.msra.mxu0 0
      %8157 = vmatprep.subr.bf16.mxu0 0
      %8158 = vmatpush1.bf16.msra.mxu0 0
      %8159 = vmatprep.subr.bf16.mxu0 0
      %8160 = vmatpush1.bf16.msra.mxu0 0
      %8161 = vmatprep.subr.bf16.mxu0 0
      %8162 = vmatpush1.bf16.msra.mxu0 0
      %8163 = vmatprep.subr.bf16.mxu0 0
      %8164 = vmatpush1.bf16.msra.mxu0 0
      %8165 = vmatprep.subr.bf16.mxu0 0
      %8166 = vmatpush1.bf16.msra.mxu0 0
      %8167 = vmatprep.subr.bf16.mxu0 0
      %8168 = vmatpush1.bf16.msra.mxu0 0
      %8169 = vmatprep.subr.bf16.mxu0 0
      %8170 = vmatpush1.bf16.msra.mxu0 0
      %8171 = vmatprep.subr.bf16.mxu0 0
      %8172 = vmatpush1.bf16.msra.mxu0 0
      %8173 = vmatprep.subr.bf16.mxu0 0
      %8174 = vmatpush1.bf16.msra.mxu0 0
      %8175 = vmatprep.subr.bf16.mxu0 0
      %8176 = vmatpush1.bf16.msra.mxu0 0
      %8177 = vmatprep.subr.bf16.mxu0 0
      %8178 = vmatpush1.bf16.msra.mxu0 0
      %8179 = vmatprep.mubr.bf16.mxu0 0
      %8180 = vmatmul.mubr.bf16.gmra.mrb[0].mxu0 %v8145
      %v8181 = vpop.f32.mrb[0].mxu0
      %v8182 = vadd.f32 0.0, %v8181
      %v8183 = vpop.f32.mrb[0].mxu0
      %v8184 = vpop.f32.mrb[0].mxu0
      %v8185 = vadd.f32 0.0, %v8184
      %v8186 = vpop.f32.mrb[0].mxu0
      %8187 = vdwg.mxu0
      %8188 = vrot.lane.b32.xlu0 %v966, 64
      %v8189 = vpop.permute.xlu0 %8188
      %v8192 = vsel %vm4177, %v5640, 0
      %8194 = vmatprep.subr.bf16.mxu0 0
      %8195 = vmatpush1.bf16.msra.mxu0 %v8189
      %8196 = vmatprep.subr.bf16.mxu0 0
      %8197 = vmatpush1.bf16.msra.mxu0 0
      %8198 = vmatprep.subr.bf16.mxu0 0
      %8199 = vmatpush1.bf16.msra.mxu0 0
      %8200 = vmatprep.subr.bf16.mxu0 0
      %8201 = vmatpush1.bf16.msra.mxu0 0
      %8202 = vmatprep.subr.bf16.mxu0 0
      %8203 = vmatpush1.bf16.msra.mxu0 0
      %8204 = vmatprep.subr.bf16.mxu0 0
      %8205 = vmatpush1.bf16.msra.mxu0 0
      %8206 = vmatprep.subr.bf16.mxu0 0
      %8207 = vmatpush1.bf16.msra.mxu0 0
      %8208 = vmatprep.subr.bf16.mxu0 0
      %8209 = vmatpush1.bf16.msra.mxu0 0
      %8210 = vmatprep.subr.bf16.mxu0 0
      %8211 = vmatpush1.bf16.msra.mxu0 0
      %8212 = vmatprep.subr.bf16.mxu0 0
      %8213 = vmatpush1.bf16.msra.mxu0 0
      %8214 = vmatprep.subr.bf16.mxu0 0
      %8215 = vmatpush1.bf16.msra.mxu0 0
      %8216 = vmatprep.subr.bf16.mxu0 0
      %8217 = vmatpush1.bf16.msra.mxu0 0
      %8218 = vmatprep.subr.bf16.mxu0 0
      %8219 = vmatpush1.bf16.msra.mxu0 0
      %8220 = vmatprep.subr.bf16.mxu0 0
      %8221 = vmatpush1.bf16.msra.mxu0 0
      %8222 = vmatprep.subr.bf16.mxu0 0
      %8223 = vmatpush1.bf16.msra.mxu0 0
      %8224 = vmatprep.subr.bf16.mxu0 0
      %8225 = vmatpush1.bf16.msra.mxu0 0
      %8226 = vmatprep.mubr.bf16.mxu0 0
      %8227 = vmatmul.mubr.bf16.gmra.mrb[0].mxu0 %v8192
      %v8228 = vpop.f32.mrb[0].mxu0
      %v8229 = vadd.f32 0.0, %v8228
      %v8230 = vpop.f32.mrb[0].mxu0
      %v8231 = vpop.f32.mrb[0].mxu0
      %v8232 = vadd.f32 0.0, %v8231
      %v8233 = vpop.f32.mrb[0].mxu0
      %8234 = vdwg.mxu0
      %8235 = vrot.lane.b32.xlu0 %v967, 64
      %v8236 = vpop.permute.xlu0 %8235
      %v8239 = vsel %vm4177, %v5641, 0
      %8241 = vmatprep.subr.bf16.mxu0 0
      %8242 = vmatpush1.bf16.msra.mxu0 %v8236
      %8243 = vmatprep.subr.bf16.mxu0 0
      %8244 = vmatpush1.bf16.msra.mxu0 0
      %8245 = vmatprep.subr.bf16.mxu0 0
      %8246 = vmatpush1.bf16.msra.mxu0 0
      %8247 = vmatprep.subr.bf16.mxu0 0
      %8248 = vmatpush1.bf16.msra.mxu0 0
      %8249 = vmatprep.subr.bf16.mxu0 0
      %8250 = vmatpush1.bf16.msra.mxu0 0
      %8251 = vmatprep.subr.bf16.mxu0 0
      %8252 = vmatpush1.bf16.msra.mxu0 0
      %8253 = vmatprep.subr.bf16.mxu0 0
      %8254 = vmatpush1.bf16.msra.mxu0 0
      %8255 = vmatprep.subr.bf16.mxu0 0
      %8256 = vmatpush1.bf16.msra.mxu0 0
      %8257 = vmatprep.subr.bf16.mxu0 0
      %8258 = vmatpush1.bf16.msra.mxu0 0
      %8259 = vmatprep.subr.bf16.mxu0 0
      %8260 = vmatpush1.bf16.msra.mxu0 0
      %8261 = vmatprep.subr.bf16.mxu0 0
      %8262 = vmatpush1.bf16.msra.mxu0 0
      %8263 = vmatprep.subr.bf16.mxu0 0
      %8264 = vmatpush1.bf16.msra.mxu0 0
      %8265 = vmatprep.subr.bf16.mxu0 0
      %8266 = vmatpush1.bf16.msra.mxu0 0
      %8267 = vmatprep.subr.bf16.mxu0 0
      %8268 = vmatpush1.bf16.msra.mxu0 0
      %8269 = vmatprep.subr.bf16.mxu0 0
      %8270 = vmatpush1.bf16.msra.mxu0 0
      %8271 = vmatprep.subr.bf16.mxu0 0
      %8272 = vmatpush1.bf16.msra.mxu0 0
      %8273 = vmatprep.mubr.bf16.mxu0 0
      %8274 = vmatmul.mubr.bf16.gmra.mrb[0].mxu0 %v8239
      %v8275 = vpop.f32.mrb[0].mxu0
      %v8276 = vadd.f32 0.0, %v8275
      %v8277 = vpop.f32.mrb[0].mxu0
      %v8278 = vpop.f32.mrb[0].mxu0
      %v8279 = vadd.f32 0.0, %v8278
      %v8280 = vpop.f32.mrb[0].mxu0
      %8281 = vdwg.mxu0
      %8282 = vrot.lane.b32.xlu0 %v968, 64
      %v8283 = vpop.permute.xlu0 %8282
      %v8286 = vsel %vm4177, %v5642, 0
      %8288 = vmatprep.subr.bf16.mxu0 0
      %8289 = vmatpush1.bf16.msra.mxu0 %v8283
      %8290 = vmatprep.subr.bf16.mxu0 0
      %8291 = vmatpush1.bf16.msra.mxu0 0
      %8292 = vmatprep.subr.bf16.mxu0 0
      %8293 = vmatpush1.bf16.msra.mxu0 0
      %8294 = vmatprep.subr.bf16.mxu0 0
      %8295 = vmatpush1.bf16.msra.mxu0 0
      %8296 = vmatprep.subr.bf16.mxu0 0
      %8297 = vmatpush1.bf16.msra.mxu0 0
      %8298 = vmatprep.subr.bf16.mxu0 0
      %8299 = vmatpush1.bf16.msra.mxu0 0
      %8300 = vmatprep.subr.bf16.mxu0 0
      %8301 = vmatpush1.bf16.msra.mxu0 0
      %8302 = vmatprep.subr.bf16.mxu0 0
      %8303 = vmatpush1.bf16.msra.mxu0 0
      %8304 = vmatprep.subr.bf16.mxu0 0
      %8305 = vmatpush1.bf16.msra.mxu0 0
      %8306 = vmatprep.subr.bf16.mxu0 0
      %8307 = vmatpush1.bf16.msra.mxu0 0
      %8308 = vmatprep.subr.bf16.mxu0 0
      %8309 = vmatpush1.bf16.msra.mxu0 0
      %8310 = vmatprep.subr.bf16.mxu0 0
      %8311 = vmatpush1.bf16.msra.mxu0 0
      %8312 = vmatprep.subr.bf16.mxu0 0
      %8313 = vmatpush1.bf16.msra.mxu0 0
      %8314 = vmatprep.subr.bf16.mxu0 0
      %8315 = vmatpush1.bf16.msra.mxu0 0
      %8316 = vmatprep.subr.bf16.mxu0 0
      %8317 = vmatpush1.bf16.msra.mxu0 0
      %8318 = vmatprep.subr.bf16.mxu0 0
      %8319 = vmatpush1.bf16.msra.mxu0 0
      %8320 = vmatprep.mubr.bf16.mxu0 0
      %8321 = vmatmul.mubr.bf16.gmra.mrb[0].mxu0 %v8286
      %v8322 = vpop.f32.mrb[0].mxu0
      %v8323 = vadd.f32 0.0, %v8322
      %v8324 = vpop.f32.mrb[0].mxu0
      %v8325 = vpop.f32.mrb[0].mxu0
      %v8326 = vadd.f32 0.0, %v8325
      %v8327 = vpop.f32.mrb[0].mxu0
      %8328 = vdwg.mxu0
      %8329 = vrot.lane.b32.xlu0 %v969, 64
      %v8330 = vpop.permute.xlu0 %8329
      %v8333 = vsel %vm4177, %v5643, 0
      %8335 = vmatprep.subr.bf16.mxu0 0
      %8336 = vmatpush1.bf16.msra.mxu0 %v8330
      %8337 = vmatprep.subr.bf16.mxu0 0
      %8338 = vmatpush1.bf16.msra.mxu0 0
      %8339 = vmatprep.subr.bf16.mxu0 0
      %8340 = vmatpush1.bf16.msra.mxu0 0
      %8341 = vmatprep.subr.bf16.mxu0 0
      %8342 = vmatpush1.bf16.msra.mxu0 0
      %8343 = vmatprep.subr.bf16.mxu0 0
      %8344 = vmatpush1.bf16.msra.mxu0 0
      %8345 = vmatprep.subr.bf16.mxu0 0
      %8346 = vmatpush1.bf16.msra.mxu0 0
      %8347 = vmatprep.subr.bf16.mxu0 0
      %8348 = vmatpush1.bf16.msra.mxu0 0
      %8349 = vmatprep.subr.bf16.mxu0 0
      %8350 = vmatpush1.bf16.msra.mxu0 0
      %8351 = vmatprep.subr.bf16.mxu0 0
      %8352 = vmatpush1.bf16.msra.mxu0 0
      %8353 = vmatprep.subr.bf16.mxu0 0
      %8354 = vmatpush1.bf16.msra.mxu0 0
      %8355 = vmatprep.subr.bf16.mxu0 0
      %8356 = vmatpush1.bf16.msra.mxu0 0
      %8357 = vmatprep.subr.bf16.mxu0 0
      %8358 = vmatpush1.bf16.msra.mxu0 0
      %8359 = vmatprep.subr.bf16.mxu0 0
      %8360 = vmatpush1.bf16.msra.mxu0 0
      %8361 = vmatprep.subr.bf16.mxu0 0
      %8362 = vmatpush1.bf16.msra.mxu0 0
      %8363 = vmatprep.subr.bf16.mxu0 0
      %8364 = vmatpush1.bf16.msra.mxu0 0
      %8365 = vmatprep.subr.bf16.mxu0 0
      %8366 = vmatpush1.bf16.msra.mxu0 0
      %8367 = vmatprep.mubr.bf16.mxu0 0
      %8368 = vmatmul.mubr.bf16.gmra.mrb[0].mxu0 %v8333
      %v8369 = vpop.f32.mrb[0].mxu0
      %v8370 = vadd.f32 0.0, %v8369
      %v8371 = vpop.f32.mrb[0].mxu0
      %v8372 = vpop.f32.mrb[0].mxu0
      %v8373 = vadd.f32 0.0, %v8372
      %v8374 = vpop.f32.mrb[0].mxu0
      %8375 = vdwg.mxu0
      %8376 = vrot.lane.b32.xlu0 %v970, 64
      %v8377 = vpop.permute.xlu0 %8376
      %v8380 = vsel %vm4177, %v5644, 0
      %8382 = vmatprep.subr.bf16.mxu0 0
      %8383 = vmatpush1.bf16.msra.mxu0 %v8377
      %8384 = vmatprep.subr.bf16.mxu0 0
      %8385 = vmatpush1.bf16.msra.mxu0 0
      %8386 = vmatprep.subr.bf16.mxu0 0
      %8387 = vmatpush1.bf16.msra.mxu0 0
      %8388 = vmatprep.subr.bf16.mxu0 0
      %8389 = vmatpush1.bf16.msra.mxu0 0
      %8390 = vmatprep.subr.bf16.mxu0 0
      %8391 = vmatpush1.bf16.msra.mxu0 0
      %8392 = vmatprep.subr.bf16.mxu0 0
      %8393 = vmatpush1.bf16.msra.mxu0 0
      %8394 = vmatprep.subr.bf16.mxu0 0
      %8395 = vmatpush1.bf16.msra.mxu0 0
      %8396 = vmatprep.subr.bf16.mxu0 0
      %8397 = vmatpush1.bf16.msra.mxu0 0
      %8398 = vmatprep.subr.bf16.mxu0 0
      %8399 = vmatpush1.bf16.msra.mxu0 0
      %8400 = vmatprep.subr.bf16.mxu0 0
      %8401 = vmatpush1.bf16.msra.mxu0 0
      %8402 = vmatprep.subr.bf16.mxu0 0
      %8403 = vmatpush1.bf16.msra.mxu0 0
      %8404 = vmatprep.subr.bf16.mxu0 0
      %8405 = vmatpush1.bf16.msra.mxu0 0
      %8406 = vmatprep.subr.bf16.mxu0 0
      %8407 = vmatpush1.bf16.msra.mxu0 0
      %8408 = vmatprep.subr.bf16.mxu0 0
      %8409 = vmatpush1.bf16.msra.mxu0 0
      %8410 = vmatprep.subr.bf16.mxu0 0
      %8411 = vmatpush1.bf16.msra.mxu0 0
      %8412 = vmatprep.subr.bf16.mxu0 0
      %8413 = vmatpush1.bf16.msra.mxu0 0
      %8414 = vmatprep.mubr.bf16.mxu0 0
      %8415 = vmatmul.mubr.bf16.gmra.mrb[0].mxu0 %v8380
      %v8416 = vpop.f32.mrb[0].mxu0
      %v8417 = vadd.f32 0.0, %v8416
      %v8418 = vpop.f32.mrb[0].mxu0
      %v8419 = vpop.f32.mrb[0].mxu0
      %v8420 = vadd.f32 0.0, %v8419
      %v8421 = vpop.f32.mrb[0].mxu0
      %8422 = vdwg.mxu0
      %8423 = vrot.lane.b32.xlu0 %v971, 64
      %v8424 = vpop.permute.xlu0 %8423
      %v8427 = vsel %vm4177, %v5645, 0
      %8429 = vmatprep.subr.bf16.mxu0 0
      %8430 = vmatpush1.bf16.msra.mxu0 %v8424
      %8431 = vmatprep.subr.bf16.mxu0 0
      %8432 = vmatpush1.bf16.msra.mxu0 0
      %8433 = vmatprep.subr.bf16.mxu0 0
      %8434 = vmatpush1.bf16.msra.mxu0 0
      %8435 = vmatprep.subr.bf16.mxu0 0
      %8436 = vmatpush1.bf16.msra.mxu0 0
      %8437 = vmatprep.subr.bf16.mxu0 0
      %8438 = vmatpush1.bf16.msra.mxu0 0
      %8439 = vmatprep.subr.bf16.mxu0 0
      %8440 = vmatpush1.bf16.msra.mxu0 0
      %8441 = vmatprep.subr.bf16.mxu0 0
      %8442 = vmatpush1.bf16.msra.mxu0 0
      %8443 = vmatprep.subr.bf16.mxu0 0
      %8444 = vmatpush1.bf16.msra.mxu0 0
      %8445 = vmatprep.subr.bf16.mxu0 0
      %8446 = vmatpush1.bf16.msra.mxu0 0
      %8447 = vmatprep.subr.bf16.mxu0 0
      %8448 = vmatpush1.bf16.msra.mxu0 0
      %8449 = vmatprep.subr.bf16.mxu0 0
      %8450 = vmatpush1.bf16.msra.mxu0 0
      %8451 = vmatprep.subr.bf16.mxu0 0
      %8452 = vmatpush1.bf16.msra.mxu0 0
      %8453 = vmatprep.subr.bf16.mxu0 0
      %8454 = vmatpush1.bf16.msra.mxu0 0
      %8455 = vmatprep.subr.bf16.mxu0 0
      %8456 = vmatpush1.bf16.msra.mxu0 0
      %8457 = vmatprep.subr.bf16.mxu0 0
      %8458 = vmatpush1.bf16.msra.mxu0 0
      %8459 = vmatprep.subr.bf16.mxu0 0
      %8460 = vmatpush1.bf16.msra.mxu0 0
      %8461 = vmatprep.mubr.bf16.mxu0 0
      %8462 = vmatmul.mubr.bf16.gmra.mrb[0].mxu0 %v8427
      %v8463 = vpop.f32.mrb[0].mxu0
      %v8464 = vadd.f32 0.0, %v8463
      %v8465 = vpop.f32.mrb[0].mxu0
      %v8466 = vpop.f32.mrb[0].mxu0
      %v8467 = vadd.f32 0.0, %v8466
      %v8468 = vpop.f32.mrb[0].mxu0
      %8469 = vdwg.mxu0
      %8470 = vrot.lane.b32.xlu0 %v972, 64
      %v8471 = vpop.permute.xlu0 %8470
      %v8474 = vsel %vm4177, %v5646, 0
      %8476 = vmatprep.subr.bf16.mxu0 0
      %8477 = vmatpush1.bf16.msra.mxu0 %v8471
      %8478 = vmatprep.subr.bf16.mxu0 0
      %8479 = vmatpush1.bf16.msra.mxu0 0
      %8480 = vmatprep.subr.bf16.mxu0 0
      %8481 = vmatpush1.bf16.msra.mxu0 0
      %8482 = vmatprep.subr.bf16.mxu0 0
      %8483 = vmatpush1.bf16.msra.mxu0 0
      %8484 = vmatprep.subr.bf16.mxu0 0
      %8485 = vmatpush1.bf16.msra.mxu0 0
      %8486 = vmatprep.subr.bf16.mxu0 0
      %8487 = vmatpush1.bf16.msra.mxu0 0
      %8488 = vmatprep.subr.bf16.mxu0 0
      %8489 = vmatpush1.bf16.msra.mxu0 0
      %8490 = vmatprep.subr.bf16.mxu0 0
      %8491 = vmatpush1.bf16.msra.mxu0 0
      %8492 = vmatprep.subr.bf16.mxu0 0
      %8493 = vmatpush1.bf16.msra.mxu0 0
      %8494 = vmatprep.subr.bf16.mxu0 0
      %8495 = vmatpush1.bf16.msra.mxu0 0
      %8496 = vmatprep.subr.bf16.mxu0 0
      %8497 = vmatpush1.bf16.msra.mxu0 0
      %8498 = vmatprep.subr.bf16.mxu0 0
      %8499 = vmatpush1.bf16.msra.mxu0 0
      %8500 = vmatprep.subr.bf16.mxu0 0
      %8501 = vmatpush1.bf16.msra.mxu0 0
      %8502 = vmatprep.subr.bf16.mxu0 0
      %8503 = vmatpush1.bf16.msra.mxu0 0
      %8504 = vmatprep.subr.bf16.mxu0 0
      %8505 = vmatpush1.bf16.msra.mxu0 0
      %8506 = vmatprep.subr.bf16.mxu0 0
      %8507 = vmatpush1.bf16.msra.mxu0 0
      %8508 = vmatprep.mubr.bf16.mxu0 0
      %8509 = vmatmul.mubr.bf16.gmra.mrb[0].mxu0 %v8474
      %v8510 = vpop.f32.mrb[0].mxu0
      %v8511 = vadd.f32 0.0, %v8510
      %v8512 = vpop.f32.mrb[0].mxu0
      %v8513 = vpop.f32.mrb[0].mxu0
      %v8514 = vadd.f32 0.0, %v8513
      %v8515 = vpop.f32.mrb[0].mxu0
      %8516 = vdwg.mxu0
      %8517 = vrot.lane.b32.xlu0 %v973, 64
      %v8518 = vpop.permute.xlu0 %8517
      %v8521 = vsel %vm4177, %v5647, 0
      %8523 = vmatprep.subr.bf16.mxu0 0
      %8524 = vmatpush1.bf16.msra.mxu0 %v8518
      %8525 = vmatprep.subr.bf16.mxu0 0
      %8526 = vmatpush1.bf16.msra.mxu0 0
      %8527 = vmatprep.subr.bf16.mxu0 0
      %8528 = vmatpush1.bf16.msra.mxu0 0
      %8529 = vmatprep.subr.bf16.mxu0 0
      %8530 = vmatpush1.bf16.msra.mxu0 0
      %8531 = vmatprep.subr.bf16.mxu0 0
      %8532 = vmatpush1.bf16.msra.mxu0 0
      %8533 = vmatprep.subr.bf16.mxu0 0
      %8534 = vmatpush1.bf16.msra.mxu0 0
      %8535 = vmatprep.subr.bf16.mxu0 0
      %8536 = vmatpush1.bf16.msra.mxu0 0
      %8537 = vmatprep.subr.bf16.mxu0 0
      %8538 = vmatpush1.bf16.msra.mxu0 0
      %8539 = vmatprep.subr.bf16.mxu0 0
      %8540 = vmatpush1.bf16.msra.mxu0 0
      %8541 = vmatprep.subr.bf16.mxu0 0
      %8542 = vmatpush1.bf16.msra.mxu0 0
      %8543 = vmatprep.subr.bf16.mxu0 0
      %8544 = vmatpush1.bf16.msra.mxu0 0
      %8545 = vmatprep.subr.bf16.mxu0 0
      %8546 = vmatpush1.bf16.msra.mxu0 0
      %8547 = vmatprep.subr.bf16.mxu0 0
      %8548 = vmatpush1.bf16.msra.mxu0 0
      %8549 = vmatprep.subr.bf16.mxu0 0
      %8550 = vmatpush1.bf16.msra.mxu0 0
      %8551 = vmatprep.subr.bf16.mxu0 0
      %8552 = vmatpush1.bf16.msra.mxu0 0
      %8553 = vmatprep.subr.bf16.mxu0 0
      %8554 = vmatpush1.bf16.msra.mxu0 0
      %8555 = vmatprep.mubr.bf16.mxu0 0
      %8556 = vmatmul.mubr.bf16.gmra.mrb[0].mxu0 %v8521
      %v8557 = vpop.f32.mrb[0].mxu0
      %v8558 = vadd.f32 0.0, %v8557
      %v8559 = vpop.f32.mrb[0].mxu0
      %v8560 = vpop.f32.mrb[0].mxu0
      %v8561 = vadd.f32 0.0, %v8560
      %v8562 = vpop.f32.mrb[0].mxu0
      %8563 = vdwg.mxu0
      %8564 = vrot.lane.b32.xlu0 %v974, 64
      %v8565 = vpop.permute.xlu0 %8564
      %v8568 = vsel %vm4177, %v5648, 0
      %8570 = vmatprep.subr.bf16.mxu0 0
      %8571 = vmatpush1.bf16.msra.mxu0 %v8565
      %8572 = vmatprep.subr.bf16.mxu0 0
      %8573 = vmatpush1.bf16.msra.mxu0 0
      %8574 = vmatprep.subr.bf16.mxu0 0
      %8575 = vmatpush1.bf16.msra.mxu0 0
      %8576 = vmatprep.subr.bf16.mxu0 0
      %8577 = vmatpush1.bf16.msra.mxu0 0
      %8578 = vmatprep.subr.bf16.mxu0 0
      %8579 = vmatpush1.bf16.msra.mxu0 0
      %8580 = vmatprep.subr.bf16.mxu0 0
      %8581 = vmatpush1.bf16.msra.mxu0 0
      %8582 = vmatprep.subr.bf16.mxu0 0
      %8583 = vmatpush1.bf16.msra.mxu0 0
      %8584 = vmatprep.subr.bf16.mxu0 0
      %8585 = vmatpush1.bf16.msra.mxu0 0
      %8586 = vmatprep.subr.bf16.mxu0 0
      %8587 = vmatpush1.bf16.msra.mxu0 0
      %8588 = vmatprep.subr.bf16.mxu0 0
      %8589 = vmatpush1.bf16.msra.mxu0 0
      %8590 = vmatprep.subr.bf16.mxu0 0
      %8591 = vmatpush1.bf16.msra.mxu0 0
      %8592 = vmatprep.subr.bf16.mxu0 0
      %8593 = vmatpush1.bf16.msra.mxu0 0
      %8594 = vmatprep.subr.bf16.mxu0 0
      %8595 = vmatpush1.bf16.msra.mxu0 0
      %8596 = vmatprep.subr.bf16.mxu0 0
      %8597 = vmatpush1.bf16.msra.mxu0 0
      %8598 = vmatprep.subr.bf16.mxu0 0
      %8599 = vmatpush1.bf16.msra.mxu0 0
      %8600 = vmatprep.subr.bf16.mxu0 0
      %8601 = vmatpush1.bf16.msra.mxu0 0
      %8602 = vmatprep.mubr.bf16.mxu0 0
      %8603 = vmatmul.mubr.bf16.gmra.mrb[0].mxu0 %v8568
      %v8604 = vpop.f32.mrb[0].mxu0
      %v8605 = vadd.f32 0.0, %v8604
      %v8606 = vpop.f32.mrb[0].mxu0
      %v8607 = vpop.f32.mrb[0].mxu0
      %v8608 = vadd.f32 0.0, %v8607
      %v8609 = vpop.f32.mrb[0].mxu0
      %8610 = vdwg.mxu0
      %8611 = vrot.lane.b32.xlu0 %v975, 64
      %v8612 = vpop.permute.xlu0 %8611
      %v8615 = vsel %vm4177, %v5649, 0
      %8617 = vmatprep.subr.bf16.mxu0 0
      %8618 = vmatpush1.bf16.msra.mxu0 %v8612
      %8619 = vmatprep.subr.bf16.mxu0 0
      %8620 = vmatpush1.bf16.msra.mxu0 0
      %8621 = vmatprep.subr.bf16.mxu0 0
      %8622 = vmatpush1.bf16.msra.mxu0 0
      %8623 = vmatprep.subr.bf16.mxu0 0
      %8624 = vmatpush1.bf16.msra.mxu0 0
      %8625 = vmatprep.subr.bf16.mxu0 0
      %8626 = vmatpush1.bf16.msra.mxu0 0
      %8627 = vmatprep.subr.bf16.mxu0 0
      %8628 = vmatpush1.bf16.msra.mxu0 0
      %8629 = vmatprep.subr.bf16.mxu0 0
      %8630 = vmatpush1.bf16.msra.mxu0 0
      %8631 = vmatprep.subr.bf16.mxu0 0
      %8632 = vmatpush1.bf16.msra.mxu0 0
      %8633 = vmatprep.subr.bf16.mxu0 0
      %8634 = vmatpush1.bf16.msra.mxu0 0
      %8635 = vmatprep.subr.bf16.mxu0 0
      %8636 = vmatpush1.bf16.msra.mxu0 0
      %8637 = vmatprep.subr.bf16.mxu0 0
      %8638 = vmatpush1.bf16.msra.mxu0 0
      %8639 = vmatprep.subr.bf16.mxu0 0
      %8640 = vmatpush1.bf16.msra.mxu0 0
      %8641 = vmatprep.subr.bf16.mxu0 0
      %8642 = vmatpush1.bf16.msra.mxu0 0
      %8643 = vmatprep.subr.bf16.mxu0 0
      %8644 = vmatpush1.bf16.msra.mxu0 0
      %8645 = vmatprep.subr.bf16.mxu0 0
      %8646 = vmatpush1.bf16.msra.mxu0 0
      %8647 = vmatprep.subr.bf16.mxu0 0
      %8648 = vmatpush1.bf16.msra.mxu0 0
      %8649 = vmatprep.mubr.bf16.mxu0 0
      %8650 = vmatmul.mubr.bf16.gmra.mrb[0].mxu0 %v8615
      %v8651 = vpop.f32.mrb[0].mxu0
      %v8652 = vadd.f32 0.0, %v8651
      %v8653 = vpop.f32.mrb[0].mxu0
      %v8654 = vpop.f32.mrb[0].mxu0
      %v8655 = vadd.f32 0.0, %v8654
      %v8656 = vpop.f32.mrb[0].mxu0
      %8657 = vdwg.mxu0
      %8690 = vrot.lane.b32.xlu0 %v6443, 8
      %v8691 = vpop.permute.xlu0 %8690
      %8692 = vrot.lane.b32.xlu0 %v6446, 8
      %v8693 = vpop.permute.xlu0 %8692
      %8694 = vrot.lane.b32.xlu0 %v6490, 8
      %v8695 = vpop.permute.xlu0 %8694
      %8696 = vrot.lane.b32.xlu0 %v6493, 8
      %v8697 = vpop.permute.xlu0 %8696
      %8698 = vrot.lane.b32.xlu0 %v6537, 8
      %v8699 = vpop.permute.xlu0 %8698
      %8700 = vrot.lane.b32.xlu0 %v6540, 8
      %v8701 = vpop.permute.xlu0 %8700
      %8702 = vrot.lane.b32.xlu0 %v6584, 8
      %v8703 = vpop.permute.xlu0 %8702
      %8704 = vrot.lane.b32.xlu0 %v6587, 8
      %v8705 = vpop.permute.xlu0 %8704
      %8706 = vrot.lane.b32.xlu0 %v6631, 8
      %v8707 = vpop.permute.xlu0 %8706
      %8708 = vrot.lane.b32.xlu0 %v6634, 8
      %v8709 = vpop.permute.xlu0 %8708
      %8710 = vrot.lane.b32.xlu0 %v6678, 8
      %v8711 = vpop.permute.xlu0 %8710
      %8712 = vrot.lane.b32.xlu0 %v6681, 8
      %v8713 = vpop.permute.xlu0 %8712
      %8714 = vrot.lane.b32.xlu0 %v6725, 8
      %v8715 = vpop.permute.xlu0 %8714
      %8716 = vrot.lane.b32.xlu0 %v6728, 8
      %v8717 = vpop.permute.xlu0 %8716
      %8718 = vrot.lane.b32.xlu0 %v6772, 8
      %v8719 = vpop.permute.xlu0 %8718
      %8720 = vrot.lane.b32.xlu0 %v6775, 8
      %v8721 = vpop.permute.xlu0 %8720
      %8722 = vrot.lane.b32.xlu0 %v6819, 8
      %v8723 = vpop.permute.xlu0 %8722
      %8724 = vrot.lane.b32.xlu0 %v6822, 8
      %v8725 = vpop.permute.xlu0 %8724
      %8726 = vrot.lane.b32.xlu0 %v6866, 8
      %v8727 = vpop.permute.xlu0 %8726
      %8728 = vrot.lane.b32.xlu0 %v6869, 8
      %v8729 = vpop.permute.xlu0 %8728
      %8730 = vrot.lane.b32.xlu0 %v6913, 8
      %v8731 = vpop.permute.xlu0 %8730
      %8732 = vrot.lane.b32.xlu0 %v6916, 8
      %v8733 = vpop.permute.xlu0 %8732
      %8734 = vrot.lane.b32.xlu0 %v6960, 8
      %v8735 = vpop.permute.xlu0 %8734
      %8736 = vrot.lane.b32.xlu0 %v6963, 8
      %v8737 = vpop.permute.xlu0 %8736
      %8738 = vrot.lane.b32.xlu0 %v7007, 8
      %v8739 = vpop.permute.xlu0 %8738
      %8740 = vrot.lane.b32.xlu0 %v7010, 8
      %v8741 = vpop.permute.xlu0 %8740
      %8742 = vrot.lane.b32.xlu0 %v7054, 8
      %v8743 = vpop.permute.xlu0 %8742
      %8744 = vrot.lane.b32.xlu0 %v7057, 8
      %v8745 = vpop.permute.xlu0 %8744
      %8746 = vrot.lane.b32.xlu0 %v7101, 8
      %v8747 = vpop.permute.xlu0 %8746
      %8748 = vrot.lane.b32.xlu0 %v7104, 8
      %v8749 = vpop.permute.xlu0 %8748
      %8750 = vrot.lane.b32.xlu0 %v7148, 8
      %v8751 = vpop.permute.xlu0 %8750
      %8752 = vrot.lane.b32.xlu0 %v7151, 8
      %v8753 = vpop.permute.xlu0 %8752
      %8818 = vrot.lane.b32.xlu0 %v7195, 16
      %v8819 = vpop.permute.xlu0 %8818
      %8820 = vrot.lane.b32.xlu0 %v7198, 16
      %v8821 = vpop.permute.xlu0 %8820
      %8822 = vrot.lane.b32.xlu0 %v7242, 16
      %v8823 = vpop.permute.xlu0 %8822
      %8824 = vrot.lane.b32.xlu0 %v7245, 16
      %v8825 = vpop.permute.xlu0 %8824
      %8826 = vrot.lane.b32.xlu0 %v7289, 16
      %v8827 = vpop.permute.xlu0 %8826
      %8828 = vrot.lane.b32.xlu0 %v7292, 16
      %v8829 = vpop.permute.xlu0 %8828
      %8830 = vrot.lane.b32.xlu0 %v7336, 16
      %v8831 = vpop.permute.xlu0 %8830
      %8832 = vrot.lane.b32.xlu0 %v7339, 16
      %v8833 = vpop.permute.xlu0 %8832
      %8834 = vrot.lane.b32.xlu0 %v7383, 16
      %v8835 = vpop.permute.xlu0 %8834
      %8836 = vrot.lane.b32.xlu0 %v7386, 16
      %v8837 = vpop.permute.xlu0 %8836
      %8838 = vrot.lane.b32.xlu0 %v7430, 16
      %v8839 = vpop.permute.xlu0 %8838
      %8840 = vrot.lane.b32.xlu0 %v7433, 16
      %v8841 = vpop.permute.xlu0 %8840
      %8842 = vrot.lane.b32.xlu0 %v7477, 16
      %v8843 = vpop.permute.xlu0 %8842
      %8844 = vrot.lane.b32.xlu0 %v7480, 16
      %v8845 = vpop.permute.xlu0 %8844
      %8846 = vrot.lane.b32.xlu0 %v7524, 16
      %v8847 = vpop.permute.xlu0 %8846
      %8848 = vrot.lane.b32.xlu0 %v7527, 16
      %v8849 = vpop.permute.xlu0 %8848
      %8850 = vrot.lane.b32.xlu0 %v7571, 16
      %v8851 = vpop.permute.xlu0 %8850
      %8852 = vrot.lane.b32.xlu0 %v7574, 16
      %v8853 = vpop.permute.xlu0 %8852
      %8854 = vrot.lane.b32.xlu0 %v7618, 16
      %v8855 = vpop.permute.xlu0 %8854
      %8856 = vrot.lane.b32.xlu0 %v7621, 16
      %v8857 = vpop.permute.xlu0 %8856
      %8858 = vrot.lane.b32.xlu0 %v7665, 16
      %v8859 = vpop.permute.xlu0 %8858
      %8860 = vrot.lane.b32.xlu0 %v7668, 16
      %v8861 = vpop.permute.xlu0 %8860
      %8862 = vrot.lane.b32.xlu0 %v7712, 16
      %v8863 = vpop.permute.xlu0 %8862
      %8864 = vrot.lane.b32.xlu0 %v7715, 16
      %v8865 = vpop.permute.xlu0 %8864
      %8866 = vrot.lane.b32.xlu0 %v7759, 16
      %v8867 = vpop.permute.xlu0 %8866
      %8868 = vrot.lane.b32.xlu0 %v7762, 16
      %v8869 = vpop.permute.xlu0 %8868
      %8870 = vrot.lane.b32.xlu0 %v7806, 16
      %v8871 = vpop.permute.xlu0 %8870
      %8872 = vrot.lane.b32.xlu0 %v7809, 16
      %v8873 = vpop.permute.xlu0 %8872
      %8874 = vrot.lane.b32.xlu0 %v7853, 16
      %v8875 = vpop.permute.xlu0 %8874
      %8876 = vrot.lane.b32.xlu0 %v7856, 16
      %v8877 = vpop.permute.xlu0 %8876
      %8878 = vrot.lane.b32.xlu0 %v7900, 16
      %v8879 = vpop.permute.xlu0 %8878
      %8880 = vrot.lane.b32.xlu0 %v7903, 16
      %v8881 = vpop.permute.xlu0 %8880
      %8946 = vrot.lane.b32.xlu0 %v7947, 24
      %v8947 = vpop.permute.xlu0 %8946
      %8948 = vrot.lane.b32.xlu0 %v7950, 24
      %v8949 = vpop.permute.xlu0 %8948
      %8950 = vrot.lane.b32.xlu0 %v7994, 24
      %v8951 = vpop.permute.xlu0 %8950
      %8952 = vrot.lane.b32.xlu0 %v7997, 24
      %v8953 = vpop.permute.xlu0 %8952
      %8954 = vrot.lane.b32.xlu0 %v8041, 24
      %v8955 = vpop.permute.xlu0 %8954
      %8956 = vrot.lane.b32.xlu0 %v8044, 24
      %v8957 = vpop.permute.xlu0 %8956
      %8958 = vrot.lane.b32.xlu0 %v8088, 24
      %v8959 = vpop.permute.xlu0 %8958
      %8960 = vrot.lane.b32.xlu0 %v8091, 24
      %v8961 = vpop.permute.xlu0 %8960
      %8962 = vrot.lane.b32.xlu0 %v8135, 24
      %v8963 = vpop.permute.xlu0 %8962
      %8964 = vrot.lane.b32.xlu0 %v8138, 24
      %v8965 = vpop.permute.xlu0 %8964
      %8966 = vrot.lane.b32.xlu0 %v8182, 24
      %v8967 = vpop.permute.xlu0 %8966
      %8968 = vrot.lane.b32.xlu0 %v8185, 24
      %v8969 = vpop.permute.xlu0 %8968
      %8970 = vrot.lane.b32.xlu0 %v8229, 24
      %v8971 = vpop.permute.xlu0 %8970
      %8972 = vrot.lane.b32.xlu0 %v8232, 24
      %v8973 = vpop.permute.xlu0 %8972
      %8974 = vrot.lane.b32.xlu0 %v8276, 24
      %v8975 = vpop.permute.xlu0 %8974
      %8976 = vrot.lane.b32.xlu0 %v8279, 24
      %v8977 = vpop.permute.xlu0 %8976
      %8978 = vrot.lane.b32.xlu0 %v8323, 24
      %v8979 = vpop.permute.xlu0 %8978
      %8980 = vrot.lane.b32.xlu0 %v8326, 24
      %v8981 = vpop.permute.xlu0 %8980
      %8982 = vrot.lane.b32.xlu0 %v8370, 24
      %v8983 = vpop.permute.xlu0 %8982
      %8984 = vrot.lane.b32.xlu0 %v8373, 24
      %v8985 = vpop.permute.xlu0 %8984
      %8986 = vrot.lane.b32.xlu0 %v8417, 24
      %v8987 = vpop.permute.xlu0 %8986
      %8988 = vrot.lane.b32.xlu0 %v8420, 24
      %v8989 = vpop.permute.xlu0 %8988
      %8990 = vrot.lane.b32.xlu0 %v8464, 24
      %v8991 = vpop.permute.xlu0 %8990
      %8992 = vrot.lane.b32.xlu0 %v8467, 24
      %v8993 = vpop.permute.xlu0 %8992
      %8994 = vrot.lane.b32.xlu0 %v8511, 24
      %v8995 = vpop.permute.xlu0 %8994
      %8996 = vrot.lane.b32.xlu0 %v8514, 24
      %v8997 = vpop.permute.xlu0 %8996
      %8998 = vrot.lane.b32.xlu0 %v8558, 24
      %v8999 = vpop.permute.xlu0 %8998
      %9000 = vrot.lane.b32.xlu0 %v8561, 24
      %v9001 = vpop.permute.xlu0 %9000
      %9002 = vrot.lane.b32.xlu0 %v8605, 24
      %v9003 = vpop.permute.xlu0 %9002
      %9004 = vrot.lane.b32.xlu0 %v8608, 24
      %v9005 = vpop.permute.xlu0 %9004
      %9006 = vrot.lane.b32.xlu0 %v8652, 24
      %v9007 = vpop.permute.xlu0 %9006
      %9008 = vrot.lane.b32.xlu0 %v8655, 24
      %v9009 = vpop.permute.xlu0 %9008
      %v9042 = vsel %vm979, %v5691, %v8691
      %v9043 = vsel %vm979, %v5694, %v8693
      %v9044 = vsel %vm979, %v5738, %v8695
      %v9045 = vsel %vm979, %v5741, %v8697
      %v9046 = vsel %vm979, %v5785, %v8699
      %v9047 = vsel %vm979, %v5788, %v8701
      %v9048 = vsel %vm979, %v5832, %v8703
      %v9049 = vsel %vm979, %v5835, %v8705
      %v9050 = vsel %vm979, %v5879, %v8707
      %v9051 = vsel %vm979, %v5882, %v8709
      %v9052 = vsel %vm979, %v5926, %v8711
      %v9053 = vsel %vm979, %v5929, %v8713
      %v9054 = vsel %vm979, %v5973, %v8715
      %v9055 = vsel %vm979, %v5976, %v8717
      %v9056 = vsel %vm979, %v6020, %v8719
      %v9057 = vsel %vm979, %v6023, %v8721
      %v9058 = vsel %vm979, %v6067, %v8723
      %v9059 = vsel %vm979, %v6070, %v8725
      %v9060 = vsel %vm979, %v6114, %v8727
      %v9061 = vsel %vm979, %v6117, %v8729
      %v9062 = vsel %vm979, %v6161, %v8731
      %v9063 = vsel %vm979, %v6164, %v8733
      %v9064 = vsel %vm979, %v6208, %v8735
      %v9065 = vsel %vm979, %v6211, %v8737
      %v9066 = vsel %vm979, %v6255, %v8739
      %v9067 = vsel %vm979, %v6258, %v8741
      %v9068 = vsel %vm979, %v6302, %v8743
      %v9069 = vsel %vm979, %v6305, %v8745
      %v9070 = vsel %vm979, %v6349, %v8747
      %v9071 = vsel %vm979, %v6352, %v8749
      %v9072 = vsel %vm979, %v6396, %v8751
      %v9073 = vsel %vm979, %v6399, %v8753
      %v9074 = vsel %vm4177, %v9042, %v8819
      %v9075 = vsel %vm4177, %v9043, %v8821
      %v9076 = vsel %vm4177, %v9044, %v8823
      %v9077 = vsel %vm4177, %v9045, %v8825
      %v9078 = vsel %vm4177, %v9046, %v8827
      %v9079 = vsel %vm4177, %v9047, %v8829
      %v9080 = vsel %vm4177, %v9048, %v8831
      %v9081 = vsel %vm4177, %v9049, %v8833
      %v9082 = vsel %vm4177, %v9050, %v8835
      %v9083 = vsel %vm4177, %v9051, %v8837
      %v9084 = vsel %vm4177, %v9052, %v8839
      %v9085 = vsel %vm4177, %v9053, %v8841
      %v9086 = vsel %vm4177, %v9054, %v8843
      %v9087 = vsel %vm4177, %v9055, %v8845
      %v9088 = vsel %vm4177, %v9056, %v8847
      %v9089 = vsel %vm4177, %v9057, %v8849
      %v9090 = vsel %vm4177, %v9058, %v8851
      %v9091 = vsel %vm4177, %v9059, %v8853
      %v9092 = vsel %vm4177, %v9060, %v8855
      %v9093 = vsel %vm4177, %v9061, %v8857
      %v9094 = vsel %vm4177, %v9062, %v8859
      %v9095 = vsel %vm4177, %v9063, %v8861
      %v9096 = vsel %vm4177, %v9064, %v8863
      %v9097 = vsel %vm4177, %v9065, %v8865
      %v9098 = vsel %vm4177, %v9066, %v8867
      %v9099 = vsel %vm4177, %v9067, %v8869
      %v9100 = vsel %vm4177, %v9068, %v8871
      %v9101 = vsel %vm4177, %v9069, %v8873
      %v9102 = vsel %vm4177, %v9070, %v8875
      %v9103 = vsel %vm4177, %v9071, %v8877
      %v9104 = vsel %vm4177, %v9072, %v8879
      %v9105 = vsel %vm4177, %v9073, %v8881
      %vm9106 = vcmask 195584
      %v9107 = vsel %vm9106, %v9074, %v8947
      %v9108 = vsel %vm9106, %v9075, %v8949
      %v9109 = vsel %vm9106, %v9076, %v8951
      %v9110 = vsel %vm9106, %v9077, %v8953
      %v9111 = vsel %vm9106, %v9078, %v8955
      %v9112 = vsel %vm9106, %v9079, %v8957
      %v9113 = vsel %vm9106, %v9080, %v8959
      %v9114 = vsel %vm9106, %v9081, %v8961
      %v9115 = vsel %vm9106, %v9082, %v8963
      %v9116 = vsel %vm9106, %v9083, %v8965
      %v9117 = vsel %vm9106, %v9084, %v8967
      %v9118 = vsel %vm9106, %v9085, %v8969
      %v9119 = vsel %vm9106, %v9086, %v8971
      %v9120 = vsel %vm9106, %v9087, %v8973
      %v9121 = vsel %vm9106, %v9088, %v8975
      %v9122 = vsel %vm9106, %v9089, %v8977
      %v9123 = vsel %vm9106, %v9090, %v8979
      %v9124 = vsel %vm9106, %v9091, %v8981
      %v9125 = vsel %vm9106, %v9092, %v8983
      %v9126 = vsel %vm9106, %v9093, %v8985
      %v9127 = vsel %vm9106, %v9094, %v8987
      %v9128 = vsel %vm9106, %v9095, %v8989
      %v9129 = vsel %vm9106, %v9096, %v8991
      %v9130 = vsel %vm9106, %v9097, %v8993
      %v9131 = vsel %vm9106, %v9098, %v8995
      %v9132 = vsel %vm9106, %v9099, %v8997
      %v9133 = vsel %vm9106, %v9100, %v8999
      %v9134 = vsel %vm9106, %v9101, %v9001
      %v9135 = vsel %vm9106, %v9102, %v9003
      %v9136 = vsel %vm9106, %v9103, %v9005
      %v9137 = vsel %vm9106, %v9104, %v9007
      %v9138 = vsel %vm9106, %v9105, %v9009
      %v9139 = vpack.c.bf16 %v9108, %v9107
      %v9140 = vpack.c.bf16 %v9110, %v9109
      %v9141 = vpack.c.bf16 %v9112, %v9111
      %v9142 = vpack.c.bf16 %v9114, %v9113
      %v9143 = vpack.c.bf16 %v9116, %v9115
      %v9144 = vpack.c.bf16 %v9118, %v9117
      %v9145 = vpack.c.bf16 %v9120, %v9119
      %v9146 = vpack.c.bf16 %v9122, %v9121
      %v9147 = vpack.c.bf16 %v9124, %v9123
      %v9148 = vpack.c.bf16 %v9126, %v9125
      %v9149 = vpack.c.bf16 %v9128, %v9127
      %v9150 = vpack.c.bf16 %v9130, %v9129
      %v9151 = vpack.c.bf16 %v9132, %v9131
      %v9152 = vpack.c.bf16 %v9134, %v9133
      %v9153 = vpack.c.bf16 %v9136, %v9135
      %v9154 = vpack.c.bf16 %v9138, %v9137
      %v9155 = vld [vmem:[%s3] sm:$0xf]
      %v9156 = vld [vmem:[%s3 + $0x4] sm:$0xf]
      %v9157 = vld [vmem:[%s3 + $0x8] sm:$0xf]
      %v9158 = vld [vmem:[%s3 + $0xc] sm:$0xf]
      %v9159 = vlaneseq
      %v9160 = vshrl.u32 %v9159, 7
      %v9161 = vsub.s32 0, %v9160
      %v9162 = vrot.slane %v358, %v9161
      %v9167 = vunpack.c.l.b16 %v9155
      %v9168 = vunpack.c.l.b16 %v9156
      %v9169 = vunpack.c.l.b16 %v9157
      %v9170 = vunpack.c.l.b16 %v9158
      %v9171 = vpack.c.b16 %v9168, %v9167
      %v9172 = vpack.c.b16 %v9170, %v9169
      %v9176 = vsel %vm382, %v9139, 0
      %v9179 = vsel %vm382, %v9140, 0
      %v9182 = vsel %vm382, %v9141, 0
      %v9185 = vsel %vm382, %v9142, 0
      %v9188 = vsel %vm382, %v9143, 0
      %v9191 = vsel %vm382, %v9144, 0
      %v9194 = vsel %vm382, %v9145, 0
      %v9197 = vsel %vm382, %v9146, 0
      %v9200 = vsel %vm382, %v9147, 0
      %v9203 = vsel %vm382, %v9148, 0
      %v9206 = vsel %vm382, %v9149, 0
      %v9209 = vsel %vm382, %v9150, 0
      %v9212 = vsel %vm382, %v9151, 0
      %v9215 = vsel %vm382, %v9152, 0
      %v9218 = vsel %vm382, %v9153, 0
      %v9221 = vsel %vm382, %v9154, 0
      %9223 = vmatprep.subr.bf16.mxu0 0
      %9224 = vmatpush1.bf16.msra.mxu0 %v9171
      %9225 = vmatprep.subr.bf16.mxu0 0
      %9226 = vmatpush1.bf16.msra.mxu0 %v9172
      %9227 = vmatprep.subr.bf16.mxu0 0
      %9228 = vmatpush1.bf16.msra.mxu0 0
      %9229 = vmatprep.subr.bf16.mxu0 0
      %9230 = vmatpush1.bf16.msra.mxu0 0
      %9231 = vmatprep.subr.bf16.mxu0 0
      %9232 = vmatpush1.bf16.msra.mxu0 0
      %9233 = vmatprep.subr.bf16.mxu0 0
      %9234 = vmatpush1.bf16.msra.mxu0 0
      %9235 = vmatprep.subr.bf16.mxu0 0
      %9236 = vmatpush1.bf16.msra.mxu0 0
      %9237 = vmatprep.subr.bf16.mxu0 0
      %9238 = vmatpush1.bf16.msra.mxu0 0
      %9239 = vmatprep.subr.bf16.mxu0 0
      %9240 = vmatpush1.bf16.msra.mxu0 0
      %9241 = vmatprep.subr.bf16.mxu0 0
      %9242 = vmatpush1.bf16.msra.mxu0 0
      %9243 = vmatprep.subr.bf16.mxu0 0
      %9244 = vmatpush1.bf16.msra.mxu0 0
      %9245 = vmatprep.subr.bf16.mxu0 0
      %9246 = vmatpush1.bf16.msra.mxu0 0
      %9247 = vmatprep.subr.bf16.mxu0 0
      %9248 = vmatpush1.bf16.msra.mxu0 0
      %9249 = vmatprep.subr.bf16.mxu0 0
      %9250 = vmatpush1.bf16.msra.mxu0 0
      %9251 = vmatprep.subr.bf16.mxu0 0
      %9252 = vmatpush1.bf16.msra.mxu0 0
      %9253 = vmatprep.subr.bf16.mxu0 0
      %9254 = vmatpush1.bf16.msra.mxu0 0
      %9255 = vmatprep.mubr.bf16.mxu0 0
      %9256 = vmatmul.mubr.bf16.gmra.mrb[0].mxu0 %v9176
      %v9257 = vpop.f32.mrb[0].mxu0
      %v9258 = vadd.f32 %v9162, %v9257
      %v9259 = vpop.f32.mrb[0].mxu0
      %v9260 = vpop.f32.mrb[0].mxu0
      %v9261 = vadd.f32 %v9162, %v9260
      %v9262 = vpop.f32.mrb[0].mxu0
      %9263 = vmatprep.mubr.bf16.mxu0 0
      %9264 = vmatmul.mubr.bf16.gmra.mrb[0].mxu0 %v9179
      %v9265 = vpop.f32.mrb[0].mxu0
      %v9266 = vadd.f32 %v9162, %v9265
      %v9267 = vpop.f32.mrb[0].mxu0
      %v9268 = vpop.f32.mrb[0].mxu0
      %v9269 = vadd.f32 %v9162, %v9268
      %v9270 = vpop.f32.mrb[0].mxu0
      %9271 = vmatprep.mubr.bf16.mxu0 0
      %9272 = vmatmul.mubr.bf16.gmra.mrb[0].mxu0 %v9182
      %v9273 = vpop.f32.mrb[0].mxu0
      %v9274 = vadd.f32 %v9162, %v9273
      %v9275 = vpop.f32.mrb[0].mxu0
      %v9276 = vpop.f32.mrb[0].mxu0
      %v9277 = vadd.f32 %v9162, %v9276
      %v9278 = vpop.f32.mrb[0].mxu0
      %9279 = vmatprep.mubr.bf16.mxu0 0
      %9280 = vmatmul.mubr.bf16.gmra.mrb[0].mxu0 %v9185
      %v9281 = vpop.f32.mrb[0].mxu0
      %v9282 = vadd.f32 %v9162, %v9281
      %v9283 = vpop.f32.mrb[0].mxu0
      %v9284 = vpop.f32.mrb[0].mxu0
      %v9285 = vadd.f32 %v9162, %v9284
      %v9286 = vpop.f32.mrb[0].mxu0
      %9287 = vmatprep.mubr.bf16.mxu0 0
      %9288 = vmatmul.mubr.bf16.gmra.mrb[0].mxu0 %v9188
      %v9289 = vpop.f32.mrb[0].mxu0
      %v9290 = vadd.f32 %v9162, %v9289
      %v9291 = vpop.f32.mrb[0].mxu0
      %v9292 = vpop.f32.mrb[0].mxu0
      %v9293 = vadd.f32 %v9162, %v9292
      %v9294 = vpop.f32.mrb[0].mxu0
      %9295 = vmatprep.mubr.bf16.mxu0 0
      %9296 = vmatmul.mubr.bf16.gmra.mrb[0].mxu0 %v9191
      %v9297 = vpop.f32.mrb[0].mxu0
      %v9298 = vadd.f32 %v9162, %v9297
      %v9299 = vpop.f32.mrb[0].mxu0
      %v9300 = vpop.f32.mrb[0].mxu0
      %v9301 = vadd.f32 %v9162, %v9300
      %v9302 = vpop.f32.mrb[0].mxu0
      %9303 = vmatprep.mubr.bf16.mxu0 0
      %9304 = vmatmul.mubr.bf16.gmra.mrb[0].mxu0 %v9194
      %v9305 = vpop.f32.mrb[0].mxu0
      %v9306 = vadd.f32 %v9162, %v9305
      %v9307 = vpop.f32.mrb[0].mxu0
      %v9308 = vpop.f32.mrb[0].mxu0
      %v9309 = vadd.f32 %v9162, %v9308
      %v9310 = vpop.f32.mrb[0].mxu0
      %9311 = vmatprep.mubr.bf16.mxu0 0
      %9312 = vmatmul.mubr.bf16.gmra.mrb[0].mxu0 %v9197
      %v9313 = vpop.f32.mrb[0].mxu0
      %v9314 = vadd.f32 %v9162, %v9313
      %v9315 = vpop.f32.mrb[0].mxu0
      %v9316 = vpop.f32.mrb[0].mxu0
      %v9317 = vadd.f32 %v9162, %v9316
      %v9318 = vpop.f32.mrb[0].mxu0
      %9319 = vmatprep.mubr.bf16.mxu0 0
      %9320 = vmatmul.mubr.bf16.gmra.mrb[0].mxu0 %v9200
      %v9321 = vpop.f32.mrb[0].mxu0
      %v9322 = vadd.f32 %v9162, %v9321
      %v9323 = vpop.f32.mrb[0].mxu0
      %v9324 = vpop.f32.mrb[0].mxu0
      %v9325 = vadd.f32 %v9162, %v9324
      %v9326 = vpop.f32.mrb[0].mxu0
      %9327 = vmatprep.mubr.bf16.mxu0 0
      %9328 = vmatmul.mubr.bf16.gmra.mrb[0].mxu0 %v9203
      %v9329 = vpop.f32.mrb[0].mxu0
      %v9330 = vadd.f32 %v9162, %v9329
      %v9331 = vpop.f32.mrb[0].mxu0
      %v9332 = vpop.f32.mrb[0].mxu0
      %v9333 = vadd.f32 %v9162, %v9332
      %v9334 = vpop.f32.mrb[0].mxu0
      %9335 = vmatprep.mubr.bf16.mxu0 0
      %9336 = vmatmul.mubr.bf16.gmra.mrb[0].mxu0 %v9206
      %v9337 = vpop.f32.mrb[0].mxu0
      %v9338 = vadd.f32 %v9162, %v9337
      %v9339 = vpop.f32.mrb[0].mxu0
      %v9340 = vpop.f32.mrb[0].mxu0
      %v9341 = vadd.f32 %v9162, %v9340
      %v9342 = vpop.f32.mrb[0].mxu0
      %9343 = vmatprep.mubr.bf16.mxu0 0
      %9344 = vmatmul.mubr.bf16.gmra.mrb[0].mxu0 %v9209
      %v9345 = vpop.f32.mrb[0].mxu0
      %v9346 = vadd.f32 %v9162, %v9345
      %v9347 = vpop.f32.mrb[0].mxu0
      %v9348 = vpop.f32.mrb[0].mxu0
      %v9349 = vadd.f32 %v9162, %v9348
      %v9350 = vpop.f32.mrb[0].mxu0
      %9351 = vmatprep.mubr.bf16.mxu0 0
      %9352 = vmatmul.mubr.bf16.gmra.mrb[0].mxu0 %v9212
      %v9353 = vpop.f32.mrb[0].mxu0
      %v9354 = vadd.f32 %v9162, %v9353
      %v9355 = vpop.f32.mrb[0].mxu0
      %v9356 = vpop.f32.mrb[0].mxu0
      %v9357 = vadd.f32 %v9162, %v9356
      %v9358 = vpop.f32.mrb[0].mxu0
      %9359 = vmatprep.mubr.bf16.mxu0 0
      %9360 = vmatmul.mubr.bf16.gmra.mrb[0].mxu0 %v9215
      %v9361 = vpop.f32.mrb[0].mxu0
      %v9362 = vadd.f32 %v9162, %v9361
      %v9363 = vpop.f32.mrb[0].mxu0
      %v9364 = vpop.f32.mrb[0].mxu0
      %v9365 = vadd.f32 %v9162, %v9364
      %v9366 = vpop.f32.mrb[0].mxu0
      %9367 = vmatprep.mubr.bf16.mxu0 0
      %9368 = vmatmul.mubr.bf16.gmra.mrb[0].mxu0 %v9218
      %v9369 = vpop.f32.mrb[0].mxu0
      %v9370 = vadd.f32 %v9162, %v9369
      %v9371 = vpop.f32.mrb[0].mxu0
      %v9372 = vpop.f32.mrb[0].mxu0
      %v9373 = vadd.f32 %v9162, %v9372
      %v9374 = vpop.f32.mrb[0].mxu0
      %9375 = vmatprep.mubr.bf16.mxu0 0
      %9376 = vmatmul.mubr.bf16.gmra.mrb[0].mxu0 %v9221
      %v9377 = vpop.f32.mrb[0].mxu0
      %v9378 = vadd.f32 %v9162, %v9377
      %v9379 = vpop.f32.mrb[0].mxu0
      %v9380 = vpop.f32.mrb[0].mxu0
      %v9381 = vadd.f32 %v9162, %v9380
      %v9382 = vpop.f32.mrb[0].mxu0
      %9383 = vdwg.mxu0
      %v9384 = vadd.f32 %v310, %v9258
      %v9385 = vadd.f32 %v311, %v9261
      %v9386 = vadd.f32 %v312, %v9266
      %v9387 = vadd.f32 %v313, %v9269
      %v9388 = vadd.f32 %v314, %v9274
      %v9389 = vadd.f32 %v315, %v9277
      %v9390 = vadd.f32 %v316, %v9282
      %v9391 = vadd.f32 %v317, %v9285
      %v9392 = vadd.f32 %v318, %v9290
      %v9393 = vadd.f32 %v319, %v9293
      %v9394 = vadd.f32 %v320, %v9298
      %v9395 = vadd.f32 %v321, %v9301
      %v9396 = vadd.f32 %v322, %v9306
      %v9397 = vadd.f32 %v323, %v9309
      %v9398 = vadd.f32 %v324, %v9314
      %v9399 = vadd.f32 %v325, %v9317
      %v9400 = vadd.f32 %v326, %v9322
      %v9401 = vadd.f32 %v327, %v9325
      %v9402 = vadd.f32 %v328, %v9330
      %v9403 = vadd.f32 %v329, %v9333
      %v9404 = vadd.f32 %v330, %v9338
      %v9405 = vadd.f32 %v331, %v9341
      %v9406 = vadd.f32 %v332, %v9346
      %v9407 = vadd.f32 %v333, %v9349
      %v9408 = vadd.f32 %v334, %v9354
      %v9409 = vadd.f32 %v335, %v9357
      %v9410 = vadd.f32 %v336, %v9362
      %v9411 = vadd.f32 %v337, %v9365
      %v9412 = vadd.f32 %v338, %v9370
      %v9413 = vadd.f32 %v339, %v9373
      %v9414 = vadd.f32 %v340, %v9378
      %v9415 = vadd.f32 %v341, %v9381
      %v9416 = vsel %vm382, %v9384, 0.0
      %9417 = vadd.xlane.f32.xlu0 %v9416
      %v9418 = vpop.xlane.xlu0 %9417
      %v9419 = vsel %vm382, %v9385, 0.0
      %9420 = vadd.xlane.f32.xlu0 %v9419
      %v9421 = vpop.xlane.xlu0 %9420
      %v9422 = vsel %vm382, %v9386, 0.0
      %9423 = vadd.xlane.f32.xlu0 %v9422
      %v9424 = vpop.xlane.xlu0 %9423
      %v9425 = vsel %vm382, %v9387, 0.0
      %9426 = vadd.xlane.f32.xlu0 %v9425
      %v9427 = vpop.xlane.xlu0 %9426
      %v9428 = vsel %vm382, %v9388, 0.0
      %9429 = vadd.xlane.f32.xlu0 %v9428
      %v9430 = vpop.xlane.xlu0 %9429
      %v9431 = vsel %vm382, %v9389, 0.0
      %9432 = vadd.xlane.f32.xlu0 %v9431
      %v9433 = vpop.xlane.xlu0 %9432
      %v9434 = vsel %vm382, %v9390, 0.0
      %9435 = vadd.xlane.f32.xlu0 %v9434
      %v9436 = vpop.xlane.xlu0 %9435
      %v9437 = vsel %vm382, %v9391, 0.0
      %9438 = vadd.xlane.f32.xlu0 %v9437
      %v9439 = vpop.xlane.xlu0 %9438
      %v9440 = vsel %vm382, %v9392, 0.0
      %9441 = vadd.xlane.f32.xlu0 %v9440
      %v9442 = vpop.xlane.xlu0 %9441
      %v9443 = vsel %vm382, %v9393, 0.0
      %9444 = vadd.xlane.f32.xlu0 %v9443
      %v9445 = vpop.xlane.xlu0 %9444
      %v9446 = vsel %vm382, %v9394, 0.0
      %9447 = vadd.xlane.f32.xlu0 %v9446
      %v9448 = vpop.xlane.xlu0 %9447
      %v9449 = vsel %vm382, %v9395, 0.0
      %9450 = vadd.xlane.f32.xlu0 %v9449
      %v9451 = vpop.xlane.xlu0 %9450
      %v9452 = vsel %vm382, %v9396, 0.0
      %9453 = vadd.xlane.f32.xlu0 %v9452
      %v9454 = vpop.xlane.xlu0 %9453
      %v9455 = vsel %vm382, %v9397, 0.0
      %9456 = vadd.xlane.f32.xlu0 %v9455
      %v9457 = vpop.xlane.xlu0 %9456
      %v9458 = vsel %vm382, %v9398, 0.0
      %9459 = vadd.xlane.f32.xlu0 %v9458
      %v9460 = vpop.xlane.xlu0 %9459
      %v9461 = vsel %vm382, %v9399, 0.0
      %9462 = vadd.xlane.f32.xlu0 %v9461
      %v9463 = vpop.xlane.xlu0 %9462
      %v9464 = vsel %vm382, %v9400, 0.0
      %9465 = vadd.xlane.f32.xlu0 %v9464
      %v9466 = vpop.xlane.xlu0 %9465
      %v9467 = vsel %vm382, %v9401, 0.0
      %9468 = vadd.xlane.f32.xlu0 %v9467
      %v9469 = vpop.xlane.xlu0 %9468
      %v9470 = vsel %vm382, %v9402, 0.0
      %9471 = vadd.xlane.f32.xlu0 %v9470
      %v9472 = vpop.xlane.xlu0 %9471
      %v9473 = vsel %vm382, %v9403, 0.0
      %9474 = vadd.xlane.f32.xlu0 %v9473
      %v9475 = vpop.xlane.xlu0 %9474
      %v9476 = vsel %vm382, %v9404, 0.0
      %9477 = vadd.xlane.f32.xlu0 %v9476
      %v9478 = vpop.xlane.xlu0 %9477
      %v9479 = vsel %vm382, %v9405, 0.0
      %9480 = vadd.xlane.f32.xlu0 %v9479
      %v9481 = vpop.xlane.xlu0 %9480
      %v9482 = vsel %vm382, %v9406, 0.0
      %9483 = vadd.xlane.f32.xlu0 %v9482
      %v9484 = vpop.xlane.xlu0 %9483
      %v9485 = vsel %vm382, %v9407, 0.0
      %9486 = vadd.xlane.f32.xlu0 %v9485
      %v9487 = vpop.xlane.xlu0 %9486
      %v9488 = vsel %vm382, %v9408, 0.0
      %9489 = vadd.xlane.f32.xlu0 %v9488
      %v9490 = vpop.xlane.xlu0 %9489
      %v9491 = vsel %vm382, %v9409, 0.0
      %9492 = vadd.xlane.f32.xlu0 %v9491
      %v9493 = vpop.xlane.xlu0 %9492
      %v9494 = vsel %vm382, %v9410, 0.0
      %9495 = vadd.xlane.f32.xlu0 %v9494
      %v9496 = vpop.xlane.xlu0 %9495
      %v9497 = vsel %vm382, %v9411, 0.0
      %9498 = vadd.xlane.f32.xlu0 %v9497
      %v9499 = vpop.xlane.xlu0 %9498
      %v9500 = vsel %vm382, %v9412, 0.0
      %9501 = vadd.xlane.f32.xlu0 %v9500
      %v9502 = vpop.xlane.xlu0 %9501
      %v9503 = vsel %vm382, %v9413, 0.0
      %9504 = vadd.xlane.f32.xlu0 %v9503
      %v9505 = vpop.xlane.xlu0 %9504
      %v9506 = vsel %vm382, %v9414, 0.0
      %9507 = vadd.xlane.f32.xlu0 %v9506
      %v9508 = vpop.xlane.xlu0 %9507
      %v9509 = vsel %vm382, %v9415, 0.0
      %9510 = vadd.xlane.f32.xlu0 %v9509
      %v9511 = vpop.xlane.xlu0 %9510
      %v9512 = vrcp.pop 32.0
      %v9513 = vmul.f32 %v9418, %v9512
      %v9514 = vmul.f32 %v9421, %v9512
      %v9515 = vmul.f32 %v9424, %v9512
      %v9516 = vmul.f32 %v9427, %v9512
      %v9517 = vmul.f32 %v9430, %v9512
      %v9518 = vmul.f32 %v9433, %v9512
      %v9519 = vmul.f32 %v9436, %v9512
      %v9520 = vmul.f32 %v9439, %v9512
      %v9521 = vmul.f32 %v9442, %v9512
      %v9522 = vmul.f32 %v9445, %v9512
      %v9523 = vmul.f32 %v9448, %v9512
      %v9524 = vmul.f32 %v9451, %v9512
      %v9525 = vmul.f32 %v9454, %v9512
      %v9526 = vmul.f32 %v9457, %v9512
      %v9527 = vmul.f32 %v9460, %v9512
      %v9528 = vmul.f32 %v9463, %v9512
      %v9529 = vmul.f32 %v9466, %v9512
      %v9530 = vmul.f32 %v9469, %v9512
      %v9531 = vmul.f32 %v9472, %v9512
      %v9532 = vmul.f32 %v9475, %v9512
      %v9533 = vmul.f32 %v9478, %v9512
      %v9534 = vmul.f32 %v9481, %v9512
      %v9535 = vmul.f32 %v9484, %v9512
      %v9536 = vmul.f32 %v9487, %v9512
      %v9537 = vmul.f32 %v9490, %v9512
      %v9538 = vmul.f32 %v9493, %v9512
      %v9539 = vmul.f32 %v9496, %v9512
      %v9540 = vmul.f32 %v9499, %v9512
      %v9541 = vmul.f32 %v9502, %v9512
      %v9542 = vmul.f32 %v9505, %v9512
      %v9543 = vmul.f32 %v9508, %v9512
      %v9544 = vmul.f32 %v9511, %v9512
      %v9545 = vsub.f32 %v9384, %v9513
      %v9546 = vsub.f32 %v9385, %v9514
      %v9547 = vsub.f32 %v9386, %v9515
      %v9548 = vsub.f32 %v9387, %v9516
      %v9549 = vsub.f32 %v9388, %v9517
      %v9550 = vsub.f32 %v9389, %v9518
      %v9551 = vsub.f32 %v9390, %v9519
      %v9552 = vsub.f32 %v9391, %v9520
      %v9553 = vsub.f32 %v9392, %v9521
      %v9554 = vsub.f32 %v9393, %v9522
      %v9555 = vsub.f32 %v9394, %v9523
      %v9556 = vsub.f32 %v9395, %v9524
      %v9557 = vsub.f32 %v9396, %v9525
      %v9558 = vsub.f32 %v9397, %v9526
      %v9559 = vsub.f32 %v9398, %v9527
      %v9560 = vsub.f32 %v9399, %v9528
      %v9561 = vsub.f32 %v9400, %v9529
      %v9562 = vsub.f32 %v9401, %v9530
      %v9563 = vsub.f32 %v9402, %v9531
      %v9564 = vsub.f32 %v9403, %v9532
      %v9565 = vsub.f32 %v9404, %v9533
      %v9566 = vsub.f32 %v9405, %v9534
      %v9567 = vsub.f32 %v9406, %v9535
      %v9568 = vsub.f32 %v9407, %v9536
      %v9569 = vsub.f32 %v9408, %v9537
      %v9570 = vsub.f32 %v9409, %v9538
      %v9571 = vsub.f32 %v9410, %v9539
      %v9572 = vsub.f32 %v9411, %v9540
      %v9573 = vsub.f32 %v9412, %v9541
      %v9574 = vsub.f32 %v9413, %v9542
      %v9575 = vsub.f32 %v9414, %v9543
      %v9576 = vsub.f32 %v9415, %v9544
      %v9577 = vmul.f32 %v9545, %v9545
      %v9578 = vmul.f32 %v9546, %v9546
      %v9579 = vmul.f32 %v9547, %v9547
      %v9580 = vmul.f32 %v9548, %v9548
      %v9581 = vmul.f32 %v9549, %v9549
      %v9582 = vmul.f32 %v9550, %v9550
      %v9583 = vmul.f32 %v9551, %v9551
      %v9584 = vmul.f32 %v9552, %v9552
      %v9585 = vmul.f32 %v9553, %v9553
      %v9586 = vmul.f32 %v9554, %v9554
      %v9587 = vmul.f32 %v9555, %v9555
      %v9588 = vmul.f32 %v9556, %v9556
      %v9589 = vmul.f32 %v9557, %v9557
      %v9590 = vmul.f32 %v9558, %v9558
      %v9591 = vmul.f32 %v9559, %v9559
      %v9592 = vmul.f32 %v9560, %v9560
      %v9593 = vmul.f32 %v9561, %v9561
      %v9594 = vmul.f32 %v9562, %v9562
      %v9595 = vmul.f32 %v9563, %v9563
      %v9596 = vmul.f32 %v9564, %v9564
      %v9597 = vmul.f32 %v9565, %v9565
      %v9598 = vmul.f32 %v9566, %v9566
      %v9599 = vmul.f32 %v9567, %v9567
      %v9600 = vmul.f32 %v9568, %v9568
      %v9601 = vmul.f32 %v9569, %v9569
      %v9602 = vmul.f32 %v9570, %v9570
      %v9603 = vmul.f32 %v9571, %v9571
      %v9604 = vmul.f32 %v9572, %v9572
      %v9605 = vmul.f32 %v9573, %v9573
      %v9606 = vmul.f32 %v9574, %v9574
      %v9607 = vmul.f32 %v9575, %v9575
      %v9608 = vmul.f32 %v9576, %v9576
      %v9609 = vsel %vm382, %v9577, 0.0
      %9610 = vadd.xlane.f32.xlu0 %v9609
      %v9611 = vpop.xlane.xlu0 %9610
      %v9612 = vsel %vm382, %v9578, 0.0
      %9613 = vadd.xlane.f32.xlu0 %v9612
      %v9614 = vpop.xlane.xlu0 %9613
      %v9615 = vsel %vm382, %v9579, 0.0
      %9616 = vadd.xlane.f32.xlu0 %v9615
      %v9617 = vpop.xlane.xlu0 %9616
      %v9618 = vsel %vm382, %v9580, 0.0
      %9619 = vadd.xlane.f32.xlu0 %v9618
      %v9620 = vpop.xlane.xlu0 %9619
      %v9621 = vsel %vm382, %v9581, 0.0
      %9622 = vadd.xlane.f32.xlu0 %v9621
      %v9623 = vpop.xlane.xlu0 %9622
      %v9624 = vsel %vm382, %v9582, 0.0
      %9625 = vadd.xlane.f32.xlu0 %v9624
      %v9626 = vpop.xlane.xlu0 %9625
      %v9627 = vsel %vm382, %v9583, 0.0
      %9628 = vadd.xlane.f32.xlu0 %v9627
      %v9629 = vpop.xlane.xlu0 %9628
      %v9630 = vsel %vm382, %v9584, 0.0
      %9631 = vadd.xlane.f32.xlu0 %v9630
      %v9632 = vpop.xlane.xlu0 %9631
      %v9633 = vsel %vm382, %v9585, 0.0
      %9634 = vadd.xlane.f32.xlu0 %v9633
      %v9635 = vpop.xlane.xlu0 %9634
      %v9636 = vsel %vm382, %v9586, 0.0
      %9637 = vadd.xlane.f32.xlu0 %v9636
      %v9638 = vpop.xlane.xlu0 %9637
      %v9639 = vsel %vm382, %v9587, 0.0
      %9640 = vadd.xlane.f32.xlu0 %v9639
      %v9641 = vpop.xlane.xlu0 %9640
      %v9642 = vsel %vm382, %v9588, 0.0
      %9643 = vadd.xlane.f32.xlu0 %v9642
      %v9644 = vpop.xlane.xlu0 %9643
      %v9645 = vsel %vm382, %v9589, 0.0
      %9646 = vadd.xlane.f32.xlu0 %v9645
      %v9647 = vpop.xlane.xlu0 %9646
      %v9648 = vsel %vm382, %v9590, 0.0
      %9649 = vadd.xlane.f32.xlu0 %v9648
      %v9650 = vpop.xlane.xlu0 %9649
      %v9651 = vsel %vm382, %v9591, 0.0
      %9652 = vadd.xlane.f32.xlu0 %v9651
      %v9653 = vpop.xlane.xlu0 %9652
      %v9654 = vsel %vm382, %v9592, 0.0
      %9655 = vadd.xlane.f32.xlu0 %v9654
      %v9656 = vpop.xlane.xlu0 %9655
      %v9657 = vsel %vm382, %v9593, 0.0
      %9658 = vadd.xlane.f32.xlu0 %v9657
      %v9659 = vpop.xlane.xlu0 %9658
      %v9660 = vsel %vm382, %v9594, 0.0
      %9661 = vadd.xlane.f32.xlu0 %v9660
      %v9662 = vpop.xlane.xlu0 %9661
      %v9663 = vsel %vm382, %v9595, 0.0
      %9664 = vadd.xlane.f32.xlu0 %v9663
      %v9665 = vpop.xlane.xlu0 %9664
      %v9666 = vsel %vm382, %v9596, 0.0
      %9667 = vadd.xlane.f32.xlu0 %v9666
      %v9668 = vpop.xlane.xlu0 %9667
      %v9669 = vsel %vm382, %v9597, 0.0
      %9670 = vadd.xlane.f32.xlu0 %v9669
      %v9671 = vpop.xlane.xlu0 %9670
      %v9672 = vsel %vm382, %v9598, 0.0
      %9673 = vadd.xlane.f32.xlu0 %v9672
      %v9674 = vpop.xlane.xlu0 %9673
      %v9675 = vsel %vm382, %v9599, 0.0
      %9676 = vadd.xlane.f32.xlu0 %v9675
      %v9677 = vpop.xlane.xlu0 %9676
      %v9678 = vsel %vm382, %v9600, 0.0
      %9679 = vadd.xlane.f32.xlu0 %v9678
      %v9680 = vpop.xlane.xlu0 %9679
      %v9681 = vsel %vm382, %v9601, 0.0
      %9682 = vadd.xlane.f32.xlu0 %v9681
      %v9683 = vpop.xlane.xlu0 %9682
      %v9684 = vsel %vm382, %v9602, 0.0
      %9685 = vadd.xlane.f32.xlu0 %v9684
      %v9686 = vpop.xlane.xlu0 %9685
      %v9687 = vsel %vm382, %v9603, 0.0
      %9688 = vadd.xlane.f32.xlu0 %v9687
      %v9689 = vpop.xlane.xlu0 %9688
      %v9690 = vsel %vm382, %v9604, 0.0
      %9691 = vadd.xlane.f32.xlu0 %v9690
      %v9692 = vpop.xlane.xlu0 %9691
      %v9693 = vsel %vm382, %v9605, 0.0
      %9694 = vadd.xlane.f32.xlu0 %v9693
      %v9695 = vpop.xlane.xlu0 %9694
      %v9696 = vsel %vm382, %v9606, 0.0
      %9697 = vadd.xlane.f32.xlu0 %v9696
      %v9698 = vpop.xlane.xlu0 %9697
      %v9699 = vsel %vm382, %v9607, 0.0
      %9700 = vadd.xlane.f32.xlu0 %v9699
      %v9701 = vpop.xlane.xlu0 %9700
      %v9702 = vsel %vm382, %v9608, 0.0
      %9703 = vadd.xlane.f32.xlu0 %v9702
      %v9704 = vpop.xlane.xlu0 %9703
      %v9705 = vmul.f32 %v9611, %v9512
      %v9706 = vmul.f32 %v9614, %v9512
      %v9707 = vmul.f32 %v9617, %v9512
      %v9708 = vmul.f32 %v9620, %v9512
      %v9709 = vmul.f32 %v9623, %v9512
      %v9710 = vmul.f32 %v9626, %v9512
      %v9711 = vmul.f32 %v9629, %v9512
      %v9712 = vmul.f32 %v9632, %v9512
      %v9713 = vmul.f32 %v9635, %v9512
      %v9714 = vmul.f32 %v9638, %v9512
      %v9715 = vmul.f32 %v9641, %v9512
      %v9716 = vmul.f32 %v9644, %v9512
      %v9717 = vmul.f32 %v9647, %v9512
      %v9718 = vmul.f32 %v9650, %v9512
      %v9719 = vmul.f32 %v9653, %v9512
      %v9720 = vmul.f32 %v9656, %v9512
      %v9721 = vmul.f32 %v9659, %v9512
      %v9722 = vmul.f32 %v9662, %v9512
      %v9723 = vmul.f32 %v9665, %v9512
      %v9724 = vmul.f32 %v9668, %v9512
      %v9725 = vmul.f32 %v9671, %v9512
      %v9726 = vmul.f32 %v9674, %v9512
      %v9727 = vmul.f32 %v9677, %v9512
      %v9728 = vmul.f32 %v9680, %v9512
      %v9729 = vmul.f32 %v9683, %v9512
      %v9730 = vmul.f32 %v9686, %v9512
      %v9731 = vmul.f32 %v9689, %v9512
      %v9732 = vmul.f32 %v9692, %v9512
      %v9733 = vmul.f32 %v9695, %v9512
      %v9734 = vmul.f32 %v9698, %v9512
      %v9735 = vmul.f32 %v9701, %v9512
      %v9736 = vmul.f32 %v9704, %v9512
      %v9737 = vadd.f32 %v9705, 1e-05
      %v9738 = vadd.f32 %v9706, 1e-05
      %v9739 = vadd.f32 %v9707, 1e-05
      %v9740 = vadd.f32 %v9708, 1e-05
      %v9741 = vadd.f32 %v9709, 1e-05
      %v9742 = vadd.f32 %v9710, 1e-05
      %v9743 = vadd.f32 %v9711, 1e-05
      %v9744 = vadd.f32 %v9712, 1e-05
      %v9745 = vadd.f32 %v9713, 1e-05
      %v9746 = vadd.f32 %v9714, 1e-05
      %v9747 = vadd.f32 %v9715, 1e-05
      %v9748 = vadd.f32 %v9716, 1e-05
      %v9749 = vadd.f32 %v9717, 1e-05
      %v9750 = vadd.f32 %v9718, 1e-05
      %v9751 = vadd.f32 %v9719, 1e-05
      %v9752 = vadd.f32 %v9720, 1e-05
      %v9753 = vadd.f32 %v9721, 1e-05
      %v9754 = vadd.f32 %v9722, 1e-05
      %v9755 = vadd.f32 %v9723, 1e-05
      %v9756 = vadd.f32 %v9724, 1e-05
      %v9757 = vadd.f32 %v9725, 1e-05
      %v9758 = vadd.f32 %v9726, 1e-05
      %v9759 = vadd.f32 %v9727, 1e-05
      %v9760 = vadd.f32 %v9728, 1e-05
      %v9761 = vadd.f32 %v9729, 1e-05
      %v9762 = vadd.f32 %v9730, 1e-05
      %v9763 = vadd.f32 %v9731, 1e-05
      %v9764 = vadd.f32 %v9732, 1e-05
      %v9765 = vadd.f32 %v9733, 1e-05
      %v9766 = vadd.f32 %v9734, 1e-05
      %v9767 = vadd.f32 %v9735, 1e-05
      %v9768 = vadd.f32 %v9736, 1e-05
      %v9769 = vrsqrt.pop %v9737
      %v9770 = vrsqrt.pop %v9738
      %v9771 = vrsqrt.pop %v9739
      %v9772 = vrsqrt.pop %v9740
      %v9773 = vrsqrt.pop %v9741
      %v9774 = vrsqrt.pop %v9742
      %v9775 = vrsqrt.pop %v9743
      %v9776 = vrsqrt.pop %v9744
      %v9777 = vrsqrt.pop %v9745
      %v9778 = vrsqrt.pop %v9746
      %v9779 = vrsqrt.pop %v9747
      %v9780 = vrsqrt.pop %v9748
      %v9781 = vrsqrt.pop %v9749
      %v9782 = vrsqrt.pop %v9750
      %v9783 = vrsqrt.pop %v9751
      %v9784 = vrsqrt.pop %v9752
      %v9785 = vrsqrt.pop %v9753
      %v9786 = vrsqrt.pop %v9754
      %v9787 = vrsqrt.pop %v9755
      %v9788 = vrsqrt.pop %v9756
      %v9789 = vrsqrt.pop %v9757
      %v9790 = vrsqrt.pop %v9758
      %v9791 = vrsqrt.pop %v9759
      %v9792 = vrsqrt.pop %v9760
      %v9793 = vrsqrt.pop %v9761
      %v9794 = vrsqrt.pop %v9762
      %v9795 = vrsqrt.pop %v9763
      %v9796 = vrsqrt.pop %v9764
      %v9797 = vrsqrt.pop %v9765
      %v9798 = vrsqrt.pop %v9766
      %v9799 = vrsqrt.pop %v9767
      %v9800 = vrsqrt.pop %v9768
      %v9801 = vmul.f32 %v9545, %v9769
      %v9802 = vmul.f32 %v9546, %v9770
      %v9803 = vmul.f32 %v9547, %v9771
      %v9804 = vmul.f32 %v9548, %v9772
      %v9805 = vmul.f32 %v9549, %v9773
      %v9806 = vmul.f32 %v9550, %v9774
      %v9807 = vmul.f32 %v9551, %v9775
      %v9808 = vmul.f32 %v9552, %v9776
      %v9809 = vmul.f32 %v9553, %v9777
      %v9810 = vmul.f32 %v9554, %v9778
      %v9811 = vmul.f32 %v9555, %v9779
      %v9812 = vmul.f32 %v9556, %v9780
      %v9813 = vmul.f32 %v9557, %v9781
      %v9814 = vmul.f32 %v9558, %v9782
      %v9815 = vmul.f32 %v9559, %v9783
      %v9816 = vmul.f32 %v9560, %v9784
      %v9817 = vmul.f32 %v9561, %v9785
      %v9818 = vmul.f32 %v9562, %v9786
      %v9819 = vmul.f32 %v9563, %v9787
      %v9820 = vmul.f32 %v9564, %v9788
      %v9821 = vmul.f32 %v9565, %v9789
      %v9822 = vmul.f32 %v9566, %v9790
      %v9823 = vmul.f32 %v9567, %v9791
      %v9824 = vmul.f32 %v9568, %v9792
      %v9825 = vmul.f32 %v9569, %v9793
      %v9826 = vmul.f32 %v9570, %v9794
      %v9827 = vmul.f32 %v9571, %v9795
      %v9828 = vmul.f32 %v9572, %v9796
      %v9829 = vmul.f32 %v9573, %v9797
      %v9830 = vmul.f32 %v9574, %v9798
      %v9831 = vmul.f32 %v9575, %v9799
      %v9832 = vmul.f32 %v9576, %v9800
      %v9833 = vlaneseq
      %v9834 = vshrl.u32 %v9833, 7
      %v9835 = vsub.s32 2, %v9834
      %v9836 = vrot.slane %v358, %v9835
      %v9837 = vmul.f32 %v9801, %v9836
      %v9838 = vmul.f32 %v9802, %v9836
      %v9839 = vmul.f32 %v9803, %v9836
      %v9840 = vmul.f32 %v9804, %v9836
      %v9841 = vmul.f32 %v9805, %v9836
      %v9842 = vmul.f32 %v9806, %v9836
      %v9843 = vmul.f32 %v9807, %v9836
      %v9844 = vmul.f32 %v9808, %v9836
      %v9845 = vmul.f32 %v9809, %v9836
      %v9846 = vmul.f32 %v9810, %v9836
      %v9847 = vmul.f32 %v9811, %v9836
      %v9848 = vmul.f32 %v9812, %v9836
      %v9849 = vmul.f32 %v9813, %v9836
      %v9850 = vmul.f32 %v9814, %v9836
      %v9851 = vmul.f32 %v9815, %v9836
      %v9852 = vmul.f32 %v9816, %v9836
      %v9853 = vmul.f32 %v9817, %v9836
      %v9854 = vmul.f32 %v9818, %v9836
      %v9855 = vmul.f32 %v9819, %v9836
      %v9856 = vmul.f32 %v9820, %v9836
      %v9857 = vmul.f32 %v9821, %v9836
      %v9858 = vmul.f32 %v9822, %v9836
      %v9859 = vmul.f32 %v9823, %v9836
      %v9860 = vmul.f32 %v9824, %v9836
      %v9861 = vmul.f32 %v9825, %v9836
      %v9862 = vmul.f32 %v9826, %v9836
      %v9863 = vmul.f32 %v9827, %v9836
      %v9864 = vmul.f32 %v9828, %v9836
      %v9865 = vmul.f32 %v9829, %v9836
      %v9866 = vmul.f32 %v9830, %v9836
      %v9867 = vmul.f32 %v9831, %v9836
      %v9868 = vmul.f32 %v9832, %v9836
      %v9869 = vlaneseq
      %v9870 = vshrl.u32 %v9869, 7
      %v9871 = vsub.s32 3, %v9870
      %v9872 = vrot.slane %v358, %v9871
      %v9873 = vadd.f32 %v9837, %v9872
      %v9874 = vadd.f32 %v9838, %v9872
      %v9875 = vadd.f32 %v9839, %v9872
      %v9876 = vadd.f32 %v9840, %v9872
      %v9877 = vadd.f32 %v9841, %v9872
      %v9878 = vadd.f32 %v9842, %v9872
      %v9879 = vadd.f32 %v9843, %v9872
      %v9880 = vadd.f32 %v9844, %v9872
      %v9881 = vadd.f32 %v9845, %v9872
      %v9882 = vadd.f32 %v9846, %v9872
      %v9883 = vadd.f32 %v9847, %v9872
      %v9884 = vadd.f32 %v9848, %v9872
      %v9885 = vadd.f32 %v9849, %v9872
      %v9886 = vadd.f32 %v9850, %v9872
      %v9887 = vadd.f32 %v9851, %v9872
      %v9888 = vadd.f32 %v9852, %v9872
      %v9889 = vadd.f32 %v9853, %v9872
      %v9890 = vadd.f32 %v9854, %v9872
      %v9891 = vadd.f32 %v9855, %v9872
      %v9892 = vadd.f32 %v9856, %v9872
      %v9893 = vadd.f32 %v9857, %v9872
      %v9894 = vadd.f32 %v9858, %v9872
      %v9895 = vadd.f32 %v9859, %v9872
      %v9896 = vadd.f32 %v9860, %v9872
      %v9897 = vadd.f32 %v9861, %v9872
      %v9898 = vadd.f32 %v9862, %v9872
      %v9899 = vadd.f32 %v9863, %v9872
      %v9900 = vadd.f32 %v9864, %v9872
      %v9901 = vadd.f32 %v9865, %v9872
      %v9902 = vadd.f32 %v9866, %v9872
      %v9903 = vadd.f32 %v9867, %v9872
      %v9904 = vadd.f32 %v9868, %v9872
      %v9905 = vpack.c.bf16 %v9874, %v9873
      %v9906 = vpack.c.bf16 %v9876, %v9875
      %v9907 = vpack.c.bf16 %v9878, %v9877
      %v9908 = vpack.c.bf16 %v9880, %v9879
      %v9909 = vpack.c.bf16 %v9882, %v9881
      %v9910 = vpack.c.bf16 %v9884, %v9883
      %v9911 = vpack.c.bf16 %v9886, %v9885
      %v9912 = vpack.c.bf16 %v9888, %v9887
      %v9913 = vpack.c.bf16 %v9890, %v9889
      %v9914 = vpack.c.bf16 %v9892, %v9891
      %v9915 = vpack.c.bf16 %v9894, %v9893
      %v9916 = vpack.c.bf16 %v9896, %v9895
      %v9917 = vpack.c.bf16 %v9898, %v9897
      %v9918 = vpack.c.bf16 %v9900, %v9899
      %v9919 = vpack.c.bf16 %v9902, %v9901
      %v9920 = vpack.c.bf16 %v9904, %v9903
      %v9921 = vld [vmem:[%s4] sm:$0xf]
      %v9922 = vld [vmem:[%s4 + $0x4] sm:$0xf]
      %v9923 = vld [vmem:[%s4 + $0x8] sm:$0xf]
      %v9924 = vld [vmem:[%s4 + $0xc] sm:$0xf]
      %v9925 = vld [vmem:[%s5] sm:$0x1]
      %v9927 = vlaneseq
      %v9928 = vshrl.u32 %v9927, 7
      %v9929 = vsub.s32 0, %v9928
      %v9930 = vrot.slane %v9925, %v9929
      %v9936 = vunpack.c.l.b16 %v9921
      %v9937 = vunpack.c.l.b16 %v9922
      %v9938 = vunpack.c.l.b16 %v9923
      %v9939 = vunpack.c.l.b16 %v9924
      %v9940 = vpack.c.b16 %v9937, %v9936
      %v9941 = vpack.c.b16 %v9939, %v9938
      %v9945 = vsel %vm382, %v9905, 0
      %v9948 = vsel %vm382, %v9906, 0
      %v9951 = vsel %vm382, %v9907, 0
      %v9954 = vsel %vm382, %v9908, 0
      %v9957 = vsel %vm382, %v9909, 0
      %v9960 = vsel %vm382, %v9910, 0
      %v9963 = vsel %vm382, %v9911, 0
      %v9966 = vsel %vm382, %v9912, 0
      %v9969 = vsel %vm382, %v9913, 0
      %v9972 = vsel %vm382, %v9914, 0
      %v9975 = vsel %vm382, %v9915, 0
      %v9978 = vsel %vm382, %v9916, 0
      %v9981 = vsel %vm382, %v9917, 0
      %v9984 = vsel %vm382, %v9918, 0
      %v9987 = vsel %vm382, %v9919, 0
      %v9990 = vsel %vm382, %v9920, 0
      %9992 = vmatprep.subr.bf16.mxu0 0
      %9993 = vmatpush1.bf16.msra.mxu0 %v9940
      %9994 = vmatprep.subr.bf16.mxu0 0
      %9995 = vmatpush1.bf16.msra.mxu0 %v9941
      %9996 = vmatprep.subr.bf16.mxu0 0
      %9997 = vmatpush1.bf16.msra.mxu0 0
      %9998 = vmatprep.subr.bf16.mxu0 0
      %9999 = vmatpush1.bf16.msra.mxu0 0
      %10000 = vmatprep.subr.bf16.mxu0 0
      %10001 = vmatpush1.bf16.msra.mxu0 0
      %10002 = vmatprep.subr.bf16.mxu0 0
      %10003 = vmatpush1.bf16.msra.mxu0 0
      %10004 = vmatprep.subr.bf16.mxu0 0
      %10005 = vmatpush1.bf16.msra.mxu0 0
      %10006 = vmatprep.subr.bf16.mxu0 0
      %10007 = vmatpush1.bf16.msra.mxu0 0
      %10008 = vmatprep.subr.bf16.mxu0 0
      %10009 = vmatpush1.bf16.msra.mxu0 0
      %10010 = vmatprep.subr.bf16.mxu0 0
      %10011 = vmatpush1.bf16.msra.mxu0 0
      %10012 = vmatprep.subr.bf16.mxu0 0
      %10013 = vmatpush1.bf16.msra.mxu0 0
      %10014 = vmatprep.subr.bf16.mxu0 0
      %10015 = vmatpush1.bf16.msra.mxu0 0
      %10016 = vmatprep.subr.bf16.mxu0 0
      %10017 = vmatpush1.bf16.msra.mxu0 0
      %10018 = vmatprep.subr.bf16.mxu0 0
      %10019 = vmatpush1.bf16.msra.mxu0 0
      %10020 = vmatprep.subr.bf16.mxu0 0
      %10021 = vmatpush1.bf16.msra.mxu0 0
      %10022 = vmatprep.subr.bf16.mxu0 0
      %10023 = vmatpush1.bf16.msra.mxu0 0
      %10024 = vmatprep.mubr.bf16.mxu0 0
      %10025 = vmatmul.mubr.bf16.gmra.mrb[0].mxu0 %v9945
      %v10026 = vpop.f32.mrb[0].mxu0
      %v10027 = vadd.f32 %v9930, %v10026
      %v10028 = vpop.f32.mrb[0].mxu0
      %v10029 = vpop.f32.mrb[0].mxu0
      %v10030 = vadd.f32 %v9930, %v10029
      %v10031 = vpop.f32.mrb[0].mxu0
      %10032 = vmatprep.mubr.bf16.mxu0 0
      %10033 = vmatmul.mubr.bf16.gmra.mrb[0].mxu0 %v9948
      %v10034 = vpop.f32.mrb[0].mxu0
      %v10035 = vadd.f32 %v9930, %v10034
      %v10036 = vpop.f32.mrb[0].mxu0
      %v10037 = vpop.f32.mrb[0].mxu0
      %v10038 = vadd.f32 %v9930, %v10037
      %v10039 = vpop.f32.mrb[0].mxu0
      %10040 = vmatprep.mubr.bf16.mxu0 0
      %10041 = vmatmul.mubr.bf16.gmra.mrb[0].mxu0 %v9951
      %v10042 = vpop.f32.mrb[0].mxu0
      %v10043 = vadd.f32 %v9930, %v10042
      %v10044 = vpop.f32.mrb[0].mxu0
      %v10045 = vpop.f32.mrb[0].mxu0
      %v10046 = vadd.f32 %v9930, %v10045
      %v10047 = vpop.f32.mrb[0].mxu0
      %10048 = vmatprep.mubr.bf16.mxu0 0
      %10049 = vmatmul.mubr.bf16.gmra.mrb[0].mxu0 %v9954
      %v10050 = vpop.f32.mrb[0].mxu0
      %v10051 = vadd.f32 %v9930, %v10050
      %v10052 = vpop.f32.mrb[0].mxu0
      %v10053 = vpop.f32.mrb[0].mxu0
      %v10054 = vadd.f32 %v9930, %v10053
      %v10055 = vpop.f32.mrb[0].mxu0
      %10056 = vmatprep.mubr.bf16.mxu0 0
      %10057 = vmatmul.mubr.bf16.gmra.mrb[0].mxu0 %v9957
      %v10058 = vpop.f32.mrb[0].mxu0
      %v10059 = vadd.f32 %v9930, %v10058
      %v10060 = vpop.f32.mrb[0].mxu0
      %v10061 = vpop.f32.mrb[0].mxu0
      %v10062 = vadd.f32 %v9930, %v10061
      %v10063 = vpop.f32.mrb[0].mxu0
      %10064 = vmatprep.mubr.bf16.mxu0 0
      %10065 = vmatmul.mubr.bf16.gmra.mrb[0].mxu0 %v9960
      %v10066 = vpop.f32.mrb[0].mxu0
      %v10067 = vadd.f32 %v9930, %v10066
      %v10068 = vpop.f32.mrb[0].mxu0
      %v10069 = vpop.f32.mrb[0].mxu0
      %v10070 = vadd.f32 %v9930, %v10069
      %v10071 = vpop.f32.mrb[0].mxu0
      %10072 = vmatprep.mubr.bf16.mxu0 0
      %10073 = vmatmul.mubr.bf16.gmra.mrb[0].mxu0 %v9963
      %v10074 = vpop.f32.mrb[0].mxu0
      %v10075 = vadd.f32 %v9930, %v10074
      %v10076 = vpop.f32.mrb[0].mxu0
      %v10077 = vpop.f32.mrb[0].mxu0
      %v10078 = vadd.f32 %v9930, %v10077
      %v10079 = vpop.f32.mrb[0].mxu0
      %10080 = vmatprep.mubr.bf16.mxu0 0
      %10081 = vmatmul.mubr.bf16.gmra.mrb[0].mxu0 %v9966
      %v10082 = vpop.f32.mrb[0].mxu0
      %v10083 = vadd.f32 %v9930, %v10082
      %v10084 = vpop.f32.mrb[0].mxu0
      %v10085 = vpop.f32.mrb[0].mxu0
      %v10086 = vadd.f32 %v9930, %v10085
      %v10087 = vpop.f32.mrb[0].mxu0
      %10088 = vmatprep.mubr.bf16.mxu0 0
      %10089 = vmatmul.mubr.bf16.gmra.mrb[0].mxu0 %v9969
      %v10090 = vpop.f32.mrb[0].mxu0
      %v10091 = vadd.f32 %v9930, %v10090
      %v10092 = vpop.f32.mrb[0].mxu0
      %v10093 = vpop.f32.mrb[0].mxu0
      %v10094 = vadd.f32 %v9930, %v10093
      %v10095 = vpop.f32.mrb[0].mxu0
      %10096 = vmatprep.mubr.bf16.mxu0 0
      %10097 = vmatmul.mubr.bf16.gmra.mrb[0].mxu0 %v9972
      %v10098 = vpop.f32.mrb[0].mxu0
      %v10099 = vadd.f32 %v9930, %v10098
      %v10100 = vpop.f32.mrb[0].mxu0
      %v10101 = vpop.f32.mrb[0].mxu0
      %v10102 = vadd.f32 %v9930, %v10101
      %v10103 = vpop.f32.mrb[0].mxu0
      %10104 = vmatprep.mubr.bf16.mxu0 0
      %10105 = vmatmul.mubr.bf16.gmra.mrb[0].mxu0 %v9975
      %v10106 = vpop.f32.mrb[0].mxu0
      %v10107 = vadd.f32 %v9930, %v10106
      %v10108 = vpop.f32.mrb[0].mxu0
      %v10109 = vpop.f32.mrb[0].mxu0
      %v10110 = vadd.f32 %v9930, %v10109
      %v10111 = vpop.f32.mrb[0].mxu0
      %10112 = vmatprep.mubr.bf16.mxu0 0
      %10113 = vmatmul.mubr.bf16.gmra.mrb[0].mxu0 %v9978
      %v10114 = vpop.f32.mrb[0].mxu0
      %v10115 = vadd.f32 %v9930, %v10114
      %v10116 = vpop.f32.mrb[0].mxu0
      %v10117 = vpop.f32.mrb[0].mxu0
      %v10118 = vadd.f32 %v9930, %v10117
      %v10119 = vpop.f32.mrb[0].mxu0
      %10120 = vmatprep.mubr.bf16.mxu0 0
      %10121 = vmatmul.mubr.bf16.gmra.mrb[0].mxu0 %v9981
      %v10122 = vpop.f32.mrb[0].mxu0
      %v10123 = vadd.f32 %v9930, %v10122
      %v10124 = vpop.f32.mrb[0].mxu0
      %v10125 = vpop.f32.mrb[0].mxu0
      %v10126 = vadd.f32 %v9930, %v10125
      %v10127 = vpop.f32.mrb[0].mxu0
      %10128 = vmatprep.mubr.bf16.mxu0 0
      %10129 = vmatmul.mubr.bf16.gmra.mrb[0].mxu0 %v9984
      %v10130 = vpop.f32.mrb[0].mxu0
      %v10131 = vadd.f32 %v9930, %v10130
      %v10132 = vpop.f32.mrb[0].mxu0
      %v10133 = vpop.f32.mrb[0].mxu0
      %v10134 = vadd.f32 %v9930, %v10133
      %v10135 = vpop.f32.mrb[0].mxu0
      %10136 = vmatprep.mubr.bf16.mxu0 0
      %10137 = vmatmul.mubr.bf16.gmra.mrb[0].mxu0 %v9987
      %v10138 = vpop.f32.mrb[0].mxu0
      %v10139 = vadd.f32 %v9930, %v10138
      %v10140 = vpop.f32.mrb[0].mxu0
      %v10141 = vpop.f32.mrb[0].mxu0
      %v10142 = vadd.f32 %v9930, %v10141
      %v10143 = vpop.f32.mrb[0].mxu0
      %10144 = vmatprep.mubr.bf16.mxu0 0
      %10145 = vmatmul.mubr.bf16.gmra.mrb[0].mxu0 %v9990
      %v10146 = vpop.f32.mrb[0].mxu0
      %v10147 = vadd.f32 %v9930, %v10146
      %v10148 = vpop.f32.mrb[0].mxu0
      %v10149 = vpop.f32.mrb[0].mxu0
      %v10150 = vadd.f32 %v9930, %v10149
      %v10151 = vpop.f32.mrb[0].mxu0
      %10152 = vdwg.mxu0
      %v10153 = vmax.f32 %v10027, 0.0
      %v10154 = vmax.f32 %v10030, 0.0
      %v10155 = vmax.f32 %v10035, 0.0
      %v10156 = vmax.f32 %v10038, 0.0
      %v10157 = vmax.f32 %v10043, 0.0
      %v10158 = vmax.f32 %v10046, 0.0
      %v10159 = vmax.f32 %v10051, 0.0
      %v10160 = vmax.f32 %v10054, 0.0
      %v10161 = vmax.f32 %v10059, 0.0
      %v10162 = vmax.f32 %v10062, 0.0
      %v10163 = vmax.f32 %v10067, 0.0
      %v10164 = vmax.f32 %v10070, 0.0
      %v10165 = vmax.f32 %v10075, 0.0
      %v10166 = vmax.f32 %v10078, 0.0
      %v10167 = vmax.f32 %v10083, 0.0
      %v10168 = vmax.f32 %v10086, 0.0
      %v10169 = vmax.f32 %v10091, 0.0
      %v10170 = vmax.f32 %v10094, 0.0
      %v10171 = vmax.f32 %v10099, 0.0
      %v10172 = vmax.f32 %v10102, 0.0
      %v10173 = vmax.f32 %v10107, 0.0
      %v10174 = vmax.f32 %v10110, 0.0
      %v10175 = vmax.f32 %v10115, 0.0
      %v10176 = vmax.f32 %v10118, 0.0
      %v10177 = vmax.f32 %v10123, 0.0
      %v10178 = vmax.f32 %v10126, 0.0
      %v10179 = vmax.f32 %v10131, 0.0
      %v10180 = vmax.f32 %v10134, 0.0
      %v10181 = vmax.f32 %v10139, 0.0
      %v10182 = vmax.f32 %v10142, 0.0
      %v10183 = vmax.f32 %v10147, 0.0
      %v10184 = vmax.f32 %v10150, 0.0
      %v10185 = vpack.c.bf16 %v10154, %v10153
      %v10186 = vpack.c.bf16 %v10156, %v10155
      %v10187 = vpack.c.bf16 %v10158, %v10157
      %v10188 = vpack.c.bf16 %v10160, %v10159
      %v10189 = vpack.c.bf16 %v10162, %v10161
      %v10190 = vpack.c.bf16 %v10164, %v10163
      %v10191 = vpack.c.bf16 %v10166, %v10165
      %v10192 = vpack.c.bf16 %v10168, %v10167
      %v10193 = vpack.c.bf16 %v10170, %v10169
      %v10194 = vpack.c.bf16 %v10172, %v10171
      %v10195 = vpack.c.bf16 %v10174, %v10173
      %v10196 = vpack.c.bf16 %v10176, %v10175
      %v10197 = vpack.c.bf16 %v10178, %v10177
      %v10198 = vpack.c.bf16 %v10180, %v10179
      %v10199 = vpack.c.bf16 %v10182, %v10181
      %v10200 = vpack.c.bf16 %v10184, %v10183
      %v10201 = vld [vmem:[%s6] sm:$0xf]
      %v10202 = vld [vmem:[%s6 + $0x4] sm:$0xf]
      %v10203 = vld [vmem:[%s6 + $0x8] sm:$0xf]
      %v10204 = vld [vmem:[%s6 + $0xc] sm:$0xf]
      %v10205 = vld [vmem:[%s6 + $0x10] sm:$0xf]
      %v10206 = vld [vmem:[%s6 + $0x14] sm:$0xf]
      %v10207 = vld [vmem:[%s6 + $0x18] sm:$0xf]
      %v10208 = vld [vmem:[%s6 + $0x1c] sm:$0xf]
      %v10209 = vlaneseq
      %v10210 = vshrl.u32 %v10209, 7
      %v10211 = vsub.s32 1, %v10210
      %v10212 = vrot.slane %v358, %v10211
      %v10221 = vunpack.c.l.b16 %v10201
      %v10222 = vunpack.c.l.b16 %v10202
      %v10223 = vunpack.c.l.b16 %v10203
      %v10224 = vunpack.c.l.b16 %v10204
      %v10225 = vunpack.c.l.b16 %v10205
      %v10226 = vunpack.c.l.b16 %v10206
      %v10227 = vunpack.c.l.b16 %v10207
      %v10228 = vunpack.c.l.b16 %v10208
      %v10229 = vpack.c.b16 %v10222, %v10221
      %v10230 = vpack.c.b16 %v10224, %v10223
      %v10231 = vpack.c.b16 %v10226, %v10225
      %v10232 = vpack.c.b16 %v10228, %v10227
      %vm10237 = vcmask 523264
      %v10239 = vsel %vm10237, %v10185, 0
      %v10242 = vsel %vm10237, %v10186, 0
      %v10245 = vsel %vm10237, %v10187, 0
      %v10248 = vsel %vm10237, %v10188, 0
      %v10251 = vsel %vm10237, %v10189, 0
      %v10254 = vsel %vm10237, %v10190, 0
      %v10257 = vsel %vm10237, %v10191, 0
      %v10260 = vsel %vm10237, %v10192, 0
      %v10263 = vsel %vm10237, %v10193, 0
      %v10266 = vsel %vm10237, %v10194, 0
      %v10269 = vsel %vm10237, %v10195, 0
      %v10272 = vsel %vm10237, %v10196, 0
      %v10275 = vsel %vm10237, %v10197, 0
      %v10278 = vsel %vm10237, %v10198, 0
      %v10281 = vsel %vm10237, %v10199, 0
      %v10284 = vsel %vm10237, %v10200, 0
      %10286 = vmatprep.subr.bf16.mxu0 0
      %10287 = vmatpush1.bf16.msra.mxu0 %v10229
      %10288 = vmatprep.subr.bf16.mxu0 0
      %10289 = vmatpush1.bf16.msra.mxu0 %v10230
      %10290 = vmatprep.subr.bf16.mxu0 0
      %10291 = vmatpush1.bf16.msra.mxu0 %v10231
      %10292 = vmatprep.subr.bf16.mxu0 0
      %10293 = vmatpush1.bf16.msra.mxu0 %v10232
      %10294 = vmatprep.subr.bf16.mxu0 0
      %10295 = vmatpush1.bf16.msra.mxu0 0
      %10296 = vmatprep.subr.bf16.mxu0 0
      %10297 = vmatpush1.bf16.msra.mxu0 0
      %10298 = vmatprep.subr.bf16.mxu0 0
      %10299 = vmatpush1.bf16.msra.mxu0 0
      %10300 = vmatprep.subr.bf16.mxu0 0
      %10301 = vmatpush1.bf16.msra.mxu0 0
      %10302 = vmatprep.subr.bf16.mxu0 0
      %10303 = vmatpush1.bf16.msra.mxu0 0
      %10304 = vmatprep.subr.bf16.mxu0 0
      %10305 = vmatpush1.bf16.msra.mxu0 0
      %10306 = vmatprep.subr.bf16.mxu0 0
      %10307 = vmatpush1.bf16.msra.mxu0 0
      %10308 = vmatprep.subr.bf16.mxu0 0
      %10309 = vmatpush1.bf16.msra.mxu0 0
      %10310 = vmatprep.subr.bf16.mxu0 0
      %10311 = vmatpush1.bf16.msra.mxu0 0
      %10312 = vmatprep.subr.bf16.mxu0 0
      %10313 = vmatpush1.bf16.msra.mxu0 0
      %10314 = vmatprep.subr.bf16.mxu0 0
      %10315 = vmatpush1.bf16.msra.mxu0 0
      %10316 = vmatprep.subr.bf16.mxu0 0
      %10317 = vmatpush1.bf16.msra.mxu0 0
      %10318 = vmatprep.mubr.bf16.mxu0 0
      %10319 = vmatmul.mubr.bf16.gmra.mrb[0].mxu0 %v10239
      %v10320 = vpop.f32.mrb[0].mxu0
      %v10321 = vadd.f32 %v10212, %v10320
      %v10322 = vpop.f32.mrb[0].mxu0
      %v10323 = vpop.f32.mrb[0].mxu0
      %v10324 = vadd.f32 %v10212, %v10323
      %v10325 = vpop.f32.mrb[0].mxu0
      %10326 = vmatprep.mubr.bf16.mxu0 0
      %10327 = vmatmul.mubr.bf16.gmra.mrb[0].mxu0 %v10242
      %v10328 = vpop.f32.mrb[0].mxu0
      %v10329 = vadd.f32 %v10212, %v10328
      %v10330 = vpop.f32.mrb[0].mxu0
      %v10331 = vpop.f32.mrb[0].mxu0
      %v10332 = vadd.f32 %v10212, %v10331
      %v10333 = vpop.f32.mrb[0].mxu0
      %10334 = vmatprep.mubr.bf16.mxu0 0
      %10335 = vmatmul.mubr.bf16.gmra.mrb[0].mxu0 %v10245
      %v10336 = vpop.f32.mrb[0].mxu0
      %v10337 = vadd.f32 %v10212, %v10336
      %v10338 = vpop.f32.mrb[0].mxu0
      %v10339 = vpop.f32.mrb[0].mxu0
      %v10340 = vadd.f32 %v10212, %v10339
      %v10341 = vpop.f32.mrb[0].mxu0
      %10342 = vmatprep.mubr.bf16.mxu0 0
      %10343 = vmatmul.mubr.bf16.gmra.mrb[0].mxu0 %v10248
      %v10344 = vpop.f32.mrb[0].mxu0
      %v10345 = vadd.f32 %v10212, %v10344
      %v10346 = vpop.f32.mrb[0].mxu0
      %v10347 = vpop.f32.mrb[0].mxu0
      %v10348 = vadd.f32 %v10212, %v10347
      %v10349 = vpop.f32.mrb[0].mxu0
      %10350 = vmatprep.mubr.bf16.mxu0 0
      %10351 = vmatmul.mubr.bf16.gmra.mrb[0].mxu0 %v10251
      %v10352 = vpop.f32.mrb[0].mxu0
      %v10353 = vadd.f32 %v10212, %v10352
      %v10354 = vpop.f32.mrb[0].mxu0
      %v10355 = vpop.f32.mrb[0].mxu0
      %v10356 = vadd.f32 %v10212, %v10355
      %v10357 = vpop.f32.mrb[0].mxu0
      %10358 = vmatprep.mubr.bf16.mxu0 0
      %10359 = vmatmul.mubr.bf16.gmra.mrb[0].mxu0 %v10254
      %v10360 = vpop.f32.mrb[0].mxu0
      %v10361 = vadd.f32 %v10212, %v10360
      %v10362 = vpop.f32.mrb[0].mxu0
      %v10363 = vpop.f32.mrb[0].mxu0
      %v10364 = vadd.f32 %v10212, %v10363
      %v10365 = vpop.f32.mrb[0].mxu0
      %10366 = vmatprep.mubr.bf16.mxu0 0
      %10367 = vmatmul.mubr.bf16.gmra.mrb[0].mxu0 %v10257
      %v10368 = vpop.f32.mrb[0].mxu0
      %v10369 = vadd.f32 %v10212, %v10368
      %v10370 = vpop.f32.mrb[0].mxu0
      %v10371 = vpop.f32.mrb[0].mxu0
      %v10372 = vadd.f32 %v10212, %v10371
      %v10373 = vpop.f32.mrb[0].mxu0
      %10374 = vmatprep.mubr.bf16.mxu0 0
      %10375 = vmatmul.mubr.bf16.gmra.mrb[0].mxu0 %v10260
      %v10376 = vpop.f32.mrb[0].mxu0
      %v10377 = vadd.f32 %v10212, %v10376
      %v10378 = vpop.f32.mrb[0].mxu0
      %v10379 = vpop.f32.mrb[0].mxu0
      %v10380 = vadd.f32 %v10212, %v10379
      %v10381 = vpop.f32.mrb[0].mxu0
      %10382 = vmatprep.mubr.bf16.mxu0 0
      %10383 = vmatmul.mubr.bf16.gmra.mrb[0].mxu0 %v10263
      %v10384 = vpop.f32.mrb[0].mxu0
      %v10385 = vadd.f32 %v10212, %v10384
      %v10386 = vpop.f32.mrb[0].mxu0
      %v10387 = vpop.f32.mrb[0].mxu0
      %v10388 = vadd.f32 %v10212, %v10387
      %v10389 = vpop.f32.mrb[0].mxu0
      %10390 = vmatprep.mubr.bf16.mxu0 0
      %10391 = vmatmul.mubr.bf16.gmra.mrb[0].mxu0 %v10266
      %v10392 = vpop.f32.mrb[0].mxu0
      %v10393 = vadd.f32 %v10212, %v10392
      %v10394 = vpop.f32.mrb[0].mxu0
      %v10395 = vpop.f32.mrb[0].mxu0
      %v10396 = vadd.f32 %v10212, %v10395
      %v10397 = vpop.f32.mrb[0].mxu0
      %10398 = vmatprep.mubr.bf16.mxu0 0
      %10399 = vmatmul.mubr.bf16.gmra.mrb[0].mxu0 %v10269
      %v10400 = vpop.f32.mrb[0].mxu0
      %v10401 = vadd.f32 %v10212, %v10400
      %v10402 = vpop.f32.mrb[0].mxu0
      %v10403 = vpop.f32.mrb[0].mxu0
      %v10404 = vadd.f32 %v10212, %v10403
      %v10405 = vpop.f32.mrb[0].mxu0
      %10406 = vmatprep.mubr.bf16.mxu0 0
      %10407 = vmatmul.mubr.bf16.gmra.mrb[0].mxu0 %v10272
      %v10408 = vpop.f32.mrb[0].mxu0
      %v10409 = vadd.f32 %v10212, %v10408
      %v10410 = vpop.f32.mrb[0].mxu0
      %v10411 = vpop.f32.mrb[0].mxu0
      %v10412 = vadd.f32 %v10212, %v10411
      %v10413 = vpop.f32.mrb[0].mxu0
      %10414 = vmatprep.mubr.bf16.mxu0 0
      %10415 = vmatmul.mubr.bf16.gmra.mrb[0].mxu0 %v10275
      %v10416 = vpop.f32.mrb[0].mxu0
      %v10417 = vadd.f32 %v10212, %v10416
      %v10418 = vpop.f32.mrb[0].mxu0
      %v10419 = vpop.f32.mrb[0].mxu0
      %v10420 = vadd.f32 %v10212, %v10419
      %v10421 = vpop.f32.mrb[0].mxu0
      %10422 = vmatprep.mubr.bf16.mxu0 0
      %10423 = vmatmul.mubr.bf16.gmra.mrb[0].mxu0 %v10278
      %v10424 = vpop.f32.mrb[0].mxu0
      %v10425 = vadd.f32 %v10212, %v10424
      %v10426 = vpop.f32.mrb[0].mxu0
      %v10427 = vpop.f32.mrb[0].mxu0
      %v10428 = vadd.f32 %v10212, %v10427
      %v10429 = vpop.f32.mrb[0].mxu0
      %10430 = vmatprep.mubr.bf16.mxu0 0
      %10431 = vmatmul.mubr.bf16.gmra.mrb[0].mxu0 %v10281
      %v10432 = vpop.f32.mrb[0].mxu0
      %v10433 = vadd.f32 %v10212, %v10432
      %v10434 = vpop.f32.mrb[0].mxu0
      %v10435 = vpop.f32.mrb[0].mxu0
      %v10436 = vadd.f32 %v10212, %v10435
      %v10437 = vpop.f32.mrb[0].mxu0
      %10438 = vmatprep.mubr.bf16.mxu0 0
      %10439 = vmatmul.mubr.bf16.gmra.mrb[0].mxu0 %v10284
      %v10440 = vpop.f32.mrb[0].mxu0
      %v10441 = vadd.f32 %v10212, %v10440
      %v10442 = vpop.f32.mrb[0].mxu0
      %v10443 = vpop.f32.mrb[0].mxu0
      %v10444 = vadd.f32 %v10212, %v10443
      %v10445 = vpop.f32.mrb[0].mxu0
      %10446 = vdwg.mxu0
      %v10447 = vadd.f32 %v9873, %v10321
      %v10448 = vadd.f32 %v9874, %v10324
      %v10449 = vadd.f32 %v9875, %v10329
      %v10450 = vadd.f32 %v9876, %v10332
      %v10451 = vadd.f32 %v9877, %v10337
      %v10452 = vadd.f32 %v9878, %v10340
      %v10453 = vadd.f32 %v9879, %v10345
      %v10454 = vadd.f32 %v9880, %v10348
      %v10455 = vadd.f32 %v9881, %v10353
      %v10456 = vadd.f32 %v9882, %v10356
      %v10457 = vadd.f32 %v9883, %v10361
      %v10458 = vadd.f32 %v9884, %v10364
      %v10459 = vadd.f32 %v9885, %v10369
      %v10460 = vadd.f32 %v9886, %v10372
      %v10461 = vadd.f32 %v9887, %v10377
      %v10462 = vadd.f32 %v9888, %v10380
      %v10463 = vadd.f32 %v9889, %v10385
      %v10464 = vadd.f32 %v9890, %v10388
      %v10465 = vadd.f32 %v9891, %v10393
      %v10466 = vadd.f32 %v9892, %v10396
      %v10467 = vadd.f32 %v9893, %v10401
      %v10468 = vadd.f32 %v9894, %v10404
      %v10469 = vadd.f32 %v9895, %v10409
      %v10470 = vadd.f32 %v9896, %v10412
      %v10471 = vadd.f32 %v9897, %v10417
      %v10472 = vadd.f32 %v9898, %v10420
      %v10473 = vadd.f32 %v9899, %v10425
      %v10474 = vadd.f32 %v9900, %v10428
      %v10475 = vadd.f32 %v9901, %v10433
      %v10476 = vadd.f32 %v9902, %v10436
      %v10477 = vadd.f32 %v9903, %v10441
      %v10478 = vadd.f32 %v9904, %v10444
      %v10479 = vsel %vm382, %v10447, 0.0
      %10480 = vadd.xlane.f32.xlu0 %v10479
      %v10481 = vpop.xlane.xlu0 %10480
      %v10482 = vsel %vm382, %v10448, 0.0
      %10483 = vadd.xlane.f32.xlu0 %v10482
      %v10484 = vpop.xlane.xlu0 %10483
      %v10485 = vsel %vm382, %v10449, 0.0
      %10486 = vadd.xlane.f32.xlu0 %v10485
      %v10487 = vpop.xlane.xlu0 %10486
      %v10488 = vsel %vm382, %v10450, 0.0
      %10489 = vadd.xlane.f32.xlu0 %v10488
      %v10490 = vpop.xlane.xlu0 %10489
      %v10491 = vsel %vm382, %v10451, 0.0
      %10492 = vadd.xlane.f32.xlu0 %v10491
      %v10493 = vpop.xlane.xlu0 %10492
      %v10494 = vsel %vm382, %v10452, 0.0
      %10495 = vadd.xlane.f32.xlu0 %v10494
      %v10496 = vpop.xlane.xlu0 %10495
      %v10497 = vsel %vm382, %v10453, 0.0
      %10498 = vadd.xlane.f32.xlu0 %v10497
      %v10499 = vpop.xlane.xlu0 %10498
      %v10500 = vsel %vm382, %v10454, 0.0
      %10501 = vadd.xlane.f32.xlu0 %v10500
      %v10502 = vpop.xlane.xlu0 %10501
      %v10503 = vsel %vm382, %v10455, 0.0
      %10504 = vadd.xlane.f32.xlu0 %v10503
      %v10505 = vpop.xlane.xlu0 %10504
      %v10506 = vsel %vm382, %v10456, 0.0
      %10507 = vadd.xlane.f32.xlu0 %v10506
      %v10508 = vpop.xlane.xlu0 %10507
      %v10509 = vsel %vm382, %v10457, 0.0
      %10510 = vadd.xlane.f32.xlu0 %v10509
      %v10511 = vpop.xlane.xlu0 %10510
      %v10512 = vsel %vm382, %v10458, 0.0
      %10513 = vadd.xlane.f32.xlu0 %v10512
      %v10514 = vpop.xlane.xlu0 %10513
      %v10515 = vsel %vm382, %v10459, 0.0
      %10516 = vadd.xlane.f32.xlu0 %v10515
      %v10517 = vpop.xlane.xlu0 %10516
      %v10518 = vsel %vm382, %v10460, 0.0
      %10519 = vadd.xlane.f32.xlu0 %v10518
      %v10520 = vpop.xlane.xlu0 %10519
      %v10521 = vsel %vm382, %v10461, 0.0
      %10522 = vadd.xlane.f32.xlu0 %v10521
      %v10523 = vpop.xlane.xlu0 %10522
      %v10524 = vsel %vm382, %v10462, 0.0
      %10525 = vadd.xlane.f32.xlu0 %v10524
      %v10526 = vpop.xlane.xlu0 %10525
      %v10527 = vsel %vm382, %v10463, 0.0
      %10528 = vadd.xlane.f32.xlu0 %v10527
      %v10529 = vpop.xlane.xlu0 %10528
      %v10530 = vsel %vm382, %v10464, 0.0
      %10531 = vadd.xlane.f32.xlu0 %v10530
      %v10532 = vpop.xlane.xlu0 %10531
      %v10533 = vsel %vm382, %v10465, 0.0
      %10534 = vadd.xlane.f32.xlu0 %v10533
      %v10535 = vpop.xlane.xlu0 %10534
      %v10536 = vsel %vm382, %v10466, 0.0
      %10537 = vadd.xlane.f32.xlu0 %v10536
      %v10538 = vpop.xlane.xlu0 %10537
      %v10539 = vsel %vm382, %v10467, 0.0
      %10540 = vadd.xlane.f32.xlu0 %v10539
      %v10541 = vpop.xlane.xlu0 %10540
      %v10542 = vsel %vm382, %v10468, 0.0
      %10543 = vadd.xlane.f32.xlu0 %v10542
      %v10544 = vpop.xlane.xlu0 %10543
      %v10545 = vsel %vm382, %v10469, 0.0
      %10546 = vadd.xlane.f32.xlu0 %v10545
      %v10547 = vpop.xlane.xlu0 %10546
      %v10548 = vsel %vm382, %v10470, 0.0
      %10549 = vadd.xlane.f32.xlu0 %v10548
      %v10550 = vpop.xlane.xlu0 %10549
      %v10551 = vsel %vm382, %v10471, 0.0
      %10552 = vadd.xlane.f32.xlu0 %v10551
      %v10553 = vpop.xlane.xlu0 %10552
      %v10554 = vsel %vm382, %v10472, 0.0
      %10555 = vadd.xlane.f32.xlu0 %v10554
      %v10556 = vpop.xlane.xlu0 %10555
      %v10557 = vsel %vm382, %v10473, 0.0
      %10558 = vadd.xlane.f32.xlu0 %v10557
      %v10559 = vpop.xlane.xlu0 %10558
      %v10560 = vsel %vm382, %v10474, 0.0
      %10561 = vadd.xlane.f32.xlu0 %v10560
      %v10562 = vpop.xlane.xlu0 %10561
      %v10563 = vsel %vm382, %v10475, 0.0
      %10564 = vadd.xlane.f32.xlu0 %v10563
      %v10565 = vpop.xlane.xlu0 %10564
      %v10566 = vsel %vm382, %v10476, 0.0
      %10567 = vadd.xlane.f32.xlu0 %v10566
      %v10568 = vpop.xlane.xlu0 %10567
      %v10569 = vsel %vm382, %v10477, 0.0
      %10570 = vadd.xlane.f32.xlu0 %v10569
      %v10571 = vpop.xlane.xlu0 %10570
      %v10572 = vsel %vm382, %v10478, 0.0
      %10573 = vadd.xlane.f32.xlu0 %v10572
      %v10574 = vpop.xlane.xlu0 %10573
      %v10575 = vmul.f32 %v10481, %v9512
      %v10576 = vmul.f32 %v10484, %v9512
      %v10577 = vmul.f32 %v10487, %v9512
      %v10578 = vmul.f32 %v10490, %v9512
      %v10579 = vmul.f32 %v10493, %v9512
      %v10580 = vmul.f32 %v10496, %v9512
      %v10581 = vmul.f32 %v10499, %v9512
      %v10582 = vmul.f32 %v10502, %v9512
      %v10583 = vmul.f32 %v10505, %v9512
      %v10584 = vmul.f32 %v10508, %v9512
      %v10585 = vmul.f32 %v10511, %v9512
      %v10586 = vmul.f32 %v10514, %v9512
      %v10587 = vmul.f32 %v10517, %v9512
      %v10588 = vmul.f32 %v10520, %v9512
      %v10589 = vmul.f32 %v10523, %v9512
      %v10590 = vmul.f32 %v10526, %v9512
      %v10591 = vmul.f32 %v10529, %v9512
      %v10592 = vmul.f32 %v10532, %v9512
      %v10593 = vmul.f32 %v10535, %v9512
      %v10594 = vmul.f32 %v10538, %v9512
      %v10595 = vmul.f32 %v10541, %v9512
      %v10596 = vmul.f32 %v10544, %v9512
      %v10597 = vmul.f32 %v10547, %v9512
      %v10598 = vmul.f32 %v10550, %v9512
      %v10599 = vmul.f32 %v10553, %v9512
      %v10600 = vmul.f32 %v10556, %v9512
      %v10601 = vmul.f32 %v10559, %v9512
      %v10602 = vmul.f32 %v10562, %v9512
      %v10603 = vmul.f32 %v10565, %v9512
      %v10604 = vmul.f32 %v10568, %v9512
      %v10605 = vmul.f32 %v10571, %v9512
      %v10606 = vmul.f32 %v10574, %v9512
      %v10607 = vsub.f32 %v10447, %v10575
      %v10608 = vsub.f32 %v10448, %v10576
      %v10609 = vsub.f32 %v10449, %v10577
      %v10610 = vsub.f32 %v10450, %v10578
      %v10611 = vsub.f32 %v10451, %v10579
      %v10612 = vsub.f32 %v10452, %v10580
      %v10613 = vsub.f32 %v10453, %v10581
      %v10614 = vsub.f32 %v10454, %v10582
      %v10615 = vsub.f32 %v10455, %v10583
      %v10616 = vsub.f32 %v10456, %v10584
      %v10617 = vsub.f32 %v10457, %v10585
      %v10618 = vsub.f32 %v10458, %v10586
      %v10619 = vsub.f32 %v10459, %v10587
      %v10620 = vsub.f32 %v10460, %v10588
      %v10621 = vsub.f32 %v10461, %v10589
      %v10622 = vsub.f32 %v10462, %v10590
      %v10623 = vsub.f32 %v10463, %v10591
      %v10624 = vsub.f32 %v10464, %v10592
      %v10625 = vsub.f32 %v10465, %v10593
      %v10626 = vsub.f32 %v10466, %v10594
      %v10627 = vsub.f32 %v10467, %v10595
      %v10628 = vsub.f32 %v10468, %v10596
      %v10629 = vsub.f32 %v10469, %v10597
      %v10630 = vsub.f32 %v10470, %v10598
      %v10631 = vsub.f32 %v10471, %v10599
      %v10632 = vsub.f32 %v10472, %v10600
      %v10633 = vsub.f32 %v10473, %v10601
      %v10634 = vsub.f32 %v10474, %v10602
      %v10635 = vsub.f32 %v10475, %v10603
      %v10636 = vsub.f32 %v10476, %v10604
      %v10637 = vsub.f32 %v10477, %v10605
      %v10638 = vsub.f32 %v10478, %v10606
      %v10639 = vmul.f32 %v10607, %v10607
      %v10640 = vmul.f32 %v10608, %v10608
      %v10641 = vmul.f32 %v10609, %v10609
      %v10642 = vmul.f32 %v10610, %v10610
      %v10643 = vmul.f32 %v10611, %v10611
      %v10644 = vmul.f32 %v10612, %v10612
      %v10645 = vmul.f32 %v10613, %v10613
      %v10646 = vmul.f32 %v10614, %v10614
      %v10647 = vmul.f32 %v10615, %v10615
      %v10648 = vmul.f32 %v10616, %v10616
      %v10649 = vmul.f32 %v10617, %v10617
      %v10650 = vmul.f32 %v10618, %v10618
      %v10651 = vmul.f32 %v10619, %v10619
      %v10652 = vmul.f32 %v10620, %v10620
      %v10653 = vmul.f32 %v10621, %v10621
      %v10654 = vmul.f32 %v10622, %v10622
      %v10655 = vmul.f32 %v10623, %v10623
      %v10656 = vmul.f32 %v10624, %v10624
      %v10657 = vmul.f32 %v10625, %v10625
      %v10658 = vmul.f32 %v10626, %v10626
      %v10659 = vmul.f32 %v10627, %v10627
      %v10660 = vmul.f32 %v10628, %v10628
      %v10661 = vmul.f32 %v10629, %v10629
      %v10662 = vmul.f32 %v10630, %v10630
      %v10663 = vmul.f32 %v10631, %v10631
      %v10664 = vmul.f32 %v10632, %v10632
      %v10665 = vmul.f32 %v10633, %v10633
      %v10666 = vmul.f32 %v10634, %v10634
      %v10667 = vmul.f32 %v10635, %v10635
      %v10668 = vmul.f32 %v10636, %v10636
      %v10669 = vmul.f32 %v10637, %v10637
      %v10670 = vmul.f32 %v10638, %v10638
      %v10671 = vsel %vm382, %v10639, 0.0
      %10672 = vadd.xlane.f32.xlu0 %v10671
      %v10673 = vpop.xlane.xlu0 %10672
      %v10674 = vsel %vm382, %v10640, 0.0
      %10675 = vadd.xlane.f32.xlu0 %v10674
      %v10676 = vpop.xlane.xlu0 %10675
      %v10677 = vsel %vm382, %v10641, 0.0
      %10678 = vadd.xlane.f32.xlu0 %v10677
      %v10679 = vpop.xlane.xlu0 %10678
      %v10680 = vsel %vm382, %v10642, 0.0
      %10681 = vadd.xlane.f32.xlu0 %v10680
      %v10682 = vpop.xlane.xlu0 %10681
      %v10683 = vsel %vm382, %v10643, 0.0
      %10684 = vadd.xlane.f32.xlu0 %v10683
      %v10685 = vpop.xlane.xlu0 %10684
      %v10686 = vsel %vm382, %v10644, 0.0
      %10687 = vadd.xlane.f32.xlu0 %v10686
      %v10688 = vpop.xlane.xlu0 %10687
      %v10689 = vsel %vm382, %v10645, 0.0
      %10690 = vadd.xlane.f32.xlu0 %v10689
      %v10691 = vpop.xlane.xlu0 %10690
      %v10692 = vsel %vm382, %v10646, 0.0
      %10693 = vadd.xlane.f32.xlu0 %v10692
      %v10694 = vpop.xlane.xlu0 %10693
      %v10695 = vsel %vm382, %v10647, 0.0
      %10696 = vadd.xlane.f32.xlu0 %v10695
      %v10697 = vpop.xlane.xlu0 %10696
      %v10698 = vsel %vm382, %v10648, 0.0
      %10699 = vadd.xlane.f32.xlu0 %v10698
      %v10700 = vpop.xlane.xlu0 %10699
      %v10701 = vsel %vm382, %v10649, 0.0
      %10702 = vadd.xlane.f32.xlu0 %v10701
      %v10703 = vpop.xlane.xlu0 %10702
      %v10704 = vsel %vm382, %v10650, 0.0
      %10705 = vadd.xlane.f32.xlu0 %v10704
      %v10706 = vpop.xlane.xlu0 %10705
      %v10707 = vsel %vm382, %v10651, 0.0
      %10708 = vadd.xlane.f32.xlu0 %v10707
      %v10709 = vpop.xlane.xlu0 %10708
      %v10710 = vsel %vm382, %v10652, 0.0
      %10711 = vadd.xlane.f32.xlu0 %v10710
      %v10712 = vpop.xlane.xlu0 %10711
      %v10713 = vsel %vm382, %v10653, 0.0
      %10714 = vadd.xlane.f32.xlu0 %v10713
      %v10715 = vpop.xlane.xlu0 %10714
      %v10716 = vsel %vm382, %v10654, 0.0
      %10717 = vadd.xlane.f32.xlu0 %v10716
      %v10718 = vpop.xlane.xlu0 %10717
      %v10719 = vsel %vm382, %v10655, 0.0
      %10720 = vadd.xlane.f32.xlu0 %v10719
      %v10721 = vpop.xlane.xlu0 %10720
      %v10722 = vsel %vm382, %v10656, 0.0
      %10723 = vadd.xlane.f32.xlu0 %v10722
      %v10724 = vpop.xlane.xlu0 %10723
      %v10725 = vsel %vm382, %v10657, 0.0
      %10726 = vadd.xlane.f32.xlu0 %v10725
      %v10727 = vpop.xlane.xlu0 %10726
      %v10728 = vsel %vm382, %v10658, 0.0
      %10729 = vadd.xlane.f32.xlu0 %v10728
      %v10730 = vpop.xlane.xlu0 %10729
      %v10731 = vsel %vm382, %v10659, 0.0
      %10732 = vadd.xlane.f32.xlu0 %v10731
      %v10733 = vpop.xlane.xlu0 %10732
      %v10734 = vsel %vm382, %v10660, 0.0
      %10735 = vadd.xlane.f32.xlu0 %v10734
      %v10736 = vpop.xlane.xlu0 %10735
      %v10737 = vsel %vm382, %v10661, 0.0
      %10738 = vadd.xlane.f32.xlu0 %v10737
      %v10739 = vpop.xlane.xlu0 %10738
      %v10740 = vsel %vm382, %v10662, 0.0
      %10741 = vadd.xlane.f32.xlu0 %v10740
      %v10742 = vpop.xlane.xlu0 %10741
      %v10743 = vsel %vm382, %v10663, 0.0
      %10744 = vadd.xlane.f32.xlu0 %v10743
      %v10745 = vpop.xlane.xlu0 %10744
      %v10746 = vsel %vm382, %v10664, 0.0
      %10747 = vadd.xlane.f32.xlu0 %v10746
      %v10748 = vpop.xlane.xlu0 %10747
      %v10749 = vsel %vm382, %v10665, 0.0
      %10750 = vadd.xlane.f32.xlu0 %v10749
      %v10751 = vpop.xlane.xlu0 %10750
      %v10752 = vsel %vm382, %v10666, 0.0
      %10753 = vadd.xlane.f32.xlu0 %v10752
      %v10754 = vpop.xlane.xlu0 %10753
      %v10755 = vsel %vm382, %v10667, 0.0
      %10756 = vadd.xlane.f32.xlu0 %v10755
      %v10757 = vpop.xlane.xlu0 %10756
      %v10758 = vsel %vm382, %v10668, 0.0
      %10759 = vadd.xlane.f32.xlu0 %v10758
      %v10760 = vpop.xlane.xlu0 %10759
      %v10761 = vsel %vm382, %v10669, 0.0
      %10762 = vadd.xlane.f32.xlu0 %v10761
      %v10763 = vpop.xlane.xlu0 %10762
      %v10764 = vsel %vm382, %v10670, 0.0
      %10765 = vadd.xlane.f32.xlu0 %v10764
      %v10766 = vpop.xlane.xlu0 %10765
      %v10767 = vmul.f32 %v10673, %v9512
      %v10768 = vmul.f32 %v10676, %v9512
      %v10769 = vmul.f32 %v10679, %v9512
      %v10770 = vmul.f32 %v10682, %v9512
      %v10771 = vmul.f32 %v10685, %v9512
      %v10772 = vmul.f32 %v10688, %v9512
      %v10773 = vmul.f32 %v10691, %v9512
      %v10774 = vmul.f32 %v10694, %v9512
      %v10775 = vmul.f32 %v10697, %v9512
      %v10776 = vmul.f32 %v10700, %v9512
      %v10777 = vmul.f32 %v10703, %v9512
      %v10778 = vmul.f32 %v10706, %v9512
      %v10779 = vmul.f32 %v10709, %v9512
      %v10780 = vmul.f32 %v10712, %v9512
      %v10781 = vmul.f32 %v10715, %v9512
      %v10782 = vmul.f32 %v10718, %v9512
      %v10783 = vmul.f32 %v10721, %v9512
      %v10784 = vmul.f32 %v10724, %v9512
      %v10785 = vmul.f32 %v10727, %v9512
      %v10786 = vmul.f32 %v10730, %v9512
      %v10787 = vmul.f32 %v10733, %v9512
      %v10788 = vmul.f32 %v10736, %v9512
      %v10789 = vmul.f32 %v10739, %v9512
      %v10790 = vmul.f32 %v10742, %v9512
      %v10791 = vmul.f32 %v10745, %v9512
      %v10792 = vmul.f32 %v10748, %v9512
      %v10793 = vmul.f32 %v10751, %v9512
      %v10794 = vmul.f32 %v10754, %v9512
      %v10795 = vmul.f32 %v10757, %v9512
      %v10796 = vmul.f32 %v10760, %v9512
      %v10797 = vmul.f32 %v10763, %v9512
      %v10798 = vmul.f32 %v10766, %v9512
      %v10799 = vadd.f32 %v10767, 1e-05
      %v10800 = vadd.f32 %v10768, 1e-05
      %v10801 = vadd.f32 %v10769, 1e-05
      %v10802 = vadd.f32 %v10770, 1e-05
      %v10803 = vadd.f32 %v10771, 1e-05
      %v10804 = vadd.f32 %v10772, 1e-05
      %v10805 = vadd.f32 %v10773, 1e-05
      %v10806 = vadd.f32 %v10774, 1e-05
      %v10807 = vadd.f32 %v10775, 1e-05
      %v10808 = vadd.f32 %v10776, 1e-05
      %v10809 = vadd.f32 %v10777, 1e-05
      %v10810 = vadd.f32 %v10778, 1e-05
      %v10811 = vadd.f32 %v10779, 1e-05
      %v10812 = vadd.f32 %v10780, 1e-05
      %v10813 = vadd.f32 %v10781, 1e-05
      %v10814 = vadd.f32 %v10782, 1e-05
      %v10815 = vadd.f32 %v10783, 1e-05
      %v10816 = vadd.f32 %v10784, 1e-05
      %v10817 = vadd.f32 %v10785, 1e-05
      %v10818 = vadd.f32 %v10786, 1e-05
      %v10819 = vadd.f32 %v10787, 1e-05
      %v10820 = vadd.f32 %v10788, 1e-05
      %v10821 = vadd.f32 %v10789, 1e-05
      %v10822 = vadd.f32 %v10790, 1e-05
      %v10823 = vadd.f32 %v10791, 1e-05
      %v10824 = vadd.f32 %v10792, 1e-05
      %v10825 = vadd.f32 %v10793, 1e-05
      %v10826 = vadd.f32 %v10794, 1e-05
      %v10827 = vadd.f32 %v10795, 1e-05
      %v10828 = vadd.f32 %v10796, 1e-05
      %v10829 = vadd.f32 %v10797, 1e-05
      %v10830 = vadd.f32 %v10798, 1e-05
      %v10831 = vrsqrt.pop %v10799
      %v10832 = vrsqrt.pop %v10800
      %v10833 = vrsqrt.pop %v10801
      %v10834 = vrsqrt.pop %v10802
      %v10835 = vrsqrt.pop %v10803
      %v10836 = vrsqrt.pop %v10804
      %v10837 = vrsqrt.pop %v10805
      %v10838 = vrsqrt.pop %v10806
      %v10839 = vrsqrt.pop %v10807
      %v10840 = vrsqrt.pop %v10808
      %v10841 = vrsqrt.pop %v10809
      %v10842 = vrsqrt.pop %v10810
      %v10843 = vrsqrt.pop %v10811
      %v10844 = vrsqrt.pop %v10812
      %v10845 = vrsqrt.pop %v10813
      %v10846 = vrsqrt.pop %v10814
      %v10847 = vrsqrt.pop %v10815
      %v10848 = vrsqrt.pop %v10816
      %v10849 = vrsqrt.pop %v10817
      %v10850 = vrsqrt.pop %v10818
      %v10851 = vrsqrt.pop %v10819
      %v10852 = vrsqrt.pop %v10820
      %v10853 = vrsqrt.pop %v10821
      %v10854 = vrsqrt.pop %v10822
      %v10855 = vrsqrt.pop %v10823
      %v10856 = vrsqrt.pop %v10824
      %v10857 = vrsqrt.pop %v10825
      %v10858 = vrsqrt.pop %v10826
      %v10859 = vrsqrt.pop %v10827
      %v10860 = vrsqrt.pop %v10828
      %v10861 = vrsqrt.pop %v10829
      %v10862 = vrsqrt.pop %v10830
      %v10863 = vmul.f32 %v10607, %v10831
      %v10864 = vmul.f32 %v10608, %v10832
      %v10865 = vmul.f32 %v10609, %v10833
      %v10866 = vmul.f32 %v10610, %v10834
      %v10867 = vmul.f32 %v10611, %v10835
      %v10868 = vmul.f32 %v10612, %v10836
      %v10869 = vmul.f32 %v10613, %v10837
      %v10870 = vmul.f32 %v10614, %v10838
      %v10871 = vmul.f32 %v10615, %v10839
      %v10872 = vmul.f32 %v10616, %v10840
      %v10873 = vmul.f32 %v10617, %v10841
      %v10874 = vmul.f32 %v10618, %v10842
      %v10875 = vmul.f32 %v10619, %v10843
      %v10876 = vmul.f32 %v10620, %v10844
      %v10877 = vmul.f32 %v10621, %v10845
      %v10878 = vmul.f32 %v10622, %v10846
      %v10879 = vmul.f32 %v10623, %v10847
      %v10880 = vmul.f32 %v10624, %v10848
      %v10881 = vmul.f32 %v10625, %v10849
      %v10882 = vmul.f32 %v10626, %v10850
      %v10883 = vmul.f32 %v10627, %v10851
      %v10884 = vmul.f32 %v10628, %v10852
      %v10885 = vmul.f32 %v10629, %v10853
      %v10886 = vmul.f32 %v10630, %v10854
      %v10887 = vmul.f32 %v10631, %v10855
      %v10888 = vmul.f32 %v10632, %v10856
      %v10889 = vmul.f32 %v10633, %v10857
      %v10890 = vmul.f32 %v10634, %v10858
      %v10891 = vmul.f32 %v10635, %v10859
      %v10892 = vmul.f32 %v10636, %v10860
      %v10893 = vmul.f32 %v10637, %v10861
      %v10894 = vmul.f32 %v10638, %v10862
      %v10895 = vlaneseq
      %v10896 = vshrl.u32 %v10895, 7
      %v10897 = vsub.s32 4, %v10896
      %v10898 = vrot.slane %v358, %v10897
      %v10899 = vmul.f32 %v10863, %v10898
      %v10900 = vmul.f32 %v10864, %v10898
      %v10901 = vmul.f32 %v10865, %v10898
      %v10902 = vmul.f32 %v10866, %v10898
      %v10903 = vmul.f32 %v10867, %v10898
      %v10904 = vmul.f32 %v10868, %v10898
      %v10905 = vmul.f32 %v10869, %v10898
      %v10906 = vmul.f32 %v10870, %v10898
      %v10907 = vmul.f32 %v10871, %v10898
      %v10908 = vmul.f32 %v10872, %v10898
      %v10909 = vmul.f32 %v10873, %v10898
      %v10910 = vmul.f32 %v10874, %v10898
      %v10911 = vmul.f32 %v10875, %v10898
      %v10912 = vmul.f32 %v10876, %v10898
      %v10913 = vmul.f32 %v10877, %v10898
      %v10914 = vmul.f32 %v10878, %v10898
      %v10915 = vmul.f32 %v10879, %v10898
      %v10916 = vmul.f32 %v10880, %v10898
      %v10917 = vmul.f32 %v10881, %v10898
      %v10918 = vmul.f32 %v10882, %v10898
      %v10919 = vmul.f32 %v10883, %v10898
      %v10920 = vmul.f32 %v10884, %v10898
      %v10921 = vmul.f32 %v10885, %v10898
      %v10922 = vmul.f32 %v10886, %v10898
      %v10923 = vmul.f32 %v10887, %v10898
      %v10924 = vmul.f32 %v10888, %v10898
      %v10925 = vmul.f32 %v10889, %v10898
      %v10926 = vmul.f32 %v10890, %v10898
      %v10927 = vmul.f32 %v10891, %v10898
      %v10928 = vmul.f32 %v10892, %v10898
      %v10929 = vmul.f32 %v10893, %v10898
      %v10930 = vmul.f32 %v10894, %v10898
      %v10931 = vlaneseq
      %v10932 = vshrl.u32 %v10931, 7
      %v10933 = vsub.s32 5, %v10932
      %v10934 = vrot.slane %v358, %v10933
      %v10935 = vadd.f32 %v10899, %v10934
      %v10936 = vadd.f32 %v10900, %v10934
      %v10937 = vadd.f32 %v10901, %v10934
      %v10938 = vadd.f32 %v10902, %v10934
      %v10939 = vadd.f32 %v10903, %v10934
      %v10940 = vadd.f32 %v10904, %v10934
      %v10941 = vadd.f32 %v10905, %v10934
      %v10942 = vadd.f32 %v10906, %v10934
      %v10943 = vadd.f32 %v10907, %v10934
      %v10944 = vadd.f32 %v10908, %v10934
      %v10945 = vadd.f32 %v10909, %v10934
      %v10946 = vadd.f32 %v10910, %v10934
      %v10947 = vadd.f32 %v10911, %v10934
      %v10948 = vadd.f32 %v10912, %v10934
      %v10949 = vadd.f32 %v10913, %v10934
      %v10950 = vadd.f32 %v10914, %v10934
      %v10951 = vadd.f32 %v10915, %v10934
      %v10952 = vadd.f32 %v10916, %v10934
      %v10953 = vadd.f32 %v10917, %v10934
      %v10954 = vadd.f32 %v10918, %v10934
      %v10955 = vadd.f32 %v10919, %v10934
      %v10956 = vadd.f32 %v10920, %v10934
      %v10957 = vadd.f32 %v10921, %v10934
      %v10958 = vadd.f32 %v10922, %v10934
      %v10959 = vadd.f32 %v10923, %v10934
      %v10960 = vadd.f32 %v10924, %v10934
      %v10961 = vadd.f32 %v10925, %v10934
      %v10962 = vadd.f32 %v10926, %v10934
      %v10963 = vadd.f32 %v10927, %v10934
      %v10964 = vadd.f32 %v10928, %v10934
      %v10965 = vadd.f32 %v10929, %v10934
      %v10966 = vadd.f32 %v10930, %v10934
      %10967 = vst.msk [vmem:[%s307] sm:$0xff] %vm382, %v10935
      %10968 = vst.msk [vmem:[%s307 + $0x8] sm:$0xff] %vm382, %v10936
      %10969 = vst.msk [vmem:[%s307 + $0x10] sm:$0xff] %vm382, %v10937
      %10970 = vst.msk [vmem:[%s307 + $0x18] sm:$0xff] %vm382, %v10938
      %10971 = vst.msk [vmem:[%s307 + $0x20] sm:$0xff] %vm382, %v10939
      %10972 = vst.msk [vmem:[%s307 + $0x28] sm:$0xff] %vm382, %v10940
      %10973 = vst.msk [vmem:[%s307 + $0x30] sm:$0xff] %vm382, %v10941
      %10974 = vst.msk [vmem:[%s307 + $0x38] sm:$0xff] %vm382, %v10942
      %10975 = vst.msk [vmem:[%s307 + $0x40] sm:$0xff] %vm382, %v10943
      %10976 = vst.msk [vmem:[%s307 + $0x48] sm:$0xff] %vm382, %v10944
      %10977 = vst.msk [vmem:[%s307 + $0x50] sm:$0xff] %vm382, %v10945
      %10978 = vst.msk [vmem:[%s307 + $0x58] sm:$0xff] %vm382, %v10946
      %10979 = vst.msk [vmem:[%s307 + $0x60] sm:$0xff] %vm382, %v10947
      %10980 = vst.msk [vmem:[%s307 + $0x68] sm:$0xff] %vm382, %v10948
      %10981 = vst.msk [vmem:[%s307 + $0x70] sm:$0xff] %vm382, %v10949
      %10982 = vst.msk [vmem:[%s307 + $0x78] sm:$0xff] %vm382, %v10950
      %10983 = vst.msk [vmem:[%s307 + $0x80] sm:$0xff] %vm382, %v10951
      %10984 = vst.msk [vmem:[%s307 + $0x88] sm:$0xff] %vm382, %v10952
      %10985 = vst.msk [vmem:[%s307 + $0x90] sm:$0xff] %vm382, %v10953
      %10986 = vst.msk [vmem:[%s307 + $0x98] sm:$0xff] %vm382, %v10954
      %10987 = vst.msk [vmem:[%s307 + $0xa0] sm:$0xff] %vm382, %v10955
      %10988 = vst.msk [vmem:[%s307 + $0xa8] sm:$0xff] %vm382, %v10956
      %10989 = vst.msk [vmem:[%s307 + $0xb0] sm:$0xff] %vm382, %v10957
      %10990 = vst.msk [vmem:[%s307 + $0xb8] sm:$0xff] %vm382, %v10958
      %10991 = vst.msk [vmem:[%s307 + $0xc0] sm:$0xff] %vm382, %v10959
      %10992 = vst.msk [vmem:[%s307 + $0xc8] sm:$0xff] %vm382, %v10960
      %10993 = vst.msk [vmem:[%s307 + $0xd0] sm:$0xff] %vm382, %v10961
      %10994 = vst.msk [vmem:[%s307 + $0xd8] sm:$0xff] %vm382, %v10962
      %10995 = vst.msk [vmem:[%s307 + $0xe0] sm:$0xff] %vm382, %v10963
      %10996 = vst.msk [vmem:[%s307 + $0xe8] sm:$0xff] %vm382, %v10964
      %10997 = vst.msk [vmem:[%s307 + $0xf0] sm:$0xff] %vm382, %v10965
      %10998 = vst.msk [vmem:[%s307 + $0xf8] sm:$0xff] %vm382, %v10966
      %s10999 = smul.u32 32, %s19
      %p11000 = scmp.lt.s32.totalorder %s10999, 127
      %s11001 = scalar_select %p11000, %s10999, 127
      %s11002 = smul.addr %s11001, 8
      %s11003 = scalar_lea.vmem %s8, %s11002
      // Predicated region
      $region53: #{transformer_encoder_layer_forward.1} parent=51 // pred_check
        %p11004 = pneg %p210
      $region54: #{transformer_encoder_layer_forward.1} parent=51 // pred_check_branch
        %11006 = sbr.rel (%p11004) target = $region56
      $region55: #{transformer_encoder_layer_forward.1} parent=51 // pred_region
        %s11007 = smul.u32 32, %s19
      $region56: #{transformer_encoder_layer_forward.1} parent=51 // pred_fallthru
        _
    $region52: #{transformer_encoder_layer_forward.1} parent=5 // pred_fallthru
      _
    %p11008 = scmp.le.s32.totalorder 2, %s14
    // Predicated region
    $region57: #{transformer_encoder_layer_forward.1} parent=5 // pred_check
      %p11009 = pneg %p11008
    $region58: #{transformer_encoder_layer_forward.1} parent=5 // pred_check_branch
      %11011 = sbr.rel (%p11009) target = $region60
    $region59: #{transformer_encoder_layer_forward.1} parent=5 // pred_region
      %s11012 = ssub.s32 %s14, 2
      // Predicated region
      $region61: #{transformer_encoder_layer_forward.1} parent=59 // pred_check
        %p11013 = pneg %p216
      $region62: #{transformer_encoder_layer_forward.1} parent=59 // pred_check_branch
        %11015 = sbr.rel (%p11013) target = $region64
      $region63: #{transformer_encoder_layer_forward.1} parent=59 // pred_region
        %s11016 = smul.u32 32, %s20
        %p11017 = scmp.lt.s32.totalorder %s11016, 127
        %s11018 = scalar_select %p11017, %s11016, 127
        %s11019 = smul.addr %s11018, 8
        %s11020 = scalar_lea.vmem %s8, %s11019
      $region64: #{transformer_encoder_layer_forward.1} parent=59 // pred_fallthru
        _
    $region60: #{transformer_encoder_layer_forward.1} parent=5 // pred_fallthru
      _
  $region6: #{transformer_encoder_layer_forward.1} parent=0 // loop_footer
    %s18 = sadd.s32 1, %s14
  $region7: #{transformer_encoder_layer_forward.1} parent=0 // loop_footer_branch
    %13 = sbr.rel target = $region3
  $region8: #{transformer_encoder_layer_forward.1} parent=0 // loop_exit
    _

</llo_original>
